<compile_context>
chip_gen: v7x
topology: tpu7x:2x2x1
jax: 0.10.0
libtpu: 0.0.40
codegen_flags: <defaults>
</compile_context>

<pallas_src>
import functools

import jax
import jax.numpy as jnp
from jax import lax
from jax.experimental import pallas as pl
from jax.experimental.pallas import tpu as pltpu

C_IN = 96
C_HID = 384
_INV_SQRT2 = 0.7071067811865476


def _gelu_exact(h):
    # PyTorch GELU(approximate='none'): 0.5 * h * (1 + erf(h / sqrt(2)))
    return 0.5 * h * (1.0 + lax.erf(h * _INV_SQRT2))


def _mlp_kernel(x_ref, w1_ref, b1_ref, w2_ref, b2_ref, o_ref):
    # x_ref:  (tm, 96)  f32     w1_ref: (96, 384)  bf16   b1_ref: (1, 384) f32
    # w2_ref: (384, 96) bf16    b2_ref: (1, 96)    f32    o_ref:  (tm, 96) f32
    x = x_ref[...].astype(jnp.bfloat16)
    h = jnp.dot(x, w1_ref[...], preferred_element_type=jnp.float32) + b1_ref[...]
    h = _gelu_exact(h)  # exact erf GELU in f32 (module semantics)
    out = jnp.dot(h.astype(jnp.bfloat16), w2_ref[...],
                  preferred_element_type=jnp.float32) + b2_ref[...]
    o_ref[...] = out.astype(o_ref.dtype)


@functools.partial(jax.jit, static_argnames=("tm",))
def convnext_mlp(x, w1, b1, w2, b2, *, tm=1568):
    """x: (N, H, W, 96) f32.  w1: (96, 384), b1: (384,), w2: (384, 96), b2: (96,).

    Weights are stored pre-transposed as (in, out) so the kernel computes x @ W + b.
    """
    orig_shape = x.shape
    x2 = x.reshape(-1, C_IN)
    rows = x2.shape[0]

    # Pad rows up to a multiple of the tile size; padded rows compute garbage
    # that is sliced off afterwards (zeros through bias+GELU cannot NaN/Inf).
    padded = pl.cdiv(rows, tm) * tm
    if padded != rows:
        x2 = jnp.pad(x2, ((0, padded - rows), (0, 0)))

    # Pre-cast weights once (bf16 MXU operands, half the weight DMA bytes).
    w1_b = w1.astype(jnp.bfloat16)
    w2_b = w2.astype(jnp.bfloat16)
    b1_2d = b1.reshape(1, C_HID).astype(jnp.float32)
    b2_2d = b2.reshape(1, C_IN).astype(jnp.float32)

    grid = (padded // tm,)

    flops = 2 * padded * C_IN * C_HID * 2          # two matmuls
    bytes_accessed = (padded * C_IN * 4 * 2        # x in + out, f32
                      + 2 * C_IN * C_HID * 2       # bf16 weights
                      + (C_HID + C_IN) * 4)        # biases
    cost = pl.CostEstimate(flops=flops,
                           transcendentals=padded * C_HID,   # one erf per hidden elem
                           bytes_accessed=bytes_accessed)

    out = pl.pallas_call(
        _mlp_kernel,
        out_shape=jax.ShapeDtypeStruct((padded, C_IN), x.dtype),
        grid_spec=pltpu.PrefetchScalarGridSpec(
            num_scalar_prefetch=0,
            grid=grid,
            in_specs=[
                pl.BlockSpec((tm, C_IN), lambda i: (i, 0)),
                # Constant index_map -> block index never changes, so the
                # pipeline DMAs these weight/bias tiles only once.
                pl.BlockSpec((C_IN, C_HID), lambda i: (0, 0)),
                pl.BlockSpec((1, C_HID), lambda i: (0, 0)),
                pl.BlockSpec((C_HID, C_IN), lambda i: (0, 0)),
                pl.BlockSpec((1, C_IN), lambda i: (0, 0)),
            ],
            out_specs=pl.BlockSpec((tm, C_IN), lambda i: (i, 0)),
        ),
        compiler_params=pltpu.CompilerParams(
            dimension_semantics=("parallel",),   # lets v7x shard the 2 row tiles
        ),
        cost_estimate=cost,
    )(x2, w1_b, b1_2d, w2_b, b2_2d)

    return out[:rows].reshape(orig_shape)


def _reference_f32(x, w1, b1, w2, b2):
    h = x @ w1 + b1
    return _gelu_exact(h) @ w2 + b2


def _reference_mixed(x, w1, b1, w2, b2):
    """Pure-JAX reference with the same bf16-operand / f32-accumulate math as the kernel."""
    xf = x.reshape(-1, C_IN)
    h = jnp.dot(xf.astype(jnp.bfloat16), w1.astype(jnp.bfloat16),
                preferred_element_type=jnp.float32) + b1.reshape(1, C_HID)
    h = _gelu_exact(h)
    out = jnp.dot(h.astype(jnp.bfloat16), w2.astype(jnp.bfloat16),
                  preferred_element_type=jnp.float32) + b2.reshape(1, C_IN)
    return out.reshape(x.shape[:-1] + (C_IN,))


if __name__ == "__main__":
    key = jax.random.PRNGKey(0)
    kx, kw1, kb1, kw2, kb2 = jax.random.split(key, 5)

    # Input consistent with the module's forward: [1, 56, 56, 96]
    x = jax.random.normal(kx, (1, 56, 56, C_IN), dtype=jnp.float32)

    # Deterministic synthetic parameters (Linear weights stored as (in, out)).
    w1 = jax.random.normal(kw1, (C_IN, C_HID), dtype=jnp.float32) * (1.0 / (C_IN ** 0.5))
    b1 = jax.random.normal(kb1, (C_HID,), dtype=jnp.float32) * 0.01
    w2 = jax.random.normal(kw2, (C_HID, C_IN), dtype=jnp.float32) * (1.0 / (C_HID ** 0.5))
    b2 = jax.random.normal(kb2, (C_IN,), dtype=jnp.float32) * 0.01

    out = jax.block_until_ready(convnext_mlp(x, w1, b1, w2, b2))
    assert out.shape == (1, 56, 56, C_IN), out.shape

    # 1) Kernel matches the bf16-operand / f32-accumulate math it implements.
    ref_mixed = _reference_mixed(x, w1, b1, w2, b2)
    err_mixed = float(jnp.max(jnp.abs(out - ref_mixed)))
    assert jnp.allclose(out, ref_mixed, atol=1e-3, rtol=1e-3), err_mixed

    # 2) And stays close to the exact-f32 module forward (bf16 operands cost
    #    ~1e-2 abs at these magnitudes, which this MLP block tolerates).
    ref_f32 = _reference_f32(x, w1, b1, w2, b2)
    err_f32 = float(jnp.max(jnp.abs(out - ref_f32)))
    assert jnp.allclose(out, ref_f32, atol=5e-2, rtol=5e-2), err_f32

    print("KERNEL_OK")
</pallas_src>

<mosaic_0001>
module attributes {stable_mosaic.version = 11 : i64} {
  func.func @_mlp_kernel(%arg0: i32, %arg1: memref<1568x96xf32, #tpu.memory_space<vmem>>, %arg2: memref<96x384xbf16, #tpu.memory_space<vmem>>, %arg3: memref<1x384xf32, #tpu.memory_space<vmem>>, %arg4: memref<384x96xbf16, #tpu.memory_space<vmem>>, %arg5: memref<1x96xf32, #tpu.memory_space<vmem>>, %arg6: memref<1568x96xf32, #tpu.memory_space<vmem>>) attributes {dimension_semantics = [#tpu.dimension_semantics<parallel>], iteration_bounds = array<i64: 2>, scalar_prefetch = 0 : i64, scratch_operands = 0 : i64, tpu.core_type = #tpu.core_type<tc>, window_params = [{transform_indices = @transform_0, window_bounds = array<i64: 1568, 96>}, {pipeline_mode = #tpu.pipeline_mode<synchronous>, transform_indices = @transform_1, window_bounds = array<i64: 96, 384>}, {pipeline_mode = #tpu.pipeline_mode<synchronous>, transform_indices = @transform_2, window_bounds = array<i64: 1, 384>}, {pipeline_mode = #tpu.pipeline_mode<synchronous>, transform_indices = @transform_3, window_bounds = array<i64: 384, 96>}, {pipeline_mode = #tpu.pipeline_mode<synchronous>, transform_indices = @transform_4, window_bounds = array<i64: 1, 96>}, {transform_indices = @transform_5, window_bounds = array<i64: 1568, 96>}]} {
    %c0 = arith.constant 0 : index
    %c0_0 = arith.constant 0 : index
    %0 = vector.load %arg1[%c0, %c0_0] : memref<1568x96xf32, #tpu.memory_space<vmem>>, vector<1568x96xf32>
    %1 = arith.truncf %0 : vector<1568x96xf32> to vector<1568x96xbf16>
    %c0_1 = arith.constant 0 : index
    %c0_2 = arith.constant 0 : index
    %2 = vector.load %arg2[%c0_1, %c0_2] : memref<96x384xbf16, #tpu.memory_space<vmem>>, vector<96x384xbf16>
    %cst = arith.constant dense<0.000000e+00> : vector<1568x384xf32>
    %3 = tpu.matmul %1, %2, %cst {dimension_numbers = #tpu.dot_dimension_numbers<[1], [0], [0], [1], [0, 0, 1, 1], [], []>} : vector<1568x96xbf16>, vector<96x384xbf16>, vector<1568x384xf32> -> vector<1568x384xf32>
    %c0_3 = arith.constant 0 : index
    %c0_4 = arith.constant 0 : index
    %4 = vector.load %arg3[%c0_3, %c0_4] : memref<1x384xf32, #tpu.memory_space<vmem>>, vector<1x384xf32>
    %5 = vector.broadcast %4 : vector<1x384xf32> to vector<1568x384xf32>
    %6 = arith.addf %3, %5 : vector<1568x384xf32>
    %cst_5 = arith.constant 5.000000e-01 : f32
    %7 = vector.broadcast %cst_5 : f32 to vector<1568x384xf32>
    %8 = arith.mulf %7, %6 : vector<1568x384xf32>
    %cst_6 = arith.constant 0.707106769 : f32
    %9 = vector.broadcast %cst_6 : f32 to vector<1568x384xf32>
    %10 = arith.mulf %6, %9 : vector<1568x384xf32>
    %11 = math.erf %10 : vector<1568x384xf32>
    %cst_7 = arith.constant 1.000000e+00 : f32
    %12 = vector.broadcast %cst_7 : f32 to vector<1568x384xf32>
    %13 = arith.addf %12, %11 : vector<1568x384xf32>
    %14 = arith.mulf %8, %13 : vector<1568x384xf32>
    %15 = arith.truncf %14 : vector<1568x384xf32> to vector<1568x384xbf16>
    %c0_8 = arith.constant 0 : index
    %c0_9 = arith.constant 0 : index
    %16 = vector.load %arg4[%c0_8, %c0_9] : memref<384x96xbf16, #tpu.memory_space<vmem>>, vector<384x96xbf16>
    %cst_10 = arith.constant dense<0.000000e+00> : vector<1568x96xf32>
    %17 = tpu.matmul %15, %16, %cst_10 {dimension_numbers = #tpu.dot_dimension_numbers<[1], [0], [0], [1], [0, 0, 1, 1], [], []>} : vector<1568x384xbf16>, vector<384x96xbf16>, vector<1568x96xf32> -> vector<1568x96xf32>
    %c0_11 = arith.constant 0 : index
    %c0_12 = arith.constant 0 : index
    %18 = vector.load %arg5[%c0_11, %c0_12] : memref<1x96xf32, #tpu.memory_space<vmem>>, vector<1x96xf32>
    %19 = vector.broadcast %18 : vector<1x96xf32> to vector<1568x96xf32>
    %20 = arith.addf %17, %19 : vector<1568x96xf32>
    %c0_13 = arith.constant 0 : index
    %c0_14 = arith.constant 0 : index
    %21 = vector.load %arg6[%c0_13, %c0_14] : memref<1568x96xf32, #tpu.memory_space<vmem>>, vector<1568x96xf32>
    tpu.vector_store %arg6[%c0_13, %c0_14], %20 {strides = array<i32>} : memref<1568x96xf32, #tpu.memory_space<vmem>>, vector<1568x96xf32>,
    return
  }
  func.func @transform_0(%arg0: i32) -> (i32, i32) {
    %c0_i32 = arith.constant 0 : i32
    %c0_i32_0 = arith.constant 0 : i32
    return %arg0, %c0_i32 : i32, i32
  }
  func.func @transform_1(%arg0: i32) -> (i32, i32) {
    %c0_i32 = arith.constant 0 : i32
    %c0_i32_0 = arith.constant 0 : i32
    %c0_i32_1 = arith.constant 0 : i32
    return %c0_i32, %c0_i32_0 : i32, i32
  }
  func.func @transform_2(%arg0: i32) -> (i32, i32) {
    %c0_i32 = arith.constant 0 : i32
    %c0_i32_0 = arith.constant 0 : i32
    %c0_i32_1 = arith.constant 0 : i32
    return %c0_i32, %c0_i32_0 : i32, i32
  }
  func.func @transform_3(%arg0: i32) -> (i32, i32) {
    %c0_i32 = arith.constant 0 : i32
    %c0_i32_0 = arith.constant 0 : i32
    %c0_i32_1 = arith.constant 0 : i32
    return %c0_i32, %c0_i32_0 : i32, i32
  }
  func.func @transform_4(%arg0: i32) -> (i32, i32) {
    %c0_i32 = arith.constant 0 : i32
    %c0_i32_0 = arith.constant 0 : i32
    %c0_i32_1 = arith.constant 0 : i32
    return %c0_i32, %c0_i32_0 : i32, i32
  }
  func.func @transform_5(%arg0: i32) -> (i32, i32) {
    %c0_i32 = arith.constant 0 : i32
    %c0_i32_0 = arith.constant 0 : i32
    return %arg0, %c0_i32 : i32, i32
  }
}

</mosaic_0001>

<llo_original>
// kernel: convnext_mlp.1
$region0: #{convnext_mlp.1}
  #allocation0 [shape = 'u32[]', space=smem, size = 0x4, offset = 0x4, fixed_abs, tag = 'smem constant byte address 0x4 - core index']
  #allocation1 [shape = 'u32[144,128]{1,0:T(1,128)}', space=vmem, size = 0x12000, scoped, tag = 'internal scratch']
  %s0 = inlined_call_operand.hbm [shape: f32[3136,96], index: 0, kind: input, shape index: {}]
  %s1 = inlined_call_operand.vmem [shape: bf16[96,384], index: 1, kind: input, shape index: {}]
  %s2 = inlined_call_operand.vmem [shape: f32[1,384], index: 2, kind: input, shape index: {}]
  %s3 = inlined_call_operand.vmem [shape: bf16[384,96], index: 3, kind: input, shape index: {}]
  %s4 = inlined_call_operand.hbm [shape: f32[1,96], index: 4, kind: input, shape index: {}]
  %s5 = inlined_call_operand.hbm [shape: f32[3136,96], index: 5, kind: output, shape index: {}]
  %s6 = sld [smem:[#allocation0]]
  $region61: #{convnext_mlp.1} parent=0
    _
  %s8 = ssub.s32 1, %s6
  %s9 = scalar_select 0, %s8, %s6
  $region1: #{convnext_mlp.1} parent=0
    #allocation2 [shape = 'u8[1605632]{0}', space=vmem, size = 0x188000, scoped, tag = 'input window, operand 0']
    #allocation3 [shape = 's32[2]{0}', space=sflag, size = 0x8, scoped, tag = 'scoped memory for convnext_mlp.1']
    #allocation4 [shape = 's32[2]{0}', space=sflag, size = 0x8, scoped, tag = 'scoped memory for convnext_mlp.1']
    #allocation5 [shape = 'u8[512]{0}', space=vmem, size = 0x400, scoped, tag = 'input window, operand 4, single buffered']
    #allocation6 [shape = 's32[1]{0}', space=sflag, size = 0x4, scoped, tag = 'scoped memory for convnext_mlp.1']
    #allocation7 [shape = 'u8[1605632]{0}', space=vmem, size = 0x188000, scoped, tag = 'output window, operand 0']
    %10 = vsyncpa [#allocation3], 0
    %s11 = scalar_lea.sflag [#allocation3], 1
    %12 = vsyncpa %s11, 0
    %13 = vsyncpa [#allocation6], 0
    %14 = vsyncpa [#allocation4], 0
    %s15 = scalar_lea.sflag [#allocation4], 1
    %16 = vsyncpa %s15, 0
    loop: start=0, step=1, limit=4
    $region2: #{convnext_mlp.1} parent=1 // loop_pre_header
      _
    $region3: #{convnext_mlp.1} parent=1 // loop_header
      %s18 = sphi 0, %s22
      %p19 = scmp.ge.s32.totalorder %s18, 4
      %s28 = sphi 0, %s30
      %s31 = sphi 0, %s28
      %s32 = sphi 0, %s31
      %s48 = sphi 0, %s32
      %s52 = sphi 0, %s52
      %s54 = sphi 0, %s52
      %s55 = sphi 0, %s54
      %s69 = sphi 0, %s55
      %s73 = sphi 0, %s73
      %s75 = sphi 0, %s73
      %s76 = sphi 0, %s75
      %s90 = sphi 0, %s76
      %s94 = sphi 0, %s94
      %s96 = sphi 0, %s94
      %s97 = sphi 0, %s96
      %s111 = sphi 0, %s97
      %s115 = sphi 0, %s115
      %s117 = sphi 0, %s115
      %s118 = sphi 0, %s117
      %s132 = sphi 0, %s118
      %s138 = sphi 0, %s140
      %s141 = sphi 0, %s138
      %s142 = sphi 0, %s141
      %s158 = sphi 0, %s142
    $region4: #{convnext_mlp.1} parent=1 // loop_header_branch
      %21 = sbr.rel (%p19) target = $region8
    $region5: #{convnext_mlp.1} parent=1 // loop_body
      %s23 = ssub.s32 %s18, 1
      %s24 = ssub.s32 %s18, 2
      %s25 = sadd.s32 %s18, 1
      %s26 = ssub.s32 %s18, %s25
      %p27 = scmp.eq.s32.totalorder %s26, 0
      %s29 = sadd.s32 %s28, 1
      %s30 = scalar_select %p27, %s28, %s29
      %p33 = pneg %p27
      %p34 = scmp.eq.s32.totalorder %s18, 1
      %p35 = por %p33, %p34
      %p36 = scmp.ne.s32.totalorder %s28, %s31
      %p37 = scmp.eq.s32.totalorder %s18, 0
      %p38 = por %p36, %p37
      %p39 = scmp.ne.s32.totalorder %s28, %s31
      %p40 = scmp.eq.s32.totalorder %s23, 1
      %p41 = por %p39, %p40
      %p42 = scmp.ne.s32.totalorder %s31, %s32
      %p43 = scmp.eq.s32.totalorder %s23, 0
      %p44 = por %p42, %p43
      %p45 = scmp.ne.s32.totalorder %s31, %s32
      %p46 = scmp.eq.s32.totalorder %s24, 1
      %p47 = por %p45, %p46
      %p49 = scmp.ne.s32.totalorder %s32, %s48
      %p50 = scmp.eq.s32.totalorder %s24, 0
      %p51 = por %p49, %p50
      %s53 = sadd.s32 %s52, 1
      %p56 = scmp.eq.s32.totalorder %s18, 1
      %p57 = scmp.ne.s32.totalorder %s52, %s54
      %p58 = scmp.eq.s32.totalorder %s18, 0
      %p59 = por %p57, %p58
      %p60 = scmp.ne.s32.totalorder %s52, %s54
      %p61 = scmp.eq.s32.totalorder %s23, 1
      %p62 = por %p60, %p61
      %p63 = scmp.ne.s32.totalorder %s54, %s55
      %p64 = scmp.eq.s32.totalorder %s23, 0
      %p65 = por %p63, %p64
      %p66 = scmp.ne.s32.totalorder %s54, %s55
      %p67 = scmp.eq.s32.totalorder %s24, 1
      %p68 = por %p66, %p67
      %p70 = scmp.ne.s32.totalorder %s55, %s69
      %p71 = scmp.eq.s32.totalorder %s24, 0
      %p72 = por %p70, %p71
      %s74 = sadd.s32 %s73, 1
      %p77 = scmp.eq.s32.totalorder %s18, 1
      %p78 = scmp.ne.s32.totalorder %s73, %s75
      %p79 = scmp.eq.s32.totalorder %s18, 0
      %p80 = por %p78, %p79
      %p81 = scmp.ne.s32.totalorder %s73, %s75
      %p82 = scmp.eq.s32.totalorder %s23, 1
      %p83 = por %p81, %p82
      %p84 = scmp.ne.s32.totalorder %s75, %s76
      %p85 = scmp.eq.s32.totalorder %s23, 0
      %p86 = por %p84, %p85
      %p87 = scmp.ne.s32.totalorder %s75, %s76
      %p88 = scmp.eq.s32.totalorder %s24, 1
      %p89 = por %p87, %p88
      %p91 = scmp.ne.s32.totalorder %s76, %s90
      %p92 = scmp.eq.s32.totalorder %s24, 0
      %p93 = por %p91, %p92
      %s95 = sadd.s32 %s94, 1
      %p98 = scmp.eq.s32.totalorder %s18, 1
      %p99 = scmp.ne.s32.totalorder %s94, %s96
      %p100 = scmp.eq.s32.totalorder %s18, 0
      %p101 = por %p99, %p100
      %p102 = scmp.ne.s32.totalorder %s94, %s96
      %p103 = scmp.eq.s32.totalorder %s23, 1
      %p104 = por %p102, %p103
      %p105 = scmp.ne.s32.totalorder %s96, %s97
      %p106 = scmp.eq.s32.totalorder %s23, 0
      %p107 = por %p105, %p106
      %p108 = scmp.ne.s32.totalorder %s96, %s97
      %p109 = scmp.eq.s32.totalorder %s24, 1
      %p110 = por %p108, %p109
      %p112 = scmp.ne.s32.totalorder %s97, %s111
      %p113 = scmp.eq.s32.totalorder %s24, 0
      %p114 = por %p112, %p113
      %s116 = sadd.s32 %s115, 1
      %p119 = scmp.eq.s32.totalorder %s18, 1
      %p120 = scmp.ne.s32.totalorder %s115, %s117
      %p121 = scmp.eq.s32.totalorder %s18, 0
      %p122 = por %p120, %p121
      %p123 = scmp.ne.s32.totalorder %s115, %s117
      %p124 = scmp.eq.s32.totalorder %s23, 1
      %p125 = por %p123, %p124
      %p126 = scmp.ne.s32.totalorder %s117, %s118
      %p127 = scmp.eq.s32.totalorder %s23, 0
      %p128 = por %p126, %p127
      %p129 = scmp.ne.s32.totalorder %s117, %s118
      %p130 = scmp.eq.s32.totalorder %s24, 1
      %p131 = por %p129, %p130
      %p133 = scmp.ne.s32.totalorder %s118, %s132
      %p134 = scmp.eq.s32.totalorder %s24, 0
      %p135 = por %p133, %p134
      %s136 = ssub.s32 %s18, %s25
      %p137 = scmp.eq.s32.totalorder %s136, 0
      %s139 = sadd.s32 %s138, 1
      %s140 = scalar_select %p137, %s138, %s139
      %p143 = pneg %p137
      %p144 = scmp.eq.s32.totalorder %s18, 1
      %p145 = por %p143, %p144
      %p146 = scmp.ne.s32.totalorder %s138, %s141
      %p147 = scmp.eq.s32.totalorder %s18, 0
      %p148 = por %p146, %p147
      %p149 = scmp.ne.s32.totalorder %s138, %s141
      %p150 = scmp.eq.s32.totalorder %s23, 1
      %p151 = por %p149, %p150
      %p152 = scmp.ne.s32.totalorder %s141, %s142
      %p153 = scmp.eq.s32.totalorder %s23, 0
      %p154 = por %p152, %p153
      %p155 = scmp.ne.s32.totalorder %s141, %s142
      %p156 = scmp.eq.s32.totalorder %s24, 1
      %p157 = por %p155, %p156
      %p159 = scmp.ne.s32.totalorder %s142, %s158
      %p160 = scmp.eq.s32.totalorder %s24, 0
      %p161 = por %p159, %p160
      %p162 = scmp.le.s32.totalorder 1, %s18
      %p163 = scmp.lt.s32.totalorder %s18, 3
      %p164 = pnand %p162, %p163
      %p165 = pneg %p164
      // Predicated region
      $region9: #{convnext_mlp.1} parent=5 // pred_check
        _
      $region10: #{convnext_mlp.1} parent=5 // pred_check_branch
        %167 = sbr.rel (%p164) target = $region12
      $region11: #{convnext_mlp.1} parent=5 // pred_region
        %s168 = ssub.s32 %s18, 1
        // Predicated region
        $region13: #{convnext_mlp.1} parent=11 // pred_check
          %p169 = pneg %p65
        $region14: #{convnext_mlp.1} parent=11 // pred_check_branch
          %171 = sbr.rel (%p169) target = $region16
        $region15: #{convnext_mlp.1} parent=11 // pred_region
          _
        $region16: #{convnext_mlp.1} parent=11 // pred_fallthru
          _
        // Predicated region
        $region17: #{convnext_mlp.1} parent=11 // pred_check
          %p172 = pneg %p86
        $region18: #{convnext_mlp.1} parent=11 // pred_check_branch
          %174 = sbr.rel (%p172) target = $region20
        $region19: #{convnext_mlp.1} parent=11 // pred_region
          _
        $region20: #{convnext_mlp.1} parent=11 // pred_fallthru
          _
        // Predicated region
        $region21: #{convnext_mlp.1} parent=11 // pred_check
          %p175 = pneg %p107
        $region22: #{convnext_mlp.1} parent=11 // pred_check_branch
          %177 = sbr.rel (%p175) target = $region24
        $region23: #{convnext_mlp.1} parent=11 // pred_region
          _
        $region24: #{convnext_mlp.1} parent=11 // pred_fallthru
          _
        // Predicated region
        $region25: #{convnext_mlp.1} parent=11 // pred_check
          %p178 = pneg %p128
        $region26: #{convnext_mlp.1} parent=11 // pred_check_branch
          %180 = sbr.rel (%p178) target = $region28
        $region27: #{convnext_mlp.1} parent=11 // pred_region
          %s182 = ssub.s32 16, 16
          %183 = vsyncadd [#allocation6], %s182
          %s185 = sshll.u32 [#allocation5], 4
          %s186 = int_to_ptr.vmem [resolvable:$true] %s185
          %188 = dma.hbm_to_vmem [thread:$0]  %s4, 16, %s186, [#allocation6]
        $region28: #{convnext_mlp.1} parent=11 // pred_fallthru
          _
      $region12: #{convnext_mlp.1} parent=5 // pred_fallthru
        _
      %p189 = scmp.lt.s32.totalorder %s18, 2
      // Predicated region
      $region29: #{convnext_mlp.1} parent=5 // pred_check
        %p190 = pneg %p189
      $region30: #{convnext_mlp.1} parent=5 // pred_check_branch
        %192 = sbr.rel (%p190) target = $region32
      $region31: #{convnext_mlp.1} parent=5 // pred_region
        // Predicated region
        $region33: #{convnext_mlp.1} parent=31 // pred_check
          %p193 = pneg %p38
        $region34: #{convnext_mlp.1} parent=31 // pred_check_branch
          %195 = sbr.rel (%p193) target = $region36
        $region35: #{convnext_mlp.1} parent=31 // pred_region
          %s196 = sand.u32 %s28, 1
          %s197 = scalar_lea.sflag [#allocation3], %s196
          %s198 = sand.u32 %s28, 1
          %s199 = smul.addr %s198, 1568
          %s200 = scalar_lea.vmem [#allocation2], %s199
          %s201 = smul.u32 196, %s18
          %s203 = ssub.s32 25088, 25088
          %204 = vsyncadd %s197, %s203
          %s205 = smul.addr %s201, 128
          %s206 = scalar_lea.hbm %s0, %s205
          %s207 = sshll.u32 %s200, 4
          %s208 = int_to_ptr.vmem [resolvable:$true] %s207
          %213 = dma.hbm_to_vmem [thread:$0]  %s206, 25088, %s208, %s197, 128, 128, 8
        $region36: #{convnext_mlp.1} parent=31 // pred_fallthru
          _
      $region32: #{convnext_mlp.1} parent=5 // pred_fallthru
        _
      %p214 = scmp.le.s32.totalorder 1, %s18
      %p215 = scmp.lt.s32.totalorder %s18, 3
      %p216 = pnand %p214, %p215
      %p217 = pneg %p216
      // Predicated region
      $region37: #{convnext_mlp.1} parent=5 // pred_check
        _
      $region38: #{convnext_mlp.1} parent=5 // pred_check_branch
        %219 = sbr.rel (%p216) target = $region40
      $region39: #{convnext_mlp.1} parent=5 // pred_region
        %s220 = ssub.s32 %s18, 1
        %s221 = sand.u32 %s31, 1
        %s222 = scalar_lea.sflag [#allocation3], %s221
        %s223 = sand.u32 %s31, 1
        %s224 = smul.addr %s223, 1568
        %s225 = scalar_lea.vmem [#allocation2], %s224
        // Predicated region
        $region41: #{convnext_mlp.1} parent=39 // pred_check
          %p226 = pneg %p44
        $region42: #{convnext_mlp.1} parent=39 // pred_check_branch
          %228 = sbr.rel (%p226) target = $region44
        $region43: #{convnext_mlp.1} parent=39 // pred_region
          %229 = dma.done %s222, 25088
        $region44: #{convnext_mlp.1} parent=39 // pred_fallthru
          _
        // Predicated region
        $region45: #{convnext_mlp.1} parent=39 // pred_check
          %p230 = pneg %p128
        $region46: #{convnext_mlp.1} parent=39 // pred_check_branch
          %232 = sbr.rel (%p230) target = $region48
        $region47: #{convnext_mlp.1} parent=39 // pred_region
          %233 = dma.done [#allocation6], 16
        $region48: #{convnext_mlp.1} parent=39 // pred_fallthru
          _
        %s234 = sand.u32 %s31, 1
        %s235 = scalar_lea.sflag [#allocation3], %s234
        %s236 = sand.u32 %s31, 1
        %s237 = smul.addr %s236, 1568
        %s238 = scalar_lea.vmem [#allocation2], %s237
        %p239 = pneg %p44
        %p240 = pneg %p41
        %p241 = pneg %p65
        %p242 = pneg %p62
        %p243 = pneg %p86
        %p244 = pneg %p83
        %p245 = pneg %p107
        %p246 = pneg %p104
        %p247 = pneg %p128
        %p248 = pneg %p125
        %p249 = pneg %p154
        %p250 = pneg %p151
        %s251 = sand.u32 %s141, 1
        %s252 = scalar_lea.sflag [#allocation4], %s251
        %s253 = sand.u32 %s141, 1
        %s254 = smul.addr %s253, 1568
        %s255 = scalar_lea.vmem [#allocation7], %s254
        %s256 = smul.u32 196, %s23
        %s257 = smul.u32 196, %s23
        %v259 = vld [vmem:[%s225] sm:$0xff]
        %v260 = vld [vmem:[%s225 + $0x8] sm:$0xff]
        %v261 = vld [vmem:[%s225 + $0x10] sm:$0xff]
        %v262 = vld [vmem:[%s225 + $0x18] sm:$0xff]
        %v263 = vld [vmem:[%s225 + $0x20] sm:$0xff]
        %v264 = vld [vmem:[%s225 + $0x28] sm:$0xff]
        %v265 = vld [vmem:[%s225 + $0x30] sm:$0xff]
        %v266 = vld [vmem:[%s225 + $0x38] sm:$0xff]
        %v267 = vld [vmem:[%s225 + $0x40] sm:$0xff]
        %v268 = vld [vmem:[%s225 + $0x48] sm:$0xff]
        %v269 = vld [vmem:[%s225 + $0x50] sm:$0xff]
        %v270 = vld [vmem:[%s225 + $0x58] sm:$0xff]
        %v271 = vld [vmem:[%s225 + $0x60] sm:$0xff]
        %v272 = vld [vmem:[%s225 + $0x68] sm:$0xff]
        %v273 = vld [vmem:[%s225 + $0x70] sm:$0xff]
        %v274 = vld [vmem:[%s225 + $0x78] sm:$0xff]
        %v275 = vld [vmem:[%s225 + $0x80] sm:$0xff]
        %v276 = vld [vmem:[%s225 + $0x88] sm:$0xff]
        %v277 = vld [vmem:[%s225 + $0x90] sm:$0xff]
        %v278 = vld [vmem:[%s225 + $0x98] sm:$0xff]
        %v279 = vld [vmem:[%s225 + $0xa0] sm:$0xff]
        %v280 = vld [vmem:[%s225 + $0xa8] sm:$0xff]
        %v281 = vld [vmem:[%s225 + $0xb0] sm:$0xff]
        %v282 = vld [vmem:[%s225 + $0xb8] sm:$0xff]
        %v283 = vld [vmem:[%s225 + $0xc0] sm:$0xff]
        %v284 = vld [vmem:[%s225 + $0xc8] sm:$0xff]
        %v285 = vld [vmem:[%s225 + $0xd0] sm:$0xff]
        %v286 = vld [vmem:[%s225 + $0xd8] sm:$0xff]
        %v287 = vld [vmem:[%s225 + $0xe0] sm:$0xff]
        %v288 = vld [vmem:[%s225 + $0xe8] sm:$0xff]
        %v289 = vld [vmem:[%s225 + $0xf0] sm:$0xff]
        %v290 = vld [vmem:[%s225 + $0xf8] sm:$0xff]
        %v291 = vld [vmem:[%s225 + $0x100] sm:$0xff]
        %v292 = vld [vmem:[%s225 + $0x108] sm:$0xff]
        %v293 = vld [vmem:[%s225 + $0x110] sm:$0xff]
        %v294 = vld [vmem:[%s225 + $0x118] sm:$0xff]
        %v295 = vld [vmem:[%s225 + $0x120] sm:$0xff]
        %v296 = vld [vmem:[%s225 + $0x128] sm:$0xff]
        %v297 = vld [vmem:[%s225 + $0x130] sm:$0xff]
        %v298 = vld [vmem:[%s225 + $0x138] sm:$0xff]
        %v299 = vld [vmem:[%s225 + $0x140] sm:$0xff]
        %v300 = vld [vmem:[%s225 + $0x148] sm:$0xff]
        %v301 = vld [vmem:[%s225 + $0x150] sm:$0xff]
        %v302 = vld [vmem:[%s225 + $0x158] sm:$0xff]
        %v303 = vld [vmem:[%s225 + $0x160] sm:$0xff]
        %v304 = vld [vmem:[%s225 + $0x168] sm:$0xff]
        %v305 = vld [vmem:[%s225 + $0x170] sm:$0xff]
        %v306 = vld [vmem:[%s225 + $0x178] sm:$0xff]
        %v307 = vld [vmem:[%s225 + $0x180] sm:$0xff]
        %v308 = vld [vmem:[%s225 + $0x188] sm:$0xff]
        %v309 = vld [vmem:[%s225 + $0x190] sm:$0xff]
        %v310 = vld [vmem:[%s225 + $0x198] sm:$0xff]
        %v311 = vld [vmem:[%s225 + $0x1a0] sm:$0xff]
        %v312 = vld [vmem:[%s225 + $0x1a8] sm:$0xff]
        %v313 = vld [vmem:[%s225 + $0x1b0] sm:$0xff]
        %v314 = vld [vmem:[%s225 + $0x1b8] sm:$0xff]
        %v315 = vld [vmem:[%s225 + $0x1c0] sm:$0xff]
        %v316 = vld [vmem:[%s225 + $0x1c8] sm:$0xff]
        %v317 = vld [vmem:[%s225 + $0x1d0] sm:$0xff]
        %v318 = vld [vmem:[%s225 + $0x1d8] sm:$0xff]
        %v319 = vld [vmem:[%s225 + $0x1e0] sm:$0xff]
        %v320 = vld [vmem:[%s225 + $0x1e8] sm:$0xff]
        %v321 = vld [vmem:[%s225 + $0x1f0] sm:$0xff]
        %v322 = vld [vmem:[%s225 + $0x1f8] sm:$0xff]
        %v323 = vld [vmem:[%s225 + $0x200] sm:$0xff]
        %v324 = vld [vmem:[%s225 + $0x208] sm:$0xff]
        %v325 = vld [vmem:[%s225 + $0x210] sm:$0xff]
        %v326 = vld [vmem:[%s225 + $0x218] sm:$0xff]
        %v327 = vld [vmem:[%s225 + $0x220] sm:$0xff]
        %v328 = vld [vmem:[%s225 + $0x228] sm:$0xff]
        %v329 = vld [vmem:[%s225 + $0x230] sm:$0xff]
        %v330 = vld [vmem:[%s225 + $0x238] sm:$0xff]
        %v331 = vld [vmem:[%s225 + $0x240] sm:$0xff]
        %v332 = vld [vmem:[%s225 + $0x248] sm:$0xff]
        %v333 = vld [vmem:[%s225 + $0x250] sm:$0xff]
        %v334 = vld [vmem:[%s225 + $0x258] sm:$0xff]
        %v335 = vld [vmem:[%s225 + $0x260] sm:$0xff]
        %v336 = vld [vmem:[%s225 + $0x268] sm:$0xff]
        %v337 = vld [vmem:[%s225 + $0x270] sm:$0xff]
        %v338 = vld [vmem:[%s225 + $0x278] sm:$0xff]
        %v339 = vld [vmem:[%s225 + $0x280] sm:$0xff]
        %v340 = vld [vmem:[%s225 + $0x288] sm:$0xff]
        %v341 = vld [vmem:[%s225 + $0x290] sm:$0xff]
        %v342 = vld [vmem:[%s225 + $0x298] sm:$0xff]
        %v343 = vld [vmem:[%s225 + $0x2a0] sm:$0xff]
        %v344 = vld [vmem:[%s225 + $0x2a8] sm:$0xff]
        %v345 = vld [vmem:[%s225 + $0x2b0] sm:$0xff]
        %v346 = vld [vmem:[%s225 + $0x2b8] sm:$0xff]
        %v347 = vld [vmem:[%s225 + $0x2c0] sm:$0xff]
        %v348 = vld [vmem:[%s225 + $0x2c8] sm:$0xff]
        %v349 = vld [vmem:[%s225 + $0x2d0] sm:$0xff]
        %v350 = vld [vmem:[%s225 + $0x2d8] sm:$0xff]
        %v351 = vld [vmem:[%s225 + $0x2e0] sm:$0xff]
        %v352 = vld [vmem:[%s225 + $0x2e8] sm:$0xff]
        %v353 = vld [vmem:[%s225 + $0x2f0] sm:$0xff]
        %v354 = vld [vmem:[%s225 + $0x2f8] sm:$0xff]
        %v355 = vld [vmem:[%s225 + $0x300] sm:$0xff]
        %v356 = vld [vmem:[%s225 + $0x308] sm:$0xff]
        %v357 = vld [vmem:[%s225 + $0x310] sm:$0xff]
        %v358 = vld [vmem:[%s225 + $0x318] sm:$0xff]
        %v359 = vld [vmem:[%s225 + $0x320] sm:$0xff]
        %v360 = vld [vmem:[%s225 + $0x328] sm:$0xff]
        %v361 = vld [vmem:[%s225 + $0x330] sm:$0xff]
        %v362 = vld [vmem:[%s225 + $0x338] sm:$0xff]
        %v363 = vld [vmem:[%s225 + $0x340] sm:$0xff]
        %v364 = vld [vmem:[%s225 + $0x348] sm:$0xff]
        %v365 = vld [vmem:[%s225 + $0x350] sm:$0xff]
        %v366 = vld [vmem:[%s225 + $0x358] sm:$0xff]
        %v367 = vld [vmem:[%s225 + $0x360] sm:$0xff]
        %v368 = vld [vmem:[%s225 + $0x368] sm:$0xff]
        %v369 = vld [vmem:[%s225 + $0x370] sm:$0xff]
        %v370 = vld [vmem:[%s225 + $0x378] sm:$0xff]
        %v371 = vld [vmem:[%s225 + $0x380] sm:$0xff]
        %v372 = vld [vmem:[%s225 + $0x388] sm:$0xff]
        %v373 = vld [vmem:[%s225 + $0x390] sm:$0xff]
        %v374 = vld [vmem:[%s225 + $0x398] sm:$0xff]
        %v375 = vld [vmem:[%s225 + $0x3a0] sm:$0xff]
        %v376 = vld [vmem:[%s225 + $0x3a8] sm:$0xff]
        %v377 = vld [vmem:[%s225 + $0x3b0] sm:$0xff]
        %v378 = vld [vmem:[%s225 + $0x3b8] sm:$0xff]
        %v379 = vld [vmem:[%s225 + $0x3c0] sm:$0xff]
        %v380 = vld [vmem:[%s225 + $0x3c8] sm:$0xff]
        %v381 = vld [vmem:[%s225 + $0x3d0] sm:$0xff]
        %v382 = vld [vmem:[%s225 + $0x3d8] sm:$0xff]
        %v383 = vld [vmem:[%s225 + $0x3e0] sm:$0xff]
        %v384 = vld [vmem:[%s225 + $0x3e8] sm:$0xff]
        %v385 = vld [vmem:[%s225 + $0x3f0] sm:$0xff]
        %v386 = vld [vmem:[%s225 + $0x3f8] sm:$0xff]
        %v387 = vld [vmem:[%s225 + $0x400] sm:$0xff]
        %v388 = vld [vmem:[%s225 + $0x408] sm:$0xff]
        %v389 = vld [vmem:[%s225 + $0x410] sm:$0xff]
        %v390 = vld [vmem:[%s225 + $0x418] sm:$0xff]
        %v391 = vld [vmem:[%s225 + $0x420] sm:$0xff]
        %v392 = vld [vmem:[%s225 + $0x428] sm:$0xff]
        %v393 = vld [vmem:[%s225 + $0x430] sm:$0xff]
        %v394 = vld [vmem:[%s225 + $0x438] sm:$0xff]
        %v395 = vld [vmem:[%s225 + $0x440] sm:$0xff]
        %v396 = vld [vmem:[%s225 + $0x448] sm:$0xff]
        %v397 = vld [vmem:[%s225 + $0x450] sm:$0xff]
        %v398 = vld [vmem:[%s225 + $0x458] sm:$0xff]
        %v399 = vld [vmem:[%s225 + $0x460] sm:$0xff]
        %v400 = vld [vmem:[%s225 + $0x468] sm:$0xff]
        %v401 = vld [vmem:[%s225 + $0x470] sm:$0xff]
        %v402 = vld [vmem:[%s225 + $0x478] sm:$0xff]
        %v403 = vld [vmem:[%s225 + $0x480] sm:$0xff]
        %v404 = vld [vmem:[%s225 + $0x488] sm:$0xff]
        %v405 = vld [vmem:[%s225 + $0x490] sm:$0xff]
        %v406 = vld [vmem:[%s225 + $0x498] sm:$0xff]
        %v407 = vld [vmem:[%s225 + $0x4a0] sm:$0xff]
        %v408 = vld [vmem:[%s225 + $0x4a8] sm:$0xff]
        %v409 = vld [vmem:[%s225 + $0x4b0] sm:$0xff]
        %v410 = vld [vmem:[%s225 + $0x4b8] sm:$0xff]
        %v411 = vld [vmem:[%s225 + $0x4c0] sm:$0xff]
        %v412 = vld [vmem:[%s225 + $0x4c8] sm:$0xff]
        %v413 = vld [vmem:[%s225 + $0x4d0] sm:$0xff]
        %v414 = vld [vmem:[%s225 + $0x4d8] sm:$0xff]
        %v415 = vld [vmem:[%s225 + $0x4e0] sm:$0xff]
        %v416 = vld [vmem:[%s225 + $0x4e8] sm:$0xff]
        %v417 = vld [vmem:[%s225 + $0x4f0] sm:$0xff]
        %v418 = vld [vmem:[%s225 + $0x4f8] sm:$0xff]
        %v419 = vld [vmem:[%s225 + $0x500] sm:$0xff]
        %v420 = vld [vmem:[%s225 + $0x508] sm:$0xff]
        %v421 = vld [vmem:[%s225 + $0x510] sm:$0xff]
        %v422 = vld [vmem:[%s225 + $0x518] sm:$0xff]
        %v423 = vld [vmem:[%s225 + $0x520] sm:$0xff]
        %v424 = vld [vmem:[%s225 + $0x528] sm:$0xff]
        %v425 = vld [vmem:[%s225 + $0x530] sm:$0xff]
        %v426 = vld [vmem:[%s225 + $0x538] sm:$0xff]
        %v427 = vld [vmem:[%s225 + $0x540] sm:$0xff]
        %v428 = vld [vmem:[%s225 + $0x548] sm:$0xff]
        %v429 = vld [vmem:[%s225 + $0x550] sm:$0xff]
        %v430 = vld [vmem:[%s225 + $0x558] sm:$0xff]
        %v431 = vld [vmem:[%s225 + $0x560] sm:$0xff]
        %v432 = vld [vmem:[%s225 + $0x568] sm:$0xff]
        %v433 = vld [vmem:[%s225 + $0x570] sm:$0xff]
        %v434 = vld [vmem:[%s225 + $0x578] sm:$0xff]
        %v435 = vld [vmem:[%s225 + $0x580] sm:$0xff]
        %v436 = vld [vmem:[%s225 + $0x588] sm:$0xff]
        %v437 = vld [vmem:[%s225 + $0x590] sm:$0xff]
        %v438 = vld [vmem:[%s225 + $0x598] sm:$0xff]
        %v439 = vld [vmem:[%s225 + $0x5a0] sm:$0xff]
        %v440 = vld [vmem:[%s225 + $0x5a8] sm:$0xff]
        %v441 = vld [vmem:[%s225 + $0x5b0] sm:$0xff]
        %v442 = vld [vmem:[%s225 + $0x5b8] sm:$0xff]
        %v443 = vld [vmem:[%s225 + $0x5c0] sm:$0xff]
        %v444 = vld [vmem:[%s225 + $0x5c8] sm:$0xff]
        %v445 = vld [vmem:[%s225 + $0x5d0] sm:$0xff]
        %v446 = vld [vmem:[%s225 + $0x5d8] sm:$0xff]
        %v447 = vld [vmem:[%s225 + $0x5e0] sm:$0xff]
        %v448 = vld [vmem:[%s225 + $0x5e8] sm:$0xff]
        %v449 = vld [vmem:[%s225 + $0x5f0] sm:$0xff]
        %v450 = vld [vmem:[%s225 + $0x5f8] sm:$0xff]
        %v451 = vld [vmem:[%s225 + $0x600] sm:$0xff]
        %v452 = vld [vmem:[%s225 + $0x608] sm:$0xff]
        %v453 = vld [vmem:[%s225 + $0x610] sm:$0xff]
        %v454 = vld [vmem:[%s225 + $0x618] sm:$0xff]
        %v455 = vpack.c.bf16 %v260, %v259
        %v456 = vpack.c.bf16 %v262, %v261
        %v457 = vpack.c.bf16 %v264, %v263
        %v458 = vpack.c.bf16 %v266, %v265
        %v459 = vpack.c.bf16 %v268, %v267
        %v460 = vpack.c.bf16 %v270, %v269
        %v461 = vpack.c.bf16 %v272, %v271
        %v462 = vpack.c.bf16 %v274, %v273
        %v463 = vpack.c.bf16 %v276, %v275
        %v464 = vpack.c.bf16 %v278, %v277
        %v465 = vpack.c.bf16 %v280, %v279
        %v466 = vpack.c.bf16 %v282, %v281
        %v467 = vpack.c.bf16 %v284, %v283
        %v468 = vpack.c.bf16 %v286, %v285
        %v469 = vpack.c.bf16 %v288, %v287
        %v470 = vpack.c.bf16 %v290, %v289
        %v471 = vpack.c.bf16 %v292, %v291
        %v472 = vpack.c.bf16 %v294, %v293
        %v473 = vpack.c.bf16 %v296, %v295
        %v474 = vpack.c.bf16 %v298, %v297
        %v475 = vpack.c.bf16 %v300, %v299
        %v476 = vpack.c.bf16 %v302, %v301
        %v477 = vpack.c.bf16 %v304, %v303
        %v478 = vpack.c.bf16 %v306, %v305
        %v479 = vpack.c.bf16 %v308, %v307
        %v480 = vpack.c.bf16 %v310, %v309
        %v481 = vpack.c.bf16 %v312, %v311
        %v482 = vpack.c.bf16 %v314, %v313
        %v483 = vpack.c.bf16 %v316, %v315
        %v484 = vpack.c.bf16 %v318, %v317
        %v485 = vpack.c.bf16 %v320, %v319
        %v486 = vpack.c.bf16 %v322, %v321
        %v487 = vpack.c.bf16 %v324, %v323
        %v488 = vpack.c.bf16 %v326, %v325
        %v489 = vpack.c.bf16 %v328, %v327
        %v490 = vpack.c.bf16 %v330, %v329
        %v491 = vpack.c.bf16 %v332, %v331
        %v492 = vpack.c.bf16 %v334, %v333
        %v493 = vpack.c.bf16 %v336, %v335
        %v494 = vpack.c.bf16 %v338, %v337
        %v495 = vpack.c.bf16 %v340, %v339
        %v496 = vpack.c.bf16 %v342, %v341
        %v497 = vpack.c.bf16 %v344, %v343
        %v498 = vpack.c.bf16 %v346, %v345
        %v499 = vpack.c.bf16 %v348, %v347
        %v500 = vpack.c.bf16 %v350, %v349
        %v501 = vpack.c.bf16 %v352, %v351
        %v502 = vpack.c.bf16 %v354, %v353
        %v503 = vpack.c.bf16 %v356, %v355
        %v504 = vpack.c.bf16 %v358, %v357
        %v505 = vpack.c.bf16 %v360, %v359
        %v506 = vpack.c.bf16 %v362, %v361
        %v507 = vpack.c.bf16 %v364, %v363
        %v508 = vpack.c.bf16 %v366, %v365
        %v509 = vpack.c.bf16 %v368, %v367
        %v510 = vpack.c.bf16 %v370, %v369
        %v511 = vpack.c.bf16 %v372, %v371
        %v512 = vpack.c.bf16 %v374, %v373
        %v513 = vpack.c.bf16 %v376, %v375
        %v514 = vpack.c.bf16 %v378, %v377
        %v515 = vpack.c.bf16 %v380, %v379
        %v516 = vpack.c.bf16 %v382, %v381
        %v517 = vpack.c.bf16 %v384, %v383
        %v518 = vpack.c.bf16 %v386, %v385
        %v519 = vpack.c.bf16 %v388, %v387
        %v520 = vpack.c.bf16 %v390, %v389
        %v521 = vpack.c.bf16 %v392, %v391
        %v522 = vpack.c.bf16 %v394, %v393
        %v523 = vpack.c.bf16 %v396, %v395
        %v524 = vpack.c.bf16 %v398, %v397
        %v525 = vpack.c.bf16 %v400, %v399
        %v526 = vpack.c.bf16 %v402, %v401
        %v527 = vpack.c.bf16 %v404, %v403
        %v528 = vpack.c.bf16 %v406, %v405
        %v529 = vpack.c.bf16 %v408, %v407
        %v530 = vpack.c.bf16 %v410, %v409
        %v531 = vpack.c.bf16 %v412, %v411
        %v532 = vpack.c.bf16 %v414, %v413
        %v533 = vpack.c.bf16 %v416, %v415
        %v534 = vpack.c.bf16 %v418, %v417
        %v535 = vpack.c.bf16 %v420, %v419
        %v536 = vpack.c.bf16 %v422, %v421
        %v537 = vpack.c.bf16 %v424, %v423
        %v538 = vpack.c.bf16 %v426, %v425
        %v539 = vpack.c.bf16 %v428, %v427
        %v540 = vpack.c.bf16 %v430, %v429
        %v541 = vpack.c.bf16 %v432, %v431
        %v542 = vpack.c.bf16 %v434, %v433
        %v543 = vpack.c.bf16 %v436, %v435
        %v544 = vpack.c.bf16 %v438, %v437
        %v545 = vpack.c.bf16 %v440, %v439
        %v546 = vpack.c.bf16 %v442, %v441
        %v547 = vpack.c.bf16 %v444, %v443
        %v548 = vpack.c.bf16 %v446, %v445
        %v549 = vpack.c.bf16 %v448, %v447
        %v550 = vpack.c.bf16 %v450, %v449
        %v551 = vpack.c.bf16 %v452, %v451
        %v552 = vpack.c.bf16 %v454, %v453
        %v553 = vld [vmem:[%s1] sm:$0xff]
        %v554 = vld [vmem:[%s1 + $0x8] sm:$0xf]
        %v555 = vld [vmem:[%s1 + $0xc] sm:$0xff]
        %v556 = vld [vmem:[%s1 + $0x14] sm:$0xf]
        %v557 = vld [vmem:[%s1 + $0x18] sm:$0xff]
        %v558 = vld [vmem:[%s1 + $0x20] sm:$0xf]
        %v559 = vld [vmem:[%s1 + $0x24] sm:$0xff]
        %v560 = vld [vmem:[%s1 + $0x2c] sm:$0xf]
        %v561 = vld [vmem:[%s1 + $0x30] sm:$0xff]
        %v562 = vld [vmem:[%s1 + $0x38] sm:$0xf]
        %v563 = vld [vmem:[%s1 + $0x3c] sm:$0xff]
        %v564 = vld [vmem:[%s1 + $0x44] sm:$0xf]
        %v565 = vld [vmem:[%s1 + $0x48] sm:$0xff]
        %v566 = vld [vmem:[%s1 + $0x50] sm:$0xf]
        %v567 = vld [vmem:[%s1 + $0x54] sm:$0xff]
        %v568 = vld [vmem:[%s1 + $0x5c] sm:$0xf]
        %v569 = vld [vmem:[%s1 + $0x60] sm:$0xff]
        %v570 = vld [vmem:[%s1 + $0x68] sm:$0xf]
        %v571 = vld [vmem:[%s1 + $0x6c] sm:$0xff]
        %v572 = vld [vmem:[%s1 + $0x74] sm:$0xf]
        %v573 = vld [vmem:[%s1 + $0x78] sm:$0xff]
        %v574 = vld [vmem:[%s1 + $0x80] sm:$0xf]
        %v575 = vld [vmem:[%s1 + $0x84] sm:$0xff]
        %v576 = vld [vmem:[%s1 + $0x8c] sm:$0xf]
        %v577 = vld [vmem:[%s2] sm:$0x7]
        %v579 = vlaneseq
        %v580 = vshrl.u32 %v579, 7
        %v581 = vsub.s32 0, %v580
        %v582 = vrot.slane %v577, %v581
        %v583 = vlaneseq
        %v584 = vshrl.u32 %v583, 7
        %v585 = vsub.s32 1, %v584
        %v586 = vrot.slane %v577, %v585
        %v587 = vlaneseq
        %v588 = vshrl.u32 %v587, 7
        %v589 = vsub.s32 2, %v588
        %v590 = vrot.slane %v577, %v589
        %v618 = vunpack.c.l.b16 %v553
        %v619 = vunpack.c.h.b16 %v553
        %v620 = vunpack.c.l.b16 %v554
        %v621 = vunpack.c.l.b16 %v555
        %v622 = vunpack.c.h.b16 %v555
        %v623 = vunpack.c.l.b16 %v556
        %v624 = vunpack.c.l.b16 %v557
        %v625 = vunpack.c.h.b16 %v557
        %v626 = vunpack.c.l.b16 %v558
        %v627 = vunpack.c.l.b16 %v559
        %v628 = vunpack.c.h.b16 %v559
        %v629 = vunpack.c.l.b16 %v560
        %v630 = vunpack.c.l.b16 %v561
        %v631 = vunpack.c.h.b16 %v561
        %v632 = vunpack.c.l.b16 %v562
        %v633 = vunpack.c.l.b16 %v563
        %v634 = vunpack.c.h.b16 %v563
        %v635 = vunpack.c.l.b16 %v564
        %v636 = vunpack.c.l.b16 %v565
        %v637 = vunpack.c.h.b16 %v565
        %v638 = vunpack.c.l.b16 %v566
        %v639 = vunpack.c.l.b16 %v567
        %v640 = vunpack.c.h.b16 %v567
        %v641 = vunpack.c.l.b16 %v568
        %v642 = vunpack.c.l.b16 %v569
        %v643 = vunpack.c.h.b16 %v569
        %v644 = vunpack.c.l.b16 %v570
        %v645 = vunpack.c.l.b16 %v571
        %v646 = vunpack.c.h.b16 %v571
        %v647 = vunpack.c.l.b16 %v572
        %v648 = vunpack.c.l.b16 %v573
        %v649 = vunpack.c.h.b16 %v573
        %v650 = vunpack.c.l.b16 %v574
        %v651 = vunpack.c.l.b16 %v575
        %v652 = vunpack.c.h.b16 %v575
        %v653 = vunpack.c.l.b16 %v576
        %v654 = vpack.c.b16 %v621, %v618
        %v655 = vpack.c.b16 %v622, %v619
        %v656 = vpack.c.b16 %v623, %v620
        %v657 = vpack.c.b16 %v627, %v624
        %v658 = vpack.c.b16 %v628, %v625
        %v659 = vpack.c.b16 %v629, %v626
        %v660 = vpack.c.b16 %v633, %v630
        %v661 = vpack.c.b16 %v634, %v631
        %v662 = vpack.c.b16 %v635, %v632
        %v663 = vpack.c.b16 %v639, %v636
        %v664 = vpack.c.b16 %v640, %v637
        %v665 = vpack.c.b16 %v641, %v638
        %v666 = vpack.c.b16 %v645, %v642
        %v667 = vpack.c.b16 %v646, %v643
        %v668 = vpack.c.b16 %v647, %v644
        %v669 = vpack.c.b16 %v651, %v648
        %v670 = vpack.c.b16 %v652, %v649
        %v671 = vpack.c.b16 %v653, %v650
        %vm690 = vcmask 785408
        %v692 = vsel %vm690, %v455, 0
        %v695 = vsel %vm690, %v456, 0
        %v698 = vsel %vm690, %v457, 0
        %v701 = vsel %vm690, %v458, 0
        %v704 = vsel %vm690, %v459, 0
        %v707 = vsel %vm690, %v460, 0
        %v710 = vsel %vm690, %v461, 0
        %v713 = vsel %vm690, %v462, 0
        %v716 = vsel %vm690, %v463, 0
        %v719 = vsel %vm690, %v464, 0
        %v722 = vsel %vm690, %v465, 0
        %v725 = vsel %vm690, %v466, 0
        %v728 = vsel %vm690, %v467, 0
        %v731 = vsel %vm690, %v468, 0
        %v734 = vsel %vm690, %v469, 0
        %v737 = vsel %vm690, %v470, 0
        %v740 = vsel %vm690, %v471, 0
        %v743 = vsel %vm690, %v472, 0
        %v746 = vsel %vm690, %v473, 0
        %v749 = vsel %vm690, %v474, 0
        %v752 = vsel %vm690, %v475, 0
        %v755 = vsel %vm690, %v476, 0
        %v758 = vsel %vm690, %v477, 0
        %v761 = vsel %vm690, %v478, 0
        %v764 = vsel %vm690, %v479, 0
        %v767 = vsel %vm690, %v480, 0
        %v770 = vsel %vm690, %v481, 0
        %v773 = vsel %vm690, %v482, 0
        %v776 = vsel %vm690, %v483, 0
        %v779 = vsel %vm690, %v484, 0
        %v782 = vsel %vm690, %v485, 0
        %v785 = vsel %vm690, %v486, 0
        %v788 = vsel %vm690, %v487, 0
        %v791 = vsel %vm690, %v488, 0
        %v794 = vsel %vm690, %v489, 0
        %v797 = vsel %vm690, %v490, 0
        %v800 = vsel %vm690, %v491, 0
        %v803 = vsel %vm690, %v492, 0
        %v806 = vsel %vm690, %v493, 0
        %v809 = vsel %vm690, %v494, 0
        %v812 = vsel %vm690, %v495, 0
        %v815 = vsel %vm690, %v496, 0
        %v818 = vsel %vm690, %v497, 0
        %v821 = vsel %vm690, %v498, 0
        %v824 = vsel %vm690, %v499, 0
        %v827 = vsel %vm690, %v500, 0
        %v830 = vsel %vm690, %v501, 0
        %v833 = vsel %vm690, %v502, 0
        %v836 = vsel %vm690, %v503, 0
        %v839 = vsel %vm690, %v504, 0
        %v842 = vsel %vm690, %v505, 0
        %v845 = vsel %vm690, %v506, 0
        %v848 = vsel %vm690, %v507, 0
        %v851 = vsel %vm690, %v508, 0
        %v854 = vsel %vm690, %v509, 0
        %v857 = vsel %vm690, %v510, 0
        %v860 = vsel %vm690, %v511, 0
        %v863 = vsel %vm690, %v512, 0
        %v866 = vsel %vm690, %v513, 0
        %v869 = vsel %vm690, %v514, 0
        %v872 = vsel %vm690, %v515, 0
        %v875 = vsel %vm690, %v516, 0
        %v878 = vsel %vm690, %v517, 0
        %v881 = vsel %vm690, %v518, 0
        %v884 = vsel %vm690, %v519, 0
        %v887 = vsel %vm690, %v520, 0
        %v890 = vsel %vm690, %v521, 0
        %v893 = vsel %vm690, %v522, 0
        %v896 = vsel %vm690, %v523, 0
        %v899 = vsel %vm690, %v524, 0
        %v902 = vsel %vm690, %v525, 0
        %v905 = vsel %vm690, %v526, 0
        %v908 = vsel %vm690, %v527, 0
        %v911 = vsel %vm690, %v528, 0
        %v914 = vsel %vm690, %v529, 0
        %v917 = vsel %vm690, %v530, 0
        %v920 = vsel %vm690, %v531, 0
        %v923 = vsel %vm690, %v532, 0
        %v926 = vsel %vm690, %v533, 0
        %v929 = vsel %vm690, %v534, 0
        %v932 = vsel %vm690, %v535, 0
        %v935 = vsel %vm690, %v536, 0
        %v938 = vsel %vm690, %v537, 0
        %v941 = vsel %vm690, %v538, 0
        %v944 = vsel %vm690, %v539, 0
        %v947 = vsel %vm690, %v540, 0
        %v950 = vsel %vm690, %v541, 0
        %v953 = vsel %vm690, %v542, 0
        %v956 = vsel %vm690, %v543, 0
        %v959 = vsel %vm690, %v544, 0
        %v962 = vsel %vm690, %v545, 0
        %v965 = vsel %vm690, %v546, 0
        %v968 = vsel %vm690, %v547, 0
        %v971 = vsel %vm690, %v548, 0
        %v974 = vsel %vm690, %v549, 0
        %v977 = vsel %vm690, %v550, 0
        %v980 = vsel %vm690, %v551, 0
        %v983 = vsel %vm690, %v552, 0
        %985 = vmatprep.subr.bf16.mxu0 %v655
        %986 = vmatpush1.bf16.msra.mxu0 %v654
        %987 = vmatprep.subr.bf16.mxu0 %v658
        %988 = vmatpush1.bf16.msra.mxu0 %v657
        %989 = vmatprep.subr.bf16.mxu0 %v661
        %990 = vmatpush1.bf16.msra.mxu0 %v660
        %991 = vmatprep.subr.bf16.mxu0 %v664
        %992 = vmatpush1.bf16.msra.mxu0 %v663
        %993 = vmatprep.subr.bf16.mxu0 %v667
        %994 = vmatpush1.bf16.msra.mxu0 %v666
        %995 = vmatprep.subr.bf16.mxu0 %v670
        %996 = vmatpush1.bf16.msra.mxu0 %v669
        %997 = vmatprep.subr.bf16.mxu0 0
        %998 = vmatpush1.bf16.msra.mxu0 0
        %999 = vmatprep.subr.bf16.mxu0 0
        %1000 = vmatpush1.bf16.msra.mxu0 0
        %1001 = vmatprep.subr.bf16.mxu0 0
        %1002 = vmatpush1.bf16.msra.mxu0 0
        %1003 = vmatprep.subr.bf16.mxu0 0
        %1004 = vmatpush1.bf16.msra.mxu0 0
        %1005 = vmatprep.subr.bf16.mxu0 0
        %1006 = vmatpush1.bf16.msra.mxu0 0
        %1007 = vmatprep.subr.bf16.mxu0 0
        %1008 = vmatpush1.bf16.msra.mxu0 0
        %1009 = vmatprep.subr.bf16.mxu0 0
        %1010 = vmatpush1.bf16.msra.mxu0 0
        %1011 = vmatprep.subr.bf16.mxu0 0
        %1012 = vmatpush1.bf16.msra.mxu0 0
        %1013 = vmatprep.subr.bf16.mxu0 0
        %1014 = vmatpush1.bf16.msra.mxu0 0
        %1015 = vmatprep.subr.bf16.mxu0 0
        %1016 = vmatpush1.bf16.msra.mxu0 0
        %1017 = vmatprep.mubr.bf16.mxu0 0
        %1018 = vmatmul.mubr.bf16.gmra.mrb[0].mxu0 %v692
        %v1019 = vpop.f32.mrb[0].mxu0
        %v1020 = vadd.f32 %v582, %v1019
        %v1021 = vpop.f32.mrb[0].mxu0
        %v1022 = vadd.f32 %v586, %v1021
        %v1023 = vpop.f32.mrb[0].mxu0
        %v1024 = vadd.f32 %v582, %v1023
        %v1025 = vpop.f32.mrb[0].mxu0
        %v1026 = vadd.f32 %v586, %v1025
        %1027 = vmatprep.mubr.bf16.mxu0 0
        %1028 = vmatmul.mubr.bf16.gmra.mrb[0].mxu0 %v695
        %v1029 = vpop.f32.mrb[0].mxu0
        %v1030 = vadd.f32 %v582, %v1029
        %v1031 = vpop.f32.mrb[0].mxu0
        %v1032 = vadd.f32 %v586, %v1031
        %v1033 = vpop.f32.mrb[0].mxu0
        %v1034 = vadd.f32 %v582, %v1033
        %v1035 = vpop.f32.mrb[0].mxu0
        %v1036 = vadd.f32 %v586, %v1035
        %1037 = vmatprep.mubr.bf16.mxu0 0
        %1038 = vmatmul.mubr.bf16.gmra.mrb[0].mxu0 %v698
        %v1039 = vpop.f32.mrb[0].mxu0
        %v1040 = vadd.f32 %v582, %v1039
        %v1041 = vpop.f32.mrb[0].mxu0
        %v1042 = vadd.f32 %v586, %v1041
        %v1043 = vpop.f32.mrb[0].mxu0
        %v1044 = vadd.f32 %v582, %v1043
        %v1045 = vpop.f32.mrb[0].mxu0
        %v1046 = vadd.f32 %v586, %v1045
        %1047 = vmatprep.mubr.bf16.mxu0 0
        %1048 = vmatmul.mubr.bf16.gmra.mrb[0].mxu0 %v701
        %v1049 = vpop.f32.mrb[0].mxu0
        %v1050 = vadd.f32 %v582, %v1049
        %v1051 = vpop.f32.mrb[0].mxu0
        %v1052 = vadd.f32 %v586, %v1051
        %v1053 = vpop.f32.mrb[0].mxu0
        %v1054 = vadd.f32 %v582, %v1053
        %v1055 = vpop.f32.mrb[0].mxu0
        %v1056 = vadd.f32 %v586, %v1055
        %1057 = vmatprep.mubr.bf16.mxu0 0
        %1058 = vmatmul.mubr.bf16.gmra.mrb[0].mxu0 %v704
        %v1059 = vpop.f32.mrb[0].mxu0
        %v1060 = vadd.f32 %v582, %v1059
        %v1061 = vpop.f32.mrb[0].mxu0
        %v1062 = vadd.f32 %v586, %v1061
        %v1063 = vpop.f32.mrb[0].mxu0
        %v1064 = vadd.f32 %v582, %v1063
        %v1065 = vpop.f32.mrb[0].mxu0
        %v1066 = vadd.f32 %v586, %v1065
        %1067 = vmatprep.mubr.bf16.mxu0 0
        %1068 = vmatmul.mubr.bf16.gmra.mrb[0].mxu0 %v707
        %v1069 = vpop.f32.mrb[0].mxu0
        %v1070 = vadd.f32 %v582, %v1069
        %v1071 = vpop.f32.mrb[0].mxu0
        %v1072 = vadd.f32 %v586, %v1071
        %v1073 = vpop.f32.mrb[0].mxu0
        %v1074 = vadd.f32 %v582, %v1073
        %v1075 = vpop.f32.mrb[0].mxu0
        %v1076 = vadd.f32 %v586, %v1075
        %1077 = vmatprep.mubr.bf16.mxu0 0
        %1078 = vmatmul.mubr.bf16.gmra.mrb[0].mxu0 %v710
        %v1079 = vpop.f32.mrb[0].mxu0
        %v1080 = vadd.f32 %v582, %v1079
        %v1081 = vpop.f32.mrb[0].mxu0
        %v1082 = vadd.f32 %v586, %v1081
        %v1083 = vpop.f32.mrb[0].mxu0
        %v1084 = vadd.f32 %v582, %v1083
        %v1085 = vpop.f32.mrb[0].mxu0
        %v1086 = vadd.f32 %v586, %v1085
        %1087 = vmatprep.mubr.bf16.mxu0 0
        %1088 = vmatmul.mubr.bf16.gmra.mrb[0].mxu0 %v713
        %v1089 = vpop.f32.mrb[0].mxu0
        %v1090 = vadd.f32 %v582, %v1089
        %v1091 = vpop.f32.mrb[0].mxu0
        %v1092 = vadd.f32 %v586, %v1091
        %v1093 = vpop.f32.mrb[0].mxu0
        %v1094 = vadd.f32 %v582, %v1093
        %v1095 = vpop.f32.mrb[0].mxu0
        %v1096 = vadd.f32 %v586, %v1095
        %1097 = vmatprep.mubr.bf16.mxu0 0
        %1098 = vmatmul.mubr.bf16.gmra.mrb[0].mxu0 %v716
        %v1099 = vpop.f32.mrb[0].mxu0
        %v1100 = vadd.f32 %v582, %v1099
        %v1101 = vpop.f32.mrb[0].mxu0
        %v1102 = vadd.f32 %v586, %v1101
        %v1103 = vpop.f32.mrb[0].mxu0
        %v1104 = vadd.f32 %v582, %v1103
        %v1105 = vpop.f32.mrb[0].mxu0
        %v1106 = vadd.f32 %v586, %v1105
        %1107 = vmatprep.mubr.bf16.mxu0 0
        %1108 = vmatmul.mubr.bf16.gmra.mrb[0].mxu0 %v719
        %v1109 = vpop.f32.mrb[0].mxu0
        %v1110 = vadd.f32 %v582, %v1109
        %v1111 = vpop.f32.mrb[0].mxu0
        %v1112 = vadd.f32 %v586, %v1111
        %v1113 = vpop.f32.mrb[0].mxu0
        %v1114 = vadd.f32 %v582, %v1113
        %v1115 = vpop.f32.mrb[0].mxu0
        %v1116 = vadd.f32 %v586, %v1115
        %1117 = vmatprep.mubr.bf16.mxu0 0
        %1118 = vmatmul.mubr.bf16.gmra.mrb[0].mxu0 %v722
        %v1119 = vpop.f32.mrb[0].mxu0
        %v1120 = vadd.f32 %v582, %v1119
        %v1121 = vpop.f32.mrb[0].mxu0
        %v1122 = vadd.f32 %v586, %v1121
        %v1123 = vpop.f32.mrb[0].mxu0
        %v1124 = vadd.f32 %v582, %v1123
        %v1125 = vpop.f32.mrb[0].mxu0
        %v1126 = vadd.f32 %v586, %v1125
        %1127 = vmatprep.mubr.bf16.mxu0 0
        %1128 = vmatmul.mubr.bf16.gmra.mrb[0].mxu0 %v725
        %v1129 = vpop.f32.mrb[0].mxu0
        %v1130 = vadd.f32 %v582, %v1129
        %v1131 = vpop.f32.mrb[0].mxu0
        %v1132 = vadd.f32 %v586, %v1131
        %v1133 = vpop.f32.mrb[0].mxu0
        %v1134 = vadd.f32 %v582, %v1133
        %v1135 = vpop.f32.mrb[0].mxu0
        %v1136 = vadd.f32 %v586, %v1135
        %1137 = vmatprep.mubr.bf16.mxu0 0
        %1138 = vmatmul.mubr.bf16.gmra.mrb[0].mxu0 %v728
        %v1139 = vpop.f32.mrb[0].mxu0
        %v1140 = vadd.f32 %v582, %v1139
        %v1141 = vpop.f32.mrb[0].mxu0
        %v1142 = vadd.f32 %v586, %v1141
        %v1143 = vpop.f32.mrb[0].mxu0
        %v1144 = vadd.f32 %v582, %v1143
        %v1145 = vpop.f32.mrb[0].mxu0
        %v1146 = vadd.f32 %v586, %v1145
        %1147 = vmatprep.mubr.bf16.mxu0 0
        %1148 = vmatmul.mubr.bf16.gmra.mrb[0].mxu0 %v731
        %v1149 = vpop.f32.mrb[0].mxu0
        %v1150 = vadd.f32 %v582, %v1149
        %v1151 = vpop.f32.mrb[0].mxu0
        %v1152 = vadd.f32 %v586, %v1151
        %v1153 = vpop.f32.mrb[0].mxu0
        %v1154 = vadd.f32 %v582, %v1153
        %v1155 = vpop.f32.mrb[0].mxu0
        %v1156 = vadd.f32 %v586, %v1155
        %1157 = vmatprep.mubr.bf16.mxu0 0
        %1158 = vmatmul.mubr.bf16.gmra.mrb[0].mxu0 %v734
        %v1159 = vpop.f32.mrb[0].mxu0
        %v1160 = vadd.f32 %v582, %v1159
        %v1161 = vpop.f32.mrb[0].mxu0
        %v1162 = vadd.f32 %v586, %v1161
        %v1163 = vpop.f32.mrb[0].mxu0
        %v1164 = vadd.f32 %v582, %v1163
        %v1165 = vpop.f32.mrb[0].mxu0
        %v1166 = vadd.f32 %v586, %v1165
        %1167 = vmatprep.mubr.bf16.mxu0 0
        %1168 = vmatmul.mubr.bf16.gmra.mrb[0].mxu0 %v737
        %v1169 = vpop.f32.mrb[0].mxu0
        %v1170 = vadd.f32 %v582, %v1169
        %v1171 = vpop.f32.mrb[0].mxu0
        %v1172 = vadd.f32 %v586, %v1171
        %v1173 = vpop.f32.mrb[0].mxu0
        %v1174 = vadd.f32 %v582, %v1173
        %v1175 = vpop.f32.mrb[0].mxu0
        %v1176 = vadd.f32 %v586, %v1175
        %1177 = vmatprep.mubr.bf16.mxu0 0
        %1178 = vmatmul.mubr.bf16.gmra.mrb[0].mxu0 %v740
        %v1179 = vpop.f32.mrb[0].mxu0
        %v1180 = vadd.f32 %v582, %v1179
        %v1181 = vpop.f32.mrb[0].mxu0
        %v1182 = vadd.f32 %v586, %v1181
        %v1183 = vpop.f32.mrb[0].mxu0
        %v1184 = vadd.f32 %v582, %v1183
        %v1185 = vpop.f32.mrb[0].mxu0
        %v1186 = vadd.f32 %v586, %v1185
        %1187 = vmatprep.mubr.bf16.mxu0 0
        %1188 = vmatmul.mubr.bf16.gmra.mrb[0].mxu0 %v743
        %v1189 = vpop.f32.mrb[0].mxu0
        %v1190 = vadd.f32 %v582, %v1189
        %v1191 = vpop.f32.mrb[0].mxu0
        %v1192 = vadd.f32 %v586, %v1191
        %v1193 = vpop.f32.mrb[0].mxu0
        %v1194 = vadd.f32 %v582, %v1193
        %v1195 = vpop.f32.mrb[0].mxu0
        %v1196 = vadd.f32 %v586, %v1195
        %1197 = vmatprep.mubr.bf16.mxu0 0
        %1198 = vmatmul.mubr.bf16.gmra.mrb[0].mxu0 %v746
        %v1199 = vpop.f32.mrb[0].mxu0
        %v1200 = vadd.f32 %v582, %v1199
        %v1201 = vpop.f32.mrb[0].mxu0
        %v1202 = vadd.f32 %v586, %v1201
        %v1203 = vpop.f32.mrb[0].mxu0
        %v1204 = vadd.f32 %v582, %v1203
        %v1205 = vpop.f32.mrb[0].mxu0
        %v1206 = vadd.f32 %v586, %v1205
        %1207 = vmatprep.mubr.bf16.mxu0 0
        %1208 = vmatmul.mubr.bf16.gmra.mrb[0].mxu0 %v749
        %v1209 = vpop.f32.mrb[0].mxu0
        %v1210 = vadd.f32 %v582, %v1209
        %v1211 = vpop.f32.mrb[0].mxu0
        %v1212 = vadd.f32 %v586, %v1211
        %v1213 = vpop.f32.mrb[0].mxu0
        %v1214 = vadd.f32 %v582, %v1213
        %v1215 = vpop.f32.mrb[0].mxu0
        %v1216 = vadd.f32 %v586, %v1215
        %1217 = vmatprep.mubr.bf16.mxu0 0
        %1218 = vmatmul.mubr.bf16.gmra.mrb[0].mxu0 %v752
        %v1219 = vpop.f32.mrb[0].mxu0
        %v1220 = vadd.f32 %v582, %v1219
        %v1221 = vpop.f32.mrb[0].mxu0
        %v1222 = vadd.f32 %v586, %v1221
        %v1223 = vpop.f32.mrb[0].mxu0
        %v1224 = vadd.f32 %v582, %v1223
        %v1225 = vpop.f32.mrb[0].mxu0
        %v1226 = vadd.f32 %v586, %v1225
        %1227 = vmatprep.mubr.bf16.mxu0 0
        %1228 = vmatmul.mubr.bf16.gmra.mrb[0].mxu0 %v755
        %v1229 = vpop.f32.mrb[0].mxu0
        %v1230 = vadd.f32 %v582, %v1229
        %v1231 = vpop.f32.mrb[0].mxu0
        %v1232 = vadd.f32 %v586, %v1231
        %v1233 = vpop.f32.mrb[0].mxu0
        %v1234 = vadd.f32 %v582, %v1233
        %v1235 = vpop.f32.mrb[0].mxu0
        %v1236 = vadd.f32 %v586, %v1235
        %1237 = vmatprep.mubr.bf16.mxu0 0
        %1238 = vmatmul.mubr.bf16.gmra.mrb[0].mxu0 %v758
        %v1239 = vpop.f32.mrb[0].mxu0
        %v1240 = vadd.f32 %v582, %v1239
        %v1241 = vpop.f32.mrb[0].mxu0
        %v1242 = vadd.f32 %v586, %v1241
        %v1243 = vpop.f32.mrb[0].mxu0
        %v1244 = vadd.f32 %v582, %v1243
        %v1245 = vpop.f32.mrb[0].mxu0
        %v1246 = vadd.f32 %v586, %v1245
        %1247 = vmatprep.mubr.bf16.mxu0 0
        %1248 = vmatmul.mubr.bf16.gmra.mrb[0].mxu0 %v761
        %v1249 = vpop.f32.mrb[0].mxu0
        %v1250 = vadd.f32 %v582, %v1249
        %v1251 = vpop.f32.mrb[0].mxu0
        %v1252 = vadd.f32 %v586, %v1251
        %v1253 = vpop.f32.mrb[0].mxu0
        %v1254 = vadd.f32 %v582, %v1253
        %v1255 = vpop.f32.mrb[0].mxu0
        %v1256 = vadd.f32 %v586, %v1255
        %1257 = vmatprep.mubr.bf16.mxu0 0
        %1258 = vmatmul.mubr.bf16.gmra.mrb[0].mxu0 %v764
        %v1259 = vpop.f32.mrb[0].mxu0
        %v1260 = vadd.f32 %v582, %v1259
        %v1261 = vpop.f32.mrb[0].mxu0
        %v1262 = vadd.f32 %v586, %v1261
        %v1263 = vpop.f32.mrb[0].mxu0
        %v1264 = vadd.f32 %v582, %v1263
        %v1265 = vpop.f32.mrb[0].mxu0
        %v1266 = vadd.f32 %v586, %v1265
        %1267 = vmatprep.mubr.bf16.mxu0 0
        %1268 = vmatmul.mubr.bf16.gmra.mrb[0].mxu0 %v767
        %v1269 = vpop.f32.mrb[0].mxu0
        %v1270 = vadd.f32 %v582, %v1269
        %v1271 = vpop.f32.mrb[0].mxu0
        %v1272 = vadd.f32 %v586, %v1271
        %v1273 = vpop.f32.mrb[0].mxu0
        %v1274 = vadd.f32 %v582, %v1273
        %v1275 = vpop.f32.mrb[0].mxu0
        %v1276 = vadd.f32 %v586, %v1275
        %1277 = vmatprep.mubr.bf16.mxu0 0
        %1278 = vmatmul.mubr.bf16.gmra.mrb[0].mxu0 %v770
        %v1279 = vpop.f32.mrb[0].mxu0
        %v1280 = vadd.f32 %v582, %v1279
        %v1281 = vpop.f32.mrb[0].mxu0
        %v1282 = vadd.f32 %v586, %v1281
        %v1283 = vpop.f32.mrb[0].mxu0
        %v1284 = vadd.f32 %v582, %v1283
        %v1285 = vpop.f32.mrb[0].mxu0
        %v1286 = vadd.f32 %v586, %v1285
        %1287 = vmatprep.mubr.bf16.mxu0 0
        %1288 = vmatmul.mubr.bf16.gmra.mrb[0].mxu0 %v773
        %v1289 = vpop.f32.mrb[0].mxu0
        %v1290 = vadd.f32 %v582, %v1289
        %v1291 = vpop.f32.mrb[0].mxu0
        %v1292 = vadd.f32 %v586, %v1291
        %v1293 = vpop.f32.mrb[0].mxu0
        %v1294 = vadd.f32 %v582, %v1293
        %v1295 = vpop.f32.mrb[0].mxu0
        %v1296 = vadd.f32 %v586, %v1295
        %1297 = vmatprep.mubr.bf16.mxu0 0
        %1298 = vmatmul.mubr.bf16.gmra.mrb[0].mxu0 %v776
        %v1299 = vpop.f32.mrb[0].mxu0
        %v1300 = vadd.f32 %v582, %v1299
        %v1301 = vpop.f32.mrb[0].mxu0
        %v1302 = vadd.f32 %v586, %v1301
        %v1303 = vpop.f32.mrb[0].mxu0
        %v1304 = vadd.f32 %v582, %v1303
        %v1305 = vpop.f32.mrb[0].mxu0
        %v1306 = vadd.f32 %v586, %v1305
        %1307 = vmatprep.mubr.bf16.mxu0 0
        %1308 = vmatmul.mubr.bf16.gmra.mrb[0].mxu0 %v779
        %v1309 = vpop.f32.mrb[0].mxu0
        %v1310 = vadd.f32 %v582, %v1309
        %v1311 = vpop.f32.mrb[0].mxu0
        %v1312 = vadd.f32 %v586, %v1311
        %v1313 = vpop.f32.mrb[0].mxu0
        %v1314 = vadd.f32 %v582, %v1313
        %v1315 = vpop.f32.mrb[0].mxu0
        %v1316 = vadd.f32 %v586, %v1315
        %1317 = vmatprep.mubr.bf16.mxu0 0
        %1318 = vmatmul.mubr.bf16.gmra.mrb[0].mxu0 %v782
        %v1319 = vpop.f32.mrb[0].mxu0
        %v1320 = vadd.f32 %v582, %v1319
        %v1321 = vpop.f32.mrb[0].mxu0
        %v1322 = vadd.f32 %v586, %v1321
        %v1323 = vpop.f32.mrb[0].mxu0
        %v1324 = vadd.f32 %v582, %v1323
        %v1325 = vpop.f32.mrb[0].mxu0
        %v1326 = vadd.f32 %v586, %v1325
        %1327 = vmatprep.mubr.bf16.mxu0 0
        %1328 = vmatmul.mubr.bf16.gmra.mrb[0].mxu0 %v785
        %v1329 = vpop.f32.mrb[0].mxu0
        %v1330 = vadd.f32 %v582, %v1329
        %v1331 = vpop.f32.mrb[0].mxu0
        %v1332 = vadd.f32 %v586, %v1331
        %v1333 = vpop.f32.mrb[0].mxu0
        %v1334 = vadd.f32 %v582, %v1333
        %v1335 = vpop.f32.mrb[0].mxu0
        %v1336 = vadd.f32 %v586, %v1335
        %1337 = vmatprep.mubr.bf16.mxu0 0
        %1338 = vmatmul.mubr.bf16.gmra.mrb[0].mxu0 %v788
        %v1339 = vpop.f32.mrb[0].mxu0
        %v1340 = vadd.f32 %v582, %v1339
        %v1341 = vpop.f32.mrb[0].mxu0
        %v1342 = vadd.f32 %v586, %v1341
        %v1343 = vpop.f32.mrb[0].mxu0
        %v1344 = vadd.f32 %v582, %v1343
        %v1345 = vpop.f32.mrb[0].mxu0
        %v1346 = vadd.f32 %v586, %v1345
        %1347 = vmatprep.mubr.bf16.mxu0 0
        %1348 = vmatmul.mubr.bf16.gmra.mrb[0].mxu0 %v791
        %v1349 = vpop.f32.mrb[0].mxu0
        %v1350 = vadd.f32 %v582, %v1349
        %v1351 = vpop.f32.mrb[0].mxu0
        %v1352 = vadd.f32 %v586, %v1351
        %v1353 = vpop.f32.mrb[0].mxu0
        %v1354 = vadd.f32 %v582, %v1353
        %v1355 = vpop.f32.mrb[0].mxu0
        %v1356 = vadd.f32 %v586, %v1355
        %1357 = vmatprep.mubr.bf16.mxu0 0
        %1358 = vmatmul.mubr.bf16.gmra.mrb[0].mxu0 %v794
        %v1359 = vpop.f32.mrb[0].mxu0
        %v1360 = vadd.f32 %v582, %v1359
        %v1361 = vpop.f32.mrb[0].mxu0
        %v1362 = vadd.f32 %v586, %v1361
        %v1363 = vpop.f32.mrb[0].mxu0
        %v1364 = vadd.f32 %v582, %v1363
        %v1365 = vpop.f32.mrb[0].mxu0
        %v1366 = vadd.f32 %v586, %v1365
        %1367 = vmatprep.mubr.bf16.mxu0 0
        %1368 = vmatmul.mubr.bf16.gmra.mrb[0].mxu0 %v797
        %v1369 = vpop.f32.mrb[0].mxu0
        %v1370 = vadd.f32 %v582, %v1369
        %v1371 = vpop.f32.mrb[0].mxu0
        %v1372 = vadd.f32 %v586, %v1371
        %v1373 = vpop.f32.mrb[0].mxu0
        %v1374 = vadd.f32 %v582, %v1373
        %v1375 = vpop.f32.mrb[0].mxu0
        %v1376 = vadd.f32 %v586, %v1375
        %1377 = vmatprep.mubr.bf16.mxu0 0
        %1378 = vmatmul.mubr.bf16.gmra.mrb[0].mxu0 %v800
        %v1379 = vpop.f32.mrb[0].mxu0
        %v1380 = vadd.f32 %v582, %v1379
        %v1381 = vpop.f32.mrb[0].mxu0
        %v1382 = vadd.f32 %v586, %v1381
        %v1383 = vpop.f32.mrb[0].mxu0
        %v1384 = vadd.f32 %v582, %v1383
        %v1385 = vpop.f32.mrb[0].mxu0
        %v1386 = vadd.f32 %v586, %v1385
        %1387 = vmatprep.mubr.bf16.mxu0 0
        %1388 = vmatmul.mubr.bf16.gmra.mrb[0].mxu0 %v803
        %v1389 = vpop.f32.mrb[0].mxu0
        %v1390 = vadd.f32 %v582, %v1389
        %v1391 = vpop.f32.mrb[0].mxu0
        %v1392 = vadd.f32 %v586, %v1391
        %v1393 = vpop.f32.mrb[0].mxu0
        %v1394 = vadd.f32 %v582, %v1393
        %v1395 = vpop.f32.mrb[0].mxu0
        %v1396 = vadd.f32 %v586, %v1395
        %1397 = vmatprep.mubr.bf16.mxu0 0
        %1398 = vmatmul.mubr.bf16.gmra.mrb[0].mxu0 %v806
        %v1399 = vpop.f32.mrb[0].mxu0
        %v1400 = vadd.f32 %v582, %v1399
        %v1401 = vpop.f32.mrb[0].mxu0
        %v1402 = vadd.f32 %v586, %v1401
        %v1403 = vpop.f32.mrb[0].mxu0
        %v1404 = vadd.f32 %v582, %v1403
        %v1405 = vpop.f32.mrb[0].mxu0
        %v1406 = vadd.f32 %v586, %v1405
        %1407 = vmatprep.mubr.bf16.mxu0 0
        %1408 = vmatmul.mubr.bf16.gmra.mrb[0].mxu0 %v809
        %v1409 = vpop.f32.mrb[0].mxu0
        %v1410 = vadd.f32 %v582, %v1409
        %v1411 = vpop.f32.mrb[0].mxu0
        %v1412 = vadd.f32 %v586, %v1411
        %v1413 = vpop.f32.mrb[0].mxu0
        %v1414 = vadd.f32 %v582, %v1413
        %v1415 = vpop.f32.mrb[0].mxu0
        %v1416 = vadd.f32 %v586, %v1415
        %1417 = vmatprep.mubr.bf16.mxu0 0
        %1418 = vmatmul.mubr.bf16.gmra.mrb[0].mxu0 %v812
        %v1419 = vpop.f32.mrb[0].mxu0
        %v1420 = vadd.f32 %v582, %v1419
        %v1421 = vpop.f32.mrb[0].mxu0
        %v1422 = vadd.f32 %v586, %v1421
        %v1423 = vpop.f32.mrb[0].mxu0
        %v1424 = vadd.f32 %v582, %v1423
        %v1425 = vpop.f32.mrb[0].mxu0
        %v1426 = vadd.f32 %v586, %v1425
        %1427 = vmatprep.mubr.bf16.mxu0 0
        %1428 = vmatmul.mubr.bf16.gmra.mrb[0].mxu0 %v815
        %v1429 = vpop.f32.mrb[0].mxu0
        %v1430 = vadd.f32 %v582, %v1429
        %v1431 = vpop.f32.mrb[0].mxu0
        %v1432 = vadd.f32 %v586, %v1431
        %v1433 = vpop.f32.mrb[0].mxu0
        %v1434 = vadd.f32 %v582, %v1433
        %v1435 = vpop.f32.mrb[0].mxu0
        %v1436 = vadd.f32 %v586, %v1435
        %1437 = vmatprep.mubr.bf16.mxu0 0
        %1438 = vmatmul.mubr.bf16.gmra.mrb[0].mxu0 %v818
        %v1439 = vpop.f32.mrb[0].mxu0
        %v1440 = vadd.f32 %v582, %v1439
        %v1441 = vpop.f32.mrb[0].mxu0
        %v1442 = vadd.f32 %v586, %v1441
        %v1443 = vpop.f32.mrb[0].mxu0
        %v1444 = vadd.f32 %v582, %v1443
        %v1445 = vpop.f32.mrb[0].mxu0
        %v1446 = vadd.f32 %v586, %v1445
        %1447 = vmatprep.mubr.bf16.mxu0 0
        %1448 = vmatmul.mubr.bf16.gmra.mrb[0].mxu0 %v821
        %v1449 = vpop.f32.mrb[0].mxu0
        %v1450 = vadd.f32 %v582, %v1449
        %v1451 = vpop.f32.mrb[0].mxu0
        %v1452 = vadd.f32 %v586, %v1451
        %v1453 = vpop.f32.mrb[0].mxu0
        %v1454 = vadd.f32 %v582, %v1453
        %v1455 = vpop.f32.mrb[0].mxu0
        %v1456 = vadd.f32 %v586, %v1455
        %1457 = vmatprep.mubr.bf16.mxu0 0
        %1458 = vmatmul.mubr.bf16.gmra.mrb[0].mxu0 %v824
        %v1459 = vpop.f32.mrb[0].mxu0
        %v1460 = vadd.f32 %v582, %v1459
        %v1461 = vpop.f32.mrb[0].mxu0
        %v1462 = vadd.f32 %v586, %v1461
        %v1463 = vpop.f32.mrb[0].mxu0
        %v1464 = vadd.f32 %v582, %v1463
        %v1465 = vpop.f32.mrb[0].mxu0
        %v1466 = vadd.f32 %v586, %v1465
        %1467 = vmatprep.mubr.bf16.mxu0 0
        %1468 = vmatmul.mubr.bf16.gmra.mrb[0].mxu0 %v827
        %v1469 = vpop.f32.mrb[0].mxu0
        %v1470 = vadd.f32 %v582, %v1469
        %v1471 = vpop.f32.mrb[0].mxu0
        %v1472 = vadd.f32 %v586, %v1471
        %v1473 = vpop.f32.mrb[0].mxu0
        %v1474 = vadd.f32 %v582, %v1473
        %v1475 = vpop.f32.mrb[0].mxu0
        %v1476 = vadd.f32 %v586, %v1475
        %1477 = vmatprep.mubr.bf16.mxu0 0
        %1478 = vmatmul.mubr.bf16.gmra.mrb[0].mxu0 %v830
        %v1479 = vpop.f32.mrb[0].mxu0
        %v1480 = vadd.f32 %v582, %v1479
        %v1481 = vpop.f32.mrb[0].mxu0
        %v1482 = vadd.f32 %v586, %v1481
        %v1483 = vpop.f32.mrb[0].mxu0
        %v1484 = vadd.f32 %v582, %v1483
        %v1485 = vpop.f32.mrb[0].mxu0
        %v1486 = vadd.f32 %v586, %v1485
        %1487 = vmatprep.mubr.bf16.mxu0 0
        %1488 = vmatmul.mubr.bf16.gmra.mrb[0].mxu0 %v833
        %v1489 = vpop.f32.mrb[0].mxu0
        %v1490 = vadd.f32 %v582, %v1489
        %v1491 = vpop.f32.mrb[0].mxu0
        %v1492 = vadd.f32 %v586, %v1491
        %v1493 = vpop.f32.mrb[0].mxu0
        %v1494 = vadd.f32 %v582, %v1493
        %v1495 = vpop.f32.mrb[0].mxu0
        %v1496 = vadd.f32 %v586, %v1495
        %1497 = vmatprep.mubr.bf16.mxu0 0
        %1498 = vmatmul.mubr.bf16.gmra.mrb[0].mxu0 %v836
        %v1499 = vpop.f32.mrb[0].mxu0
        %v1500 = vadd.f32 %v582, %v1499
        %v1501 = vpop.f32.mrb[0].mxu0
        %v1502 = vadd.f32 %v586, %v1501
        %v1503 = vpop.f32.mrb[0].mxu0
        %v1504 = vadd.f32 %v582, %v1503
        %v1505 = vpop.f32.mrb[0].mxu0
        %v1506 = vadd.f32 %v586, %v1505
        %1507 = vmatprep.mubr.bf16.mxu0 0
        %1508 = vmatmul.mubr.bf16.gmra.mrb[0].mxu0 %v839
        %v1509 = vpop.f32.mrb[0].mxu0
        %v1510 = vadd.f32 %v582, %v1509
        %v1511 = vpop.f32.mrb[0].mxu0
        %v1512 = vadd.f32 %v586, %v1511
        %v1513 = vpop.f32.mrb[0].mxu0
        %v1514 = vadd.f32 %v582, %v1513
        %v1515 = vpop.f32.mrb[0].mxu0
        %v1516 = vadd.f32 %v586, %v1515
        %1517 = vmatprep.mubr.bf16.mxu0 0
        %1518 = vmatmul.mubr.bf16.gmra.mrb[0].mxu0 %v842
        %v1519 = vpop.f32.mrb[0].mxu0
        %v1520 = vadd.f32 %v582, %v1519
        %v1521 = vpop.f32.mrb[0].mxu0
        %v1522 = vadd.f32 %v586, %v1521
        %v1523 = vpop.f32.mrb[0].mxu0
        %v1524 = vadd.f32 %v582, %v1523
        %v1525 = vpop.f32.mrb[0].mxu0
        %v1526 = vadd.f32 %v586, %v1525
        %1527 = vmatprep.mubr.bf16.mxu0 0
        %1528 = vmatmul.mubr.bf16.gmra.mrb[0].mxu0 %v845
        %v1529 = vpop.f32.mrb[0].mxu0
        %v1530 = vadd.f32 %v582, %v1529
        %v1531 = vpop.f32.mrb[0].mxu0
        %v1532 = vadd.f32 %v586, %v1531
        %v1533 = vpop.f32.mrb[0].mxu0
        %v1534 = vadd.f32 %v582, %v1533
        %v1535 = vpop.f32.mrb[0].mxu0
        %v1536 = vadd.f32 %v586, %v1535
        %1537 = vmatprep.mubr.bf16.mxu0 0
        %1538 = vmatmul.mubr.bf16.gmra.mrb[0].mxu0 %v848
        %v1539 = vpop.f32.mrb[0].mxu0
        %v1540 = vadd.f32 %v582, %v1539
        %v1541 = vpop.f32.mrb[0].mxu0
        %v1542 = vadd.f32 %v586, %v1541
        %v1543 = vpop.f32.mrb[0].mxu0
        %v1544 = vadd.f32 %v582, %v1543
        %v1545 = vpop.f32.mrb[0].mxu0
        %v1546 = vadd.f32 %v586, %v1545
        %1547 = vmatprep.mubr.bf16.mxu0 0
        %1548 = vmatmul.mubr.bf16.gmra.mrb[0].mxu0 %v851
        %v1549 = vpop.f32.mrb[0].mxu0
        %v1550 = vadd.f32 %v582, %v1549
        %v1551 = vpop.f32.mrb[0].mxu0
        %v1552 = vadd.f32 %v586, %v1551
        %v1553 = vpop.f32.mrb[0].mxu0
        %v1554 = vadd.f32 %v582, %v1553
        %v1555 = vpop.f32.mrb[0].mxu0
        %v1556 = vadd.f32 %v586, %v1555
        %1557 = vmatprep.mubr.bf16.mxu0 0
        %1558 = vmatmul.mubr.bf16.gmra.mrb[0].mxu0 %v854
        %v1559 = vpop.f32.mrb[0].mxu0
        %v1560 = vadd.f32 %v582, %v1559
        %v1561 = vpop.f32.mrb[0].mxu0
        %v1562 = vadd.f32 %v586, %v1561
        %v1563 = vpop.f32.mrb[0].mxu0
        %v1564 = vadd.f32 %v582, %v1563
        %v1565 = vpop.f32.mrb[0].mxu0
        %v1566 = vadd.f32 %v586, %v1565
        %1567 = vmatprep.mubr.bf16.mxu0 0
        %1568 = vmatmul.mubr.bf16.gmra.mrb[0].mxu0 %v857
        %v1569 = vpop.f32.mrb[0].mxu0
        %v1570 = vadd.f32 %v582, %v1569
        %v1571 = vpop.f32.mrb[0].mxu0
        %v1572 = vadd.f32 %v586, %v1571
        %v1573 = vpop.f32.mrb[0].mxu0
        %v1574 = vadd.f32 %v582, %v1573
        %v1575 = vpop.f32.mrb[0].mxu0
        %v1576 = vadd.f32 %v586, %v1575
        %1577 = vmatprep.mubr.bf16.mxu0 0
        %1578 = vmatmul.mubr.bf16.gmra.mrb[0].mxu0 %v860
        %v1579 = vpop.f32.mrb[0].mxu0
        %v1580 = vadd.f32 %v582, %v1579
        %v1581 = vpop.f32.mrb[0].mxu0
        %v1582 = vadd.f32 %v586, %v1581
        %v1583 = vpop.f32.mrb[0].mxu0
        %v1584 = vadd.f32 %v582, %v1583
        %v1585 = vpop.f32.mrb[0].mxu0
        %v1586 = vadd.f32 %v586, %v1585
        %1587 = vmatprep.mubr.bf16.mxu0 0
        %1588 = vmatmul.mubr.bf16.gmra.mrb[0].mxu0 %v863
        %v1589 = vpop.f32.mrb[0].mxu0
        %v1590 = vadd.f32 %v582, %v1589
        %v1591 = vpop.f32.mrb[0].mxu0
        %v1592 = vadd.f32 %v586, %v1591
        %v1593 = vpop.f32.mrb[0].mxu0
        %v1594 = vadd.f32 %v582, %v1593
        %v1595 = vpop.f32.mrb[0].mxu0
        %v1596 = vadd.f32 %v586, %v1595
        %1597 = vmatprep.mubr.bf16.mxu0 0
        %1598 = vmatmul.mubr.bf16.gmra.mrb[0].mxu0 %v866
        %v1599 = vpop.f32.mrb[0].mxu0
        %v1600 = vadd.f32 %v582, %v1599
        %v1601 = vpop.f32.mrb[0].mxu0
        %v1602 = vadd.f32 %v586, %v1601
        %v1603 = vpop.f32.mrb[0].mxu0
        %v1604 = vadd.f32 %v582, %v1603
        %v1605 = vpop.f32.mrb[0].mxu0
        %v1606 = vadd.f32 %v586, %v1605
        %1607 = vmatprep.mubr.bf16.mxu0 0
        %1608 = vmatmul.mubr.bf16.gmra.mrb[0].mxu0 %v869
        %v1609 = vpop.f32.mrb[0].mxu0
        %v1610 = vadd.f32 %v582, %v1609
        %v1611 = vpop.f32.mrb[0].mxu0
        %v1612 = vadd.f32 %v586, %v1611
        %v1613 = vpop.f32.mrb[0].mxu0
        %v1614 = vadd.f32 %v582, %v1613
        %v1615 = vpop.f32.mrb[0].mxu0
        %v1616 = vadd.f32 %v586, %v1615
        %1617 = vmatprep.mubr.bf16.mxu0 0
        %1618 = vmatmul.mubr.bf16.gmra.mrb[0].mxu0 %v872
        %v1619 = vpop.f32.mrb[0].mxu0
        %v1620 = vadd.f32 %v582, %v1619
        %v1621 = vpop.f32.mrb[0].mxu0
        %v1622 = vadd.f32 %v586, %v1621
        %v1623 = vpop.f32.mrb[0].mxu0
        %v1624 = vadd.f32 %v582, %v1623
        %v1625 = vpop.f32.mrb[0].mxu0
        %v1626 = vadd.f32 %v586, %v1625
        %1627 = vmatprep.mubr.bf16.mxu0 0
        %1628 = vmatmul.mubr.bf16.gmra.mrb[0].mxu0 %v875
        %v1629 = vpop.f32.mrb[0].mxu0
        %v1630 = vadd.f32 %v582, %v1629
        %v1631 = vpop.f32.mrb[0].mxu0
        %v1632 = vadd.f32 %v586, %v1631
        %v1633 = vpop.f32.mrb[0].mxu0
        %v1634 = vadd.f32 %v582, %v1633
        %v1635 = vpop.f32.mrb[0].mxu0
        %v1636 = vadd.f32 %v586, %v1635
        %1637 = vmatprep.mubr.bf16.mxu0 0
        %1638 = vmatmul.mubr.bf16.gmra.mrb[0].mxu0 %v878
        %v1639 = vpop.f32.mrb[0].mxu0
        %v1640 = vadd.f32 %v582, %v1639
        %v1641 = vpop.f32.mrb[0].mxu0
        %v1642 = vadd.f32 %v586, %v1641
        %v1643 = vpop.f32.mrb[0].mxu0
        %v1644 = vadd.f32 %v582, %v1643
        %v1645 = vpop.f32.mrb[0].mxu0
        %v1646 = vadd.f32 %v586, %v1645
        %1647 = vmatprep.mubr.bf16.mxu0 0
        %1648 = vmatmul.mubr.bf16.gmra.mrb[0].mxu0 %v881
        %v1649 = vpop.f32.mrb[0].mxu0
        %v1650 = vadd.f32 %v582, %v1649
        %v1651 = vpop.f32.mrb[0].mxu0
        %v1652 = vadd.f32 %v586, %v1651
        %v1653 = vpop.f32.mrb[0].mxu0
        %v1654 = vadd.f32 %v582, %v1653
        %v1655 = vpop.f32.mrb[0].mxu0
        %v1656 = vadd.f32 %v586, %v1655
        %1657 = vmatprep.mubr.bf16.mxu0 0
        %1658 = vmatmul.mubr.bf16.gmra.mrb[0].mxu0 %v884
        %v1659 = vpop.f32.mrb[0].mxu0
        %v1660 = vadd.f32 %v582, %v1659
        %v1661 = vpop.f32.mrb[0].mxu0
        %v1662 = vadd.f32 %v586, %v1661
        %v1663 = vpop.f32.mrb[0].mxu0
        %v1664 = vadd.f32 %v582, %v1663
        %v1665 = vpop.f32.mrb[0].mxu0
        %v1666 = vadd.f32 %v586, %v1665
        %1667 = vmatprep.mubr.bf16.mxu0 0
        %1668 = vmatmul.mubr.bf16.gmra.mrb[0].mxu0 %v887
        %v1669 = vpop.f32.mrb[0].mxu0
        %v1670 = vadd.f32 %v582, %v1669
        %v1671 = vpop.f32.mrb[0].mxu0
        %v1672 = vadd.f32 %v586, %v1671
        %v1673 = vpop.f32.mrb[0].mxu0
        %v1674 = vadd.f32 %v582, %v1673
        %v1675 = vpop.f32.mrb[0].mxu0
        %v1676 = vadd.f32 %v586, %v1675
        %1677 = vmatprep.mubr.bf16.mxu0 0
        %1678 = vmatmul.mubr.bf16.gmra.mrb[0].mxu0 %v890
        %v1679 = vpop.f32.mrb[0].mxu0
        %v1680 = vadd.f32 %v582, %v1679
        %v1681 = vpop.f32.mrb[0].mxu0
        %v1682 = vadd.f32 %v586, %v1681
        %v1683 = vpop.f32.mrb[0].mxu0
        %v1684 = vadd.f32 %v582, %v1683
        %v1685 = vpop.f32.mrb[0].mxu0
        %v1686 = vadd.f32 %v586, %v1685
        %1687 = vmatprep.mubr.bf16.mxu0 0
        %1688 = vmatmul.mubr.bf16.gmra.mrb[0].mxu0 %v893
        %v1689 = vpop.f32.mrb[0].mxu0
        %v1690 = vadd.f32 %v582, %v1689
        %v1691 = vpop.f32.mrb[0].mxu0
        %v1692 = vadd.f32 %v586, %v1691
        %v1693 = vpop.f32.mrb[0].mxu0
        %v1694 = vadd.f32 %v582, %v1693
        %v1695 = vpop.f32.mrb[0].mxu0
        %v1696 = vadd.f32 %v586, %v1695
        %1697 = vmatprep.mubr.bf16.mxu0 0
        %1698 = vmatmul.mubr.bf16.gmra.mrb[0].mxu0 %v896
        %v1699 = vpop.f32.mrb[0].mxu0
        %v1700 = vadd.f32 %v582, %v1699
        %v1701 = vpop.f32.mrb[0].mxu0
        %v1702 = vadd.f32 %v586, %v1701
        %v1703 = vpop.f32.mrb[0].mxu0
        %v1704 = vadd.f32 %v582, %v1703
        %v1705 = vpop.f32.mrb[0].mxu0
        %v1706 = vadd.f32 %v586, %v1705
        %1707 = vmatprep.mubr.bf16.mxu0 0
        %1708 = vmatmul.mubr.bf16.gmra.mrb[0].mxu0 %v899
        %v1709 = vpop.f32.mrb[0].mxu0
        %v1710 = vadd.f32 %v582, %v1709
        %v1711 = vpop.f32.mrb[0].mxu0
        %v1712 = vadd.f32 %v586, %v1711
        %v1713 = vpop.f32.mrb[0].mxu0
        %v1714 = vadd.f32 %v582, %v1713
        %v1715 = vpop.f32.mrb[0].mxu0
        %v1716 = vadd.f32 %v586, %v1715
        %1717 = vmatprep.mubr.bf16.mxu0 0
        %1718 = vmatmul.mubr.bf16.gmra.mrb[0].mxu0 %v902
        %v1719 = vpop.f32.mrb[0].mxu0
        %v1720 = vadd.f32 %v582, %v1719
        %v1721 = vpop.f32.mrb[0].mxu0
        %v1722 = vadd.f32 %v586, %v1721
        %v1723 = vpop.f32.mrb[0].mxu0
        %v1724 = vadd.f32 %v582, %v1723
        %v1725 = vpop.f32.mrb[0].mxu0
        %v1726 = vadd.f32 %v586, %v1725
        %1727 = vmatprep.mubr.bf16.mxu0 0
        %1728 = vmatmul.mubr.bf16.gmra.mrb[0].mxu0 %v905
        %v1729 = vpop.f32.mrb[0].mxu0
        %v1730 = vadd.f32 %v582, %v1729
        %v1731 = vpop.f32.mrb[0].mxu0
        %v1732 = vadd.f32 %v586, %v1731
        %v1733 = vpop.f32.mrb[0].mxu0
        %v1734 = vadd.f32 %v582, %v1733
        %v1735 = vpop.f32.mrb[0].mxu0
        %v1736 = vadd.f32 %v586, %v1735
        %1737 = vmatprep.mubr.bf16.mxu0 0
        %1738 = vmatmul.mubr.bf16.gmra.mrb[0].mxu0 %v908
        %v1739 = vpop.f32.mrb[0].mxu0
        %v1740 = vadd.f32 %v582, %v1739
        %v1741 = vpop.f32.mrb[0].mxu0
        %v1742 = vadd.f32 %v586, %v1741
        %v1743 = vpop.f32.mrb[0].mxu0
        %v1744 = vadd.f32 %v582, %v1743
        %v1745 = vpop.f32.mrb[0].mxu0
        %v1746 = vadd.f32 %v586, %v1745
        %1747 = vmatprep.mubr.bf16.mxu0 0
        %1748 = vmatmul.mubr.bf16.gmra.mrb[0].mxu0 %v911
        %v1749 = vpop.f32.mrb[0].mxu0
        %v1750 = vadd.f32 %v582, %v1749
        %v1751 = vpop.f32.mrb[0].mxu0
        %v1752 = vadd.f32 %v586, %v1751
        %v1753 = vpop.f32.mrb[0].mxu0
        %v1754 = vadd.f32 %v582, %v1753
        %v1755 = vpop.f32.mrb[0].mxu0
        %v1756 = vadd.f32 %v586, %v1755
        %1757 = vmatprep.mubr.bf16.mxu0 0
        %1758 = vmatmul.mubr.bf16.gmra.mrb[0].mxu0 %v914
        %v1759 = vpop.f32.mrb[0].mxu0
        %v1760 = vadd.f32 %v582, %v1759
        %v1761 = vpop.f32.mrb[0].mxu0
        %v1762 = vadd.f32 %v586, %v1761
        %v1763 = vpop.f32.mrb[0].mxu0
        %v1764 = vadd.f32 %v582, %v1763
        %v1765 = vpop.f32.mrb[0].mxu0
        %v1766 = vadd.f32 %v586, %v1765
        %1767 = vmatprep.mubr.bf16.mxu0 0
        %1768 = vmatmul.mubr.bf16.gmra.mrb[0].mxu0 %v917
        %v1769 = vpop.f32.mrb[0].mxu0
        %v1770 = vadd.f32 %v582, %v1769
        %v1771 = vpop.f32.mrb[0].mxu0
        %v1772 = vadd.f32 %v586, %v1771
        %v1773 = vpop.f32.mrb[0].mxu0
        %v1774 = vadd.f32 %v582, %v1773
        %v1775 = vpop.f32.mrb[0].mxu0
        %v1776 = vadd.f32 %v586, %v1775
        %1777 = vmatprep.mubr.bf16.mxu0 0
        %1778 = vmatmul.mubr.bf16.gmra.mrb[0].mxu0 %v920
        %v1779 = vpop.f32.mrb[0].mxu0
        %v1780 = vadd.f32 %v582, %v1779
        %v1781 = vpop.f32.mrb[0].mxu0
        %v1782 = vadd.f32 %v586, %v1781
        %v1783 = vpop.f32.mrb[0].mxu0
        %v1784 = vadd.f32 %v582, %v1783
        %v1785 = vpop.f32.mrb[0].mxu0
        %v1786 = vadd.f32 %v586, %v1785
        %1787 = vmatprep.mubr.bf16.mxu0 0
        %1788 = vmatmul.mubr.bf16.gmra.mrb[0].mxu0 %v923
        %v1789 = vpop.f32.mrb[0].mxu0
        %v1790 = vadd.f32 %v582, %v1789
        %v1791 = vpop.f32.mrb[0].mxu0
        %v1792 = vadd.f32 %v586, %v1791
        %v1793 = vpop.f32.mrb[0].mxu0
        %v1794 = vadd.f32 %v582, %v1793
        %v1795 = vpop.f32.mrb[0].mxu0
        %v1796 = vadd.f32 %v586, %v1795
        %1797 = vmatprep.mubr.bf16.mxu0 0
        %1798 = vmatmul.mubr.bf16.gmra.mrb[0].mxu0 %v926
        %v1799 = vpop.f32.mrb[0].mxu0
        %v1800 = vadd.f32 %v582, %v1799
        %v1801 = vpop.f32.mrb[0].mxu0
        %v1802 = vadd.f32 %v586, %v1801
        %v1803 = vpop.f32.mrb[0].mxu0
        %v1804 = vadd.f32 %v582, %v1803
        %v1805 = vpop.f32.mrb[0].mxu0
        %v1806 = vadd.f32 %v586, %v1805
        %1807 = vmatprep.mubr.bf16.mxu0 0
        %1808 = vmatmul.mubr.bf16.gmra.mrb[0].mxu0 %v929
        %v1809 = vpop.f32.mrb[0].mxu0
        %v1810 = vadd.f32 %v582, %v1809
        %v1811 = vpop.f32.mrb[0].mxu0
        %v1812 = vadd.f32 %v586, %v1811
        %v1813 = vpop.f32.mrb[0].mxu0
        %v1814 = vadd.f32 %v582, %v1813
        %v1815 = vpop.f32.mrb[0].mxu0
        %v1816 = vadd.f32 %v586, %v1815
        %1817 = vmatprep.mubr.bf16.mxu0 0
        %1818 = vmatmul.mubr.bf16.gmra.mrb[0].mxu0 %v932
        %v1819 = vpop.f32.mrb[0].mxu0
        %v1820 = vadd.f32 %v582, %v1819
        %v1821 = vpop.f32.mrb[0].mxu0
        %v1822 = vadd.f32 %v586, %v1821
        %v1823 = vpop.f32.mrb[0].mxu0
        %v1824 = vadd.f32 %v582, %v1823
        %v1825 = vpop.f32.mrb[0].mxu0
        %v1826 = vadd.f32 %v586, %v1825
        %1827 = vmatprep.mubr.bf16.mxu0 0
        %1828 = vmatmul.mubr.bf16.gmra.mrb[0].mxu0 %v935
        %v1829 = vpop.f32.mrb[0].mxu0
        %v1830 = vadd.f32 %v582, %v1829
        %v1831 = vpop.f32.mrb[0].mxu0
        %v1832 = vadd.f32 %v586, %v1831
        %v1833 = vpop.f32.mrb[0].mxu0
        %v1834 = vadd.f32 %v582, %v1833
        %v1835 = vpop.f32.mrb[0].mxu0
        %v1836 = vadd.f32 %v586, %v1835
        %1837 = vmatprep.mubr.bf16.mxu0 0
        %1838 = vmatmul.mubr.bf16.gmra.mrb[0].mxu0 %v938
        %v1839 = vpop.f32.mrb[0].mxu0
        %v1840 = vadd.f32 %v582, %v1839
        %v1841 = vpop.f32.mrb[0].mxu0
        %v1842 = vadd.f32 %v586, %v1841
        %v1843 = vpop.f32.mrb[0].mxu0
        %v1844 = vadd.f32 %v582, %v1843
        %v1845 = vpop.f32.mrb[0].mxu0
        %v1846 = vadd.f32 %v586, %v1845
        %1847 = vmatprep.mubr.bf16.mxu0 0
        %1848 = vmatmul.mubr.bf16.gmra.mrb[0].mxu0 %v941
        %v1849 = vpop.f32.mrb[0].mxu0
        %v1850 = vadd.f32 %v582, %v1849
        %v1851 = vpop.f32.mrb[0].mxu0
        %v1852 = vadd.f32 %v586, %v1851
        %v1853 = vpop.f32.mrb[0].mxu0
        %v1854 = vadd.f32 %v582, %v1853
        %v1855 = vpop.f32.mrb[0].mxu0
        %v1856 = vadd.f32 %v586, %v1855
        %1857 = vmatprep.mubr.bf16.mxu0 0
        %1858 = vmatmul.mubr.bf16.gmra.mrb[0].mxu0 %v944
        %v1859 = vpop.f32.mrb[0].mxu0
        %v1860 = vadd.f32 %v582, %v1859
        %v1861 = vpop.f32.mrb[0].mxu0
        %v1862 = vadd.f32 %v586, %v1861
        %v1863 = vpop.f32.mrb[0].mxu0
        %v1864 = vadd.f32 %v582, %v1863
        %v1865 = vpop.f32.mrb[0].mxu0
        %v1866 = vadd.f32 %v586, %v1865
        %1867 = vmatprep.mubr.bf16.mxu0 0
        %1868 = vmatmul.mubr.bf16.gmra.mrb[0].mxu0 %v947
        %v1869 = vpop.f32.mrb[0].mxu0
        %v1870 = vadd.f32 %v582, %v1869
        %v1871 = vpop.f32.mrb[0].mxu0
        %v1872 = vadd.f32 %v586, %v1871
        %v1873 = vpop.f32.mrb[0].mxu0
        %v1874 = vadd.f32 %v582, %v1873
        %v1875 = vpop.f32.mrb[0].mxu0
        %v1876 = vadd.f32 %v586, %v1875
        %1877 = vmatprep.mubr.bf16.mxu0 0
        %1878 = vmatmul.mubr.bf16.gmra.mrb[0].mxu0 %v950
        %v1879 = vpop.f32.mrb[0].mxu0
        %v1880 = vadd.f32 %v582, %v1879
        %v1881 = vpop.f32.mrb[0].mxu0
        %v1882 = vadd.f32 %v586, %v1881
        %v1883 = vpop.f32.mrb[0].mxu0
        %v1884 = vadd.f32 %v582, %v1883
        %v1885 = vpop.f32.mrb[0].mxu0
        %v1886 = vadd.f32 %v586, %v1885
        %1887 = vmatprep.mubr.bf16.mxu0 0
        %1888 = vmatmul.mubr.bf16.gmra.mrb[0].mxu0 %v953
        %v1889 = vpop.f32.mrb[0].mxu0
        %v1890 = vadd.f32 %v582, %v1889
        %v1891 = vpop.f32.mrb[0].mxu0
        %v1892 = vadd.f32 %v586, %v1891
        %v1893 = vpop.f32.mrb[0].mxu0
        %v1894 = vadd.f32 %v582, %v1893
        %v1895 = vpop.f32.mrb[0].mxu0
        %v1896 = vadd.f32 %v586, %v1895
        %1897 = vmatprep.mubr.bf16.mxu0 0
        %1898 = vmatmul.mubr.bf16.gmra.mrb[0].mxu0 %v956
        %v1899 = vpop.f32.mrb[0].mxu0
        %v1900 = vadd.f32 %v582, %v1899
        %v1901 = vpop.f32.mrb[0].mxu0
        %v1902 = vadd.f32 %v586, %v1901
        %v1903 = vpop.f32.mrb[0].mxu0
        %v1904 = vadd.f32 %v582, %v1903
        %v1905 = vpop.f32.mrb[0].mxu0
        %v1906 = vadd.f32 %v586, %v1905
        %1907 = vmatprep.mubr.bf16.mxu0 0
        %1908 = vmatmul.mubr.bf16.gmra.mrb[0].mxu0 %v959
        %v1909 = vpop.f32.mrb[0].mxu0
        %v1910 = vadd.f32 %v582, %v1909
        %v1911 = vpop.f32.mrb[0].mxu0
        %v1912 = vadd.f32 %v586, %v1911
        %v1913 = vpop.f32.mrb[0].mxu0
        %v1914 = vadd.f32 %v582, %v1913
        %v1915 = vpop.f32.mrb[0].mxu0
        %v1916 = vadd.f32 %v586, %v1915
        %1917 = vmatprep.mubr.bf16.mxu0 0
        %1918 = vmatmul.mubr.bf16.gmra.mrb[0].mxu0 %v962
        %v1919 = vpop.f32.mrb[0].mxu0
        %v1920 = vadd.f32 %v582, %v1919
        %v1921 = vpop.f32.mrb[0].mxu0
        %v1922 = vadd.f32 %v586, %v1921
        %v1923 = vpop.f32.mrb[0].mxu0
        %v1924 = vadd.f32 %v582, %v1923
        %v1925 = vpop.f32.mrb[0].mxu0
        %v1926 = vadd.f32 %v586, %v1925
        %1927 = vmatprep.mubr.bf16.mxu0 0
        %1928 = vmatmul.mubr.bf16.gmra.mrb[0].mxu0 %v965
        %v1929 = vpop.f32.mrb[0].mxu0
        %v1930 = vadd.f32 %v582, %v1929
        %v1931 = vpop.f32.mrb[0].mxu0
        %v1932 = vadd.f32 %v586, %v1931
        %v1933 = vpop.f32.mrb[0].mxu0
        %v1934 = vadd.f32 %v582, %v1933
        %v1935 = vpop.f32.mrb[0].mxu0
        %v1936 = vadd.f32 %v586, %v1935
        %1937 = vmatprep.mubr.bf16.mxu0 0
        %1938 = vmatmul.mubr.bf16.gmra.mrb[0].mxu0 %v968
        %v1939 = vpop.f32.mrb[0].mxu0
        %v1940 = vadd.f32 %v582, %v1939
        %v1941 = vpop.f32.mrb[0].mxu0
        %v1942 = vadd.f32 %v586, %v1941
        %v1943 = vpop.f32.mrb[0].mxu0
        %v1944 = vadd.f32 %v582, %v1943
        %v1945 = vpop.f32.mrb[0].mxu0
        %v1946 = vadd.f32 %v586, %v1945
        %1947 = vmatprep.mubr.bf16.mxu0 0
        %1948 = vmatmul.mubr.bf16.gmra.mrb[0].mxu0 %v971
        %v1949 = vpop.f32.mrb[0].mxu0
        %v1950 = vadd.f32 %v582, %v1949
        %v1951 = vpop.f32.mrb[0].mxu0
        %v1952 = vadd.f32 %v586, %v1951
        %v1953 = vpop.f32.mrb[0].mxu0
        %v1954 = vadd.f32 %v582, %v1953
        %v1955 = vpop.f32.mrb[0].mxu0
        %v1956 = vadd.f32 %v586, %v1955
        %1957 = vmatprep.mubr.bf16.mxu0 0
        %1958 = vmatmul.mubr.bf16.gmra.mrb[0].mxu0 %v974
        %v1959 = vpop.f32.mrb[0].mxu0
        %v1960 = vadd.f32 %v582, %v1959
        %v1961 = vpop.f32.mrb[0].mxu0
        %v1962 = vadd.f32 %v586, %v1961
        %v1963 = vpop.f32.mrb[0].mxu0
        %v1964 = vadd.f32 %v582, %v1963
        %v1965 = vpop.f32.mrb[0].mxu0
        %v1966 = vadd.f32 %v586, %v1965
        %1967 = vmatprep.mubr.bf16.mxu0 0
        %1968 = vmatmul.mubr.bf16.gmra.mrb[0].mxu0 %v977
        %v1969 = vpop.f32.mrb[0].mxu0
        %v1970 = vadd.f32 %v582, %v1969
        %v1971 = vpop.f32.mrb[0].mxu0
        %v1972 = vadd.f32 %v586, %v1971
        %v1973 = vpop.f32.mrb[0].mxu0
        %v1974 = vadd.f32 %v582, %v1973
        %v1975 = vpop.f32.mrb[0].mxu0
        %v1976 = vadd.f32 %v586, %v1975
        %1977 = vmatprep.mubr.bf16.mxu0 0
        %1978 = vmatmul.mubr.bf16.gmra.mrb[0].mxu0 %v980
        %v1979 = vpop.f32.mrb[0].mxu0
        %v1980 = vadd.f32 %v582, %v1979
        %v1981 = vpop.f32.mrb[0].mxu0
        %v1982 = vadd.f32 %v586, %v1981
        %v1983 = vpop.f32.mrb[0].mxu0
        %v1984 = vadd.f32 %v582, %v1983
        %v1985 = vpop.f32.mrb[0].mxu0
        %v1986 = vadd.f32 %v586, %v1985
        %1987 = vmatprep.mubr.bf16.mxu0 0
        %1988 = vmatmul.mubr.bf16.gmra.mrb[0].mxu0 %v983
        %v1989 = vpop.f32.mrb[0].mxu0
        %v1990 = vadd.f32 %v582, %v1989
        %v1991 = vpop.f32.mrb[0].mxu0
        %v1992 = vadd.f32 %v586, %v1991
        %v1993 = vpop.f32.mrb[0].mxu0
        %v1994 = vadd.f32 %v582, %v1993
        %v1995 = vpop.f32.mrb[0].mxu0
        %v1996 = vadd.f32 %v586, %v1995
        %1997 = vdwg.mxu0
        %1998 = vmatprep.subr.bf16.mxu0 0
        %1999 = vmatpush1.bf16.msra.mxu0 %v656
        %2000 = vmatprep.subr.bf16.mxu0 0
        %2001 = vmatpush1.bf16.msra.mxu0 %v659
        %2002 = vmatprep.subr.bf16.mxu0 0
        %2003 = vmatpush1.bf16.msra.mxu0 %v662
        %2004 = vmatprep.subr.bf16.mxu0 0
        %2005 = vmatpush1.bf16.msra.mxu0 %v665
        %2006 = vmatprep.subr.bf16.mxu0 0
        %2007 = vmatpush1.bf16.msra.mxu0 %v668
        %2008 = vmatprep.subr.bf16.mxu0 0
        %2009 = vmatpush1.bf16.msra.mxu0 %v671
        %2010 = vmatprep.subr.bf16.mxu0 0
        %2011 = vmatpush1.bf16.msra.mxu0 0
        %2012 = vmatprep.subr.bf16.mxu0 0
        %2013 = vmatpush1.bf16.msra.mxu0 0
        %2014 = vmatprep.subr.bf16.mxu0 0
        %2015 = vmatpush1.bf16.msra.mxu0 0
        %2016 = vmatprep.subr.bf16.mxu0 0
        %2017 = vmatpush1.bf16.msra.mxu0 0
        %2018 = vmatprep.subr.bf16.mxu0 0
        %2019 = vmatpush1.bf16.msra.mxu0 0
        %2020 = vmatprep.subr.bf16.mxu0 0
        %2021 = vmatpush1.bf16.msra.mxu0 0
        %2022 = vmatprep.subr.bf16.mxu0 0
        %2023 = vmatpush1.bf16.msra.mxu0 0
        %2024 = vmatprep.subr.bf16.mxu0 0
        %2025 = vmatpush1.bf16.msra.mxu0 0
        %2026 = vmatprep.subr.bf16.mxu0 0
        %2027 = vmatpush1.bf16.msra.mxu0 0
        %2028 = vmatprep.subr.bf16.mxu0 0
        %2029 = vmatpush1.bf16.msra.mxu0 0
        %2030 = vmatprep.mubr.bf16.mxu0 0
        %2031 = vmatmul.mubr.bf16.gmra.mrb[0].mxu0 %v692
        %v2032 = vpop.f32.mrb[0].mxu0
        %v2033 = vadd.f32 %v590, %v2032
        %v2034 = vpop.f32.mrb[0].mxu0
        %v2035 = vpop.f32.mrb[0].mxu0
        %v2036 = vadd.f32 %v590, %v2035
        %v2037 = vpop.f32.mrb[0].mxu0
        %2038 = vmatprep.mubr.bf16.mxu0 0
        %2039 = vmatmul.mubr.bf16.gmra.mrb[0].mxu0 %v695
        %v2040 = vpop.f32.mrb[0].mxu0
        %v2041 = vadd.f32 %v590, %v2040
        %v2042 = vpop.f32.mrb[0].mxu0
        %v2043 = vpop.f32.mrb[0].mxu0
        %v2044 = vadd.f32 %v590, %v2043
        %v2045 = vpop.f32.mrb[0].mxu0
        %2046 = vmatprep.mubr.bf16.mxu0 0
        %2047 = vmatmul.mubr.bf16.gmra.mrb[0].mxu0 %v698
        %v2048 = vpop.f32.mrb[0].mxu0
        %v2049 = vadd.f32 %v590, %v2048
        %v2050 = vpop.f32.mrb[0].mxu0
        %v2051 = vpop.f32.mrb[0].mxu0
        %v2052 = vadd.f32 %v590, %v2051
        %v2053 = vpop.f32.mrb[0].mxu0
        %2054 = vmatprep.mubr.bf16.mxu0 0
        %2055 = vmatmul.mubr.bf16.gmra.mrb[0].mxu0 %v701
        %v2056 = vpop.f32.mrb[0].mxu0
        %v2057 = vadd.f32 %v590, %v2056
        %v2058 = vpop.f32.mrb[0].mxu0
        %v2059 = vpop.f32.mrb[0].mxu0
        %v2060 = vadd.f32 %v590, %v2059
        %v2061 = vpop.f32.mrb[0].mxu0
        %2062 = vmatprep.mubr.bf16.mxu0 0
        %2063 = vmatmul.mubr.bf16.gmra.mrb[0].mxu0 %v704
        %v2064 = vpop.f32.mrb[0].mxu0
        %v2065 = vadd.f32 %v590, %v2064
        %v2066 = vpop.f32.mrb[0].mxu0
        %v2067 = vpop.f32.mrb[0].mxu0
        %v2068 = vadd.f32 %v590, %v2067
        %v2069 = vpop.f32.mrb[0].mxu0
        %2070 = vmatprep.mubr.bf16.mxu0 0
        %2071 = vmatmul.mubr.bf16.gmra.mrb[0].mxu0 %v707
        %v2072 = vpop.f32.mrb[0].mxu0
        %v2073 = vadd.f32 %v590, %v2072
        %v2074 = vpop.f32.mrb[0].mxu0
        %v2075 = vpop.f32.mrb[0].mxu0
        %v2076 = vadd.f32 %v590, %v2075
        %v2077 = vpop.f32.mrb[0].mxu0
        %2078 = vmatprep.mubr.bf16.mxu0 0
        %2079 = vmatmul.mubr.bf16.gmra.mrb[0].mxu0 %v710
        %v2080 = vpop.f32.mrb[0].mxu0
        %v2081 = vadd.f32 %v590, %v2080
        %v2082 = vpop.f32.mrb[0].mxu0
        %v2083 = vpop.f32.mrb[0].mxu0
        %v2084 = vadd.f32 %v590, %v2083
        %v2085 = vpop.f32.mrb[0].mxu0
        %2086 = vmatprep.mubr.bf16.mxu0 0
        %2087 = vmatmul.mubr.bf16.gmra.mrb[0].mxu0 %v713
        %v2088 = vpop.f32.mrb[0].mxu0
        %v2089 = vadd.f32 %v590, %v2088
        %v2090 = vpop.f32.mrb[0].mxu0
        %v2091 = vpop.f32.mrb[0].mxu0
        %v2092 = vadd.f32 %v590, %v2091
        %v2093 = vpop.f32.mrb[0].mxu0
        %2094 = vmatprep.mubr.bf16.mxu0 0
        %2095 = vmatmul.mubr.bf16.gmra.mrb[0].mxu0 %v716
        %v2096 = vpop.f32.mrb[0].mxu0
        %v2097 = vadd.f32 %v590, %v2096
        %v2098 = vpop.f32.mrb[0].mxu0
        %v2099 = vpop.f32.mrb[0].mxu0
        %v2100 = vadd.f32 %v590, %v2099
        %v2101 = vpop.f32.mrb[0].mxu0
        %2102 = vmatprep.mubr.bf16.mxu0 0
        %2103 = vmatmul.mubr.bf16.gmra.mrb[0].mxu0 %v719
        %v2104 = vpop.f32.mrb[0].mxu0
        %v2105 = vadd.f32 %v590, %v2104
        %v2106 = vpop.f32.mrb[0].mxu0
        %v2107 = vpop.f32.mrb[0].mxu0
        %v2108 = vadd.f32 %v590, %v2107
        %v2109 = vpop.f32.mrb[0].mxu0
        %2110 = vmatprep.mubr.bf16.mxu0 0
        %2111 = vmatmul.mubr.bf16.gmra.mrb[0].mxu0 %v722
        %v2112 = vpop.f32.mrb[0].mxu0
        %v2113 = vadd.f32 %v590, %v2112
        %v2114 = vpop.f32.mrb[0].mxu0
        %v2115 = vpop.f32.mrb[0].mxu0
        %v2116 = vadd.f32 %v590, %v2115
        %v2117 = vpop.f32.mrb[0].mxu0
        %2118 = vmatprep.mubr.bf16.mxu0 0
        %2119 = vmatmul.mubr.bf16.gmra.mrb[0].mxu0 %v725
        %v2120 = vpop.f32.mrb[0].mxu0
        %v2121 = vadd.f32 %v590, %v2120
        %v2122 = vpop.f32.mrb[0].mxu0
        %v2123 = vpop.f32.mrb[0].mxu0
        %v2124 = vadd.f32 %v590, %v2123
        %v2125 = vpop.f32.mrb[0].mxu0
        %2126 = vmatprep.mubr.bf16.mxu0 0
        %2127 = vmatmul.mubr.bf16.gmra.mrb[0].mxu0 %v728
        %v2128 = vpop.f32.mrb[0].mxu0
        %v2129 = vadd.f32 %v590, %v2128
        %v2130 = vpop.f32.mrb[0].mxu0
        %v2131 = vpop.f32.mrb[0].mxu0
        %v2132 = vadd.f32 %v590, %v2131
        %v2133 = vpop.f32.mrb[0].mxu0
        %2134 = vmatprep.mubr.bf16.mxu0 0
        %2135 = vmatmul.mubr.bf16.gmra.mrb[0].mxu0 %v731
        %v2136 = vpop.f32.mrb[0].mxu0
        %v2137 = vadd.f32 %v590, %v2136
        %v2138 = vpop.f32.mrb[0].mxu0
        %v2139 = vpop.f32.mrb[0].mxu0
        %v2140 = vadd.f32 %v590, %v2139
        %v2141 = vpop.f32.mrb[0].mxu0
        %2142 = vmatprep.mubr.bf16.mxu0 0
        %2143 = vmatmul.mubr.bf16.gmra.mrb[0].mxu0 %v734
        %v2144 = vpop.f32.mrb[0].mxu0
        %v2145 = vadd.f32 %v590, %v2144
        %v2146 = vpop.f32.mrb[0].mxu0
        %v2147 = vpop.f32.mrb[0].mxu0
        %v2148 = vadd.f32 %v590, %v2147
        %v2149 = vpop.f32.mrb[0].mxu0
        %2150 = vmatprep.mubr.bf16.mxu0 0
        %2151 = vmatmul.mubr.bf16.gmra.mrb[0].mxu0 %v737
        %v2152 = vpop.f32.mrb[0].mxu0
        %v2153 = vadd.f32 %v590, %v2152
        %v2154 = vpop.f32.mrb[0].mxu0
        %v2155 = vpop.f32.mrb[0].mxu0
        %v2156 = vadd.f32 %v590, %v2155
        %v2157 = vpop.f32.mrb[0].mxu0
        %2158 = vmatprep.mubr.bf16.mxu0 0
        %2159 = vmatmul.mubr.bf16.gmra.mrb[0].mxu0 %v740
        %v2160 = vpop.f32.mrb[0].mxu0
        %v2161 = vadd.f32 %v590, %v2160
        %v2162 = vpop.f32.mrb[0].mxu0
        %v2163 = vpop.f32.mrb[0].mxu0
        %v2164 = vadd.f32 %v590, %v2163
        %v2165 = vpop.f32.mrb[0].mxu0
        %2166 = vmatprep.mubr.bf16.mxu0 0
        %2167 = vmatmul.mubr.bf16.gmra.mrb[0].mxu0 %v743
        %v2168 = vpop.f32.mrb[0].mxu0
        %v2169 = vadd.f32 %v590, %v2168
        %v2170 = vpop.f32.mrb[0].mxu0
        %v2171 = vpop.f32.mrb[0].mxu0
        %v2172 = vadd.f32 %v590, %v2171
        %v2173 = vpop.f32.mrb[0].mxu0
        %2174 = vmatprep.mubr.bf16.mxu0 0
        %2175 = vmatmul.mubr.bf16.gmra.mrb[0].mxu0 %v746
        %v2176 = vpop.f32.mrb[0].mxu0
        %v2177 = vadd.f32 %v590, %v2176
        %v2178 = vpop.f32.mrb[0].mxu0
        %v2179 = vpop.f32.mrb[0].mxu0
        %v2180 = vadd.f32 %v590, %v2179
        %v2181 = vpop.f32.mrb[0].mxu0
        %2182 = vmatprep.mubr.bf16.mxu0 0
        %2183 = vmatmul.mubr.bf16.gmra.mrb[0].mxu0 %v749
        %v2184 = vpop.f32.mrb[0].mxu0
        %v2185 = vadd.f32 %v590, %v2184
        %v2186 = vpop.f32.mrb[0].mxu0
        %v2187 = vpop.f32.mrb[0].mxu0
        %v2188 = vadd.f32 %v590, %v2187
        %v2189 = vpop.f32.mrb[0].mxu0
        %2190 = vmatprep.mubr.bf16.mxu0 0
        %2191 = vmatmul.mubr.bf16.gmra.mrb[0].mxu0 %v752
        %v2192 = vpop.f32.mrb[0].mxu0
        %v2193 = vadd.f32 %v590, %v2192
        %v2194 = vpop.f32.mrb[0].mxu0
        %v2195 = vpop.f32.mrb[0].mxu0
        %v2196 = vadd.f32 %v590, %v2195
        %v2197 = vpop.f32.mrb[0].mxu0
        %2198 = vmatprep.mubr.bf16.mxu0 0
        %2199 = vmatmul.mubr.bf16.gmra.mrb[0].mxu0 %v755
        %v2200 = vpop.f32.mrb[0].mxu0
        %v2201 = vadd.f32 %v590, %v2200
        %v2202 = vpop.f32.mrb[0].mxu0
        %v2203 = vpop.f32.mrb[0].mxu0
        %v2204 = vadd.f32 %v590, %v2203
        %v2205 = vpop.f32.mrb[0].mxu0
        %2206 = vmatprep.mubr.bf16.mxu0 0
        %2207 = vmatmul.mubr.bf16.gmra.mrb[0].mxu0 %v758
        %v2208 = vpop.f32.mrb[0].mxu0
        %v2209 = vadd.f32 %v590, %v2208
        %v2210 = vpop.f32.mrb[0].mxu0
        %v2211 = vpop.f32.mrb[0].mxu0
        %v2212 = vadd.f32 %v590, %v2211
        %v2213 = vpop.f32.mrb[0].mxu0
        %2214 = vmatprep.mubr.bf16.mxu0 0
        %2215 = vmatmul.mubr.bf16.gmra.mrb[0].mxu0 %v761
        %v2216 = vpop.f32.mrb[0].mxu0
        %v2217 = vadd.f32 %v590, %v2216
        %v2218 = vpop.f32.mrb[0].mxu0
        %v2219 = vpop.f32.mrb[0].mxu0
        %v2220 = vadd.f32 %v590, %v2219
        %v2221 = vpop.f32.mrb[0].mxu0
        %2222 = vmatprep.mubr.bf16.mxu0 0
        %2223 = vmatmul.mubr.bf16.gmra.mrb[0].mxu0 %v764
        %v2224 = vpop.f32.mrb[0].mxu0
        %v2225 = vadd.f32 %v590, %v2224
        %v2226 = vpop.f32.mrb[0].mxu0
        %v2227 = vpop.f32.mrb[0].mxu0
        %v2228 = vadd.f32 %v590, %v2227
        %v2229 = vpop.f32.mrb[0].mxu0
        %2230 = vmatprep.mubr.bf16.mxu0 0
        %2231 = vmatmul.mubr.bf16.gmra.mrb[0].mxu0 %v767
        %v2232 = vpop.f32.mrb[0].mxu0
        %v2233 = vadd.f32 %v590, %v2232
        %v2234 = vpop.f32.mrb[0].mxu0
        %v2235 = vpop.f32.mrb[0].mxu0
        %v2236 = vadd.f32 %v590, %v2235
        %v2237 = vpop.f32.mrb[0].mxu0
        %2238 = vmatprep.mubr.bf16.mxu0 0
        %2239 = vmatmul.mubr.bf16.gmra.mrb[0].mxu0 %v770
        %v2240 = vpop.f32.mrb[0].mxu0
        %v2241 = vadd.f32 %v590, %v2240
        %v2242 = vpop.f32.mrb[0].mxu0
        %v2243 = vpop.f32.mrb[0].mxu0
        %v2244 = vadd.f32 %v590, %v2243
        %v2245 = vpop.f32.mrb[0].mxu0
        %2246 = vmatprep.mubr.bf16.mxu0 0
        %2247 = vmatmul.mubr.bf16.gmra.mrb[0].mxu0 %v773
        %v2248 = vpop.f32.mrb[0].mxu0
        %v2249 = vadd.f32 %v590, %v2248
        %v2250 = vpop.f32.mrb[0].mxu0
        %v2251 = vpop.f32.mrb[0].mxu0
        %v2252 = vadd.f32 %v590, %v2251
        %v2253 = vpop.f32.mrb[0].mxu0
        %2254 = vmatprep.mubr.bf16.mxu0 0
        %2255 = vmatmul.mubr.bf16.gmra.mrb[0].mxu0 %v776
        %v2256 = vpop.f32.mrb[0].mxu0
        %v2257 = vadd.f32 %v590, %v2256
        %v2258 = vpop.f32.mrb[0].mxu0
        %v2259 = vpop.f32.mrb[0].mxu0
        %v2260 = vadd.f32 %v590, %v2259
        %v2261 = vpop.f32.mrb[0].mxu0
        %2262 = vmatprep.mubr.bf16.mxu0 0
        %2263 = vmatmul.mubr.bf16.gmra.mrb[0].mxu0 %v779
        %v2264 = vpop.f32.mrb[0].mxu0
        %v2265 = vadd.f32 %v590, %v2264
        %v2266 = vpop.f32.mrb[0].mxu0
        %v2267 = vpop.f32.mrb[0].mxu0
        %v2268 = vadd.f32 %v590, %v2267
        %v2269 = vpop.f32.mrb[0].mxu0
        %2270 = vmatprep.mubr.bf16.mxu0 0
        %2271 = vmatmul.mubr.bf16.gmra.mrb[0].mxu0 %v782
        %v2272 = vpop.f32.mrb[0].mxu0
        %v2273 = vadd.f32 %v590, %v2272
        %v2274 = vpop.f32.mrb[0].mxu0
        %v2275 = vpop.f32.mrb[0].mxu0
        %v2276 = vadd.f32 %v590, %v2275
        %v2277 = vpop.f32.mrb[0].mxu0
        %2278 = vmatprep.mubr.bf16.mxu0 0
        %2279 = vmatmul.mubr.bf16.gmra.mrb[0].mxu0 %v785
        %v2280 = vpop.f32.mrb[0].mxu0
        %v2281 = vadd.f32 %v590, %v2280
        %v2282 = vpop.f32.mrb[0].mxu0
        %v2283 = vpop.f32.mrb[0].mxu0
        %v2284 = vadd.f32 %v590, %v2283
        %v2285 = vpop.f32.mrb[0].mxu0
        %2286 = vmatprep.mubr.bf16.mxu0 0
        %2287 = vmatmul.mubr.bf16.gmra.mrb[0].mxu0 %v788
        %v2288 = vpop.f32.mrb[0].mxu0
        %v2289 = vadd.f32 %v590, %v2288
        %v2290 = vpop.f32.mrb[0].mxu0
        %v2291 = vpop.f32.mrb[0].mxu0
        %v2292 = vadd.f32 %v590, %v2291
        %v2293 = vpop.f32.mrb[0].mxu0
        %2294 = vmatprep.mubr.bf16.mxu0 0
        %2295 = vmatmul.mubr.bf16.gmra.mrb[0].mxu0 %v791
        %v2296 = vpop.f32.mrb[0].mxu0
        %v2297 = vadd.f32 %v590, %v2296
        %v2298 = vpop.f32.mrb[0].mxu0
        %v2299 = vpop.f32.mrb[0].mxu0
        %v2300 = vadd.f32 %v590, %v2299
        %v2301 = vpop.f32.mrb[0].mxu0
        %2302 = vmatprep.mubr.bf16.mxu0 0
        %2303 = vmatmul.mubr.bf16.gmra.mrb[0].mxu0 %v794
        %v2304 = vpop.f32.mrb[0].mxu0
        %v2305 = vadd.f32 %v590, %v2304
        %v2306 = vpop.f32.mrb[0].mxu0
        %v2307 = vpop.f32.mrb[0].mxu0
        %v2308 = vadd.f32 %v590, %v2307
        %v2309 = vpop.f32.mrb[0].mxu0
        %2310 = vmatprep.mubr.bf16.mxu0 0
        %2311 = vmatmul.mubr.bf16.gmra.mrb[0].mxu0 %v797
        %v2312 = vpop.f32.mrb[0].mxu0
        %v2313 = vadd.f32 %v590, %v2312
        %v2314 = vpop.f32.mrb[0].mxu0
        %v2315 = vpop.f32.mrb[0].mxu0
        %v2316 = vadd.f32 %v590, %v2315
        %v2317 = vpop.f32.mrb[0].mxu0
        %2318 = vmatprep.mubr.bf16.mxu0 0
        %2319 = vmatmul.mubr.bf16.gmra.mrb[0].mxu0 %v800
        %v2320 = vpop.f32.mrb[0].mxu0
        %v2321 = vadd.f32 %v590, %v2320
        %v2322 = vpop.f32.mrb[0].mxu0
        %v2323 = vpop.f32.mrb[0].mxu0
        %v2324 = vadd.f32 %v590, %v2323
        %v2325 = vpop.f32.mrb[0].mxu0
        %2326 = vmatprep.mubr.bf16.mxu0 0
        %2327 = vmatmul.mubr.bf16.gmra.mrb[0].mxu0 %v803
        %v2328 = vpop.f32.mrb[0].mxu0
        %v2329 = vadd.f32 %v590, %v2328
        %v2330 = vpop.f32.mrb[0].mxu0
        %v2331 = vpop.f32.mrb[0].mxu0
        %v2332 = vadd.f32 %v590, %v2331
        %v2333 = vpop.f32.mrb[0].mxu0
        %2334 = vmatprep.mubr.bf16.mxu0 0
        %2335 = vmatmul.mubr.bf16.gmra.mrb[0].mxu0 %v806
        %v2336 = vpop.f32.mrb[0].mxu0
        %v2337 = vadd.f32 %v590, %v2336
        %v2338 = vpop.f32.mrb[0].mxu0
        %v2339 = vpop.f32.mrb[0].mxu0
        %v2340 = vadd.f32 %v590, %v2339
        %v2341 = vpop.f32.mrb[0].mxu0
        %2342 = vmatprep.mubr.bf16.mxu0 0
        %2343 = vmatmul.mubr.bf16.gmra.mrb[0].mxu0 %v809
        %v2344 = vpop.f32.mrb[0].mxu0
        %v2345 = vadd.f32 %v590, %v2344
        %v2346 = vpop.f32.mrb[0].mxu0
        %v2347 = vpop.f32.mrb[0].mxu0
        %v2348 = vadd.f32 %v590, %v2347
        %v2349 = vpop.f32.mrb[0].mxu0
        %2350 = vmatprep.mubr.bf16.mxu0 0
        %2351 = vmatmul.mubr.bf16.gmra.mrb[0].mxu0 %v812
        %v2352 = vpop.f32.mrb[0].mxu0
        %v2353 = vadd.f32 %v590, %v2352
        %v2354 = vpop.f32.mrb[0].mxu0
        %v2355 = vpop.f32.mrb[0].mxu0
        %v2356 = vadd.f32 %v590, %v2355
        %v2357 = vpop.f32.mrb[0].mxu0
        %2358 = vmatprep.mubr.bf16.mxu0 0
        %2359 = vmatmul.mubr.bf16.gmra.mrb[0].mxu0 %v815
        %v2360 = vpop.f32.mrb[0].mxu0
        %v2361 = vadd.f32 %v590, %v2360
        %v2362 = vpop.f32.mrb[0].mxu0
        %v2363 = vpop.f32.mrb[0].mxu0
        %v2364 = vadd.f32 %v590, %v2363
        %v2365 = vpop.f32.mrb[0].mxu0
        %2366 = vmatprep.mubr.bf16.mxu0 0
        %2367 = vmatmul.mubr.bf16.gmra.mrb[0].mxu0 %v818
        %v2368 = vpop.f32.mrb[0].mxu0
        %v2369 = vadd.f32 %v590, %v2368
        %v2370 = vpop.f32.mrb[0].mxu0
        %v2371 = vpop.f32.mrb[0].mxu0
        %v2372 = vadd.f32 %v590, %v2371
        %v2373 = vpop.f32.mrb[0].mxu0
        %2374 = vmatprep.mubr.bf16.mxu0 0
        %2375 = vmatmul.mubr.bf16.gmra.mrb[0].mxu0 %v821
        %v2376 = vpop.f32.mrb[0].mxu0
        %v2377 = vadd.f32 %v590, %v2376
        %v2378 = vpop.f32.mrb[0].mxu0
        %v2379 = vpop.f32.mrb[0].mxu0
        %v2380 = vadd.f32 %v590, %v2379
        %v2381 = vpop.f32.mrb[0].mxu0
        %2382 = vmatprep.mubr.bf16.mxu0 0
        %2383 = vmatmul.mubr.bf16.gmra.mrb[0].mxu0 %v824
        %v2384 = vpop.f32.mrb[0].mxu0
        %v2385 = vadd.f32 %v590, %v2384
        %v2386 = vpop.f32.mrb[0].mxu0
        %v2387 = vpop.f32.mrb[0].mxu0
        %v2388 = vadd.f32 %v590, %v2387
        %v2389 = vpop.f32.mrb[0].mxu0
        %2390 = vmatprep.mubr.bf16.mxu0 0
        %2391 = vmatmul.mubr.bf16.gmra.mrb[0].mxu0 %v827
        %v2392 = vpop.f32.mrb[0].mxu0
        %v2393 = vadd.f32 %v590, %v2392
        %v2394 = vpop.f32.mrb[0].mxu0
        %v2395 = vpop.f32.mrb[0].mxu0
        %v2396 = vadd.f32 %v590, %v2395
        %v2397 = vpop.f32.mrb[0].mxu0
        %2398 = vmatprep.mubr.bf16.mxu0 0
        %2399 = vmatmul.mubr.bf16.gmra.mrb[0].mxu0 %v830
        %v2400 = vpop.f32.mrb[0].mxu0
        %v2401 = vadd.f32 %v590, %v2400
        %v2402 = vpop.f32.mrb[0].mxu0
        %v2403 = vpop.f32.mrb[0].mxu0
        %v2404 = vadd.f32 %v590, %v2403
        %v2405 = vpop.f32.mrb[0].mxu0
        %2406 = vmatprep.mubr.bf16.mxu0 0
        %2407 = vmatmul.mubr.bf16.gmra.mrb[0].mxu0 %v833
        %v2408 = vpop.f32.mrb[0].mxu0
        %v2409 = vadd.f32 %v590, %v2408
        %v2410 = vpop.f32.mrb[0].mxu0
        %v2411 = vpop.f32.mrb[0].mxu0
        %v2412 = vadd.f32 %v590, %v2411
        %v2413 = vpop.f32.mrb[0].mxu0
        %2414 = vmatprep.mubr.bf16.mxu0 0
        %2415 = vmatmul.mubr.bf16.gmra.mrb[0].mxu0 %v836
        %v2416 = vpop.f32.mrb[0].mxu0
        %v2417 = vadd.f32 %v590, %v2416
        %v2418 = vpop.f32.mrb[0].mxu0
        %v2419 = vpop.f32.mrb[0].mxu0
        %v2420 = vadd.f32 %v590, %v2419
        %v2421 = vpop.f32.mrb[0].mxu0
        %2422 = vmatprep.mubr.bf16.mxu0 0
        %2423 = vmatmul.mubr.bf16.gmra.mrb[0].mxu0 %v839
        %v2424 = vpop.f32.mrb[0].mxu0
        %v2425 = vadd.f32 %v590, %v2424
        %v2426 = vpop.f32.mrb[0].mxu0
        %v2427 = vpop.f32.mrb[0].mxu0
        %v2428 = vadd.f32 %v590, %v2427
        %v2429 = vpop.f32.mrb[0].mxu0
        %2430 = vmatprep.mubr.bf16.mxu0 0
        %2431 = vmatmul.mubr.bf16.gmra.mrb[0].mxu0 %v842
        %v2432 = vpop.f32.mrb[0].mxu0
        %v2433 = vadd.f32 %v590, %v2432
        %v2434 = vpop.f32.mrb[0].mxu0
        %v2435 = vpop.f32.mrb[0].mxu0
        %v2436 = vadd.f32 %v590, %v2435
        %v2437 = vpop.f32.mrb[0].mxu0
        %2438 = vmatprep.mubr.bf16.mxu0 0
        %2439 = vmatmul.mubr.bf16.gmra.mrb[0].mxu0 %v845
        %v2440 = vpop.f32.mrb[0].mxu0
        %v2441 = vadd.f32 %v590, %v2440
        %v2442 = vpop.f32.mrb[0].mxu0
        %v2443 = vpop.f32.mrb[0].mxu0
        %v2444 = vadd.f32 %v590, %v2443
        %v2445 = vpop.f32.mrb[0].mxu0
        %2446 = vmatprep.mubr.bf16.mxu0 0
        %2447 = vmatmul.mubr.bf16.gmra.mrb[0].mxu0 %v848
        %v2448 = vpop.f32.mrb[0].mxu0
        %v2449 = vadd.f32 %v590, %v2448
        %v2450 = vpop.f32.mrb[0].mxu0
        %v2451 = vpop.f32.mrb[0].mxu0
        %v2452 = vadd.f32 %v590, %v2451
        %v2453 = vpop.f32.mrb[0].mxu0
        %2454 = vmatprep.mubr.bf16.mxu0 0
        %2455 = vmatmul.mubr.bf16.gmra.mrb[0].mxu0 %v851
        %v2456 = vpop.f32.mrb[0].mxu0
        %v2457 = vadd.f32 %v590, %v2456
        %v2458 = vpop.f32.mrb[0].mxu0
        %v2459 = vpop.f32.mrb[0].mxu0
        %v2460 = vadd.f32 %v590, %v2459
        %v2461 = vpop.f32.mrb[0].mxu0
        %2462 = vmatprep.mubr.bf16.mxu0 0
        %2463 = vmatmul.mubr.bf16.gmra.mrb[0].mxu0 %v854
        %v2464 = vpop.f32.mrb[0].mxu0
        %v2465 = vadd.f32 %v590, %v2464
        %v2466 = vpop.f32.mrb[0].mxu0
        %v2467 = vpop.f32.mrb[0].mxu0
        %v2468 = vadd.f32 %v590, %v2467
        %v2469 = vpop.f32.mrb[0].mxu0
        %2470 = vmatprep.mubr.bf16.mxu0 0
        %2471 = vmatmul.mubr.bf16.gmra.mrb[0].mxu0 %v857
        %v2472 = vpop.f32.mrb[0].mxu0
        %v2473 = vadd.f32 %v590, %v2472
        %v2474 = vpop.f32.mrb[0].mxu0
        %v2475 = vpop.f32.mrb[0].mxu0
        %v2476 = vadd.f32 %v590, %v2475
        %v2477 = vpop.f32.mrb[0].mxu0
        %2478 = vmatprep.mubr.bf16.mxu0 0
        %2479 = vmatmul.mubr.bf16.gmra.mrb[0].mxu0 %v860
        %v2480 = vpop.f32.mrb[0].mxu0
        %v2481 = vadd.f32 %v590, %v2480
        %v2482 = vpop.f32.mrb[0].mxu0
        %v2483 = vpop.f32.mrb[0].mxu0
        %v2484 = vadd.f32 %v590, %v2483
        %v2485 = vpop.f32.mrb[0].mxu0
        %2486 = vmatprep.mubr.bf16.mxu0 0
        %2487 = vmatmul.mubr.bf16.gmra.mrb[0].mxu0 %v863
        %v2488 = vpop.f32.mrb[0].mxu0
        %v2489 = vadd.f32 %v590, %v2488
        %v2490 = vpop.f32.mrb[0].mxu0
        %v2491 = vpop.f32.mrb[0].mxu0
        %v2492 = vadd.f32 %v590, %v2491
        %v2493 = vpop.f32.mrb[0].mxu0
        %2494 = vmatprep.mubr.bf16.mxu0 0
        %2495 = vmatmul.mubr.bf16.gmra.mrb[0].mxu0 %v866
        %v2496 = vpop.f32.mrb[0].mxu0
        %v2497 = vadd.f32 %v590, %v2496
        %v2498 = vpop.f32.mrb[0].mxu0
        %v2499 = vpop.f32.mrb[0].mxu0
        %v2500 = vadd.f32 %v590, %v2499
        %v2501 = vpop.f32.mrb[0].mxu0
        %2502 = vmatprep.mubr.bf16.mxu0 0
        %2503 = vmatmul.mubr.bf16.gmra.mrb[0].mxu0 %v869
        %v2504 = vpop.f32.mrb[0].mxu0
        %v2505 = vadd.f32 %v590, %v2504
        %v2506 = vpop.f32.mrb[0].mxu0
        %v2507 = vpop.f32.mrb[0].mxu0
        %v2508 = vadd.f32 %v590, %v2507
        %v2509 = vpop.f32.mrb[0].mxu0
        %2510 = vmatprep.mubr.bf16.mxu0 0
        %2511 = vmatmul.mubr.bf16.gmra.mrb[0].mxu0 %v872
        %v2512 = vpop.f32.mrb[0].mxu0
        %v2513 = vadd.f32 %v590, %v2512
        %v2514 = vpop.f32.mrb[0].mxu0
        %v2515 = vpop.f32.mrb[0].mxu0
        %v2516 = vadd.f32 %v590, %v2515
        %v2517 = vpop.f32.mrb[0].mxu0
        %2518 = vmatprep.mubr.bf16.mxu0 0
        %2519 = vmatmul.mubr.bf16.gmra.mrb[0].mxu0 %v875
        %v2520 = vpop.f32.mrb[0].mxu0
        %v2521 = vadd.f32 %v590, %v2520
        %v2522 = vpop.f32.mrb[0].mxu0
        %v2523 = vpop.f32.mrb[0].mxu0
        %v2524 = vadd.f32 %v590, %v2523
        %v2525 = vpop.f32.mrb[0].mxu0
        %2526 = vmatprep.mubr.bf16.mxu0 0
        %2527 = vmatmul.mubr.bf16.gmra.mrb[0].mxu0 %v878
        %v2528 = vpop.f32.mrb[0].mxu0
        %v2529 = vadd.f32 %v590, %v2528
        %v2530 = vpop.f32.mrb[0].mxu0
        %v2531 = vpop.f32.mrb[0].mxu0
        %v2532 = vadd.f32 %v590, %v2531
        %v2533 = vpop.f32.mrb[0].mxu0
        %2534 = vmatprep.mubr.bf16.mxu0 0
        %2535 = vmatmul.mubr.bf16.gmra.mrb[0].mxu0 %v881
        %v2536 = vpop.f32.mrb[0].mxu0
        %v2537 = vadd.f32 %v590, %v2536
        %v2538 = vpop.f32.mrb[0].mxu0
        %v2539 = vpop.f32.mrb[0].mxu0
        %v2540 = vadd.f32 %v590, %v2539
        %v2541 = vpop.f32.mrb[0].mxu0
        %2542 = vmatprep.mubr.bf16.mxu0 0
        %2543 = vmatmul.mubr.bf16.gmra.mrb[0].mxu0 %v884
        %v2544 = vpop.f32.mrb[0].mxu0
        %v2545 = vadd.f32 %v590, %v2544
        %v2546 = vpop.f32.mrb[0].mxu0
        %v2547 = vpop.f32.mrb[0].mxu0
        %v2548 = vadd.f32 %v590, %v2547
        %v2549 = vpop.f32.mrb[0].mxu0
        %2550 = vmatprep.mubr.bf16.mxu0 0
        %2551 = vmatmul.mubr.bf16.gmra.mrb[0].mxu0 %v887
        %v2552 = vpop.f32.mrb[0].mxu0
        %v2553 = vadd.f32 %v590, %v2552
        %v2554 = vpop.f32.mrb[0].mxu0
        %v2555 = vpop.f32.mrb[0].mxu0
        %v2556 = vadd.f32 %v590, %v2555
        %v2557 = vpop.f32.mrb[0].mxu0
        %2558 = vmatprep.mubr.bf16.mxu0 0
        %2559 = vmatmul.mubr.bf16.gmra.mrb[0].mxu0 %v890
        %v2560 = vpop.f32.mrb[0].mxu0
        %v2561 = vadd.f32 %v590, %v2560
        %v2562 = vpop.f32.mrb[0].mxu0
        %v2563 = vpop.f32.mrb[0].mxu0
        %v2564 = vadd.f32 %v590, %v2563
        %v2565 = vpop.f32.mrb[0].mxu0
        %2566 = vmatprep.mubr.bf16.mxu0 0
        %2567 = vmatmul.mubr.bf16.gmra.mrb[0].mxu0 %v893
        %v2568 = vpop.f32.mrb[0].mxu0
        %v2569 = vadd.f32 %v590, %v2568
        %v2570 = vpop.f32.mrb[0].mxu0
        %v2571 = vpop.f32.mrb[0].mxu0
        %v2572 = vadd.f32 %v590, %v2571
        %v2573 = vpop.f32.mrb[0].mxu0
        %2574 = vmatprep.mubr.bf16.mxu0 0
        %2575 = vmatmul.mubr.bf16.gmra.mrb[0].mxu0 %v896
        %v2576 = vpop.f32.mrb[0].mxu0
        %v2577 = vadd.f32 %v590, %v2576
        %v2578 = vpop.f32.mrb[0].mxu0
        %v2579 = vpop.f32.mrb[0].mxu0
        %v2580 = vadd.f32 %v590, %v2579
        %v2581 = vpop.f32.mrb[0].mxu0
        %2582 = vmatprep.mubr.bf16.mxu0 0
        %2583 = vmatmul.mubr.bf16.gmra.mrb[0].mxu0 %v899
        %v2584 = vpop.f32.mrb[0].mxu0
        %v2585 = vadd.f32 %v590, %v2584
        %v2586 = vpop.f32.mrb[0].mxu0
        %v2587 = vpop.f32.mrb[0].mxu0
        %v2588 = vadd.f32 %v590, %v2587
        %v2589 = vpop.f32.mrb[0].mxu0
        %2590 = vmatprep.mubr.bf16.mxu0 0
        %2591 = vmatmul.mubr.bf16.gmra.mrb[0].mxu0 %v902
        %v2592 = vpop.f32.mrb[0].mxu0
        %v2593 = vadd.f32 %v590, %v2592
        %v2594 = vpop.f32.mrb[0].mxu0
        %v2595 = vpop.f32.mrb[0].mxu0
        %v2596 = vadd.f32 %v590, %v2595
        %v2597 = vpop.f32.mrb[0].mxu0
        %2598 = vmatprep.mubr.bf16.mxu0 0
        %2599 = vmatmul.mubr.bf16.gmra.mrb[0].mxu0 %v905
        %v2600 = vpop.f32.mrb[0].mxu0
        %v2601 = vadd.f32 %v590, %v2600
        %v2602 = vpop.f32.mrb[0].mxu0
        %v2603 = vpop.f32.mrb[0].mxu0
        %v2604 = vadd.f32 %v590, %v2603
        %v2605 = vpop.f32.mrb[0].mxu0
        %2606 = vmatprep.mubr.bf16.mxu0 0
        %2607 = vmatmul.mubr.bf16.gmra.mrb[0].mxu0 %v908
        %v2608 = vpop.f32.mrb[0].mxu0
        %v2609 = vadd.f32 %v590, %v2608
        %v2610 = vpop.f32.mrb[0].mxu0
        %v2611 = vpop.f32.mrb[0].mxu0
        %v2612 = vadd.f32 %v590, %v2611
        %v2613 = vpop.f32.mrb[0].mxu0
        %2614 = vmatprep.mubr.bf16.mxu0 0
        %2615 = vmatmul.mubr.bf16.gmra.mrb[0].mxu0 %v911
        %v2616 = vpop.f32.mrb[0].mxu0
        %v2617 = vadd.f32 %v590, %v2616
        %v2618 = vpop.f32.mrb[0].mxu0
        %v2619 = vpop.f32.mrb[0].mxu0
        %v2620 = vadd.f32 %v590, %v2619
        %v2621 = vpop.f32.mrb[0].mxu0
        %2622 = vmatprep.mubr.bf16.mxu0 0
        %2623 = vmatmul.mubr.bf16.gmra.mrb[0].mxu0 %v914
        %v2624 = vpop.f32.mrb[0].mxu0
        %v2625 = vadd.f32 %v590, %v2624
        %v2626 = vpop.f32.mrb[0].mxu0
        %v2627 = vpop.f32.mrb[0].mxu0
        %v2628 = vadd.f32 %v590, %v2627
        %v2629 = vpop.f32.mrb[0].mxu0
        %2630 = vmatprep.mubr.bf16.mxu0 0
        %2631 = vmatmul.mubr.bf16.gmra.mrb[0].mxu0 %v917
        %v2632 = vpop.f32.mrb[0].mxu0
        %v2633 = vadd.f32 %v590, %v2632
        %v2634 = vpop.f32.mrb[0].mxu0
        %v2635 = vpop.f32.mrb[0].mxu0
        %v2636 = vadd.f32 %v590, %v2635
        %v2637 = vpop.f32.mrb[0].mxu0
        %2638 = vmatprep.mubr.bf16.mxu0 0
        %2639 = vmatmul.mubr.bf16.gmra.mrb[0].mxu0 %v920
        %v2640 = vpop.f32.mrb[0].mxu0
        %v2641 = vadd.f32 %v590, %v2640
        %v2642 = vpop.f32.mrb[0].mxu0
        %v2643 = vpop.f32.mrb[0].mxu0
        %v2644 = vadd.f32 %v590, %v2643
        %v2645 = vpop.f32.mrb[0].mxu0
        %2646 = vmatprep.mubr.bf16.mxu0 0
        %2647 = vmatmul.mubr.bf16.gmra.mrb[0].mxu0 %v923
        %v2648 = vpop.f32.mrb[0].mxu0
        %v2649 = vadd.f32 %v590, %v2648
        %v2650 = vpop.f32.mrb[0].mxu0
        %v2651 = vpop.f32.mrb[0].mxu0
        %v2652 = vadd.f32 %v590, %v2651
        %v2653 = vpop.f32.mrb[0].mxu0
        %2654 = vmatprep.mubr.bf16.mxu0 0
        %2655 = vmatmul.mubr.bf16.gmra.mrb[0].mxu0 %v926
        %v2656 = vpop.f32.mrb[0].mxu0
        %v2657 = vadd.f32 %v590, %v2656
        %v2658 = vpop.f32.mrb[0].mxu0
        %v2659 = vpop.f32.mrb[0].mxu0
        %v2660 = vadd.f32 %v590, %v2659
        %v2661 = vpop.f32.mrb[0].mxu0
        %2662 = vmatprep.mubr.bf16.mxu0 0
        %2663 = vmatmul.mubr.bf16.gmra.mrb[0].mxu0 %v929
        %v2664 = vpop.f32.mrb[0].mxu0
        %v2665 = vadd.f32 %v590, %v2664
        %v2666 = vpop.f32.mrb[0].mxu0
        %v2667 = vpop.f32.mrb[0].mxu0
        %v2668 = vadd.f32 %v590, %v2667
        %v2669 = vpop.f32.mrb[0].mxu0
        %2670 = vmatprep.mubr.bf16.mxu0 0
        %2671 = vmatmul.mubr.bf16.gmra.mrb[0].mxu0 %v932
        %v2672 = vpop.f32.mrb[0].mxu0
        %v2673 = vadd.f32 %v590, %v2672
        %v2674 = vpop.f32.mrb[0].mxu0
        %v2675 = vpop.f32.mrb[0].mxu0
        %v2676 = vadd.f32 %v590, %v2675
        %v2677 = vpop.f32.mrb[0].mxu0
        %2678 = vmatprep.mubr.bf16.mxu0 0
        %2679 = vmatmul.mubr.bf16.gmra.mrb[0].mxu0 %v935
        %v2680 = vpop.f32.mrb[0].mxu0
        %v2681 = vadd.f32 %v590, %v2680
        %v2682 = vpop.f32.mrb[0].mxu0
        %v2683 = vpop.f32.mrb[0].mxu0
        %v2684 = vadd.f32 %v590, %v2683
        %v2685 = vpop.f32.mrb[0].mxu0
        %2686 = vmatprep.mubr.bf16.mxu0 0
        %2687 = vmatmul.mubr.bf16.gmra.mrb[0].mxu0 %v938
        %v2688 = vpop.f32.mrb[0].mxu0
        %v2689 = vadd.f32 %v590, %v2688
        %v2690 = vpop.f32.mrb[0].mxu0
        %v2691 = vpop.f32.mrb[0].mxu0
        %v2692 = vadd.f32 %v590, %v2691
        %v2693 = vpop.f32.mrb[0].mxu0
        %2694 = vmatprep.mubr.bf16.mxu0 0
        %2695 = vmatmul.mubr.bf16.gmra.mrb[0].mxu0 %v941
        %v2696 = vpop.f32.mrb[0].mxu0
        %v2697 = vadd.f32 %v590, %v2696
        %v2698 = vpop.f32.mrb[0].mxu0
        %v2699 = vpop.f32.mrb[0].mxu0
        %v2700 = vadd.f32 %v590, %v2699
        %v2701 = vpop.f32.mrb[0].mxu0
        %2702 = vmatprep.mubr.bf16.mxu0 0
        %2703 = vmatmul.mubr.bf16.gmra.mrb[0].mxu0 %v944
        %v2704 = vpop.f32.mrb[0].mxu0
        %v2705 = vadd.f32 %v590, %v2704
        %v2706 = vpop.f32.mrb[0].mxu0
        %v2707 = vpop.f32.mrb[0].mxu0
        %v2708 = vadd.f32 %v590, %v2707
        %v2709 = vpop.f32.mrb[0].mxu0
        %2710 = vmatprep.mubr.bf16.mxu0 0
        %2711 = vmatmul.mubr.bf16.gmra.mrb[0].mxu0 %v947
        %v2712 = vpop.f32.mrb[0].mxu0
        %v2713 = vadd.f32 %v590, %v2712
        %v2714 = vpop.f32.mrb[0].mxu0
        %v2715 = vpop.f32.mrb[0].mxu0
        %v2716 = vadd.f32 %v590, %v2715
        %v2717 = vpop.f32.mrb[0].mxu0
        %2718 = vmatprep.mubr.bf16.mxu0 0
        %2719 = vmatmul.mubr.bf16.gmra.mrb[0].mxu0 %v950
        %v2720 = vpop.f32.mrb[0].mxu0
        %v2721 = vadd.f32 %v590, %v2720
        %v2722 = vpop.f32.mrb[0].mxu0
        %v2723 = vpop.f32.mrb[0].mxu0
        %v2724 = vadd.f32 %v590, %v2723
        %v2725 = vpop.f32.mrb[0].mxu0
        %2726 = vmatprep.mubr.bf16.mxu0 0
        %2727 = vmatmul.mubr.bf16.gmra.mrb[0].mxu0 %v953
        %v2728 = vpop.f32.mrb[0].mxu0
        %v2729 = vadd.f32 %v590, %v2728
        %v2730 = vpop.f32.mrb[0].mxu0
        %v2731 = vpop.f32.mrb[0].mxu0
        %v2732 = vadd.f32 %v590, %v2731
        %v2733 = vpop.f32.mrb[0].mxu0
        %2734 = vmatprep.mubr.bf16.mxu0 0
        %2735 = vmatmul.mubr.bf16.gmra.mrb[0].mxu0 %v956
        %v2736 = vpop.f32.mrb[0].mxu0
        %v2737 = vadd.f32 %v590, %v2736
        %v2738 = vpop.f32.mrb[0].mxu0
        %v2739 = vpop.f32.mrb[0].mxu0
        %v2740 = vadd.f32 %v590, %v2739
        %v2741 = vpop.f32.mrb[0].mxu0
        %2742 = vmatprep.mubr.bf16.mxu0 0
        %2743 = vmatmul.mubr.bf16.gmra.mrb[0].mxu0 %v959
        %v2744 = vpop.f32.mrb[0].mxu0
        %v2745 = vadd.f32 %v590, %v2744
        %v2746 = vpop.f32.mrb[0].mxu0
        %v2747 = vpop.f32.mrb[0].mxu0
        %v2748 = vadd.f32 %v590, %v2747
        %v2749 = vpop.f32.mrb[0].mxu0
        %2750 = vmatprep.mubr.bf16.mxu0 0
        %2751 = vmatmul.mubr.bf16.gmra.mrb[0].mxu0 %v962
        %v2752 = vpop.f32.mrb[0].mxu0
        %v2753 = vadd.f32 %v590, %v2752
        %v2754 = vpop.f32.mrb[0].mxu0
        %v2755 = vpop.f32.mrb[0].mxu0
        %v2756 = vadd.f32 %v590, %v2755
        %v2757 = vpop.f32.mrb[0].mxu0
        %2758 = vmatprep.mubr.bf16.mxu0 0
        %2759 = vmatmul.mubr.bf16.gmra.mrb[0].mxu0 %v965
        %v2760 = vpop.f32.mrb[0].mxu0
        %v2761 = vadd.f32 %v590, %v2760
        %v2762 = vpop.f32.mrb[0].mxu0
        %v2763 = vpop.f32.mrb[0].mxu0
        %v2764 = vadd.f32 %v590, %v2763
        %v2765 = vpop.f32.mrb[0].mxu0
        %2766 = vmatprep.mubr.bf16.mxu0 0
        %2767 = vmatmul.mubr.bf16.gmra.mrb[0].mxu0 %v968
        %v2768 = vpop.f32.mrb[0].mxu0
        %v2769 = vadd.f32 %v590, %v2768
        %v2770 = vpop.f32.mrb[0].mxu0
        %v2771 = vpop.f32.mrb[0].mxu0
        %v2772 = vadd.f32 %v590, %v2771
        %v2773 = vpop.f32.mrb[0].mxu0
        %2774 = vmatprep.mubr.bf16.mxu0 0
        %2775 = vmatmul.mubr.bf16.gmra.mrb[0].mxu0 %v971
        %v2776 = vpop.f32.mrb[0].mxu0
        %v2777 = vadd.f32 %v590, %v2776
        %v2778 = vpop.f32.mrb[0].mxu0
        %v2779 = vpop.f32.mrb[0].mxu0
        %v2780 = vadd.f32 %v590, %v2779
        %v2781 = vpop.f32.mrb[0].mxu0
        %2782 = vmatprep.mubr.bf16.mxu0 0
        %2783 = vmatmul.mubr.bf16.gmra.mrb[0].mxu0 %v974
        %v2784 = vpop.f32.mrb[0].mxu0
        %v2785 = vadd.f32 %v590, %v2784
        %v2786 = vpop.f32.mrb[0].mxu0
        %v2787 = vpop.f32.mrb[0].mxu0
        %v2788 = vadd.f32 %v590, %v2787
        %v2789 = vpop.f32.mrb[0].mxu0
        %2790 = vmatprep.mubr.bf16.mxu0 0
        %2791 = vmatmul.mubr.bf16.gmra.mrb[0].mxu0 %v977
        %v2792 = vpop.f32.mrb[0].mxu0
        %v2793 = vadd.f32 %v590, %v2792
        %v2794 = vpop.f32.mrb[0].mxu0
        %v2795 = vpop.f32.mrb[0].mxu0
        %v2796 = vadd.f32 %v590, %v2795
        %v2797 = vpop.f32.mrb[0].mxu0
        %2798 = vmatprep.mubr.bf16.mxu0 0
        %2799 = vmatmul.mubr.bf16.gmra.mrb[0].mxu0 %v980
        %v2800 = vpop.f32.mrb[0].mxu0
        %v2801 = vadd.f32 %v590, %v2800
        %v2802 = vpop.f32.mrb[0].mxu0
        %v2803 = vpop.f32.mrb[0].mxu0
        %v2804 = vadd.f32 %v590, %v2803
        %v2805 = vpop.f32.mrb[0].mxu0
        %2806 = vmatprep.mubr.bf16.mxu0 0
        %2807 = vmatmul.mubr.bf16.gmra.mrb[0].mxu0 %v983
        %v2808 = vpop.f32.mrb[0].mxu0
        %v2809 = vadd.f32 %v590, %v2808
        %v2810 = vpop.f32.mrb[0].mxu0
        %v2811 = vpop.f32.mrb[0].mxu0
        %v2812 = vadd.f32 %v590, %v2811
        %v2813 = vpop.f32.mrb[0].mxu0
        %2814 = vdwg.mxu0
        %v2815 = vmul.f32 %v1020, 0.5
        %v2816 = vmul.f32 %v1022, 0.5
        %v2817 = vmul.f32 %v2033, 0.5
        %v2818 = vmul.f32 %v1024, 0.5
        %v2819 = vmul.f32 %v1026, 0.5
        %v2820 = vmul.f32 %v2036, 0.5
        %v2821 = vmul.f32 %v1030, 0.5
        %v2822 = vmul.f32 %v1032, 0.5
        %v2823 = vmul.f32 %v2041, 0.5
        %v2824 = vmul.f32 %v1034, 0.5
        %v2825 = vmul.f32 %v1036, 0.5
        %v2826 = vmul.f32 %v2044, 0.5
        %v2827 = vmul.f32 %v1040, 0.5
        %v2828 = vmul.f32 %v1042, 0.5
        %v2829 = vmul.f32 %v2049, 0.5
        %v2830 = vmul.f32 %v1044, 0.5
        %v2831 = vmul.f32 %v1046, 0.5
        %v2832 = vmul.f32 %v2052, 0.5
        %v2833 = vmul.f32 %v1050, 0.5
        %v2834 = vmul.f32 %v1052, 0.5
        %v2835 = vmul.f32 %v2057, 0.5
        %v2836 = vmul.f32 %v1054, 0.5
        %v2837 = vmul.f32 %v1056, 0.5
        %v2838 = vmul.f32 %v2060, 0.5
        %v2839 = vmul.f32 %v1060, 0.5
        %v2840 = vmul.f32 %v1062, 0.5
        %v2841 = vmul.f32 %v2065, 0.5
        %v2842 = vmul.f32 %v1064, 0.5
        %v2843 = vmul.f32 %v1066, 0.5
        %v2844 = vmul.f32 %v2068, 0.5
        %v2845 = vmul.f32 %v1070, 0.5
        %v2846 = vmul.f32 %v1072, 0.5
        %v2847 = vmul.f32 %v2073, 0.5
        %v2848 = vmul.f32 %v1074, 0.5
        %v2849 = vmul.f32 %v1076, 0.5
        %v2850 = vmul.f32 %v2076, 0.5
        %v2851 = vmul.f32 %v1080, 0.5
        %v2852 = vmul.f32 %v1082, 0.5
        %v2853 = vmul.f32 %v2081, 0.5
        %v2854 = vmul.f32 %v1084, 0.5
        %v2855 = vmul.f32 %v1086, 0.5
        %v2856 = vmul.f32 %v2084, 0.5
        %v2857 = vmul.f32 %v1090, 0.5
        %v2858 = vmul.f32 %v1092, 0.5
        %v2859 = vmul.f32 %v2089, 0.5
        %v2860 = vmul.f32 %v1094, 0.5
        %v2861 = vmul.f32 %v1096, 0.5
        %v2862 = vmul.f32 %v2092, 0.5
        %v2863 = vmul.f32 %v1100, 0.5
        %v2864 = vmul.f32 %v1102, 0.5
        %v2865 = vmul.f32 %v2097, 0.5
        %v2866 = vmul.f32 %v1104, 0.5
        %v2867 = vmul.f32 %v1106, 0.5
        %v2868 = vmul.f32 %v2100, 0.5
        %v2869 = vmul.f32 %v1110, 0.5
        %v2870 = vmul.f32 %v1112, 0.5
        %v2871 = vmul.f32 %v2105, 0.5
        %v2872 = vmul.f32 %v1114, 0.5
        %v2873 = vmul.f32 %v1116, 0.5
        %v2874 = vmul.f32 %v2108, 0.5
        %v2875 = vmul.f32 %v1120, 0.5
        %v2876 = vmul.f32 %v1122, 0.5
        %v2877 = vmul.f32 %v2113, 0.5
        %v2878 = vmul.f32 %v1124, 0.5
        %v2879 = vmul.f32 %v1126, 0.5
        %v2880 = vmul.f32 %v2116, 0.5
        %v2881 = vmul.f32 %v1130, 0.5
        %v2882 = vmul.f32 %v1132, 0.5
        %v2883 = vmul.f32 %v2121, 0.5
        %v2884 = vmul.f32 %v1134, 0.5
        %v2885 = vmul.f32 %v1136, 0.5
        %v2886 = vmul.f32 %v2124, 0.5
        %v2887 = vmul.f32 %v1140, 0.5
        %v2888 = vmul.f32 %v1142, 0.5
        %v2889 = vmul.f32 %v2129, 0.5
        %v2890 = vmul.f32 %v1144, 0.5
        %v2891 = vmul.f32 %v1146, 0.5
        %v2892 = vmul.f32 %v2132, 0.5
        %v2893 = vmul.f32 %v1150, 0.5
        %v2894 = vmul.f32 %v1152, 0.5
        %v2895 = vmul.f32 %v2137, 0.5
        %v2896 = vmul.f32 %v1154, 0.5
        %v2897 = vmul.f32 %v1156, 0.5
        %v2898 = vmul.f32 %v2140, 0.5
        %v2899 = vmul.f32 %v1160, 0.5
        %v2900 = vmul.f32 %v1162, 0.5
        %v2901 = vmul.f32 %v2145, 0.5
        %v2902 = vmul.f32 %v1164, 0.5
        %v2903 = vmul.f32 %v1166, 0.5
        %v2904 = vmul.f32 %v2148, 0.5
        %v2905 = vmul.f32 %v1170, 0.5
        %v2906 = vmul.f32 %v1172, 0.5
        %v2907 = vmul.f32 %v2153, 0.5
        %v2908 = vmul.f32 %v1174, 0.5
        %v2909 = vmul.f32 %v1176, 0.5
        %v2910 = vmul.f32 %v2156, 0.5
        %v2911 = vmul.f32 %v1180, 0.5
        %v2912 = vmul.f32 %v1182, 0.5
        %v2913 = vmul.f32 %v2161, 0.5
        %v2914 = vmul.f32 %v1184, 0.5
        %v2915 = vmul.f32 %v1186, 0.5
        %v2916 = vmul.f32 %v2164, 0.5
        %v2917 = vmul.f32 %v1190, 0.5
        %v2918 = vmul.f32 %v1192, 0.5
        %v2919 = vmul.f32 %v2169, 0.5
        %v2920 = vmul.f32 %v1194, 0.5
        %v2921 = vmul.f32 %v1196, 0.5
        %v2922 = vmul.f32 %v2172, 0.5
        %v2923 = vmul.f32 %v1200, 0.5
        %v2924 = vmul.f32 %v1202, 0.5
        %v2925 = vmul.f32 %v2177, 0.5
        %v2926 = vmul.f32 %v1204, 0.5
        %v2927 = vmul.f32 %v1206, 0.5
        %v2928 = vmul.f32 %v2180, 0.5
        %v2929 = vmul.f32 %v1210, 0.5
        %v2930 = vmul.f32 %v1212, 0.5
        %v2931 = vmul.f32 %v2185, 0.5
        %v2932 = vmul.f32 %v1214, 0.5
        %v2933 = vmul.f32 %v1216, 0.5
        %v2934 = vmul.f32 %v2188, 0.5
        %v2935 = vmul.f32 %v1220, 0.5
        %v2936 = vmul.f32 %v1222, 0.5
        %v2937 = vmul.f32 %v2193, 0.5
        %v2938 = vmul.f32 %v1224, 0.5
        %v2939 = vmul.f32 %v1226, 0.5
        %v2940 = vmul.f32 %v2196, 0.5
        %v2941 = vmul.f32 %v1230, 0.5
        %v2942 = vmul.f32 %v1232, 0.5
        %v2943 = vmul.f32 %v2201, 0.5
        %v2944 = vmul.f32 %v1234, 0.5
        %v2945 = vmul.f32 %v1236, 0.5
        %v2946 = vmul.f32 %v2204, 0.5
        %v2947 = vmul.f32 %v1240, 0.5
        %v2948 = vmul.f32 %v1242, 0.5
        %v2949 = vmul.f32 %v2209, 0.5
        %v2950 = vmul.f32 %v1244, 0.5
        %v2951 = vmul.f32 %v1246, 0.5
        %v2952 = vmul.f32 %v2212, 0.5
        %v2953 = vmul.f32 %v1250, 0.5
        %v2954 = vmul.f32 %v1252, 0.5
        %v2955 = vmul.f32 %v2217, 0.5
        %v2956 = vmul.f32 %v1254, 0.5
        %v2957 = vmul.f32 %v1256, 0.5
        %v2958 = vmul.f32 %v2220, 0.5
        %v2959 = vmul.f32 %v1260, 0.5
        %v2960 = vmul.f32 %v1262, 0.5
        %v2961 = vmul.f32 %v2225, 0.5
        %v2962 = vmul.f32 %v1264, 0.5
        %v2963 = vmul.f32 %v1266, 0.5
        %v2964 = vmul.f32 %v2228, 0.5
        %v2965 = vmul.f32 %v1270, 0.5
        %v2966 = vmul.f32 %v1272, 0.5
        %v2967 = vmul.f32 %v2233, 0.5
        %v2968 = vmul.f32 %v1274, 0.5
        %v2969 = vmul.f32 %v1276, 0.5
        %v2970 = vmul.f32 %v2236, 0.5
        %v2971 = vmul.f32 %v1280, 0.5
        %v2972 = vmul.f32 %v1282, 0.5
        %v2973 = vmul.f32 %v2241, 0.5
        %v2974 = vmul.f32 %v1284, 0.5
        %v2975 = vmul.f32 %v1286, 0.5
        %v2976 = vmul.f32 %v2244, 0.5
        %v2977 = vmul.f32 %v1290, 0.5
        %v2978 = vmul.f32 %v1292, 0.5
        %v2979 = vmul.f32 %v2249, 0.5
        %v2980 = vmul.f32 %v1294, 0.5
        %v2981 = vmul.f32 %v1296, 0.5
        %v2982 = vmul.f32 %v2252, 0.5
        %v2983 = vmul.f32 %v1300, 0.5
        %v2984 = vmul.f32 %v1302, 0.5
        %v2985 = vmul.f32 %v2257, 0.5
        %v2986 = vmul.f32 %v1304, 0.5
        %v2987 = vmul.f32 %v1306, 0.5
        %v2988 = vmul.f32 %v2260, 0.5
        %v2989 = vmul.f32 %v1310, 0.5
        %v2990 = vmul.f32 %v1312, 0.5
        %v2991 = vmul.f32 %v2265, 0.5
        %v2992 = vmul.f32 %v1314, 0.5
        %v2993 = vmul.f32 %v1316, 0.5
        %v2994 = vmul.f32 %v2268, 0.5
        %v2995 = vmul.f32 %v1320, 0.5
        %v2996 = vmul.f32 %v1322, 0.5
        %v2997 = vmul.f32 %v2273, 0.5
        %v2998 = vmul.f32 %v1324, 0.5
        %v2999 = vmul.f32 %v1326, 0.5
        %v3000 = vmul.f32 %v2276, 0.5
        %v3001 = vmul.f32 %v1330, 0.5
        %v3002 = vmul.f32 %v1332, 0.5
        %v3003 = vmul.f32 %v2281, 0.5
        %v3004 = vmul.f32 %v1334, 0.5
        %v3005 = vmul.f32 %v1336, 0.5
        %v3006 = vmul.f32 %v2284, 0.5
        %v3007 = vmul.f32 %v1340, 0.5
        %v3008 = vmul.f32 %v1342, 0.5
        %v3009 = vmul.f32 %v2289, 0.5
        %v3010 = vmul.f32 %v1344, 0.5
        %v3011 = vmul.f32 %v1346, 0.5
        %v3012 = vmul.f32 %v2292, 0.5
        %v3013 = vmul.f32 %v1350, 0.5
        %v3014 = vmul.f32 %v1352, 0.5
        %v3015 = vmul.f32 %v2297, 0.5
        %v3016 = vmul.f32 %v1354, 0.5
        %v3017 = vmul.f32 %v1356, 0.5
        %v3018 = vmul.f32 %v2300, 0.5
        %v3019 = vmul.f32 %v1360, 0.5
        %v3020 = vmul.f32 %v1362, 0.5
        %v3021 = vmul.f32 %v2305, 0.5
        %v3022 = vmul.f32 %v1364, 0.5
        %v3023 = vmul.f32 %v1366, 0.5
        %v3024 = vmul.f32 %v2308, 0.5
        %v3025 = vmul.f32 %v1370, 0.5
        %v3026 = vmul.f32 %v1372, 0.5
        %v3027 = vmul.f32 %v2313, 0.5
        %v3028 = vmul.f32 %v1374, 0.5
        %v3029 = vmul.f32 %v1376, 0.5
        %v3030 = vmul.f32 %v2316, 0.5
        %v3031 = vmul.f32 %v1380, 0.5
        %v3032 = vmul.f32 %v1382, 0.5
        %v3033 = vmul.f32 %v2321, 0.5
        %v3034 = vmul.f32 %v1384, 0.5
        %v3035 = vmul.f32 %v1386, 0.5
        %v3036 = vmul.f32 %v2324, 0.5
        %v3037 = vmul.f32 %v1390, 0.5
        %v3038 = vmul.f32 %v1392, 0.5
        %v3039 = vmul.f32 %v2329, 0.5
        %v3040 = vmul.f32 %v1394, 0.5
        %v3041 = vmul.f32 %v1396, 0.5
        %v3042 = vmul.f32 %v2332, 0.5
        %v3043 = vmul.f32 %v1400, 0.5
        %v3044 = vmul.f32 %v1402, 0.5
        %v3045 = vmul.f32 %v2337, 0.5
        %v3046 = vmul.f32 %v1404, 0.5
        %v3047 = vmul.f32 %v1406, 0.5
        %v3048 = vmul.f32 %v2340, 0.5
        %v3049 = vmul.f32 %v1410, 0.5
        %v3050 = vmul.f32 %v1412, 0.5
        %v3051 = vmul.f32 %v2345, 0.5
        %v3052 = vmul.f32 %v1414, 0.5
        %v3053 = vmul.f32 %v1416, 0.5
        %v3054 = vmul.f32 %v2348, 0.5
        %v3055 = vmul.f32 %v1420, 0.5
        %v3056 = vmul.f32 %v1422, 0.5
        %v3057 = vmul.f32 %v2353, 0.5
        %v3058 = vmul.f32 %v1424, 0.5
        %v3059 = vmul.f32 %v1426, 0.5
        %v3060 = vmul.f32 %v2356, 0.5
        %v3061 = vmul.f32 %v1430, 0.5
        %v3062 = vmul.f32 %v1432, 0.5
        %v3063 = vmul.f32 %v2361, 0.5
        %v3064 = vmul.f32 %v1434, 0.5
        %v3065 = vmul.f32 %v1436, 0.5
        %v3066 = vmul.f32 %v2364, 0.5
        %v3067 = vmul.f32 %v1440, 0.5
        %v3068 = vmul.f32 %v1442, 0.5
        %v3069 = vmul.f32 %v2369, 0.5
        %v3070 = vmul.f32 %v1444, 0.5
        %v3071 = vmul.f32 %v1446, 0.5
        %v3072 = vmul.f32 %v2372, 0.5
        %v3073 = vmul.f32 %v1450, 0.5
        %v3074 = vmul.f32 %v1452, 0.5
        %v3075 = vmul.f32 %v2377, 0.5
        %v3076 = vmul.f32 %v1454, 0.5
        %v3077 = vmul.f32 %v1456, 0.5
        %v3078 = vmul.f32 %v2380, 0.5
        %v3079 = vmul.f32 %v1460, 0.5
        %v3080 = vmul.f32 %v1462, 0.5
        %v3081 = vmul.f32 %v2385, 0.5
        %v3082 = vmul.f32 %v1464, 0.5
        %v3083 = vmul.f32 %v1466, 0.5
        %v3084 = vmul.f32 %v2388, 0.5
        %v3085 = vmul.f32 %v1470, 0.5
        %v3086 = vmul.f32 %v1472, 0.5
        %v3087 = vmul.f32 %v2393, 0.5
        %v3088 = vmul.f32 %v1474, 0.5
        %v3089 = vmul.f32 %v1476, 0.5
        %v3090 = vmul.f32 %v2396, 0.5
        %v3091 = vmul.f32 %v1480, 0.5
        %v3092 = vmul.f32 %v1482, 0.5
        %v3093 = vmul.f32 %v2401, 0.5
        %v3094 = vmul.f32 %v1484, 0.5
        %v3095 = vmul.f32 %v1486, 0.5
        %v3096 = vmul.f32 %v2404, 0.5
        %v3097 = vmul.f32 %v1490, 0.5
        %v3098 = vmul.f32 %v1492, 0.5
        %v3099 = vmul.f32 %v2409, 0.5
        %v3100 = vmul.f32 %v1494, 0.5
        %v3101 = vmul.f32 %v1496, 0.5
        %v3102 = vmul.f32 %v2412, 0.5
        %v3103 = vmul.f32 %v1500, 0.5
        %v3104 = vmul.f32 %v1502, 0.5
        %v3105 = vmul.f32 %v2417, 0.5
        %v3106 = vmul.f32 %v1504, 0.5
        %v3107 = vmul.f32 %v1506, 0.5
        %v3108 = vmul.f32 %v2420, 0.5
        %v3109 = vmul.f32 %v1510, 0.5
        %v3110 = vmul.f32 %v1512, 0.5
        %v3111 = vmul.f32 %v2425, 0.5
        %v3112 = vmul.f32 %v1514, 0.5
        %v3113 = vmul.f32 %v1516, 0.5
        %v3114 = vmul.f32 %v2428, 0.5
        %v3115 = vmul.f32 %v1520, 0.5
        %v3116 = vmul.f32 %v1522, 0.5
        %v3117 = vmul.f32 %v2433, 0.5
        %v3118 = vmul.f32 %v1524, 0.5
        %v3119 = vmul.f32 %v1526, 0.5
        %v3120 = vmul.f32 %v2436, 0.5
        %v3121 = vmul.f32 %v1530, 0.5
        %v3122 = vmul.f32 %v1532, 0.5
        %v3123 = vmul.f32 %v2441, 0.5
        %v3124 = vmul.f32 %v1534, 0.5
        %v3125 = vmul.f32 %v1536, 0.5
        %v3126 = vmul.f32 %v2444, 0.5
        %v3127 = vmul.f32 %v1540, 0.5
        %v3128 = vmul.f32 %v1542, 0.5
        %v3129 = vmul.f32 %v2449, 0.5
        %v3130 = vmul.f32 %v1544, 0.5
        %v3131 = vmul.f32 %v1546, 0.5
        %v3132 = vmul.f32 %v2452, 0.5
        %v3133 = vmul.f32 %v1550, 0.5
        %v3134 = vmul.f32 %v1552, 0.5
        %v3135 = vmul.f32 %v2457, 0.5
        %v3136 = vmul.f32 %v1554, 0.5
        %v3137 = vmul.f32 %v1556, 0.5
        %v3138 = vmul.f32 %v2460, 0.5
        %v3139 = vmul.f32 %v1560, 0.5
        %v3140 = vmul.f32 %v1562, 0.5
        %v3141 = vmul.f32 %v2465, 0.5
        %v3142 = vmul.f32 %v1564, 0.5
        %v3143 = vmul.f32 %v1566, 0.5
        %v3144 = vmul.f32 %v2468, 0.5
        %v3145 = vmul.f32 %v1570, 0.5
        %v3146 = vmul.f32 %v1572, 0.5
        %v3147 = vmul.f32 %v2473, 0.5
        %v3148 = vmul.f32 %v1574, 0.5
        %v3149 = vmul.f32 %v1576, 0.5
        %v3150 = vmul.f32 %v2476, 0.5
        %v3151 = vmul.f32 %v1580, 0.5
        %v3152 = vmul.f32 %v1582, 0.5
        %v3153 = vmul.f32 %v2481, 0.5
        %v3154 = vmul.f32 %v1584, 0.5
        %v3155 = vmul.f32 %v1586, 0.5
        %v3156 = vmul.f32 %v2484, 0.5
        %v3157 = vmul.f32 %v1590, 0.5
        %v3158 = vmul.f32 %v1592, 0.5
        %v3159 = vmul.f32 %v2489, 0.5
        %v3160 = vmul.f32 %v1594, 0.5
        %v3161 = vmul.f32 %v1596, 0.5
        %v3162 = vmul.f32 %v2492, 0.5
        %v3163 = vmul.f32 %v1600, 0.5
        %v3164 = vmul.f32 %v1602, 0.5
        %v3165 = vmul.f32 %v2497, 0.5
        %v3166 = vmul.f32 %v1604, 0.5
        %v3167 = vmul.f32 %v1606, 0.5
        %v3168 = vmul.f32 %v2500, 0.5
        %v3169 = vmul.f32 %v1610, 0.5
        %v3170 = vmul.f32 %v1612, 0.5
        %v3171 = vmul.f32 %v2505, 0.5
        %v3172 = vmul.f32 %v1614, 0.5
        %v3173 = vmul.f32 %v1616, 0.5
        %v3174 = vmul.f32 %v2508, 0.5
        %v3175 = vmul.f32 %v1620, 0.5
        %v3176 = vmul.f32 %v1622, 0.5
        %v3177 = vmul.f32 %v2513, 0.5
        %v3178 = vmul.f32 %v1624, 0.5
        %v3179 = vmul.f32 %v1626, 0.5
        %v3180 = vmul.f32 %v2516, 0.5
        %v3181 = vmul.f32 %v1630, 0.5
        %v3182 = vmul.f32 %v1632, 0.5
        %v3183 = vmul.f32 %v2521, 0.5
        %v3184 = vmul.f32 %v1634, 0.5
        %v3185 = vmul.f32 %v1636, 0.5
        %v3186 = vmul.f32 %v2524, 0.5
        %v3187 = vmul.f32 %v1640, 0.5
        %v3188 = vmul.f32 %v1642, 0.5
        %v3189 = vmul.f32 %v2529, 0.5
        %v3190 = vmul.f32 %v1644, 0.5
        %v3191 = vmul.f32 %v1646, 0.5
        %v3192 = vmul.f32 %v2532, 0.5
        %v3193 = vmul.f32 %v1650, 0.5
        %v3194 = vmul.f32 %v1652, 0.5
        %v3195 = vmul.f32 %v2537, 0.5
        %v3196 = vmul.f32 %v1654, 0.5
        %v3197 = vmul.f32 %v1656, 0.5
        %v3198 = vmul.f32 %v2540, 0.5
        %v3199 = vmul.f32 %v1660, 0.5
        %v3200 = vmul.f32 %v1662, 0.5
        %v3201 = vmul.f32 %v2545, 0.5
        %v3202 = vmul.f32 %v1664, 0.5
        %v3203 = vmul.f32 %v1666, 0.5
        %v3204 = vmul.f32 %v2548, 0.5
        %v3205 = vmul.f32 %v1670, 0.5
        %v3206 = vmul.f32 %v1672, 0.5
        %v3207 = vmul.f32 %v2553, 0.5
        %v3208 = vmul.f32 %v1674, 0.5
        %v3209 = vmul.f32 %v1676, 0.5
        %v3210 = vmul.f32 %v2556, 0.5
        %v3211 = vmul.f32 %v1680, 0.5
        %v3212 = vmul.f32 %v1682, 0.5
        %v3213 = vmul.f32 %v2561, 0.5
        %v3214 = vmul.f32 %v1684, 0.5
        %v3215 = vmul.f32 %v1686, 0.5
        %v3216 = vmul.f32 %v2564, 0.5
        %v3217 = vmul.f32 %v1690, 0.5
        %v3218 = vmul.f32 %v1692, 0.5
        %v3219 = vmul.f32 %v2569, 0.5
        %v3220 = vmul.f32 %v1694, 0.5
        %v3221 = vmul.f32 %v1696, 0.5
        %v3222 = vmul.f32 %v2572, 0.5
        %v3223 = vmul.f32 %v1700, 0.5
        %v3224 = vmul.f32 %v1702, 0.5
        %v3225 = vmul.f32 %v2577, 0.5
        %v3226 = vmul.f32 %v1704, 0.5
        %v3227 = vmul.f32 %v1706, 0.5
        %v3228 = vmul.f32 %v2580, 0.5
        %v3229 = vmul.f32 %v1710, 0.5
        %v3230 = vmul.f32 %v1712, 0.5
        %v3231 = vmul.f32 %v2585, 0.5
        %v3232 = vmul.f32 %v1714, 0.5
        %v3233 = vmul.f32 %v1716, 0.5
        %v3234 = vmul.f32 %v2588, 0.5
        %v3235 = vmul.f32 %v1720, 0.5
        %v3236 = vmul.f32 %v1722, 0.5
        %v3237 = vmul.f32 %v2593, 0.5
        %v3238 = vmul.f32 %v1724, 0.5
        %v3239 = vmul.f32 %v1726, 0.5
        %v3240 = vmul.f32 %v2596, 0.5
        %v3241 = vmul.f32 %v1730, 0.5
        %v3242 = vmul.f32 %v1732, 0.5
        %v3243 = vmul.f32 %v2601, 0.5
        %v3244 = vmul.f32 %v1734, 0.5
        %v3245 = vmul.f32 %v1736, 0.5
        %v3246 = vmul.f32 %v2604, 0.5
        %v3247 = vmul.f32 %v1740, 0.5
        %v3248 = vmul.f32 %v1742, 0.5
        %v3249 = vmul.f32 %v2609, 0.5
        %v3250 = vmul.f32 %v1744, 0.5
        %v3251 = vmul.f32 %v1746, 0.5
        %v3252 = vmul.f32 %v2612, 0.5
        %v3253 = vmul.f32 %v1750, 0.5
        %v3254 = vmul.f32 %v1752, 0.5
        %v3255 = vmul.f32 %v2617, 0.5
        %v3256 = vmul.f32 %v1754, 0.5
        %v3257 = vmul.f32 %v1756, 0.5
        %v3258 = vmul.f32 %v2620, 0.5
        %v3259 = vmul.f32 %v1760, 0.5
        %v3260 = vmul.f32 %v1762, 0.5
        %v3261 = vmul.f32 %v2625, 0.5
        %v3262 = vmul.f32 %v1764, 0.5
        %v3263 = vmul.f32 %v1766, 0.5
        %v3264 = vmul.f32 %v2628, 0.5
        %v3265 = vmul.f32 %v1770, 0.5
        %v3266 = vmul.f32 %v1772, 0.5
        %v3267 = vmul.f32 %v2633, 0.5
        %v3268 = vmul.f32 %v1774, 0.5
        %v3269 = vmul.f32 %v1776, 0.5
        %v3270 = vmul.f32 %v2636, 0.5
        %v3271 = vmul.f32 %v1780, 0.5
        %v3272 = vmul.f32 %v1782, 0.5
        %v3273 = vmul.f32 %v2641, 0.5
        %v3274 = vmul.f32 %v1784, 0.5
        %v3275 = vmul.f32 %v1786, 0.5
        %v3276 = vmul.f32 %v2644, 0.5
        %v3277 = vmul.f32 %v1790, 0.5
        %v3278 = vmul.f32 %v1792, 0.5
        %v3279 = vmul.f32 %v2649, 0.5
        %v3280 = vmul.f32 %v1794, 0.5
        %v3281 = vmul.f32 %v1796, 0.5
        %v3282 = vmul.f32 %v2652, 0.5
        %v3283 = vmul.f32 %v1800, 0.5
        %v3284 = vmul.f32 %v1802, 0.5
        %v3285 = vmul.f32 %v2657, 0.5
        %v3286 = vmul.f32 %v1804, 0.5
        %v3287 = vmul.f32 %v1806, 0.5
        %v3288 = vmul.f32 %v2660, 0.5
        %v3289 = vmul.f32 %v1810, 0.5
        %v3290 = vmul.f32 %v1812, 0.5
        %v3291 = vmul.f32 %v2665, 0.5
        %v3292 = vmul.f32 %v1814, 0.5
        %v3293 = vmul.f32 %v1816, 0.5
        %v3294 = vmul.f32 %v2668, 0.5
        %v3295 = vmul.f32 %v1820, 0.5
        %v3296 = vmul.f32 %v1822, 0.5
        %v3297 = vmul.f32 %v2673, 0.5
        %v3298 = vmul.f32 %v1824, 0.5
        %v3299 = vmul.f32 %v1826, 0.5
        %v3300 = vmul.f32 %v2676, 0.5
        %v3301 = vmul.f32 %v1830, 0.5
        %v3302 = vmul.f32 %v1832, 0.5
        %v3303 = vmul.f32 %v2681, 0.5
        %v3304 = vmul.f32 %v1834, 0.5
        %v3305 = vmul.f32 %v1836, 0.5
        %v3306 = vmul.f32 %v2684, 0.5
        %v3307 = vmul.f32 %v1840, 0.5
        %v3308 = vmul.f32 %v1842, 0.5
        %v3309 = vmul.f32 %v2689, 0.5
        %v3310 = vmul.f32 %v1844, 0.5
        %v3311 = vmul.f32 %v1846, 0.5
        %v3312 = vmul.f32 %v2692, 0.5
        %v3313 = vmul.f32 %v1850, 0.5
        %v3314 = vmul.f32 %v1852, 0.5
        %v3315 = vmul.f32 %v2697, 0.5
        %v3316 = vmul.f32 %v1854, 0.5
        %v3317 = vmul.f32 %v1856, 0.5
        %v3318 = vmul.f32 %v2700, 0.5
        %v3319 = vmul.f32 %v1860, 0.5
        %v3320 = vmul.f32 %v1862, 0.5
        %v3321 = vmul.f32 %v2705, 0.5
        %v3322 = vmul.f32 %v1864, 0.5
        %v3323 = vmul.f32 %v1866, 0.5
        %v3324 = vmul.f32 %v2708, 0.5
        %v3325 = vmul.f32 %v1870, 0.5
        %v3326 = vmul.f32 %v1872, 0.5
        %v3327 = vmul.f32 %v2713, 0.5
        %v3328 = vmul.f32 %v1874, 0.5
        %v3329 = vmul.f32 %v1876, 0.5
        %v3330 = vmul.f32 %v2716, 0.5
        %v3331 = vmul.f32 %v1880, 0.5
        %v3332 = vmul.f32 %v1882, 0.5
        %v3333 = vmul.f32 %v2721, 0.5
        %v3334 = vmul.f32 %v1884, 0.5
        %v3335 = vmul.f32 %v1886, 0.5
        %v3336 = vmul.f32 %v2724, 0.5
        %v3337 = vmul.f32 %v1890, 0.5
        %v3338 = vmul.f32 %v1892, 0.5
        %v3339 = vmul.f32 %v2729, 0.5
        %v3340 = vmul.f32 %v1894, 0.5
        %v3341 = vmul.f32 %v1896, 0.5
        %v3342 = vmul.f32 %v2732, 0.5
        %v3343 = vmul.f32 %v1900, 0.5
        %v3344 = vmul.f32 %v1902, 0.5
        %v3345 = vmul.f32 %v2737, 0.5
        %v3346 = vmul.f32 %v1904, 0.5
        %v3347 = vmul.f32 %v1906, 0.5
        %v3348 = vmul.f32 %v2740, 0.5
        %v3349 = vmul.f32 %v1910, 0.5
        %v3350 = vmul.f32 %v1912, 0.5
        %v3351 = vmul.f32 %v2745, 0.5
        %v3352 = vmul.f32 %v1914, 0.5
        %v3353 = vmul.f32 %v1916, 0.5
        %v3354 = vmul.f32 %v2748, 0.5
        %v3355 = vmul.f32 %v1920, 0.5
        %v3356 = vmul.f32 %v1922, 0.5
        %v3357 = vmul.f32 %v2753, 0.5
        %v3358 = vmul.f32 %v1924, 0.5
        %v3359 = vmul.f32 %v1926, 0.5
        %v3360 = vmul.f32 %v2756, 0.5
        %v3361 = vmul.f32 %v1930, 0.5
        %v3362 = vmul.f32 %v1932, 0.5
        %v3363 = vmul.f32 %v2761, 0.5
        %v3364 = vmul.f32 %v1934, 0.5
        %v3365 = vmul.f32 %v1936, 0.5
        %v3366 = vmul.f32 %v2764, 0.5
        %v3367 = vmul.f32 %v1940, 0.5
        %v3368 = vmul.f32 %v1942, 0.5
        %v3369 = vmul.f32 %v2769, 0.5
        %v3370 = vmul.f32 %v1944, 0.5
        %v3371 = vmul.f32 %v1946, 0.5
        %v3372 = vmul.f32 %v2772, 0.5
        %v3373 = vmul.f32 %v1950, 0.5
        %v3374 = vmul.f32 %v1952, 0.5
        %v3375 = vmul.f32 %v2777, 0.5
        %v3376 = vmul.f32 %v1954, 0.5
        %v3377 = vmul.f32 %v1956, 0.5
        %v3378 = vmul.f32 %v2780, 0.5
        %v3379 = vmul.f32 %v1960, 0.5
        %v3380 = vmul.f32 %v1962, 0.5
        %v3381 = vmul.f32 %v2785, 0.5
        %v3382 = vmul.f32 %v1964, 0.5
        %v3383 = vmul.f32 %v1966, 0.5
        %v3384 = vmul.f32 %v2788, 0.5
        %v3385 = vmul.f32 %v1970, 0.5
        %v3386 = vmul.f32 %v1972, 0.5
        %v3387 = vmul.f32 %v2793, 0.5
        %v3388 = vmul.f32 %v1974, 0.5
        %v3389 = vmul.f32 %v1976, 0.5
        %v3390 = vmul.f32 %v2796, 0.5
        %v3391 = vmul.f32 %v1980, 0.5
        %v3392 = vmul.f32 %v1982, 0.5
        %v3393 = vmul.f32 %v2801, 0.5
        %v3394 = vmul.f32 %v1984, 0.5
        %v3395 = vmul.f32 %v1986, 0.5
        %v3396 = vmul.f32 %v2804, 0.5
        %v3397 = vmul.f32 %v1990, 0.5
        %v3398 = vmul.f32 %v1992, 0.5
        %v3399 = vmul.f32 %v2809, 0.5
        %v3400 = vmul.f32 %v1994, 0.5
        %v3401 = vmul.f32 %v1996, 0.5
        %v3402 = vmul.f32 %v2812, 0.5
        %v3403 = vmul.f32 %v1020, 0.70710677
        %v3404 = vmul.f32 %v1022, 0.70710677
        %v3405 = vmul.f32 %v2033, 0.70710677
        %v3406 = vmul.f32 %v1024, 0.70710677
        %v3407 = vmul.f32 %v1026, 0.70710677
        %v3408 = vmul.f32 %v2036, 0.70710677
        %v3409 = vmul.f32 %v1030, 0.70710677
        %v3410 = vmul.f32 %v1032, 0.70710677
        %v3411 = vmul.f32 %v2041, 0.70710677
        %v3412 = vmul.f32 %v1034, 0.70710677
        %v3413 = vmul.f32 %v1036, 0.70710677
        %v3414 = vmul.f32 %v2044, 0.70710677
        %v3415 = vmul.f32 %v1040, 0.70710677
        %v3416 = vmul.f32 %v1042, 0.70710677
        %v3417 = vmul.f32 %v2049, 0.70710677
        %v3418 = vmul.f32 %v1044, 0.70710677
        %v3419 = vmul.f32 %v1046, 0.70710677
        %v3420 = vmul.f32 %v2052, 0.70710677
        %v3421 = vmul.f32 %v1050, 0.70710677
        %v3422 = vmul.f32 %v1052, 0.70710677
        %v3423 = vmul.f32 %v2057, 0.70710677
        %v3424 = vmul.f32 %v1054, 0.70710677
        %v3425 = vmul.f32 %v1056, 0.70710677
        %v3426 = vmul.f32 %v2060, 0.70710677
        %v3427 = vmul.f32 %v1060, 0.70710677
        %v3428 = vmul.f32 %v1062, 0.70710677
        %v3429 = vmul.f32 %v2065, 0.70710677
        %v3430 = vmul.f32 %v1064, 0.70710677
        %v3431 = vmul.f32 %v1066, 0.70710677
        %v3432 = vmul.f32 %v2068, 0.70710677
        %v3433 = vmul.f32 %v1070, 0.70710677
        %v3434 = vmul.f32 %v1072, 0.70710677
        %v3435 = vmul.f32 %v2073, 0.70710677
        %v3436 = vmul.f32 %v1074, 0.70710677
        %v3437 = vmul.f32 %v1076, 0.70710677
        %v3438 = vmul.f32 %v2076, 0.70710677
        %v3439 = vmul.f32 %v1080, 0.70710677
        %v3440 = vmul.f32 %v1082, 0.70710677
        %v3441 = vmul.f32 %v2081, 0.70710677
        %v3442 = vmul.f32 %v1084, 0.70710677
        %v3443 = vmul.f32 %v1086, 0.70710677
        %v3444 = vmul.f32 %v2084, 0.70710677
        %v3445 = vmul.f32 %v1090, 0.70710677
        %v3446 = vmul.f32 %v1092, 0.70710677
        %v3447 = vmul.f32 %v2089, 0.70710677
        %v3448 = vmul.f32 %v1094, 0.70710677
        %v3449 = vmul.f32 %v1096, 0.70710677
        %v3450 = vmul.f32 %v2092, 0.70710677
        %v3451 = vmul.f32 %v1100, 0.70710677
        %v3452 = vmul.f32 %v1102, 0.70710677
        %v3453 = vmul.f32 %v2097, 0.70710677
        %v3454 = vmul.f32 %v1104, 0.70710677
        %v3455 = vmul.f32 %v1106, 0.70710677
        %v3456 = vmul.f32 %v2100, 0.70710677
        %v3457 = vmul.f32 %v1110, 0.70710677
        %v3458 = vmul.f32 %v1112, 0.70710677
        %v3459 = vmul.f32 %v2105, 0.70710677
        %v3460 = vmul.f32 %v1114, 0.70710677
        %v3461 = vmul.f32 %v1116, 0.70710677
        %v3462 = vmul.f32 %v2108, 0.70710677
        %v3463 = vmul.f32 %v1120, 0.70710677
        %v3464 = vmul.f32 %v1122, 0.70710677
        %v3465 = vmul.f32 %v2113, 0.70710677
        %v3466 = vmul.f32 %v1124, 0.70710677
        %v3467 = vmul.f32 %v1126, 0.70710677
        %v3468 = vmul.f32 %v2116, 0.70710677
        %v3469 = vmul.f32 %v1130, 0.70710677
        %v3470 = vmul.f32 %v1132, 0.70710677
        %v3471 = vmul.f32 %v2121, 0.70710677
        %v3472 = vmul.f32 %v1134, 0.70710677
        %v3473 = vmul.f32 %v1136, 0.70710677
        %v3474 = vmul.f32 %v2124, 0.70710677
        %v3475 = vmul.f32 %v1140, 0.70710677
        %v3476 = vmul.f32 %v1142, 0.70710677
        %v3477 = vmul.f32 %v2129, 0.70710677
        %v3478 = vmul.f32 %v1144, 0.70710677
        %v3479 = vmul.f32 %v1146, 0.70710677
        %v3480 = vmul.f32 %v2132, 0.70710677
        %v3481 = vmul.f32 %v1150, 0.70710677
        %v3482 = vmul.f32 %v1152, 0.70710677
        %v3483 = vmul.f32 %v2137, 0.70710677
        %v3484 = vmul.f32 %v1154, 0.70710677
        %v3485 = vmul.f32 %v1156, 0.70710677
        %v3486 = vmul.f32 %v2140, 0.70710677
        %v3487 = vmul.f32 %v1160, 0.70710677
        %v3488 = vmul.f32 %v1162, 0.70710677
        %v3489 = vmul.f32 %v2145, 0.70710677
        %v3490 = vmul.f32 %v1164, 0.70710677
        %v3491 = vmul.f32 %v1166, 0.70710677
        %v3492 = vmul.f32 %v2148, 0.70710677
        %v3493 = vmul.f32 %v1170, 0.70710677
        %v3494 = vmul.f32 %v1172, 0.70710677
        %v3495 = vmul.f32 %v2153, 0.70710677
        %v3496 = vmul.f32 %v1174, 0.70710677
        %v3497 = vmul.f32 %v1176, 0.70710677
        %v3498 = vmul.f32 %v2156, 0.70710677
        %v3499 = vmul.f32 %v1180, 0.70710677
        %v3500 = vmul.f32 %v1182, 0.70710677
        %v3501 = vmul.f32 %v2161, 0.70710677
        %v3502 = vmul.f32 %v1184, 0.70710677
        %v3503 = vmul.f32 %v1186, 0.70710677
        %v3504 = vmul.f32 %v2164, 0.70710677
        %v3505 = vmul.f32 %v1190, 0.70710677
        %v3506 = vmul.f32 %v1192, 0.70710677
        %v3507 = vmul.f32 %v2169, 0.70710677
        %v3508 = vmul.f32 %v1194, 0.70710677
        %v3509 = vmul.f32 %v1196, 0.70710677
        %v3510 = vmul.f32 %v2172, 0.70710677
        %v3511 = vmul.f32 %v1200, 0.70710677
        %v3512 = vmul.f32 %v1202, 0.70710677
        %v3513 = vmul.f32 %v2177, 0.70710677
        %v3514 = vmul.f32 %v1204, 0.70710677
        %v3515 = vmul.f32 %v1206, 0.70710677
        %v3516 = vmul.f32 %v2180, 0.70710677
        %v3517 = vmul.f32 %v1210, 0.70710677
        %v3518 = vmul.f32 %v1212, 0.70710677
        %v3519 = vmul.f32 %v2185, 0.70710677
        %v3520 = vmul.f32 %v1214, 0.70710677
        %v3521 = vmul.f32 %v1216, 0.70710677
        %v3522 = vmul.f32 %v2188, 0.70710677
        %v3523 = vmul.f32 %v1220, 0.70710677
        %v3524 = vmul.f32 %v1222, 0.70710677
        %v3525 = vmul.f32 %v2193, 0.70710677
        %v3526 = vmul.f32 %v1224, 0.70710677
        %v3527 = vmul.f32 %v1226, 0.70710677
        %v3528 = vmul.f32 %v2196, 0.70710677
        %v3529 = vmul.f32 %v1230, 0.70710677
        %v3530 = vmul.f32 %v1232, 0.70710677
        %v3531 = vmul.f32 %v2201, 0.70710677
        %v3532 = vmul.f32 %v1234, 0.70710677
        %v3533 = vmul.f32 %v1236, 0.70710677
        %v3534 = vmul.f32 %v2204, 0.70710677
        %v3535 = vmul.f32 %v1240, 0.70710677
        %v3536 = vmul.f32 %v1242, 0.70710677
        %v3537 = vmul.f32 %v2209, 0.70710677
        %v3538 = vmul.f32 %v1244, 0.70710677
        %v3539 = vmul.f32 %v1246, 0.70710677
        %v3540 = vmul.f32 %v2212, 0.70710677
        %v3541 = vmul.f32 %v1250, 0.70710677
        %v3542 = vmul.f32 %v1252, 0.70710677
        %v3543 = vmul.f32 %v2217, 0.70710677
        %v3544 = vmul.f32 %v1254, 0.70710677
        %v3545 = vmul.f32 %v1256, 0.70710677
        %v3546 = vmul.f32 %v2220, 0.70710677
        %v3547 = vmul.f32 %v1260, 0.70710677
        %v3548 = vmul.f32 %v1262, 0.70710677
        %v3549 = vmul.f32 %v2225, 0.70710677
        %v3550 = vmul.f32 %v1264, 0.70710677
        %v3551 = vmul.f32 %v1266, 0.70710677
        %v3552 = vmul.f32 %v2228, 0.70710677
        %v3553 = vmul.f32 %v1270, 0.70710677
        %v3554 = vmul.f32 %v1272, 0.70710677
        %v3555 = vmul.f32 %v2233, 0.70710677
        %v3556 = vmul.f32 %v1274, 0.70710677
        %v3557 = vmul.f32 %v1276, 0.70710677
        %v3558 = vmul.f32 %v2236, 0.70710677
        %v3559 = vmul.f32 %v1280, 0.70710677
        %v3560 = vmul.f32 %v1282, 0.70710677
        %v3561 = vmul.f32 %v2241, 0.70710677
        %v3562 = vmul.f32 %v1284, 0.70710677
        %v3563 = vmul.f32 %v1286, 0.70710677
        %v3564 = vmul.f32 %v2244, 0.70710677
        %v3565 = vmul.f32 %v1290, 0.70710677
        %v3566 = vmul.f32 %v1292, 0.70710677
        %v3567 = vmul.f32 %v2249, 0.70710677
        %v3568 = vmul.f32 %v1294, 0.70710677
        %v3569 = vmul.f32 %v1296, 0.70710677
        %v3570 = vmul.f32 %v2252, 0.70710677
        %v3571 = vmul.f32 %v1300, 0.70710677
        %v3572 = vmul.f32 %v1302, 0.70710677
        %v3573 = vmul.f32 %v2257, 0.70710677
        %v3574 = vmul.f32 %v1304, 0.70710677
        %v3575 = vmul.f32 %v1306, 0.70710677
        %v3576 = vmul.f32 %v2260, 0.70710677
        %v3577 = vmul.f32 %v1310, 0.70710677
        %v3578 = vmul.f32 %v1312, 0.70710677
        %v3579 = vmul.f32 %v2265, 0.70710677
        %v3580 = vmul.f32 %v1314, 0.70710677
        %v3581 = vmul.f32 %v1316, 0.70710677
        %v3582 = vmul.f32 %v2268, 0.70710677
        %v3583 = vmul.f32 %v1320, 0.70710677
        %v3584 = vmul.f32 %v1322, 0.70710677
        %v3585 = vmul.f32 %v2273, 0.70710677
        %v3586 = vmul.f32 %v1324, 0.70710677
        %v3587 = vmul.f32 %v1326, 0.70710677
        %v3588 = vmul.f32 %v2276, 0.70710677
        %v3589 = vmul.f32 %v1330, 0.70710677
        %v3590 = vmul.f32 %v1332, 0.70710677
        %v3591 = vmul.f32 %v2281, 0.70710677
        %v3592 = vmul.f32 %v1334, 0.70710677
        %v3593 = vmul.f32 %v1336, 0.70710677
        %v3594 = vmul.f32 %v2284, 0.70710677
        %v3595 = vmul.f32 %v1340, 0.70710677
        %v3596 = vmul.f32 %v1342, 0.70710677
        %v3597 = vmul.f32 %v2289, 0.70710677
        %v3598 = vmul.f32 %v1344, 0.70710677
        %v3599 = vmul.f32 %v1346, 0.70710677
        %v3600 = vmul.f32 %v2292, 0.70710677
        %v3601 = vmul.f32 %v1350, 0.70710677
        %v3602 = vmul.f32 %v1352, 0.70710677
        %v3603 = vmul.f32 %v2297, 0.70710677
        %v3604 = vmul.f32 %v1354, 0.70710677
        %v3605 = vmul.f32 %v1356, 0.70710677
        %v3606 = vmul.f32 %v2300, 0.70710677
        %v3607 = vmul.f32 %v1360, 0.70710677
        %v3608 = vmul.f32 %v1362, 0.70710677
        %v3609 = vmul.f32 %v2305, 0.70710677
        %v3610 = vmul.f32 %v1364, 0.70710677
        %v3611 = vmul.f32 %v1366, 0.70710677
        %v3612 = vmul.f32 %v2308, 0.70710677
        %v3613 = vmul.f32 %v1370, 0.70710677
        %v3614 = vmul.f32 %v1372, 0.70710677
        %v3615 = vmul.f32 %v2313, 0.70710677
        %v3616 = vmul.f32 %v1374, 0.70710677
        %v3617 = vmul.f32 %v1376, 0.70710677
        %v3618 = vmul.f32 %v2316, 0.70710677
        %v3619 = vmul.f32 %v1380, 0.70710677
        %v3620 = vmul.f32 %v1382, 0.70710677
        %v3621 = vmul.f32 %v2321, 0.70710677
        %v3622 = vmul.f32 %v1384, 0.70710677
        %v3623 = vmul.f32 %v1386, 0.70710677
        %v3624 = vmul.f32 %v2324, 0.70710677
        %v3625 = vmul.f32 %v1390, 0.70710677
        %v3626 = vmul.f32 %v1392, 0.70710677
        %v3627 = vmul.f32 %v2329, 0.70710677
        %v3628 = vmul.f32 %v1394, 0.70710677
        %v3629 = vmul.f32 %v1396, 0.70710677
        %v3630 = vmul.f32 %v2332, 0.70710677
        %v3631 = vmul.f32 %v1400, 0.70710677
        %v3632 = vmul.f32 %v1402, 0.70710677
        %v3633 = vmul.f32 %v2337, 0.70710677
        %v3634 = vmul.f32 %v1404, 0.70710677
        %v3635 = vmul.f32 %v1406, 0.70710677
        %v3636 = vmul.f32 %v2340, 0.70710677
        %v3637 = vmul.f32 %v1410, 0.70710677
        %v3638 = vmul.f32 %v1412, 0.70710677
        %v3639 = vmul.f32 %v2345, 0.70710677
        %v3640 = vmul.f32 %v1414, 0.70710677
        %v3641 = vmul.f32 %v1416, 0.70710677
        %v3642 = vmul.f32 %v2348, 0.70710677
        %v3643 = vmul.f32 %v1420, 0.70710677
        %v3644 = vmul.f32 %v1422, 0.70710677
        %v3645 = vmul.f32 %v2353, 0.70710677
        %v3646 = vmul.f32 %v1424, 0.70710677
        %v3647 = vmul.f32 %v1426, 0.70710677
        %v3648 = vmul.f32 %v2356, 0.70710677
        %v3649 = vmul.f32 %v1430, 0.70710677
        %v3650 = vmul.f32 %v1432, 0.70710677
        %v3651 = vmul.f32 %v2361, 0.70710677
        %v3652 = vmul.f32 %v1434, 0.70710677
        %v3653 = vmul.f32 %v1436, 0.70710677
        %v3654 = vmul.f32 %v2364, 0.70710677
        %v3655 = vmul.f32 %v1440, 0.70710677
        %v3656 = vmul.f32 %v1442, 0.70710677
        %v3657 = vmul.f32 %v2369, 0.70710677
        %v3658 = vmul.f32 %v1444, 0.70710677
        %v3659 = vmul.f32 %v1446, 0.70710677
        %v3660 = vmul.f32 %v2372, 0.70710677
        %v3661 = vmul.f32 %v1450, 0.70710677
        %v3662 = vmul.f32 %v1452, 0.70710677
        %v3663 = vmul.f32 %v2377, 0.70710677
        %v3664 = vmul.f32 %v1454, 0.70710677
        %v3665 = vmul.f32 %v1456, 0.70710677
        %v3666 = vmul.f32 %v2380, 0.70710677
        %v3667 = vmul.f32 %v1460, 0.70710677
        %v3668 = vmul.f32 %v1462, 0.70710677
        %v3669 = vmul.f32 %v2385, 0.70710677
        %v3670 = vmul.f32 %v1464, 0.70710677
        %v3671 = vmul.f32 %v1466, 0.70710677
        %v3672 = vmul.f32 %v2388, 0.70710677
        %v3673 = vmul.f32 %v1470, 0.70710677
        %v3674 = vmul.f32 %v1472, 0.70710677
        %v3675 = vmul.f32 %v2393, 0.70710677
        %v3676 = vmul.f32 %v1474, 0.70710677
        %v3677 = vmul.f32 %v1476, 0.70710677
        %v3678 = vmul.f32 %v2396, 0.70710677
        %v3679 = vmul.f32 %v1480, 0.70710677
        %v3680 = vmul.f32 %v1482, 0.70710677
        %v3681 = vmul.f32 %v2401, 0.70710677
        %v3682 = vmul.f32 %v1484, 0.70710677
        %v3683 = vmul.f32 %v1486, 0.70710677
        %v3684 = vmul.f32 %v2404, 0.70710677
        %v3685 = vmul.f32 %v1490, 0.70710677
        %v3686 = vmul.f32 %v1492, 0.70710677
        %v3687 = vmul.f32 %v2409, 0.70710677
        %v3688 = vmul.f32 %v1494, 0.70710677
        %v3689 = vmul.f32 %v1496, 0.70710677
        %v3690 = vmul.f32 %v2412, 0.70710677
        %v3691 = vmul.f32 %v1500, 0.70710677
        %v3692 = vmul.f32 %v1502, 0.70710677
        %v3693 = vmul.f32 %v2417, 0.70710677
        %v3694 = vmul.f32 %v1504, 0.70710677
        %v3695 = vmul.f32 %v1506, 0.70710677
        %v3696 = vmul.f32 %v2420, 0.70710677
        %v3697 = vmul.f32 %v1510, 0.70710677
        %v3698 = vmul.f32 %v1512, 0.70710677
        %v3699 = vmul.f32 %v2425, 0.70710677
        %v3700 = vmul.f32 %v1514, 0.70710677
        %v3701 = vmul.f32 %v1516, 0.70710677
        %v3702 = vmul.f32 %v2428, 0.70710677
        %v3703 = vmul.f32 %v1520, 0.70710677
        %v3704 = vmul.f32 %v1522, 0.70710677
        %v3705 = vmul.f32 %v2433, 0.70710677
        %v3706 = vmul.f32 %v1524, 0.70710677
        %v3707 = vmul.f32 %v1526, 0.70710677
        %v3708 = vmul.f32 %v2436, 0.70710677
        %v3709 = vmul.f32 %v1530, 0.70710677
        %v3710 = vmul.f32 %v1532, 0.70710677
        %v3711 = vmul.f32 %v2441, 0.70710677
        %v3712 = vmul.f32 %v1534, 0.70710677
        %v3713 = vmul.f32 %v1536, 0.70710677
        %v3714 = vmul.f32 %v2444, 0.70710677
        %v3715 = vmul.f32 %v1540, 0.70710677
        %v3716 = vmul.f32 %v1542, 0.70710677
        %v3717 = vmul.f32 %v2449, 0.70710677
        %v3718 = vmul.f32 %v1544, 0.70710677
        %v3719 = vmul.f32 %v1546, 0.70710677
        %v3720 = vmul.f32 %v2452, 0.70710677
        %v3721 = vmul.f32 %v1550, 0.70710677
        %v3722 = vmul.f32 %v1552, 0.70710677
        %v3723 = vmul.f32 %v2457, 0.70710677
        %v3724 = vmul.f32 %v1554, 0.70710677
        %v3725 = vmul.f32 %v1556, 0.70710677
        %v3726 = vmul.f32 %v2460, 0.70710677
        %v3727 = vmul.f32 %v1560, 0.70710677
        %v3728 = vmul.f32 %v1562, 0.70710677
        %v3729 = vmul.f32 %v2465, 0.70710677
        %v3730 = vmul.f32 %v1564, 0.70710677
        %v3731 = vmul.f32 %v1566, 0.70710677
        %v3732 = vmul.f32 %v2468, 0.70710677
        %v3733 = vmul.f32 %v1570, 0.70710677
        %v3734 = vmul.f32 %v1572, 0.70710677
        %v3735 = vmul.f32 %v2473, 0.70710677
        %v3736 = vmul.f32 %v1574, 0.70710677
        %v3737 = vmul.f32 %v1576, 0.70710677
        %v3738 = vmul.f32 %v2476, 0.70710677
        %v3739 = vmul.f32 %v1580, 0.70710677
        %v3740 = vmul.f32 %v1582, 0.70710677
        %v3741 = vmul.f32 %v2481, 0.70710677
        %v3742 = vmul.f32 %v1584, 0.70710677
        %v3743 = vmul.f32 %v1586, 0.70710677
        %v3744 = vmul.f32 %v2484, 0.70710677
        %v3745 = vmul.f32 %v1590, 0.70710677
        %v3746 = vmul.f32 %v1592, 0.70710677
        %v3747 = vmul.f32 %v2489, 0.70710677
        %v3748 = vmul.f32 %v1594, 0.70710677
        %v3749 = vmul.f32 %v1596, 0.70710677
        %v3750 = vmul.f32 %v2492, 0.70710677
        %v3751 = vmul.f32 %v1600, 0.70710677
        %v3752 = vmul.f32 %v1602, 0.70710677
        %v3753 = vmul.f32 %v2497, 0.70710677
        %v3754 = vmul.f32 %v1604, 0.70710677
        %v3755 = vmul.f32 %v1606, 0.70710677
        %v3756 = vmul.f32 %v2500, 0.70710677
        %v3757 = vmul.f32 %v1610, 0.70710677
        %v3758 = vmul.f32 %v1612, 0.70710677
        %v3759 = vmul.f32 %v2505, 0.70710677
        %v3760 = vmul.f32 %v1614, 0.70710677
        %v3761 = vmul.f32 %v1616, 0.70710677
        %v3762 = vmul.f32 %v2508, 0.70710677
        %v3763 = vmul.f32 %v1620, 0.70710677
        %v3764 = vmul.f32 %v1622, 0.70710677
        %v3765 = vmul.f32 %v2513, 0.70710677
        %v3766 = vmul.f32 %v1624, 0.70710677
        %v3767 = vmul.f32 %v1626, 0.70710677
        %v3768 = vmul.f32 %v2516, 0.70710677
        %v3769 = vmul.f32 %v1630, 0.70710677
        %v3770 = vmul.f32 %v1632, 0.70710677
        %v3771 = vmul.f32 %v2521, 0.70710677
        %v3772 = vmul.f32 %v1634, 0.70710677
        %v3773 = vmul.f32 %v1636, 0.70710677
        %v3774 = vmul.f32 %v2524, 0.70710677
        %v3775 = vmul.f32 %v1640, 0.70710677
        %v3776 = vmul.f32 %v1642, 0.70710677
        %v3777 = vmul.f32 %v2529, 0.70710677
        %v3778 = vmul.f32 %v1644, 0.70710677
        %v3779 = vmul.f32 %v1646, 0.70710677
        %v3780 = vmul.f32 %v2532, 0.70710677
        %v3781 = vmul.f32 %v1650, 0.70710677
        %v3782 = vmul.f32 %v1652, 0.70710677
        %v3783 = vmul.f32 %v2537, 0.70710677
        %v3784 = vmul.f32 %v1654, 0.70710677
        %v3785 = vmul.f32 %v1656, 0.70710677
        %v3786 = vmul.f32 %v2540, 0.70710677
        %v3787 = vmul.f32 %v1660, 0.70710677
        %v3788 = vmul.f32 %v1662, 0.70710677
        %v3789 = vmul.f32 %v2545, 0.70710677
        %v3790 = vmul.f32 %v1664, 0.70710677
        %v3791 = vmul.f32 %v1666, 0.70710677
        %v3792 = vmul.f32 %v2548, 0.70710677
        %v3793 = vmul.f32 %v1670, 0.70710677
        %v3794 = vmul.f32 %v1672, 0.70710677
        %v3795 = vmul.f32 %v2553, 0.70710677
        %v3796 = vmul.f32 %v1674, 0.70710677
        %v3797 = vmul.f32 %v1676, 0.70710677
        %v3798 = vmul.f32 %v2556, 0.70710677
        %v3799 = vmul.f32 %v1680, 0.70710677
        %v3800 = vmul.f32 %v1682, 0.70710677
        %v3801 = vmul.f32 %v2561, 0.70710677
        %v3802 = vmul.f32 %v1684, 0.70710677
        %v3803 = vmul.f32 %v1686, 0.70710677
        %v3804 = vmul.f32 %v2564, 0.70710677
        %v3805 = vmul.f32 %v1690, 0.70710677
        %v3806 = vmul.f32 %v1692, 0.70710677
        %v3807 = vmul.f32 %v2569, 0.70710677
        %v3808 = vmul.f32 %v1694, 0.70710677
        %v3809 = vmul.f32 %v1696, 0.70710677
        %v3810 = vmul.f32 %v2572, 0.70710677
        %v3811 = vmul.f32 %v1700, 0.70710677
        %v3812 = vmul.f32 %v1702, 0.70710677
        %v3813 = vmul.f32 %v2577, 0.70710677
        %v3814 = vmul.f32 %v1704, 0.70710677
        %v3815 = vmul.f32 %v1706, 0.70710677
        %v3816 = vmul.f32 %v2580, 0.70710677
        %v3817 = vmul.f32 %v1710, 0.70710677
        %v3818 = vmul.f32 %v1712, 0.70710677
        %v3819 = vmul.f32 %v2585, 0.70710677
        %v3820 = vmul.f32 %v1714, 0.70710677
        %v3821 = vmul.f32 %v1716, 0.70710677
        %v3822 = vmul.f32 %v2588, 0.70710677
        %v3823 = vmul.f32 %v1720, 0.70710677
        %v3824 = vmul.f32 %v1722, 0.70710677
        %v3825 = vmul.f32 %v2593, 0.70710677
        %v3826 = vmul.f32 %v1724, 0.70710677
        %v3827 = vmul.f32 %v1726, 0.70710677
        %v3828 = vmul.f32 %v2596, 0.70710677
        %v3829 = vmul.f32 %v1730, 0.70710677
        %v3830 = vmul.f32 %v1732, 0.70710677
        %v3831 = vmul.f32 %v2601, 0.70710677
        %v3832 = vmul.f32 %v1734, 0.70710677
        %v3833 = vmul.f32 %v1736, 0.70710677
        %v3834 = vmul.f32 %v2604, 0.70710677
        %v3835 = vmul.f32 %v1740, 0.70710677
        %v3836 = vmul.f32 %v1742, 0.70710677
        %v3837 = vmul.f32 %v2609, 0.70710677
        %v3838 = vmul.f32 %v1744, 0.70710677
        %v3839 = vmul.f32 %v1746, 0.70710677
        %v3840 = vmul.f32 %v2612, 0.70710677
        %v3841 = vmul.f32 %v1750, 0.70710677
        %v3842 = vmul.f32 %v1752, 0.70710677
        %v3843 = vmul.f32 %v2617, 0.70710677
        %v3844 = vmul.f32 %v1754, 0.70710677
        %v3845 = vmul.f32 %v1756, 0.70710677
        %v3846 = vmul.f32 %v2620, 0.70710677
        %v3847 = vmul.f32 %v1760, 0.70710677
        %v3848 = vmul.f32 %v1762, 0.70710677
        %v3849 = vmul.f32 %v2625, 0.70710677
        %v3850 = vmul.f32 %v1764, 0.70710677
        %v3851 = vmul.f32 %v1766, 0.70710677
        %v3852 = vmul.f32 %v2628, 0.70710677
        %v3853 = vmul.f32 %v1770, 0.70710677
        %v3854 = vmul.f32 %v1772, 0.70710677
        %v3855 = vmul.f32 %v2633, 0.70710677
        %v3856 = vmul.f32 %v1774, 0.70710677
        %v3857 = vmul.f32 %v1776, 0.70710677
        %v3858 = vmul.f32 %v2636, 0.70710677
        %v3859 = vmul.f32 %v1780, 0.70710677
        %v3860 = vmul.f32 %v1782, 0.70710677
        %v3861 = vmul.f32 %v2641, 0.70710677
        %v3862 = vmul.f32 %v1784, 0.70710677
        %v3863 = vmul.f32 %v1786, 0.70710677
        %v3864 = vmul.f32 %v2644, 0.70710677
        %v3865 = vmul.f32 %v1790, 0.70710677
        %v3866 = vmul.f32 %v1792, 0.70710677
        %v3867 = vmul.f32 %v2649, 0.70710677
        %v3868 = vmul.f32 %v1794, 0.70710677
        %v3869 = vmul.f32 %v1796, 0.70710677
        %v3870 = vmul.f32 %v2652, 0.70710677
        %v3871 = vmul.f32 %v1800, 0.70710677
        %v3872 = vmul.f32 %v1802, 0.70710677
        %v3873 = vmul.f32 %v2657, 0.70710677
        %v3874 = vmul.f32 %v1804, 0.70710677
        %v3875 = vmul.f32 %v1806, 0.70710677
        %v3876 = vmul.f32 %v2660, 0.70710677
        %v3877 = vmul.f32 %v1810, 0.70710677
        %v3878 = vmul.f32 %v1812, 0.70710677
        %v3879 = vmul.f32 %v2665, 0.70710677
        %v3880 = vmul.f32 %v1814, 0.70710677
        %v3881 = vmul.f32 %v1816, 0.70710677
        %v3882 = vmul.f32 %v2668, 0.70710677
        %v3883 = vmul.f32 %v1820, 0.70710677
        %v3884 = vmul.f32 %v1822, 0.70710677
        %v3885 = vmul.f32 %v2673, 0.70710677
        %v3886 = vmul.f32 %v1824, 0.70710677
        %v3887 = vmul.f32 %v1826, 0.70710677
        %v3888 = vmul.f32 %v2676, 0.70710677
        %v3889 = vmul.f32 %v1830, 0.70710677
        %v3890 = vmul.f32 %v1832, 0.70710677
        %v3891 = vmul.f32 %v2681, 0.70710677
        %v3892 = vmul.f32 %v1834, 0.70710677
        %v3893 = vmul.f32 %v1836, 0.70710677
        %v3894 = vmul.f32 %v2684, 0.70710677
        %v3895 = vmul.f32 %v1840, 0.70710677
        %v3896 = vmul.f32 %v1842, 0.70710677
        %v3897 = vmul.f32 %v2689, 0.70710677
        %v3898 = vmul.f32 %v1844, 0.70710677
        %v3899 = vmul.f32 %v1846, 0.70710677
        %v3900 = vmul.f32 %v2692, 0.70710677
        %v3901 = vmul.f32 %v1850, 0.70710677
        %v3902 = vmul.f32 %v1852, 0.70710677
        %v3903 = vmul.f32 %v2697, 0.70710677
        %v3904 = vmul.f32 %v1854, 0.70710677
        %v3905 = vmul.f32 %v1856, 0.70710677
        %v3906 = vmul.f32 %v2700, 0.70710677
        %v3907 = vmul.f32 %v1860, 0.70710677
        %v3908 = vmul.f32 %v1862, 0.70710677
        %v3909 = vmul.f32 %v2705, 0.70710677
        %v3910 = vmul.f32 %v1864, 0.70710677
        %v3911 = vmul.f32 %v1866, 0.70710677
        %v3912 = vmul.f32 %v2708, 0.70710677
        %v3913 = vmul.f32 %v1870, 0.70710677
        %v3914 = vmul.f32 %v1872, 0.70710677
        %v3915 = vmul.f32 %v2713, 0.70710677
        %v3916 = vmul.f32 %v1874, 0.70710677
        %v3917 = vmul.f32 %v1876, 0.70710677
        %v3918 = vmul.f32 %v2716, 0.70710677
        %v3919 = vmul.f32 %v1880, 0.70710677
        %v3920 = vmul.f32 %v1882, 0.70710677
        %v3921 = vmul.f32 %v2721, 0.70710677
        %v3922 = vmul.f32 %v1884, 0.70710677
        %v3923 = vmul.f32 %v1886, 0.70710677
        %v3924 = vmul.f32 %v2724, 0.70710677
        %v3925 = vmul.f32 %v1890, 0.70710677
        %v3926 = vmul.f32 %v1892, 0.70710677
        %v3927 = vmul.f32 %v2729, 0.70710677
        %v3928 = vmul.f32 %v1894, 0.70710677
        %v3929 = vmul.f32 %v1896, 0.70710677
        %v3930 = vmul.f32 %v2732, 0.70710677
        %v3931 = vmul.f32 %v1900, 0.70710677
        %v3932 = vmul.f32 %v1902, 0.70710677
        %v3933 = vmul.f32 %v2737, 0.70710677
        %v3934 = vmul.f32 %v1904, 0.70710677
        %v3935 = vmul.f32 %v1906, 0.70710677
        %v3936 = vmul.f32 %v2740, 0.70710677
        %v3937 = vmul.f32 %v1910, 0.70710677
        %v3938 = vmul.f32 %v1912, 0.70710677
        %v3939 = vmul.f32 %v2745, 0.70710677
        %v3940 = vmul.f32 %v1914, 0.70710677
        %v3941 = vmul.f32 %v1916, 0.70710677
        %v3942 = vmul.f32 %v2748, 0.70710677
        %v3943 = vmul.f32 %v1920, 0.70710677
        %v3944 = vmul.f32 %v1922, 0.70710677
        %v3945 = vmul.f32 %v2753, 0.70710677
        %v3946 = vmul.f32 %v1924, 0.70710677
        %v3947 = vmul.f32 %v1926, 0.70710677
        %v3948 = vmul.f32 %v2756, 0.70710677
        %v3949 = vmul.f32 %v1930, 0.70710677
        %v3950 = vmul.f32 %v1932, 0.70710677
        %v3951 = vmul.f32 %v2761, 0.70710677
        %v3952 = vmul.f32 %v1934, 0.70710677
        %v3953 = vmul.f32 %v1936, 0.70710677
        %v3954 = vmul.f32 %v2764, 0.70710677
        %v3955 = vmul.f32 %v1940, 0.70710677
        %v3956 = vmul.f32 %v1942, 0.70710677
        %v3957 = vmul.f32 %v2769, 0.70710677
        %v3958 = vmul.f32 %v1944, 0.70710677
        %v3959 = vmul.f32 %v1946, 0.70710677
        %v3960 = vmul.f32 %v2772, 0.70710677
        %v3961 = vmul.f32 %v1950, 0.70710677
        %v3962 = vmul.f32 %v1952, 0.70710677
        %v3963 = vmul.f32 %v2777, 0.70710677
        %v3964 = vmul.f32 %v1954, 0.70710677
        %v3965 = vmul.f32 %v1956, 0.70710677
        %v3966 = vmul.f32 %v2780, 0.70710677
        %v3967 = vmul.f32 %v1960, 0.70710677
        %v3968 = vmul.f32 %v1962, 0.70710677
        %v3969 = vmul.f32 %v2785, 0.70710677
        %v3970 = vmul.f32 %v1964, 0.70710677
        %v3971 = vmul.f32 %v1966, 0.70710677
        %v3972 = vmul.f32 %v2788, 0.70710677
        %v3973 = vmul.f32 %v1970, 0.70710677
        %v3974 = vmul.f32 %v1972, 0.70710677
        %v3975 = vmul.f32 %v2793, 0.70710677
        %v3976 = vmul.f32 %v1974, 0.70710677
        %v3977 = vmul.f32 %v1976, 0.70710677
        %v3978 = vmul.f32 %v2796, 0.70710677
        %v3979 = vmul.f32 %v1980, 0.70710677
        %v3980 = vmul.f32 %v1982, 0.70710677
        %v3981 = vmul.f32 %v2801, 0.70710677
        %v3982 = vmul.f32 %v1984, 0.70710677
        %v3983 = vmul.f32 %v1986, 0.70710677
        %v3984 = vmul.f32 %v2804, 0.70710677
        %v3985 = vmul.f32 %v1990, 0.70710677
        %v3986 = vmul.f32 %v1992, 0.70710677
        %v3987 = vmul.f32 %v2809, 0.70710677
        %v3988 = vmul.f32 %v1994, 0.70710677
        %v3989 = vmul.f32 %v1996, 0.70710677
        %v3990 = vmul.f32 %v2812, 0.70710677
        %v3991 = verf.f32.pop %v3403
        %v3992 = verf.f32.pop %v3404
        %v3993 = verf.f32.pop %v3405
        %v3994 = verf.f32.pop %v3406
        %v3995 = verf.f32.pop %v3407
        %v3996 = verf.f32.pop %v3408
        %v3997 = verf.f32.pop %v3409
        %v3998 = verf.f32.pop %v3410
        %v3999 = verf.f32.pop %v3411
        %v4000 = verf.f32.pop %v3412
        %v4001 = verf.f32.pop %v3413
        %v4002 = verf.f32.pop %v3414
        %v4003 = verf.f32.pop %v3415
        %v4004 = verf.f32.pop %v3416
        %v4005 = verf.f32.pop %v3417
        %v4006 = verf.f32.pop %v3418
        %v4007 = verf.f32.pop %v3419
        %v4008 = verf.f32.pop %v3420
        %v4009 = verf.f32.pop %v3421
        %v4010 = verf.f32.pop %v3422
        %v4011 = verf.f32.pop %v3423
        %v4012 = verf.f32.pop %v3424
        %v4013 = verf.f32.pop %v3425
        %v4014 = verf.f32.pop %v3426
        %v4015 = verf.f32.pop %v3427
        %v4016 = verf.f32.pop %v3428
        %v4017 = verf.f32.pop %v3429
        %v4018 = verf.f32.pop %v3430
        %v4019 = verf.f32.pop %v3431
        %v4020 = verf.f32.pop %v3432
        %v4021 = verf.f32.pop %v3433
        %v4022 = verf.f32.pop %v3434
        %v4023 = verf.f32.pop %v3435
        %v4024 = verf.f32.pop %v3436
        %v4025 = verf.f32.pop %v3437
        %v4026 = verf.f32.pop %v3438
        %v4027 = verf.f32.pop %v3439
        %v4028 = verf.f32.pop %v3440
        %v4029 = verf.f32.pop %v3441
        %v4030 = verf.f32.pop %v3442
        %v4031 = verf.f32.pop %v3443
        %v4032 = verf.f32.pop %v3444
        %v4033 = verf.f32.pop %v3445
        %v4034 = verf.f32.pop %v3446
        %v4035 = verf.f32.pop %v3447
        %v4036 = verf.f32.pop %v3448
        %v4037 = verf.f32.pop %v3449
        %v4038 = verf.f32.pop %v3450
        %v4039 = verf.f32.pop %v3451
        %v4040 = verf.f32.pop %v3452
        %v4041 = verf.f32.pop %v3453
        %v4042 = verf.f32.pop %v3454
        %v4043 = verf.f32.pop %v3455
        %v4044 = verf.f32.pop %v3456
        %v4045 = verf.f32.pop %v3457
        %v4046 = verf.f32.pop %v3458
        %v4047 = verf.f32.pop %v3459
        %v4048 = verf.f32.pop %v3460
        %v4049 = verf.f32.pop %v3461
        %v4050 = verf.f32.pop %v3462
        %v4051 = verf.f32.pop %v3463
        %v4052 = verf.f32.pop %v3464
        %v4053 = verf.f32.pop %v3465
        %v4054 = verf.f32.pop %v3466
        %v4055 = verf.f32.pop %v3467
        %v4056 = verf.f32.pop %v3468
        %v4057 = verf.f32.pop %v3469
        %v4058 = verf.f32.pop %v3470
        %v4059 = verf.f32.pop %v3471
        %v4060 = verf.f32.pop %v3472
        %v4061 = verf.f32.pop %v3473
        %v4062 = verf.f32.pop %v3474
        %v4063 = verf.f32.pop %v3475
        %v4064 = verf.f32.pop %v3476
        %v4065 = verf.f32.pop %v3477
        %v4066 = verf.f32.pop %v3478
        %v4067 = verf.f32.pop %v3479
        %v4068 = verf.f32.pop %v3480
        %v4069 = verf.f32.pop %v3481
        %v4070 = verf.f32.pop %v3482
        %v4071 = verf.f32.pop %v3483
        %v4072 = verf.f32.pop %v3484
        %v4073 = verf.f32.pop %v3485
        %v4074 = verf.f32.pop %v3486
        %v4075 = verf.f32.pop %v3487
        %v4076 = verf.f32.pop %v3488
        %v4077 = verf.f32.pop %v3489
        %v4078 = verf.f32.pop %v3490
        %v4079 = verf.f32.pop %v3491
        %v4080 = verf.f32.pop %v3492
        %v4081 = verf.f32.pop %v3493
        %v4082 = verf.f32.pop %v3494
        %v4083 = verf.f32.pop %v3495
        %v4084 = verf.f32.pop %v3496
        %v4085 = verf.f32.pop %v3497
        %v4086 = verf.f32.pop %v3498
        %v4087 = verf.f32.pop %v3499
        %v4088 = verf.f32.pop %v3500
        %v4089 = verf.f32.pop %v3501
        %v4090 = verf.f32.pop %v3502
        %v4091 = verf.f32.pop %v3503
        %v4092 = verf.f32.pop %v3504
        %v4093 = verf.f32.pop %v3505
        %v4094 = verf.f32.pop %v3506
        %v4095 = verf.f32.pop %v3507
        %v4096 = verf.f32.pop %v3508
        %v4097 = verf.f32.pop %v3509
        %v4098 = verf.f32.pop %v3510
        %v4099 = verf.f32.pop %v3511
        %v4100 = verf.f32.pop %v3512
        %v4101 = verf.f32.pop %v3513
        %v4102 = verf.f32.pop %v3514
        %v4103 = verf.f32.pop %v3515
        %v4104 = verf.f32.pop %v3516
        %v4105 = verf.f32.pop %v3517
        %v4106 = verf.f32.pop %v3518
        %v4107 = verf.f32.pop %v3519
        %v4108 = verf.f32.pop %v3520
        %v4109 = verf.f32.pop %v3521
        %v4110 = verf.f32.pop %v3522
        %v4111 = verf.f32.pop %v3523
        %v4112 = verf.f32.pop %v3524
        %v4113 = verf.f32.pop %v3525
        %v4114 = verf.f32.pop %v3526
        %v4115 = verf.f32.pop %v3527
        %v4116 = verf.f32.pop %v3528
        %v4117 = verf.f32.pop %v3529
        %v4118 = verf.f32.pop %v3530
        %v4119 = verf.f32.pop %v3531
        %v4120 = verf.f32.pop %v3532
        %v4121 = verf.f32.pop %v3533
        %v4122 = verf.f32.pop %v3534
        %v4123 = verf.f32.pop %v3535
        %v4124 = verf.f32.pop %v3536
        %v4125 = verf.f32.pop %v3537
        %v4126 = verf.f32.pop %v3538
        %v4127 = verf.f32.pop %v3539
        %v4128 = verf.f32.pop %v3540
        %v4129 = verf.f32.pop %v3541
        %v4130 = verf.f32.pop %v3542
        %v4131 = verf.f32.pop %v3543
        %v4132 = verf.f32.pop %v3544
        %v4133 = verf.f32.pop %v3545
        %v4134 = verf.f32.pop %v3546
        %v4135 = verf.f32.pop %v3547
        %v4136 = verf.f32.pop %v3548
        %v4137 = verf.f32.pop %v3549
        %v4138 = verf.f32.pop %v3550
        %v4139 = verf.f32.pop %v3551
        %v4140 = verf.f32.pop %v3552
        %v4141 = verf.f32.pop %v3553
        %v4142 = verf.f32.pop %v3554
        %v4143 = verf.f32.pop %v3555
        %v4144 = verf.f32.pop %v3556
        %v4145 = verf.f32.pop %v3557
        %v4146 = verf.f32.pop %v3558
        %v4147 = verf.f32.pop %v3559
        %v4148 = verf.f32.pop %v3560
        %v4149 = verf.f32.pop %v3561
        %v4150 = verf.f32.pop %v3562
        %v4151 = verf.f32.pop %v3563
        %v4152 = verf.f32.pop %v3564
        %v4153 = verf.f32.pop %v3565
        %v4154 = verf.f32.pop %v3566
        %v4155 = verf.f32.pop %v3567
        %v4156 = verf.f32.pop %v3568
        %v4157 = verf.f32.pop %v3569
        %v4158 = verf.f32.pop %v3570
        %v4159 = verf.f32.pop %v3571
        %v4160 = verf.f32.pop %v3572
        %v4161 = verf.f32.pop %v3573
        %v4162 = verf.f32.pop %v3574
        %v4163 = verf.f32.pop %v3575
        %v4164 = verf.f32.pop %v3576
        %v4165 = verf.f32.pop %v3577
        %v4166 = verf.f32.pop %v3578
        %v4167 = verf.f32.pop %v3579
        %v4168 = verf.f32.pop %v3580
        %v4169 = verf.f32.pop %v3581
        %v4170 = verf.f32.pop %v3582
        %v4171 = verf.f32.pop %v3583
        %v4172 = verf.f32.pop %v3584
        %v4173 = verf.f32.pop %v3585
        %v4174 = verf.f32.pop %v3586
        %v4175 = verf.f32.pop %v3587
        %v4176 = verf.f32.pop %v3588
        %v4177 = verf.f32.pop %v3589
        %v4178 = verf.f32.pop %v3590
        %v4179 = verf.f32.pop %v3591
        %v4180 = verf.f32.pop %v3592
        %v4181 = verf.f32.pop %v3593
        %v4182 = verf.f32.pop %v3594
        %v4183 = verf.f32.pop %v3595
        %v4184 = verf.f32.pop %v3596
        %v4185 = verf.f32.pop %v3597
        %v4186 = verf.f32.pop %v3598
        %v4187 = verf.f32.pop %v3599
        %v4188 = verf.f32.pop %v3600
        %v4189 = verf.f32.pop %v3601
        %v4190 = verf.f32.pop %v3602
        %v4191 = verf.f32.pop %v3603
        %v4192 = verf.f32.pop %v3604
        %v4193 = verf.f32.pop %v3605
        %v4194 = verf.f32.pop %v3606
        %v4195 = verf.f32.pop %v3607
        %v4196 = verf.f32.pop %v3608
        %v4197 = verf.f32.pop %v3609
        %v4198 = verf.f32.pop %v3610
        %v4199 = verf.f32.pop %v3611
        %v4200 = verf.f32.pop %v3612
        %v4201 = verf.f32.pop %v3613
        %v4202 = verf.f32.pop %v3614
        %v4203 = verf.f32.pop %v3615
        %v4204 = verf.f32.pop %v3616
        %v4205 = verf.f32.pop %v3617
        %v4206 = verf.f32.pop %v3618
        %v4207 = verf.f32.pop %v3619
        %v4208 = verf.f32.pop %v3620
        %v4209 = verf.f32.pop %v3621
        %v4210 = verf.f32.pop %v3622
        %v4211 = verf.f32.pop %v3623
        %v4212 = verf.f32.pop %v3624
        %v4213 = verf.f32.pop %v3625
        %v4214 = verf.f32.pop %v3626
        %v4215 = verf.f32.pop %v3627
        %v4216 = verf.f32.pop %v3628
        %v4217 = verf.f32.pop %v3629
        %v4218 = verf.f32.pop %v3630
        %v4219 = verf.f32.pop %v3631
        %v4220 = verf.f32.pop %v3632
        %v4221 = verf.f32.pop %v3633
        %v4222 = verf.f32.pop %v3634
        %v4223 = verf.f32.pop %v3635
        %v4224 = verf.f32.pop %v3636
        %v4225 = verf.f32.pop %v3637
        %v4226 = verf.f32.pop %v3638
        %v4227 = verf.f32.pop %v3639
        %v4228 = verf.f32.pop %v3640
        %v4229 = verf.f32.pop %v3641
        %v4230 = verf.f32.pop %v3642
        %v4231 = verf.f32.pop %v3643
        %v4232 = verf.f32.pop %v3644
        %v4233 = verf.f32.pop %v3645
        %v4234 = verf.f32.pop %v3646
        %v4235 = verf.f32.pop %v3647
        %v4236 = verf.f32.pop %v3648
        %v4237 = verf.f32.pop %v3649
        %v4238 = verf.f32.pop %v3650
        %v4239 = verf.f32.pop %v3651
        %v4240 = verf.f32.pop %v3652
        %v4241 = verf.f32.pop %v3653
        %v4242 = verf.f32.pop %v3654
        %v4243 = verf.f32.pop %v3655
        %v4244 = verf.f32.pop %v3656
        %v4245 = verf.f32.pop %v3657
        %v4246 = verf.f32.pop %v3658
        %v4247 = verf.f32.pop %v3659
        %v4248 = verf.f32.pop %v3660
        %v4249 = verf.f32.pop %v3661
        %v4250 = verf.f32.pop %v3662
        %v4251 = verf.f32.pop %v3663
        %v4252 = verf.f32.pop %v3664
        %v4253 = verf.f32.pop %v3665
        %v4254 = verf.f32.pop %v3666
        %v4255 = verf.f32.pop %v3667
        %v4256 = verf.f32.pop %v3668
        %v4257 = verf.f32.pop %v3669
        %v4258 = verf.f32.pop %v3670
        %v4259 = verf.f32.pop %v3671
        %v4260 = verf.f32.pop %v3672
        %v4261 = verf.f32.pop %v3673
        %v4262 = verf.f32.pop %v3674
        %v4263 = verf.f32.pop %v3675
        %v4264 = verf.f32.pop %v3676
        %v4265 = verf.f32.pop %v3677
        %v4266 = verf.f32.pop %v3678
        %v4267 = verf.f32.pop %v3679
        %v4268 = verf.f32.pop %v3680
        %v4269 = verf.f32.pop %v3681
        %v4270 = verf.f32.pop %v3682
        %v4271 = verf.f32.pop %v3683
        %v4272 = verf.f32.pop %v3684
        %v4273 = verf.f32.pop %v3685
        %v4274 = verf.f32.pop %v3686
        %v4275 = verf.f32.pop %v3687
        %v4276 = verf.f32.pop %v3688
        %v4277 = verf.f32.pop %v3689
        %v4278 = verf.f32.pop %v3690
        %v4279 = verf.f32.pop %v3691
        %v4280 = verf.f32.pop %v3692
        %v4281 = verf.f32.pop %v3693
        %v4282 = verf.f32.pop %v3694
        %v4283 = verf.f32.pop %v3695
        %v4284 = verf.f32.pop %v3696
        %v4285 = verf.f32.pop %v3697
        %v4286 = verf.f32.pop %v3698
        %v4287 = verf.f32.pop %v3699
        %v4288 = verf.f32.pop %v3700
        %v4289 = verf.f32.pop %v3701
        %v4290 = verf.f32.pop %v3702
        %v4291 = verf.f32.pop %v3703
        %v4292 = verf.f32.pop %v3704
        %v4293 = verf.f32.pop %v3705
        %v4294 = verf.f32.pop %v3706
        %v4295 = verf.f32.pop %v3707
        %v4296 = verf.f32.pop %v3708
        %v4297 = verf.f32.pop %v3709
        %v4298 = verf.f32.pop %v3710
        %v4299 = verf.f32.pop %v3711
        %v4300 = verf.f32.pop %v3712
        %v4301 = verf.f32.pop %v3713
        %v4302 = verf.f32.pop %v3714
        %v4303 = verf.f32.pop %v3715
        %v4304 = verf.f32.pop %v3716
        %v4305 = verf.f32.pop %v3717
        %v4306 = verf.f32.pop %v3718
        %v4307 = verf.f32.pop %v3719
        %v4308 = verf.f32.pop %v3720
        %v4309 = verf.f32.pop %v3721
        %v4310 = verf.f32.pop %v3722
        %v4311 = verf.f32.pop %v3723
        %v4312 = verf.f32.pop %v3724
        %v4313 = verf.f32.pop %v3725
        %v4314 = verf.f32.pop %v3726
        %v4315 = verf.f32.pop %v3727
        %v4316 = verf.f32.pop %v3728
        %v4317 = verf.f32.pop %v3729
        %v4318 = verf.f32.pop %v3730
        %v4319 = verf.f32.pop %v3731
        %v4320 = verf.f32.pop %v3732
        %v4321 = verf.f32.pop %v3733
        %v4322 = verf.f32.pop %v3734
        %v4323 = verf.f32.pop %v3735
        %v4324 = verf.f32.pop %v3736
        %v4325 = verf.f32.pop %v3737
        %v4326 = verf.f32.pop %v3738
        %v4327 = verf.f32.pop %v3739
        %v4328 = verf.f32.pop %v3740
        %v4329 = verf.f32.pop %v3741
        %v4330 = verf.f32.pop %v3742
        %v4331 = verf.f32.pop %v3743
        %v4332 = verf.f32.pop %v3744
        %v4333 = verf.f32.pop %v3745
        %v4334 = verf.f32.pop %v3746
        %v4335 = verf.f32.pop %v3747
        %v4336 = verf.f32.pop %v3748
        %v4337 = verf.f32.pop %v3749
        %v4338 = verf.f32.pop %v3750
        %v4339 = verf.f32.pop %v3751
        %v4340 = verf.f32.pop %v3752
        %v4341 = verf.f32.pop %v3753
        %v4342 = verf.f32.pop %v3754
        %v4343 = verf.f32.pop %v3755
        %v4344 = verf.f32.pop %v3756
        %v4345 = verf.f32.pop %v3757
        %v4346 = verf.f32.pop %v3758
        %v4347 = verf.f32.pop %v3759
        %v4348 = verf.f32.pop %v3760
        %v4349 = verf.f32.pop %v3761
        %v4350 = verf.f32.pop %v3762
        %v4351 = verf.f32.pop %v3763
        %v4352 = verf.f32.pop %v3764
        %v4353 = verf.f32.pop %v3765
        %v4354 = verf.f32.pop %v3766
        %v4355 = verf.f32.pop %v3767
        %v4356 = verf.f32.pop %v3768
        %v4357 = verf.f32.pop %v3769
        %v4358 = verf.f32.pop %v3770
        %v4359 = verf.f32.pop %v3771
        %v4360 = verf.f32.pop %v3772
        %v4361 = verf.f32.pop %v3773
        %v4362 = verf.f32.pop %v3774
        %v4363 = verf.f32.pop %v3775
        %v4364 = verf.f32.pop %v3776
        %v4365 = verf.f32.pop %v3777
        %v4366 = verf.f32.pop %v3778
        %v4367 = verf.f32.pop %v3779
        %v4368 = verf.f32.pop %v3780
        %v4369 = verf.f32.pop %v3781
        %v4370 = verf.f32.pop %v3782
        %v4371 = verf.f32.pop %v3783
        %v4372 = verf.f32.pop %v3784
        %v4373 = verf.f32.pop %v3785
        %v4374 = verf.f32.pop %v3786
        %v4375 = verf.f32.pop %v3787
        %v4376 = verf.f32.pop %v3788
        %v4377 = verf.f32.pop %v3789
        %v4378 = verf.f32.pop %v3790
        %v4379 = verf.f32.pop %v3791
        %v4380 = verf.f32.pop %v3792
        %v4381 = verf.f32.pop %v3793
        %v4382 = verf.f32.pop %v3794
        %v4383 = verf.f32.pop %v3795
        %v4384 = verf.f32.pop %v3796
        %v4385 = verf.f32.pop %v3797
        %v4386 = verf.f32.pop %v3798
        %v4387 = verf.f32.pop %v3799
        %v4388 = verf.f32.pop %v3800
        %v4389 = verf.f32.pop %v3801
        %v4390 = verf.f32.pop %v3802
        %v4391 = verf.f32.pop %v3803
        %v4392 = verf.f32.pop %v3804
        %v4393 = verf.f32.pop %v3805
        %v4394 = verf.f32.pop %v3806
        %v4395 = verf.f32.pop %v3807
        %v4396 = verf.f32.pop %v3808
        %v4397 = verf.f32.pop %v3809
        %v4398 = verf.f32.pop %v3810
        %v4399 = verf.f32.pop %v3811
        %v4400 = verf.f32.pop %v3812
        %v4401 = verf.f32.pop %v3813
        %v4402 = verf.f32.pop %v3814
        %v4403 = verf.f32.pop %v3815
        %v4404 = verf.f32.pop %v3816
        %v4405 = verf.f32.pop %v3817
        %v4406 = verf.f32.pop %v3818
        %v4407 = verf.f32.pop %v3819
        %v4408 = verf.f32.pop %v3820
        %v4409 = verf.f32.pop %v3821
        %v4410 = verf.f32.pop %v3822
        %v4411 = verf.f32.pop %v3823
        %v4412 = verf.f32.pop %v3824
        %v4413 = verf.f32.pop %v3825
        %v4414 = verf.f32.pop %v3826
        %v4415 = verf.f32.pop %v3827
        %v4416 = verf.f32.pop %v3828
        %v4417 = verf.f32.pop %v3829
        %v4418 = verf.f32.pop %v3830
        %v4419 = verf.f32.pop %v3831
        %v4420 = verf.f32.pop %v3832
        %v4421 = verf.f32.pop %v3833
        %v4422 = verf.f32.pop %v3834
        %v4423 = verf.f32.pop %v3835
        %v4424 = verf.f32.pop %v3836
        %v4425 = verf.f32.pop %v3837
        %v4426 = verf.f32.pop %v3838
        %v4427 = verf.f32.pop %v3839
        %v4428 = verf.f32.pop %v3840
        %v4429 = verf.f32.pop %v3841
        %v4430 = verf.f32.pop %v3842
        %v4431 = verf.f32.pop %v3843
        %v4432 = verf.f32.pop %v3844
        %v4433 = verf.f32.pop %v3845
        %v4434 = verf.f32.pop %v3846
        %v4435 = verf.f32.pop %v3847
        %v4436 = verf.f32.pop %v3848
        %v4437 = verf.f32.pop %v3849
        %v4438 = verf.f32.pop %v3850
        %v4439 = verf.f32.pop %v3851
        %v4440 = verf.f32.pop %v3852
        %v4441 = verf.f32.pop %v3853
        %v4442 = verf.f32.pop %v3854
        %v4443 = verf.f32.pop %v3855
        %v4444 = verf.f32.pop %v3856
        %v4445 = verf.f32.pop %v3857
        %v4446 = verf.f32.pop %v3858
        %v4447 = verf.f32.pop %v3859
        %v4448 = verf.f32.pop %v3860
        %v4449 = verf.f32.pop %v3861
        %v4450 = verf.f32.pop %v3862
        %v4451 = verf.f32.pop %v3863
        %v4452 = verf.f32.pop %v3864
        %v4453 = verf.f32.pop %v3865
        %v4454 = verf.f32.pop %v3866
        %v4455 = verf.f32.pop %v3867
        %v4456 = verf.f32.pop %v3868
        %v4457 = verf.f32.pop %v3869
        %v4458 = verf.f32.pop %v3870
        %v4459 = verf.f32.pop %v3871
        %v4460 = verf.f32.pop %v3872
        %v4461 = verf.f32.pop %v3873
        %v4462 = verf.f32.pop %v3874
        %v4463 = verf.f32.pop %v3875
        %v4464 = verf.f32.pop %v3876
        %v4465 = verf.f32.pop %v3877
        %v4466 = verf.f32.pop %v3878
        %v4467 = verf.f32.pop %v3879
        %v4468 = verf.f32.pop %v3880
        %v4469 = verf.f32.pop %v3881
        %v4470 = verf.f32.pop %v3882
        %v4471 = verf.f32.pop %v3883
        %v4472 = verf.f32.pop %v3884
        %v4473 = verf.f32.pop %v3885
        %v4474 = verf.f32.pop %v3886
        %v4475 = verf.f32.pop %v3887
        %v4476 = verf.f32.pop %v3888
        %v4477 = verf.f32.pop %v3889
        %v4478 = verf.f32.pop %v3890
        %v4479 = verf.f32.pop %v3891
        %v4480 = verf.f32.pop %v3892
        %v4481 = verf.f32.pop %v3893
        %v4482 = verf.f32.pop %v3894
        %v4483 = verf.f32.pop %v3895
        %v4484 = verf.f32.pop %v3896
        %v4485 = verf.f32.pop %v3897
        %v4486 = verf.f32.pop %v3898
        %v4487 = verf.f32.pop %v3899
        %v4488 = verf.f32.pop %v3900
        %v4489 = verf.f32.pop %v3901
        %v4490 = verf.f32.pop %v3902
        %v4491 = verf.f32.pop %v3903
        %v4492 = verf.f32.pop %v3904
        %v4493 = verf.f32.pop %v3905
        %v4494 = verf.f32.pop %v3906
        %v4495 = verf.f32.pop %v3907
        %v4496 = verf.f32.pop %v3908
        %v4497 = verf.f32.pop %v3909
        %v4498 = verf.f32.pop %v3910
        %v4499 = verf.f32.pop %v3911
        %v4500 = verf.f32.pop %v3912
        %v4501 = verf.f32.pop %v3913
        %v4502 = verf.f32.pop %v3914
        %v4503 = verf.f32.pop %v3915
        %v4504 = verf.f32.pop %v3916
        %v4505 = verf.f32.pop %v3917
        %v4506 = verf.f32.pop %v3918
        %v4507 = verf.f32.pop %v3919
        %v4508 = verf.f32.pop %v3920
        %v4509 = verf.f32.pop %v3921
        %v4510 = verf.f32.pop %v3922
        %v4511 = verf.f32.pop %v3923
        %v4512 = verf.f32.pop %v3924
        %v4513 = verf.f32.pop %v3925
        %v4514 = verf.f32.pop %v3926
        %v4515 = verf.f32.pop %v3927
        %v4516 = verf.f32.pop %v3928
        %v4517 = verf.f32.pop %v3929
        %v4518 = verf.f32.pop %v3930
        %v4519 = verf.f32.pop %v3931
        %v4520 = verf.f32.pop %v3932
        %v4521 = verf.f32.pop %v3933
        %v4522 = verf.f32.pop %v3934
        %v4523 = verf.f32.pop %v3935
        %v4524 = verf.f32.pop %v3936
        %v4525 = verf.f32.pop %v3937
        %v4526 = verf.f32.pop %v3938
        %v4527 = verf.f32.pop %v3939
        %v4528 = verf.f32.pop %v3940
        %v4529 = verf.f32.pop %v3941
        %v4530 = verf.f32.pop %v3942
        %v4531 = verf.f32.pop %v3943
        %v4532 = verf.f32.pop %v3944
        %v4533 = verf.f32.pop %v3945
        %v4534 = verf.f32.pop %v3946
        %v4535 = verf.f32.pop %v3947
        %v4536 = verf.f32.pop %v3948
        %v4537 = verf.f32.pop %v3949
        %v4538 = verf.f32.pop %v3950
        %v4539 = verf.f32.pop %v3951
        %v4540 = verf.f32.pop %v3952
        %v4541 = verf.f32.pop %v3953
        %v4542 = verf.f32.pop %v3954
        %v4543 = verf.f32.pop %v3955
        %v4544 = verf.f32.pop %v3956
        %v4545 = verf.f32.pop %v3957
        %v4546 = verf.f32.pop %v3958
        %v4547 = verf.f32.pop %v3959
        %v4548 = verf.f32.pop %v3960
        %v4549 = verf.f32.pop %v3961
        %v4550 = verf.f32.pop %v3962
        %v4551 = verf.f32.pop %v3963
        %v4552 = verf.f32.pop %v3964
        %v4553 = verf.f32.pop %v3965
        %v4554 = verf.f32.pop %v3966
        %v4555 = verf.f32.pop %v3967
        %v4556 = verf.f32.pop %v3968
        %v4557 = verf.f32.pop %v3969
        %v4558 = verf.f32.pop %v3970
        %v4559 = verf.f32.pop %v3971
        %v4560 = verf.f32.pop %v3972
        %v4561 = verf.f32.pop %v3973
        %v4562 = verf.f32.pop %v3974
        %v4563 = verf.f32.pop %v3975
        %v4564 = verf.f32.pop %v3976
        %v4565 = verf.f32.pop %v3977
        %v4566 = verf.f32.pop %v3978
        %v4567 = verf.f32.pop %v3979
        %v4568 = verf.f32.pop %v3980
        %v4569 = verf.f32.pop %v3981
        %v4570 = verf.f32.pop %v3982
        %v4571 = verf.f32.pop %v3983
        %v4572 = verf.f32.pop %v3984
        %v4573 = verf.f32.pop %v3985
        %v4574 = verf.f32.pop %v3986
        %v4575 = verf.f32.pop %v3987
        %v4576 = verf.f32.pop %v3988
        %v4577 = verf.f32.pop %v3989
        %v4578 = verf.f32.pop %v3990
        %v4579 = vadd.f32 %v3991, 1.0
        %v4580 = vadd.f32 %v3992, 1.0
        %v4581 = vadd.f32 %v3993, 1.0
        %v4582 = vadd.f32 %v3994, 1.0
        %v4583 = vadd.f32 %v3995, 1.0
        %v4584 = vadd.f32 %v3996, 1.0
        %v4585 = vadd.f32 %v3997, 1.0
        %v4586 = vadd.f32 %v3998, 1.0
        %v4587 = vadd.f32 %v3999, 1.0
        %v4588 = vadd.f32 %v4000, 1.0
        %v4589 = vadd.f32 %v4001, 1.0
        %v4590 = vadd.f32 %v4002, 1.0
        %v4591 = vadd.f32 %v4003, 1.0
        %v4592 = vadd.f32 %v4004, 1.0
        %v4593 = vadd.f32 %v4005, 1.0
        %v4594 = vadd.f32 %v4006, 1.0
        %v4595 = vadd.f32 %v4007, 1.0
        %v4596 = vadd.f32 %v4008, 1.0
        %v4597 = vadd.f32 %v4009, 1.0
        %v4598 = vadd.f32 %v4010, 1.0
        %v4599 = vadd.f32 %v4011, 1.0
        %v4600 = vadd.f32 %v4012, 1.0
        %v4601 = vadd.f32 %v4013, 1.0
        %v4602 = vadd.f32 %v4014, 1.0
        %v4603 = vadd.f32 %v4015, 1.0
        %v4604 = vadd.f32 %v4016, 1.0
        %v4605 = vadd.f32 %v4017, 1.0
        %v4606 = vadd.f32 %v4018, 1.0
        %v4607 = vadd.f32 %v4019, 1.0
        %v4608 = vadd.f32 %v4020, 1.0
        %v4609 = vadd.f32 %v4021, 1.0
        %v4610 = vadd.f32 %v4022, 1.0
        %v4611 = vadd.f32 %v4023, 1.0
        %v4612 = vadd.f32 %v4024, 1.0
        %v4613 = vadd.f32 %v4025, 1.0
        %v4614 = vadd.f32 %v4026, 1.0
        %v4615 = vadd.f32 %v4027, 1.0
        %v4616 = vadd.f32 %v4028, 1.0
        %v4617 = vadd.f32 %v4029, 1.0
        %v4618 = vadd.f32 %v4030, 1.0
        %v4619 = vadd.f32 %v4031, 1.0
        %v4620 = vadd.f32 %v4032, 1.0
        %v4621 = vadd.f32 %v4033, 1.0
        %v4622 = vadd.f32 %v4034, 1.0
        %v4623 = vadd.f32 %v4035, 1.0
        %v4624 = vadd.f32 %v4036, 1.0
        %v4625 = vadd.f32 %v4037, 1.0
        %v4626 = vadd.f32 %v4038, 1.0
        %v4627 = vadd.f32 %v4039, 1.0
        %v4628 = vadd.f32 %v4040, 1.0
        %v4629 = vadd.f32 %v4041, 1.0
        %v4630 = vadd.f32 %v4042, 1.0
        %v4631 = vadd.f32 %v4043, 1.0
        %v4632 = vadd.f32 %v4044, 1.0
        %v4633 = vadd.f32 %v4045, 1.0
        %v4634 = vadd.f32 %v4046, 1.0
        %v4635 = vadd.f32 %v4047, 1.0
        %v4636 = vadd.f32 %v4048, 1.0
        %v4637 = vadd.f32 %v4049, 1.0
        %v4638 = vadd.f32 %v4050, 1.0
        %v4639 = vadd.f32 %v4051, 1.0
        %v4640 = vadd.f32 %v4052, 1.0
        %v4641 = vadd.f32 %v4053, 1.0
        %v4642 = vadd.f32 %v4054, 1.0
        %v4643 = vadd.f32 %v4055, 1.0
        %v4644 = vadd.f32 %v4056, 1.0
        %v4645 = vadd.f32 %v4057, 1.0
        %v4646 = vadd.f32 %v4058, 1.0
        %v4647 = vadd.f32 %v4059, 1.0
        %v4648 = vadd.f32 %v4060, 1.0
        %v4649 = vadd.f32 %v4061, 1.0
        %v4650 = vadd.f32 %v4062, 1.0
        %v4651 = vadd.f32 %v4063, 1.0
        %v4652 = vadd.f32 %v4064, 1.0
        %v4653 = vadd.f32 %v4065, 1.0
        %v4654 = vadd.f32 %v4066, 1.0
        %v4655 = vadd.f32 %v4067, 1.0
        %v4656 = vadd.f32 %v4068, 1.0
        %v4657 = vadd.f32 %v4069, 1.0
        %v4658 = vadd.f32 %v4070, 1.0
        %v4659 = vadd.f32 %v4071, 1.0
        %v4660 = vadd.f32 %v4072, 1.0
        %v4661 = vadd.f32 %v4073, 1.0
        %v4662 = vadd.f32 %v4074, 1.0
        %v4663 = vadd.f32 %v4075, 1.0
        %v4664 = vadd.f32 %v4076, 1.0
        %v4665 = vadd.f32 %v4077, 1.0
        %v4666 = vadd.f32 %v4078, 1.0
        %v4667 = vadd.f32 %v4079, 1.0
        %v4668 = vadd.f32 %v4080, 1.0
        %v4669 = vadd.f32 %v4081, 1.0
        %v4670 = vadd.f32 %v4082, 1.0
        %v4671 = vadd.f32 %v4083, 1.0
        %v4672 = vadd.f32 %v4084, 1.0
        %v4673 = vadd.f32 %v4085, 1.0
        %v4674 = vadd.f32 %v4086, 1.0
        %v4675 = vadd.f32 %v4087, 1.0
        %v4676 = vadd.f32 %v4088, 1.0
        %v4677 = vadd.f32 %v4089, 1.0
        %v4678 = vadd.f32 %v4090, 1.0
        %v4679 = vadd.f32 %v4091, 1.0
        %v4680 = vadd.f32 %v4092, 1.0
        %v4681 = vadd.f32 %v4093, 1.0
        %v4682 = vadd.f32 %v4094, 1.0
        %v4683 = vadd.f32 %v4095, 1.0
        %v4684 = vadd.f32 %v4096, 1.0
        %v4685 = vadd.f32 %v4097, 1.0
        %v4686 = vadd.f32 %v4098, 1.0
        %v4687 = vadd.f32 %v4099, 1.0
        %v4688 = vadd.f32 %v4100, 1.0
        %v4689 = vadd.f32 %v4101, 1.0
        %v4690 = vadd.f32 %v4102, 1.0
        %v4691 = vadd.f32 %v4103, 1.0
        %v4692 = vadd.f32 %v4104, 1.0
        %v4693 = vadd.f32 %v4105, 1.0
        %v4694 = vadd.f32 %v4106, 1.0
        %v4695 = vadd.f32 %v4107, 1.0
        %v4696 = vadd.f32 %v4108, 1.0
        %v4697 = vadd.f32 %v4109, 1.0
        %v4698 = vadd.f32 %v4110, 1.0
        %v4699 = vadd.f32 %v4111, 1.0
        %v4700 = vadd.f32 %v4112, 1.0
        %v4701 = vadd.f32 %v4113, 1.0
        %v4702 = vadd.f32 %v4114, 1.0
        %v4703 = vadd.f32 %v4115, 1.0
        %v4704 = vadd.f32 %v4116, 1.0
        %v4705 = vadd.f32 %v4117, 1.0
        %v4706 = vadd.f32 %v4118, 1.0
        %v4707 = vadd.f32 %v4119, 1.0
        %v4708 = vadd.f32 %v4120, 1.0
        %v4709 = vadd.f32 %v4121, 1.0
        %v4710 = vadd.f32 %v4122, 1.0
        %v4711 = vadd.f32 %v4123, 1.0
        %v4712 = vadd.f32 %v4124, 1.0
        %v4713 = vadd.f32 %v4125, 1.0
        %v4714 = vadd.f32 %v4126, 1.0
        %v4715 = vadd.f32 %v4127, 1.0
        %v4716 = vadd.f32 %v4128, 1.0
        %v4717 = vadd.f32 %v4129, 1.0
        %v4718 = vadd.f32 %v4130, 1.0
        %v4719 = vadd.f32 %v4131, 1.0
        %v4720 = vadd.f32 %v4132, 1.0
        %v4721 = vadd.f32 %v4133, 1.0
        %v4722 = vadd.f32 %v4134, 1.0
        %v4723 = vadd.f32 %v4135, 1.0
        %v4724 = vadd.f32 %v4136, 1.0
        %v4725 = vadd.f32 %v4137, 1.0
        %v4726 = vadd.f32 %v4138, 1.0
        %v4727 = vadd.f32 %v4139, 1.0
        %v4728 = vadd.f32 %v4140, 1.0
        %v4729 = vadd.f32 %v4141, 1.0
        %v4730 = vadd.f32 %v4142, 1.0
        %v4731 = vadd.f32 %v4143, 1.0
        %v4732 = vadd.f32 %v4144, 1.0
        %v4733 = vadd.f32 %v4145, 1.0
        %v4734 = vadd.f32 %v4146, 1.0
        %v4735 = vadd.f32 %v4147, 1.0
        %v4736 = vadd.f32 %v4148, 1.0
        %v4737 = vadd.f32 %v4149, 1.0
        %v4738 = vadd.f32 %v4150, 1.0
        %v4739 = vadd.f32 %v4151, 1.0
        %v4740 = vadd.f32 %v4152, 1.0
        %v4741 = vadd.f32 %v4153, 1.0
        %v4742 = vadd.f32 %v4154, 1.0
        %v4743 = vadd.f32 %v4155, 1.0
        %v4744 = vadd.f32 %v4156, 1.0
        %v4745 = vadd.f32 %v4157, 1.0
        %v4746 = vadd.f32 %v4158, 1.0
        %v4747 = vadd.f32 %v4159, 1.0
        %v4748 = vadd.f32 %v4160, 1.0
        %v4749 = vadd.f32 %v4161, 1.0
        %v4750 = vadd.f32 %v4162, 1.0
        %v4751 = vadd.f32 %v4163, 1.0
        %v4752 = vadd.f32 %v4164, 1.0
        %v4753 = vadd.f32 %v4165, 1.0
        %v4754 = vadd.f32 %v4166, 1.0
        %v4755 = vadd.f32 %v4167, 1.0
        %v4756 = vadd.f32 %v4168, 1.0
        %v4757 = vadd.f32 %v4169, 1.0
        %v4758 = vadd.f32 %v4170, 1.0
        %v4759 = vadd.f32 %v4171, 1.0
        %v4760 = vadd.f32 %v4172, 1.0
        %v4761 = vadd.f32 %v4173, 1.0
        %v4762 = vadd.f32 %v4174, 1.0
        %v4763 = vadd.f32 %v4175, 1.0
        %v4764 = vadd.f32 %v4176, 1.0
        %v4765 = vadd.f32 %v4177, 1.0
        %v4766 = vadd.f32 %v4178, 1.0
        %v4767 = vadd.f32 %v4179, 1.0
        %v4768 = vadd.f32 %v4180, 1.0
        %v4769 = vadd.f32 %v4181, 1.0
        %v4770 = vadd.f32 %v4182, 1.0
        %v4771 = vadd.f32 %v4183, 1.0
        %v4772 = vadd.f32 %v4184, 1.0
        %v4773 = vadd.f32 %v4185, 1.0
        %v4774 = vadd.f32 %v4186, 1.0
        %v4775 = vadd.f32 %v4187, 1.0
        %v4776 = vadd.f32 %v4188, 1.0
        %v4777 = vadd.f32 %v4189, 1.0
        %v4778 = vadd.f32 %v4190, 1.0
        %v4779 = vadd.f32 %v4191, 1.0
        %v4780 = vadd.f32 %v4192, 1.0
        %v4781 = vadd.f32 %v4193, 1.0
        %v4782 = vadd.f32 %v4194, 1.0
        %v4783 = vadd.f32 %v4195, 1.0
        %v4784 = vadd.f32 %v4196, 1.0
        %v4785 = vadd.f32 %v4197, 1.0
        %v4786 = vadd.f32 %v4198, 1.0
        %v4787 = vadd.f32 %v4199, 1.0
        %v4788 = vadd.f32 %v4200, 1.0
        %v4789 = vadd.f32 %v4201, 1.0
        %v4790 = vadd.f32 %v4202, 1.0
        %v4791 = vadd.f32 %v4203, 1.0
        %v4792 = vadd.f32 %v4204, 1.0
        %v4793 = vadd.f32 %v4205, 1.0
        %v4794 = vadd.f32 %v4206, 1.0
        %v4795 = vadd.f32 %v4207, 1.0
        %v4796 = vadd.f32 %v4208, 1.0
        %v4797 = vadd.f32 %v4209, 1.0
        %v4798 = vadd.f32 %v4210, 1.0
        %v4799 = vadd.f32 %v4211, 1.0
        %v4800 = vadd.f32 %v4212, 1.0
        %v4801 = vadd.f32 %v4213, 1.0
        %v4802 = vadd.f32 %v4214, 1.0
        %v4803 = vadd.f32 %v4215, 1.0
        %v4804 = vadd.f32 %v4216, 1.0
        %v4805 = vadd.f32 %v4217, 1.0
        %v4806 = vadd.f32 %v4218, 1.0
        %v4807 = vadd.f32 %v4219, 1.0
        %v4808 = vadd.f32 %v4220, 1.0
        %v4809 = vadd.f32 %v4221, 1.0
        %v4810 = vadd.f32 %v4222, 1.0
        %v4811 = vadd.f32 %v4223, 1.0
        %v4812 = vadd.f32 %v4224, 1.0
        %v4813 = vadd.f32 %v4225, 1.0
        %v4814 = vadd.f32 %v4226, 1.0
        %v4815 = vadd.f32 %v4227, 1.0
        %v4816 = vadd.f32 %v4228, 1.0
        %v4817 = vadd.f32 %v4229, 1.0
        %v4818 = vadd.f32 %v4230, 1.0
        %v4819 = vadd.f32 %v4231, 1.0
        %v4820 = vadd.f32 %v4232, 1.0
        %v4821 = vadd.f32 %v4233, 1.0
        %v4822 = vadd.f32 %v4234, 1.0
        %v4823 = vadd.f32 %v4235, 1.0
        %v4824 = vadd.f32 %v4236, 1.0
        %v4825 = vadd.f32 %v4237, 1.0
        %v4826 = vadd.f32 %v4238, 1.0
        %v4827 = vadd.f32 %v4239, 1.0
        %v4828 = vadd.f32 %v4240, 1.0
        %v4829 = vadd.f32 %v4241, 1.0
        %v4830 = vadd.f32 %v4242, 1.0
        %v4831 = vadd.f32 %v4243, 1.0
        %v4832 = vadd.f32 %v4244, 1.0
        %v4833 = vadd.f32 %v4245, 1.0
        %v4834 = vadd.f32 %v4246, 1.0
        %v4835 = vadd.f32 %v4247, 1.0
        %v4836 = vadd.f32 %v4248, 1.0
        %v4837 = vadd.f32 %v4249, 1.0
        %v4838 = vadd.f32 %v4250, 1.0
        %v4839 = vadd.f32 %v4251, 1.0
        %v4840 = vadd.f32 %v4252, 1.0
        %v4841 = vadd.f32 %v4253, 1.0
        %v4842 = vadd.f32 %v4254, 1.0
        %v4843 = vadd.f32 %v4255, 1.0
        %v4844 = vadd.f32 %v4256, 1.0
        %v4845 = vadd.f32 %v4257, 1.0
        %v4846 = vadd.f32 %v4258, 1.0
        %v4847 = vadd.f32 %v4259, 1.0
        %v4848 = vadd.f32 %v4260, 1.0
        %v4849 = vadd.f32 %v4261, 1.0
        %v4850 = vadd.f32 %v4262, 1.0
        %v4851 = vadd.f32 %v4263, 1.0
        %v4852 = vadd.f32 %v4264, 1.0
        %v4853 = vadd.f32 %v4265, 1.0
        %v4854 = vadd.f32 %v4266, 1.0
        %v4855 = vadd.f32 %v4267, 1.0
        %v4856 = vadd.f32 %v4268, 1.0
        %v4857 = vadd.f32 %v4269, 1.0
        %v4858 = vadd.f32 %v4270, 1.0
        %v4859 = vadd.f32 %v4271, 1.0
        %v4860 = vadd.f32 %v4272, 1.0
        %v4861 = vadd.f32 %v4273, 1.0
        %v4862 = vadd.f32 %v4274, 1.0
        %v4863 = vadd.f32 %v4275, 1.0
        %v4864 = vadd.f32 %v4276, 1.0
        %v4865 = vadd.f32 %v4277, 1.0
        %v4866 = vadd.f32 %v4278, 1.0
        %v4867 = vadd.f32 %v4279, 1.0
        %v4868 = vadd.f32 %v4280, 1.0
        %v4869 = vadd.f32 %v4281, 1.0
        %v4870 = vadd.f32 %v4282, 1.0
        %v4871 = vadd.f32 %v4283, 1.0
        %v4872 = vadd.f32 %v4284, 1.0
        %v4873 = vadd.f32 %v4285, 1.0
        %v4874 = vadd.f32 %v4286, 1.0
        %v4875 = vadd.f32 %v4287, 1.0
        %v4876 = vadd.f32 %v4288, 1.0
        %v4877 = vadd.f32 %v4289, 1.0
        %v4878 = vadd.f32 %v4290, 1.0
        %v4879 = vadd.f32 %v4291, 1.0
        %v4880 = vadd.f32 %v4292, 1.0
        %v4881 = vadd.f32 %v4293, 1.0
        %v4882 = vadd.f32 %v4294, 1.0
        %v4883 = vadd.f32 %v4295, 1.0
        %v4884 = vadd.f32 %v4296, 1.0
        %v4885 = vadd.f32 %v4297, 1.0
        %v4886 = vadd.f32 %v4298, 1.0
        %v4887 = vadd.f32 %v4299, 1.0
        %v4888 = vadd.f32 %v4300, 1.0
        %v4889 = vadd.f32 %v4301, 1.0
        %v4890 = vadd.f32 %v4302, 1.0
        %v4891 = vadd.f32 %v4303, 1.0
        %v4892 = vadd.f32 %v4304, 1.0
        %v4893 = vadd.f32 %v4305, 1.0
        %v4894 = vadd.f32 %v4306, 1.0
        %v4895 = vadd.f32 %v4307, 1.0
        %v4896 = vadd.f32 %v4308, 1.0
        %v4897 = vadd.f32 %v4309, 1.0
        %v4898 = vadd.f32 %v4310, 1.0
        %v4899 = vadd.f32 %v4311, 1.0
        %v4900 = vadd.f32 %v4312, 1.0
        %v4901 = vadd.f32 %v4313, 1.0
        %v4902 = vadd.f32 %v4314, 1.0
        %v4903 = vadd.f32 %v4315, 1.0
        %v4904 = vadd.f32 %v4316, 1.0
        %v4905 = vadd.f32 %v4317, 1.0
        %v4906 = vadd.f32 %v4318, 1.0
        %v4907 = vadd.f32 %v4319, 1.0
        %v4908 = vadd.f32 %v4320, 1.0
        %v4909 = vadd.f32 %v4321, 1.0
        %v4910 = vadd.f32 %v4322, 1.0
        %v4911 = vadd.f32 %v4323, 1.0
        %v4912 = vadd.f32 %v4324, 1.0
        %v4913 = vadd.f32 %v4325, 1.0
        %v4914 = vadd.f32 %v4326, 1.0
        %v4915 = vadd.f32 %v4327, 1.0
        %v4916 = vadd.f32 %v4328, 1.0
        %v4917 = vadd.f32 %v4329, 1.0
        %v4918 = vadd.f32 %v4330, 1.0
        %v4919 = vadd.f32 %v4331, 1.0
        %v4920 = vadd.f32 %v4332, 1.0
        %v4921 = vadd.f32 %v4333, 1.0
        %v4922 = vadd.f32 %v4334, 1.0
        %v4923 = vadd.f32 %v4335, 1.0
        %v4924 = vadd.f32 %v4336, 1.0
        %v4925 = vadd.f32 %v4337, 1.0
        %v4926 = vadd.f32 %v4338, 1.0
        %v4927 = vadd.f32 %v4339, 1.0
        %v4928 = vadd.f32 %v4340, 1.0
        %v4929 = vadd.f32 %v4341, 1.0
        %v4930 = vadd.f32 %v4342, 1.0
        %v4931 = vadd.f32 %v4343, 1.0
        %v4932 = vadd.f32 %v4344, 1.0
        %v4933 = vadd.f32 %v4345, 1.0
        %v4934 = vadd.f32 %v4346, 1.0
        %v4935 = vadd.f32 %v4347, 1.0
        %v4936 = vadd.f32 %v4348, 1.0
        %v4937 = vadd.f32 %v4349, 1.0
        %v4938 = vadd.f32 %v4350, 1.0
        %v4939 = vadd.f32 %v4351, 1.0
        %v4940 = vadd.f32 %v4352, 1.0
        %v4941 = vadd.f32 %v4353, 1.0
        %v4942 = vadd.f32 %v4354, 1.0
        %v4943 = vadd.f32 %v4355, 1.0
        %v4944 = vadd.f32 %v4356, 1.0
        %v4945 = vadd.f32 %v4357, 1.0
        %v4946 = vadd.f32 %v4358, 1.0
        %v4947 = vadd.f32 %v4359, 1.0
        %v4948 = vadd.f32 %v4360, 1.0
        %v4949 = vadd.f32 %v4361, 1.0
        %v4950 = vadd.f32 %v4362, 1.0
        %v4951 = vadd.f32 %v4363, 1.0
        %v4952 = vadd.f32 %v4364, 1.0
        %v4953 = vadd.f32 %v4365, 1.0
        %v4954 = vadd.f32 %v4366, 1.0
        %v4955 = vadd.f32 %v4367, 1.0
        %v4956 = vadd.f32 %v4368, 1.0
        %v4957 = vadd.f32 %v4369, 1.0
        %v4958 = vadd.f32 %v4370, 1.0
        %v4959 = vadd.f32 %v4371, 1.0
        %v4960 = vadd.f32 %v4372, 1.0
        %v4961 = vadd.f32 %v4373, 1.0
        %v4962 = vadd.f32 %v4374, 1.0
        %v4963 = vadd.f32 %v4375, 1.0
        %v4964 = vadd.f32 %v4376, 1.0
        %v4965 = vadd.f32 %v4377, 1.0
        %v4966 = vadd.f32 %v4378, 1.0
        %v4967 = vadd.f32 %v4379, 1.0
        %v4968 = vadd.f32 %v4380, 1.0
        %v4969 = vadd.f32 %v4381, 1.0
        %v4970 = vadd.f32 %v4382, 1.0
        %v4971 = vadd.f32 %v4383, 1.0
        %v4972 = vadd.f32 %v4384, 1.0
        %v4973 = vadd.f32 %v4385, 1.0
        %v4974 = vadd.f32 %v4386, 1.0
        %v4975 = vadd.f32 %v4387, 1.0
        %v4976 = vadd.f32 %v4388, 1.0
        %v4977 = vadd.f32 %v4389, 1.0
        %v4978 = vadd.f32 %v4390, 1.0
        %v4979 = vadd.f32 %v4391, 1.0
        %v4980 = vadd.f32 %v4392, 1.0
        %v4981 = vadd.f32 %v4393, 1.0
        %v4982 = vadd.f32 %v4394, 1.0
        %v4983 = vadd.f32 %v4395, 1.0
        %v4984 = vadd.f32 %v4396, 1.0
        %v4985 = vadd.f32 %v4397, 1.0
        %v4986 = vadd.f32 %v4398, 1.0
        %v4987 = vadd.f32 %v4399, 1.0
        %v4988 = vadd.f32 %v4400, 1.0
        %v4989 = vadd.f32 %v4401, 1.0
        %v4990 = vadd.f32 %v4402, 1.0
        %v4991 = vadd.f32 %v4403, 1.0
        %v4992 = vadd.f32 %v4404, 1.0
        %v4993 = vadd.f32 %v4405, 1.0
        %v4994 = vadd.f32 %v4406, 1.0
        %v4995 = vadd.f32 %v4407, 1.0
        %v4996 = vadd.f32 %v4408, 1.0
        %v4997 = vadd.f32 %v4409, 1.0
        %v4998 = vadd.f32 %v4410, 1.0
        %v4999 = vadd.f32 %v4411, 1.0
        %v5000 = vadd.f32 %v4412, 1.0
        %v5001 = vadd.f32 %v4413, 1.0
        %v5002 = vadd.f32 %v4414, 1.0
        %v5003 = vadd.f32 %v4415, 1.0
        %v5004 = vadd.f32 %v4416, 1.0
        %v5005 = vadd.f32 %v4417, 1.0
        %v5006 = vadd.f32 %v4418, 1.0
        %v5007 = vadd.f32 %v4419, 1.0
        %v5008 = vadd.f32 %v4420, 1.0
        %v5009 = vadd.f32 %v4421, 1.0
        %v5010 = vadd.f32 %v4422, 1.0
        %v5011 = vadd.f32 %v4423, 1.0
        %v5012 = vadd.f32 %v4424, 1.0
        %v5013 = vadd.f32 %v4425, 1.0
        %v5014 = vadd.f32 %v4426, 1.0
        %v5015 = vadd.f32 %v4427, 1.0
        %v5016 = vadd.f32 %v4428, 1.0
        %v5017 = vadd.f32 %v4429, 1.0
        %v5018 = vadd.f32 %v4430, 1.0
        %v5019 = vadd.f32 %v4431, 1.0
        %v5020 = vadd.f32 %v4432, 1.0
        %v5021 = vadd.f32 %v4433, 1.0
        %v5022 = vadd.f32 %v4434, 1.0
        %v5023 = vadd.f32 %v4435, 1.0
        %v5024 = vadd.f32 %v4436, 1.0
        %v5025 = vadd.f32 %v4437, 1.0
        %v5026 = vadd.f32 %v4438, 1.0
        %v5027 = vadd.f32 %v4439, 1.0
        %v5028 = vadd.f32 %v4440, 1.0
        %v5029 = vadd.f32 %v4441, 1.0
        %v5030 = vadd.f32 %v4442, 1.0
        %v5031 = vadd.f32 %v4443, 1.0
        %v5032 = vadd.f32 %v4444, 1.0
        %v5033 = vadd.f32 %v4445, 1.0
        %v5034 = vadd.f32 %v4446, 1.0
        %v5035 = vadd.f32 %v4447, 1.0
        %v5036 = vadd.f32 %v4448, 1.0
        %v5037 = vadd.f32 %v4449, 1.0
        %v5038 = vadd.f32 %v4450, 1.0
        %v5039 = vadd.f32 %v4451, 1.0
        %v5040 = vadd.f32 %v4452, 1.0
        %v5041 = vadd.f32 %v4453, 1.0
        %v5042 = vadd.f32 %v4454, 1.0
        %v5043 = vadd.f32 %v4455, 1.0
        %v5044 = vadd.f32 %v4456, 1.0
        %v5045 = vadd.f32 %v4457, 1.0
        %v5046 = vadd.f32 %v4458, 1.0
        %v5047 = vadd.f32 %v4459, 1.0
        %v5048 = vadd.f32 %v4460, 1.0
        %v5049 = vadd.f32 %v4461, 1.0
        %v5050 = vadd.f32 %v4462, 1.0
        %v5051 = vadd.f32 %v4463, 1.0
        %v5052 = vadd.f32 %v4464, 1.0
        %v5053 = vadd.f32 %v4465, 1.0
        %v5054 = vadd.f32 %v4466, 1.0
        %v5055 = vadd.f32 %v4467, 1.0
        %v5056 = vadd.f32 %v4468, 1.0
        %v5057 = vadd.f32 %v4469, 1.0
        %v5058 = vadd.f32 %v4470, 1.0
        %v5059 = vadd.f32 %v4471, 1.0
        %v5060 = vadd.f32 %v4472, 1.0
        %v5061 = vadd.f32 %v4473, 1.0
        %v5062 = vadd.f32 %v4474, 1.0
        %v5063 = vadd.f32 %v4475, 1.0
        %v5064 = vadd.f32 %v4476, 1.0
        %v5065 = vadd.f32 %v4477, 1.0
        %v5066 = vadd.f32 %v4478, 1.0
        %v5067 = vadd.f32 %v4479, 1.0
        %v5068 = vadd.f32 %v4480, 1.0
        %v5069 = vadd.f32 %v4481, 1.0
        %v5070 = vadd.f32 %v4482, 1.0
        %v5071 = vadd.f32 %v4483, 1.0
        %v5072 = vadd.f32 %v4484, 1.0
        %v5073 = vadd.f32 %v4485, 1.0
        %v5074 = vadd.f32 %v4486, 1.0
        %v5075 = vadd.f32 %v4487, 1.0
        %v5076 = vadd.f32 %v4488, 1.0
        %v5077 = vadd.f32 %v4489, 1.0
        %v5078 = vadd.f32 %v4490, 1.0
        %v5079 = vadd.f32 %v4491, 1.0
        %v5080 = vadd.f32 %v4492, 1.0
        %v5081 = vadd.f32 %v4493, 1.0
        %v5082 = vadd.f32 %v4494, 1.0
        %v5083 = vadd.f32 %v4495, 1.0
        %v5084 = vadd.f32 %v4496, 1.0
        %v5085 = vadd.f32 %v4497, 1.0
        %v5086 = vadd.f32 %v4498, 1.0
        %v5087 = vadd.f32 %v4499, 1.0
        %v5088 = vadd.f32 %v4500, 1.0
        %v5089 = vadd.f32 %v4501, 1.0
        %v5090 = vadd.f32 %v4502, 1.0
        %v5091 = vadd.f32 %v4503, 1.0
        %v5092 = vadd.f32 %v4504, 1.0
        %v5093 = vadd.f32 %v4505, 1.0
        %v5094 = vadd.f32 %v4506, 1.0
        %v5095 = vadd.f32 %v4507, 1.0
        %v5096 = vadd.f32 %v4508, 1.0
        %v5097 = vadd.f32 %v4509, 1.0
        %v5098 = vadd.f32 %v4510, 1.0
        %v5099 = vadd.f32 %v4511, 1.0
        %v5100 = vadd.f32 %v4512, 1.0
        %v5101 = vadd.f32 %v4513, 1.0
        %v5102 = vadd.f32 %v4514, 1.0
        %v5103 = vadd.f32 %v4515, 1.0
        %v5104 = vadd.f32 %v4516, 1.0
        %v5105 = vadd.f32 %v4517, 1.0
        %v5106 = vadd.f32 %v4518, 1.0
        %v5107 = vadd.f32 %v4519, 1.0
        %v5108 = vadd.f32 %v4520, 1.0
        %v5109 = vadd.f32 %v4521, 1.0
        %v5110 = vadd.f32 %v4522, 1.0
        %v5111 = vadd.f32 %v4523, 1.0
        %v5112 = vadd.f32 %v4524, 1.0
        %v5113 = vadd.f32 %v4525, 1.0
        %v5114 = vadd.f32 %v4526, 1.0
        %v5115 = vadd.f32 %v4527, 1.0
        %v5116 = vadd.f32 %v4528, 1.0
        %v5117 = vadd.f32 %v4529, 1.0
        %v5118 = vadd.f32 %v4530, 1.0
        %v5119 = vadd.f32 %v4531, 1.0
        %v5120 = vadd.f32 %v4532, 1.0
        %v5121 = vadd.f32 %v4533, 1.0
        %v5122 = vadd.f32 %v4534, 1.0
        %v5123 = vadd.f32 %v4535, 1.0
        %v5124 = vadd.f32 %v4536, 1.0
        %v5125 = vadd.f32 %v4537, 1.0
        %v5126 = vadd.f32 %v4538, 1.0
        %v5127 = vadd.f32 %v4539, 1.0
        %v5128 = vadd.f32 %v4540, 1.0
        %v5129 = vadd.f32 %v4541, 1.0
        %v5130 = vadd.f32 %v4542, 1.0
        %v5131 = vadd.f32 %v4543, 1.0
        %v5132 = vadd.f32 %v4544, 1.0
        %v5133 = vadd.f32 %v4545, 1.0
        %v5134 = vadd.f32 %v4546, 1.0
        %v5135 = vadd.f32 %v4547, 1.0
        %v5136 = vadd.f32 %v4548, 1.0
        %v5137 = vadd.f32 %v4549, 1.0
        %v5138 = vadd.f32 %v4550, 1.0
        %v5139 = vadd.f32 %v4551, 1.0
        %v5140 = vadd.f32 %v4552, 1.0
        %v5141 = vadd.f32 %v4553, 1.0
        %v5142 = vadd.f32 %v4554, 1.0
        %v5143 = vadd.f32 %v4555, 1.0
        %v5144 = vadd.f32 %v4556, 1.0
        %v5145 = vadd.f32 %v4557, 1.0
        %v5146 = vadd.f32 %v4558, 1.0
        %v5147 = vadd.f32 %v4559, 1.0
        %v5148 = vadd.f32 %v4560, 1.0
        %v5149 = vadd.f32 %v4561, 1.0
        %v5150 = vadd.f32 %v4562, 1.0
        %v5151 = vadd.f32 %v4563, 1.0
        %v5152 = vadd.f32 %v4564, 1.0
        %v5153 = vadd.f32 %v4565, 1.0
        %v5154 = vadd.f32 %v4566, 1.0
        %v5155 = vadd.f32 %v4567, 1.0
        %v5156 = vadd.f32 %v4568, 1.0
        %v5157 = vadd.f32 %v4569, 1.0
        %v5158 = vadd.f32 %v4570, 1.0
        %v5159 = vadd.f32 %v4571, 1.0
        %v5160 = vadd.f32 %v4572, 1.0
        %v5161 = vadd.f32 %v4573, 1.0
        %v5162 = vadd.f32 %v4574, 1.0
        %v5163 = vadd.f32 %v4575, 1.0
        %v5164 = vadd.f32 %v4576, 1.0
        %v5165 = vadd.f32 %v4577, 1.0
        %v5166 = vadd.f32 %v4578, 1.0
        %v5167 = vmul.f32 %v2815, %v4579
        %v5168 = vmul.f32 %v2816, %v4580
        %v5169 = vmul.f32 %v2817, %v4581
        %v5170 = vmul.f32 %v2818, %v4582
        %v5171 = vmul.f32 %v2819, %v4583
        %v5172 = vmul.f32 %v2820, %v4584
        %v5173 = vmul.f32 %v2821, %v4585
        %v5174 = vmul.f32 %v2822, %v4586
        %v5175 = vmul.f32 %v2823, %v4587
        %v5176 = vmul.f32 %v2824, %v4588
        %v5177 = vmul.f32 %v2825, %v4589
        %v5178 = vmul.f32 %v2826, %v4590
        %v5179 = vmul.f32 %v2827, %v4591
        %v5180 = vmul.f32 %v2828, %v4592
        %v5181 = vmul.f32 %v2829, %v4593
        %v5182 = vmul.f32 %v2830, %v4594
        %v5183 = vmul.f32 %v2831, %v4595
        %v5184 = vmul.f32 %v2832, %v4596
        %v5185 = vmul.f32 %v2833, %v4597
        %v5186 = vmul.f32 %v2834, %v4598
        %v5187 = vmul.f32 %v2835, %v4599
        %v5188 = vmul.f32 %v2836, %v4600
        %v5189 = vmul.f32 %v2837, %v4601
        %v5190 = vmul.f32 %v2838, %v4602
        %v5191 = vmul.f32 %v2839, %v4603
        %v5192 = vmul.f32 %v2840, %v4604
        %v5193 = vmul.f32 %v2841, %v4605
        %v5194 = vmul.f32 %v2842, %v4606
        %v5195 = vmul.f32 %v2843, %v4607
        %v5196 = vmul.f32 %v2844, %v4608
        %v5197 = vmul.f32 %v2845, %v4609
        %v5198 = vmul.f32 %v2846, %v4610
        %v5199 = vmul.f32 %v2847, %v4611
        %v5200 = vmul.f32 %v2848, %v4612
        %v5201 = vmul.f32 %v2849, %v4613
        %v5202 = vmul.f32 %v2850, %v4614
        %v5203 = vmul.f32 %v2851, %v4615
        %v5204 = vmul.f32 %v2852, %v4616
        %v5205 = vmul.f32 %v2853, %v4617
        %v5206 = vmul.f32 %v2854, %v4618
        %v5207 = vmul.f32 %v2855, %v4619
        %v5208 = vmul.f32 %v2856, %v4620
        %v5209 = vmul.f32 %v2857, %v4621
        %v5210 = vmul.f32 %v2858, %v4622
        %v5211 = vmul.f32 %v2859, %v4623
        %v5212 = vmul.f32 %v2860, %v4624
        %v5213 = vmul.f32 %v2861, %v4625
        %v5214 = vmul.f32 %v2862, %v4626
        %v5215 = vmul.f32 %v2863, %v4627
        %v5216 = vmul.f32 %v2864, %v4628
        %v5217 = vmul.f32 %v2865, %v4629
        %v5218 = vmul.f32 %v2866, %v4630
        %v5219 = vmul.f32 %v2867, %v4631
        %v5220 = vmul.f32 %v2868, %v4632
        %v5221 = vmul.f32 %v2869, %v4633
        %v5222 = vmul.f32 %v2870, %v4634
        %v5223 = vmul.f32 %v2871, %v4635
        %v5224 = vmul.f32 %v2872, %v4636
        %v5225 = vmul.f32 %v2873, %v4637
        %v5226 = vmul.f32 %v2874, %v4638
        %v5227 = vmul.f32 %v2875, %v4639
        %v5228 = vmul.f32 %v2876, %v4640
        %v5229 = vmul.f32 %v2877, %v4641
        %v5230 = vmul.f32 %v2878, %v4642
        %v5231 = vmul.f32 %v2879, %v4643
        %v5232 = vmul.f32 %v2880, %v4644
        %v5233 = vmul.f32 %v2881, %v4645
        %v5234 = vmul.f32 %v2882, %v4646
        %v5235 = vmul.f32 %v2883, %v4647
        %v5236 = vmul.f32 %v2884, %v4648
        %v5237 = vmul.f32 %v2885, %v4649
        %v5238 = vmul.f32 %v2886, %v4650
        %v5239 = vmul.f32 %v2887, %v4651
        %v5240 = vmul.f32 %v2888, %v4652
        %v5241 = vmul.f32 %v2889, %v4653
        %v5242 = vmul.f32 %v2890, %v4654
        %v5243 = vmul.f32 %v2891, %v4655
        %v5244 = vmul.f32 %v2892, %v4656
        %v5245 = vmul.f32 %v2893, %v4657
        %v5246 = vmul.f32 %v2894, %v4658
        %v5247 = vmul.f32 %v2895, %v4659
        %v5248 = vmul.f32 %v2896, %v4660
        %v5249 = vmul.f32 %v2897, %v4661
        %v5250 = vmul.f32 %v2898, %v4662
        %v5251 = vmul.f32 %v2899, %v4663
        %v5252 = vmul.f32 %v2900, %v4664
        %v5253 = vmul.f32 %v2901, %v4665
        %v5254 = vmul.f32 %v2902, %v4666
        %v5255 = vmul.f32 %v2903, %v4667
        %v5256 = vmul.f32 %v2904, %v4668
        %v5257 = vmul.f32 %v2905, %v4669
        %v5258 = vmul.f32 %v2906, %v4670
        %v5259 = vmul.f32 %v2907, %v4671
        %v5260 = vmul.f32 %v2908, %v4672
        %v5261 = vmul.f32 %v2909, %v4673
        %v5262 = vmul.f32 %v2910, %v4674
        %v5263 = vmul.f32 %v2911, %v4675
        %v5264 = vmul.f32 %v2912, %v4676
        %v5265 = vmul.f32 %v2913, %v4677
        %v5266 = vmul.f32 %v2914, %v4678
        %v5267 = vmul.f32 %v2915, %v4679
        %v5268 = vmul.f32 %v2916, %v4680
        %v5269 = vmul.f32 %v2917, %v4681
        %v5270 = vmul.f32 %v2918, %v4682
        %v5271 = vmul.f32 %v2919, %v4683
        %v5272 = vmul.f32 %v2920, %v4684
        %v5273 = vmul.f32 %v2921, %v4685
        %v5274 = vmul.f32 %v2922, %v4686
        %v5275 = vmul.f32 %v2923, %v4687
        %v5276 = vmul.f32 %v2924, %v4688
        %v5277 = vmul.f32 %v2925, %v4689
        %v5278 = vmul.f32 %v2926, %v4690
        %v5279 = vmul.f32 %v2927, %v4691
        %v5280 = vmul.f32 %v2928, %v4692
        %v5281 = vmul.f32 %v2929, %v4693
        %v5282 = vmul.f32 %v2930, %v4694
        %v5283 = vmul.f32 %v2931, %v4695
        %v5284 = vmul.f32 %v2932, %v4696
        %v5285 = vmul.f32 %v2933, %v4697
        %v5286 = vmul.f32 %v2934, %v4698
        %v5287 = vmul.f32 %v2935, %v4699
        %v5288 = vmul.f32 %v2936, %v4700
        %v5289 = vmul.f32 %v2937, %v4701
        %v5290 = vmul.f32 %v2938, %v4702
        %v5291 = vmul.f32 %v2939, %v4703
        %v5292 = vmul.f32 %v2940, %v4704
        %v5293 = vmul.f32 %v2941, %v4705
        %v5294 = vmul.f32 %v2942, %v4706
        %v5295 = vmul.f32 %v2943, %v4707
        %v5296 = vmul.f32 %v2944, %v4708
        %v5297 = vmul.f32 %v2945, %v4709
        %v5298 = vmul.f32 %v2946, %v4710
        %v5299 = vmul.f32 %v2947, %v4711
        %v5300 = vmul.f32 %v2948, %v4712
        %v5301 = vmul.f32 %v2949, %v4713
        %v5302 = vmul.f32 %v2950, %v4714
        %v5303 = vmul.f32 %v2951, %v4715
        %v5304 = vmul.f32 %v2952, %v4716
        %v5305 = vmul.f32 %v2953, %v4717
        %v5306 = vmul.f32 %v2954, %v4718
        %v5307 = vmul.f32 %v2955, %v4719
        %v5308 = vmul.f32 %v2956, %v4720
        %v5309 = vmul.f32 %v2957, %v4721
        %v5310 = vmul.f32 %v2958, %v4722
        %v5311 = vmul.f32 %v2959, %v4723
        %v5312 = vmul.f32 %v2960, %v4724
        %v5313 = vmul.f32 %v2961, %v4725
        %v5314 = vmul.f32 %v2962, %v4726
        %v5315 = vmul.f32 %v2963, %v4727
        %v5316 = vmul.f32 %v2964, %v4728
        %v5317 = vmul.f32 %v2965, %v4729
        %v5318 = vmul.f32 %v2966, %v4730
        %v5319 = vmul.f32 %v2967, %v4731
        %v5320 = vmul.f32 %v2968, %v4732
        %v5321 = vmul.f32 %v2969, %v4733
        %v5322 = vmul.f32 %v2970, %v4734
        %v5323 = vmul.f32 %v2971, %v4735
        %v5324 = vmul.f32 %v2972, %v4736
        %v5325 = vmul.f32 %v2973, %v4737
        %v5326 = vmul.f32 %v2974, %v4738
        %v5327 = vmul.f32 %v2975, %v4739
        %v5328 = vmul.f32 %v2976, %v4740
        %v5329 = vmul.f32 %v2977, %v4741
        %v5330 = vmul.f32 %v2978, %v4742
        %v5331 = vmul.f32 %v2979, %v4743
        %v5332 = vmul.f32 %v2980, %v4744
        %v5333 = vmul.f32 %v2981, %v4745
        %v5334 = vmul.f32 %v2982, %v4746
        %v5335 = vmul.f32 %v2983, %v4747
        %v5336 = vmul.f32 %v2984, %v4748
        %v5337 = vmul.f32 %v2985, %v4749
        %v5338 = vmul.f32 %v2986, %v4750
        %v5339 = vmul.f32 %v2987, %v4751
        %v5340 = vmul.f32 %v2988, %v4752
        %v5341 = vmul.f32 %v2989, %v4753
        %v5342 = vmul.f32 %v2990, %v4754
        %v5343 = vmul.f32 %v2991, %v4755
        %v5344 = vmul.f32 %v2992, %v4756
        %v5345 = vmul.f32 %v2993, %v4757
        %v5346 = vmul.f32 %v2994, %v4758
        %v5347 = vmul.f32 %v2995, %v4759
        %v5348 = vmul.f32 %v2996, %v4760
        %v5349 = vmul.f32 %v2997, %v4761
        %v5350 = vmul.f32 %v2998, %v4762
        %v5351 = vmul.f32 %v2999, %v4763
        %v5352 = vmul.f32 %v3000, %v4764
        %v5353 = vmul.f32 %v3001, %v4765
        %v5354 = vmul.f32 %v3002, %v4766
        %v5355 = vmul.f32 %v3003, %v4767
        %v5356 = vmul.f32 %v3004, %v4768
        %v5357 = vmul.f32 %v3005, %v4769
        %v5358 = vmul.f32 %v3006, %v4770
        %v5359 = vmul.f32 %v3007, %v4771
        %v5360 = vmul.f32 %v3008, %v4772
        %v5361 = vmul.f32 %v3009, %v4773
        %v5362 = vmul.f32 %v3010, %v4774
        %v5363 = vmul.f32 %v3011, %v4775
        %v5364 = vmul.f32 %v3012, %v4776
        %v5365 = vmul.f32 %v3013, %v4777
        %v5366 = vmul.f32 %v3014, %v4778
        %v5367 = vmul.f32 %v3015, %v4779
        %v5368 = vmul.f32 %v3016, %v4780
        %v5369 = vmul.f32 %v3017, %v4781
        %v5370 = vmul.f32 %v3018, %v4782
        %v5371 = vmul.f32 %v3019, %v4783
        %v5372 = vmul.f32 %v3020, %v4784
        %v5373 = vmul.f32 %v3021, %v4785
        %v5374 = vmul.f32 %v3022, %v4786
        %v5375 = vmul.f32 %v3023, %v4787
        %v5376 = vmul.f32 %v3024, %v4788
        %v5377 = vmul.f32 %v3025, %v4789
        %v5378 = vmul.f32 %v3026, %v4790
        %v5379 = vmul.f32 %v3027, %v4791
        %v5380 = vmul.f32 %v3028, %v4792
        %v5381 = vmul.f32 %v3029, %v4793
        %v5382 = vmul.f32 %v3030, %v4794
        %v5383 = vmul.f32 %v3031, %v4795
        %v5384 = vmul.f32 %v3032, %v4796
        %v5385 = vmul.f32 %v3033, %v4797
        %v5386 = vmul.f32 %v3034, %v4798
        %v5387 = vmul.f32 %v3035, %v4799
        %v5388 = vmul.f32 %v3036, %v4800
        %v5389 = vmul.f32 %v3037, %v4801
        %v5390 = vmul.f32 %v3038, %v4802
        %v5391 = vmul.f32 %v3039, %v4803
        %v5392 = vmul.f32 %v3040, %v4804
        %v5393 = vmul.f32 %v3041, %v4805
        %v5394 = vmul.f32 %v3042, %v4806
        %v5395 = vmul.f32 %v3043, %v4807
        %v5396 = vmul.f32 %v3044, %v4808
        %v5397 = vmul.f32 %v3045, %v4809
        %v5398 = vmul.f32 %v3046, %v4810
        %v5399 = vmul.f32 %v3047, %v4811
        %v5400 = vmul.f32 %v3048, %v4812
        %v5401 = vmul.f32 %v3049, %v4813
        %v5402 = vmul.f32 %v3050, %v4814
        %v5403 = vmul.f32 %v3051, %v4815
        %v5404 = vmul.f32 %v3052, %v4816
        %v5405 = vmul.f32 %v3053, %v4817
        %v5406 = vmul.f32 %v3054, %v4818
        %v5407 = vmul.f32 %v3055, %v4819
        %v5408 = vmul.f32 %v3056, %v4820
        %v5409 = vmul.f32 %v3057, %v4821
        %v5410 = vmul.f32 %v3058, %v4822
        %v5411 = vmul.f32 %v3059, %v4823
        %v5412 = vmul.f32 %v3060, %v4824
        %v5413 = vmul.f32 %v3061, %v4825
        %v5414 = vmul.f32 %v3062, %v4826
        %v5415 = vmul.f32 %v3063, %v4827
        %v5416 = vmul.f32 %v3064, %v4828
        %v5417 = vmul.f32 %v3065, %v4829
        %v5418 = vmul.f32 %v3066, %v4830
        %v5419 = vmul.f32 %v3067, %v4831
        %v5420 = vmul.f32 %v3068, %v4832
        %v5421 = vmul.f32 %v3069, %v4833
        %v5422 = vmul.f32 %v3070, %v4834
        %v5423 = vmul.f32 %v3071, %v4835
        %v5424 = vmul.f32 %v3072, %v4836
        %v5425 = vmul.f32 %v3073, %v4837
        %v5426 = vmul.f32 %v3074, %v4838
        %v5427 = vmul.f32 %v3075, %v4839
        %v5428 = vmul.f32 %v3076, %v4840
        %v5429 = vmul.f32 %v3077, %v4841
        %v5430 = vmul.f32 %v3078, %v4842
        %v5431 = vmul.f32 %v3079, %v4843
        %v5432 = vmul.f32 %v3080, %v4844
        %v5433 = vmul.f32 %v3081, %v4845
        %v5434 = vmul.f32 %v3082, %v4846
        %v5435 = vmul.f32 %v3083, %v4847
        %v5436 = vmul.f32 %v3084, %v4848
        %v5437 = vmul.f32 %v3085, %v4849
        %v5438 = vmul.f32 %v3086, %v4850
        %v5439 = vmul.f32 %v3087, %v4851
        %v5440 = vmul.f32 %v3088, %v4852
        %v5441 = vmul.f32 %v3089, %v4853
        %v5442 = vmul.f32 %v3090, %v4854
        %v5443 = vmul.f32 %v3091, %v4855
        %v5444 = vmul.f32 %v3092, %v4856
        %v5445 = vmul.f32 %v3093, %v4857
        %v5446 = vmul.f32 %v3094, %v4858
        %v5447 = vmul.f32 %v3095, %v4859
        %v5448 = vmul.f32 %v3096, %v4860
        %v5449 = vmul.f32 %v3097, %v4861
        %v5450 = vmul.f32 %v3098, %v4862
        %v5451 = vmul.f32 %v3099, %v4863
        %v5452 = vmul.f32 %v3100, %v4864
        %v5453 = vmul.f32 %v3101, %v4865
        %v5454 = vmul.f32 %v3102, %v4866
        %v5455 = vmul.f32 %v3103, %v4867
        %v5456 = vmul.f32 %v3104, %v4868
        %v5457 = vmul.f32 %v3105, %v4869
        %v5458 = vmul.f32 %v3106, %v4870
        %v5459 = vmul.f32 %v3107, %v4871
        %v5460 = vmul.f32 %v3108, %v4872
        %v5461 = vmul.f32 %v3109, %v4873
        %v5462 = vmul.f32 %v3110, %v4874
        %v5463 = vmul.f32 %v3111, %v4875
        %v5464 = vmul.f32 %v3112, %v4876
        %v5465 = vmul.f32 %v3113, %v4877
        %v5466 = vmul.f32 %v3114, %v4878
        %v5467 = vmul.f32 %v3115, %v4879
        %v5468 = vmul.f32 %v3116, %v4880
        %v5469 = vmul.f32 %v3117, %v4881
        %v5470 = vmul.f32 %v3118, %v4882
        %v5471 = vmul.f32 %v3119, %v4883
        %v5472 = vmul.f32 %v3120, %v4884
        %v5473 = vmul.f32 %v3121, %v4885
        %v5474 = vmul.f32 %v3122, %v4886
        %v5475 = vmul.f32 %v3123, %v4887
        %v5476 = vmul.f32 %v3124, %v4888
        %v5477 = vmul.f32 %v3125, %v4889
        %v5478 = vmul.f32 %v3126, %v4890
        %v5479 = vmul.f32 %v3127, %v4891
        %v5480 = vmul.f32 %v3128, %v4892
        %v5481 = vmul.f32 %v3129, %v4893
        %v5482 = vmul.f32 %v3130, %v4894
        %v5483 = vmul.f32 %v3131, %v4895
        %v5484 = vmul.f32 %v3132, %v4896
        %v5485 = vmul.f32 %v3133, %v4897
        %v5486 = vmul.f32 %v3134, %v4898
        %v5487 = vmul.f32 %v3135, %v4899
        %v5488 = vmul.f32 %v3136, %v4900
        %v5489 = vmul.f32 %v3137, %v4901
        %v5490 = vmul.f32 %v3138, %v4902
        %v5491 = vmul.f32 %v3139, %v4903
        %v5492 = vmul.f32 %v3140, %v4904
        %v5493 = vmul.f32 %v3141, %v4905
        %v5494 = vmul.f32 %v3142, %v4906
        %v5495 = vmul.f32 %v3143, %v4907
        %v5496 = vmul.f32 %v3144, %v4908
        %v5497 = vmul.f32 %v3145, %v4909
        %v5498 = vmul.f32 %v3146, %v4910
        %v5499 = vmul.f32 %v3147, %v4911
        %v5500 = vmul.f32 %v3148, %v4912
        %v5501 = vmul.f32 %v3149, %v4913
        %v5502 = vmul.f32 %v3150, %v4914
        %v5503 = vmul.f32 %v3151, %v4915
        %v5504 = vmul.f32 %v3152, %v4916
        %v5505 = vmul.f32 %v3153, %v4917
        %v5506 = vmul.f32 %v3154, %v4918
        %v5507 = vmul.f32 %v3155, %v4919
        %v5508 = vmul.f32 %v3156, %v4920
        %v5509 = vmul.f32 %v3157, %v4921
        %v5510 = vmul.f32 %v3158, %v4922
        %v5511 = vmul.f32 %v3159, %v4923
        %v5512 = vmul.f32 %v3160, %v4924
        %v5513 = vmul.f32 %v3161, %v4925
        %v5514 = vmul.f32 %v3162, %v4926
        %v5515 = vmul.f32 %v3163, %v4927
        %v5516 = vmul.f32 %v3164, %v4928
        %v5517 = vmul.f32 %v3165, %v4929
        %v5518 = vmul.f32 %v3166, %v4930
        %v5519 = vmul.f32 %v3167, %v4931
        %v5520 = vmul.f32 %v3168, %v4932
        %v5521 = vmul.f32 %v3169, %v4933
        %v5522 = vmul.f32 %v3170, %v4934
        %v5523 = vmul.f32 %v3171, %v4935
        %v5524 = vmul.f32 %v3172, %v4936
        %v5525 = vmul.f32 %v3173, %v4937
        %v5526 = vmul.f32 %v3174, %v4938
        %v5527 = vmul.f32 %v3175, %v4939
        %v5528 = vmul.f32 %v3176, %v4940
        %v5529 = vmul.f32 %v3177, %v4941
        %v5530 = vmul.f32 %v3178, %v4942
        %v5531 = vmul.f32 %v3179, %v4943
        %v5532 = vmul.f32 %v3180, %v4944
        %v5533 = vmul.f32 %v3181, %v4945
        %v5534 = vmul.f32 %v3182, %v4946
        %v5535 = vmul.f32 %v3183, %v4947
        %v5536 = vmul.f32 %v3184, %v4948
        %v5537 = vmul.f32 %v3185, %v4949
        %v5538 = vmul.f32 %v3186, %v4950
        %v5539 = vmul.f32 %v3187, %v4951
        %v5540 = vmul.f32 %v3188, %v4952
        %v5541 = vmul.f32 %v3189, %v4953
        %v5542 = vmul.f32 %v3190, %v4954
        %v5543 = vmul.f32 %v3191, %v4955
        %v5544 = vmul.f32 %v3192, %v4956
        %v5545 = vmul.f32 %v3193, %v4957
        %v5546 = vmul.f32 %v3194, %v4958
        %v5547 = vmul.f32 %v3195, %v4959
        %v5548 = vmul.f32 %v3196, %v4960
        %v5549 = vmul.f32 %v3197, %v4961
        %v5550 = vmul.f32 %v3198, %v4962
        %v5551 = vmul.f32 %v3199, %v4963
        %v5552 = vmul.f32 %v3200, %v4964
        %v5553 = vmul.f32 %v3201, %v4965
        %v5554 = vmul.f32 %v3202, %v4966
        %v5555 = vmul.f32 %v3203, %v4967
        %v5556 = vmul.f32 %v3204, %v4968
        %v5557 = vmul.f32 %v3205, %v4969
        %v5558 = vmul.f32 %v3206, %v4970
        %v5559 = vmul.f32 %v3207, %v4971
        %v5560 = vmul.f32 %v3208, %v4972
        %v5561 = vmul.f32 %v3209, %v4973
        %v5562 = vmul.f32 %v3210, %v4974
        %v5563 = vmul.f32 %v3211, %v4975
        %v5564 = vmul.f32 %v3212, %v4976
        %v5565 = vmul.f32 %v3213, %v4977
        %v5566 = vmul.f32 %v3214, %v4978
        %v5567 = vmul.f32 %v3215, %v4979
        %v5568 = vmul.f32 %v3216, %v4980
        %v5569 = vmul.f32 %v3217, %v4981
        %v5570 = vmul.f32 %v3218, %v4982
        %v5571 = vmul.f32 %v3219, %v4983
        %v5572 = vmul.f32 %v3220, %v4984
        %v5573 = vmul.f32 %v3221, %v4985
        %v5574 = vmul.f32 %v3222, %v4986
        %v5575 = vmul.f32 %v3223, %v4987
        %v5576 = vmul.f32 %v3224, %v4988
        %v5577 = vmul.f32 %v3225, %v4989
        %v5578 = vmul.f32 %v3226, %v4990
        %v5579 = vmul.f32 %v3227, %v4991
        %v5580 = vmul.f32 %v3228, %v4992
        %v5581 = vmul.f32 %v3229, %v4993
        %v5582 = vmul.f32 %v3230, %v4994
        %v5583 = vmul.f32 %v3231, %v4995
        %v5584 = vmul.f32 %v3232, %v4996
        %v5585 = vmul.f32 %v3233, %v4997
        %v5586 = vmul.f32 %v3234, %v4998
        %v5587 = vmul.f32 %v3235, %v4999
        %v5588 = vmul.f32 %v3236, %v5000
        %v5589 = vmul.f32 %v3237, %v5001
        %v5590 = vmul.f32 %v3238, %v5002
        %v5591 = vmul.f32 %v3239, %v5003
        %v5592 = vmul.f32 %v3240, %v5004
        %v5593 = vmul.f32 %v3241, %v5005
        %v5594 = vmul.f32 %v3242, %v5006
        %v5595 = vmul.f32 %v3243, %v5007
        %v5596 = vmul.f32 %v3244, %v5008
        %v5597 = vmul.f32 %v3245, %v5009
        %v5598 = vmul.f32 %v3246, %v5010
        %v5599 = vmul.f32 %v3247, %v5011
        %v5600 = vmul.f32 %v3248, %v5012
        %v5601 = vmul.f32 %v3249, %v5013
        %v5602 = vmul.f32 %v3250, %v5014
        %v5603 = vmul.f32 %v3251, %v5015
        %v5604 = vmul.f32 %v3252, %v5016
        %v5605 = vmul.f32 %v3253, %v5017
        %v5606 = vmul.f32 %v3254, %v5018
        %v5607 = vmul.f32 %v3255, %v5019
        %v5608 = vmul.f32 %v3256, %v5020
        %v5609 = vmul.f32 %v3257, %v5021
        %v5610 = vmul.f32 %v3258, %v5022
        %v5611 = vmul.f32 %v3259, %v5023
        %v5612 = vmul.f32 %v3260, %v5024
        %v5613 = vmul.f32 %v3261, %v5025
        %v5614 = vmul.f32 %v3262, %v5026
        %v5615 = vmul.f32 %v3263, %v5027
        %v5616 = vmul.f32 %v3264, %v5028
        %v5617 = vmul.f32 %v3265, %v5029
        %v5618 = vmul.f32 %v3266, %v5030
        %v5619 = vmul.f32 %v3267, %v5031
        %v5620 = vmul.f32 %v3268, %v5032
        %v5621 = vmul.f32 %v3269, %v5033
        %v5622 = vmul.f32 %v3270, %v5034
        %v5623 = vmul.f32 %v3271, %v5035
        %v5624 = vmul.f32 %v3272, %v5036
        %v5625 = vmul.f32 %v3273, %v5037
        %v5626 = vmul.f32 %v3274, %v5038
        %v5627 = vmul.f32 %v3275, %v5039
        %v5628 = vmul.f32 %v3276, %v5040
        %v5629 = vmul.f32 %v3277, %v5041
        %v5630 = vmul.f32 %v3278, %v5042
        %v5631 = vmul.f32 %v3279, %v5043
        %v5632 = vmul.f32 %v3280, %v5044
        %v5633 = vmul.f32 %v3281, %v5045
        %v5634 = vmul.f32 %v3282, %v5046
        %v5635 = vmul.f32 %v3283, %v5047
        %v5636 = vmul.f32 %v3284, %v5048
        %v5637 = vmul.f32 %v3285, %v5049
        %v5638 = vmul.f32 %v3286, %v5050
        %v5639 = vmul.f32 %v3287, %v5051
        %v5640 = vmul.f32 %v3288, %v5052
        %v5641 = vmul.f32 %v3289, %v5053
        %v5642 = vmul.f32 %v3290, %v5054
        %v5643 = vmul.f32 %v3291, %v5055
        %v5644 = vmul.f32 %v3292, %v5056
        %v5645 = vmul.f32 %v3293, %v5057
        %v5646 = vmul.f32 %v3294, %v5058
        %v5647 = vmul.f32 %v3295, %v5059
        %v5648 = vmul.f32 %v3296, %v5060
        %v5649 = vmul.f32 %v3297, %v5061
        %v5650 = vmul.f32 %v3298, %v5062
        %v5651 = vmul.f32 %v3299, %v5063
        %v5652 = vmul.f32 %v3300, %v5064
        %v5653 = vmul.f32 %v3301, %v5065
        %v5654 = vmul.f32 %v3302, %v5066
        %v5655 = vmul.f32 %v3303, %v5067
        %v5656 = vmul.f32 %v3304, %v5068
        %v5657 = vmul.f32 %v3305, %v5069
        %v5658 = vmul.f32 %v3306, %v5070
        %v5659 = vmul.f32 %v3307, %v5071
        %v5660 = vmul.f32 %v3308, %v5072
        %v5661 = vmul.f32 %v3309, %v5073
        %v5662 = vmul.f32 %v3310, %v5074
        %v5663 = vmul.f32 %v3311, %v5075
        %v5664 = vmul.f32 %v3312, %v5076
        %v5665 = vmul.f32 %v3313, %v5077
        %v5666 = vmul.f32 %v3314, %v5078
        %v5667 = vmul.f32 %v3315, %v5079
        %v5668 = vmul.f32 %v3316, %v5080
        %v5669 = vmul.f32 %v3317, %v5081
        %v5670 = vmul.f32 %v3318, %v5082
        %v5671 = vmul.f32 %v3319, %v5083
        %v5672 = vmul.f32 %v3320, %v5084
        %v5673 = vmul.f32 %v3321, %v5085
        %v5674 = vmul.f32 %v3322, %v5086
        %v5675 = vmul.f32 %v3323, %v5087
        %v5676 = vmul.f32 %v3324, %v5088
        %v5677 = vmul.f32 %v3325, %v5089
        %v5678 = vmul.f32 %v3326, %v5090
        %v5679 = vmul.f32 %v3327, %v5091
        %v5680 = vmul.f32 %v3328, %v5092
        %v5681 = vmul.f32 %v3329, %v5093
        %v5682 = vmul.f32 %v3330, %v5094
        %v5683 = vmul.f32 %v3331, %v5095
        %v5684 = vmul.f32 %v3332, %v5096
        %v5685 = vmul.f32 %v3333, %v5097
        %v5686 = vmul.f32 %v3334, %v5098
        %v5687 = vmul.f32 %v3335, %v5099
        %v5688 = vmul.f32 %v3336, %v5100
        %v5689 = vmul.f32 %v3337, %v5101
        %v5690 = vmul.f32 %v3338, %v5102
        %v5691 = vmul.f32 %v3339, %v5103
        %v5692 = vmul.f32 %v3340, %v5104
        %v5693 = vmul.f32 %v3341, %v5105
        %v5694 = vmul.f32 %v3342, %v5106
        %v5695 = vmul.f32 %v3343, %v5107
        %v5696 = vmul.f32 %v3344, %v5108
        %v5697 = vmul.f32 %v3345, %v5109
        %v5698 = vmul.f32 %v3346, %v5110
        %v5699 = vmul.f32 %v3347, %v5111
        %v5700 = vmul.f32 %v3348, %v5112
        %v5701 = vmul.f32 %v3349, %v5113
        %v5702 = vmul.f32 %v3350, %v5114
        %v5703 = vmul.f32 %v3351, %v5115
        %v5704 = vmul.f32 %v3352, %v5116
        %v5705 = vmul.f32 %v3353, %v5117
        %v5706 = vmul.f32 %v3354, %v5118
        %v5707 = vmul.f32 %v3355, %v5119
        %v5708 = vmul.f32 %v3356, %v5120
        %v5709 = vmul.f32 %v3357, %v5121
        %v5710 = vmul.f32 %v3358, %v5122
        %v5711 = vmul.f32 %v3359, %v5123
        %v5712 = vmul.f32 %v3360, %v5124
        %v5713 = vmul.f32 %v3361, %v5125
        %v5714 = vmul.f32 %v3362, %v5126
        %v5715 = vmul.f32 %v3363, %v5127
        %v5716 = vmul.f32 %v3364, %v5128
        %v5717 = vmul.f32 %v3365, %v5129
        %v5718 = vmul.f32 %v3366, %v5130
        %v5719 = vmul.f32 %v3367, %v5131
        %v5720 = vmul.f32 %v3368, %v5132
        %v5721 = vmul.f32 %v3369, %v5133
        %v5722 = vmul.f32 %v3370, %v5134
        %v5723 = vmul.f32 %v3371, %v5135
        %v5724 = vmul.f32 %v3372, %v5136
        %v5725 = vmul.f32 %v3373, %v5137
        %v5726 = vmul.f32 %v3374, %v5138
        %v5727 = vmul.f32 %v3375, %v5139
        %v5728 = vmul.f32 %v3376, %v5140
        %v5729 = vmul.f32 %v3377, %v5141
        %v5730 = vmul.f32 %v3378, %v5142
        %v5731 = vmul.f32 %v3379, %v5143
        %v5732 = vmul.f32 %v3380, %v5144
        %v5733 = vmul.f32 %v3381, %v5145
        %v5734 = vmul.f32 %v3382, %v5146
        %v5735 = vmul.f32 %v3383, %v5147
        %v5736 = vmul.f32 %v3384, %v5148
        %v5737 = vmul.f32 %v3385, %v5149
        %v5738 = vmul.f32 %v3386, %v5150
        %v5739 = vmul.f32 %v3387, %v5151
        %v5740 = vmul.f32 %v3388, %v5152
        %v5741 = vmul.f32 %v3389, %v5153
        %v5742 = vmul.f32 %v3390, %v5154
        %v5743 = vmul.f32 %v3391, %v5155
        %v5744 = vmul.f32 %v3392, %v5156
        %v5745 = vmul.f32 %v3393, %v5157
        %v5746 = vmul.f32 %v3394, %v5158
        %v5747 = vmul.f32 %v3395, %v5159
        %v5748 = vmul.f32 %v3396, %v5160
        %v5749 = vmul.f32 %v3397, %v5161
        %v5750 = vmul.f32 %v3398, %v5162
        %v5751 = vmul.f32 %v3399, %v5163
        %v5752 = vmul.f32 %v3400, %v5164
        %v5753 = vmul.f32 %v3401, %v5165
        %v5754 = vmul.f32 %v3402, %v5166
        %v5755 = vpack.c.bf16 %v5170, %v5167
        %v5756 = vpack.c.bf16 %v5171, %v5168
        %v5757 = vpack.c.bf16 %v5172, %v5169
        %v5758 = vpack.c.bf16 %v5176, %v5173
        %v5759 = vpack.c.bf16 %v5177, %v5174
        %v5760 = vpack.c.bf16 %v5178, %v5175
        %v5761 = vpack.c.bf16 %v5182, %v5179
        %v5762 = vpack.c.bf16 %v5183, %v5180
        %v5763 = vpack.c.bf16 %v5184, %v5181
        %v5764 = vpack.c.bf16 %v5188, %v5185
        %v5765 = vpack.c.bf16 %v5189, %v5186
        %v5766 = vpack.c.bf16 %v5190, %v5187
        %v5767 = vpack.c.bf16 %v5194, %v5191
        %v5768 = vpack.c.bf16 %v5195, %v5192
        %v5769 = vpack.c.bf16 %v5196, %v5193
        %v5770 = vpack.c.bf16 %v5200, %v5197
        %v5771 = vpack.c.bf16 %v5201, %v5198
        %v5772 = vpack.c.bf16 %v5202, %v5199
        %v5773 = vpack.c.bf16 %v5206, %v5203
        %v5774 = vpack.c.bf16 %v5207, %v5204
        %v5775 = vpack.c.bf16 %v5208, %v5205
        %v5776 = vpack.c.bf16 %v5212, %v5209
        %v5777 = vpack.c.bf16 %v5213, %v5210
        %v5778 = vpack.c.bf16 %v5214, %v5211
        %v5779 = vpack.c.bf16 %v5218, %v5215
        %v5780 = vpack.c.bf16 %v5219, %v5216
        %v5781 = vpack.c.bf16 %v5220, %v5217
        %v5782 = vpack.c.bf16 %v5224, %v5221
        %v5783 = vpack.c.bf16 %v5225, %v5222
        %v5784 = vpack.c.bf16 %v5226, %v5223
        %v5785 = vpack.c.bf16 %v5230, %v5227
        %v5786 = vpack.c.bf16 %v5231, %v5228
        %v5787 = vpack.c.bf16 %v5232, %v5229
        %v5788 = vpack.c.bf16 %v5236, %v5233
        %v5789 = vpack.c.bf16 %v5237, %v5234
        %v5790 = vpack.c.bf16 %v5238, %v5235
        %v5791 = vpack.c.bf16 %v5242, %v5239
        %v5792 = vpack.c.bf16 %v5243, %v5240
        %v5793 = vpack.c.bf16 %v5244, %v5241
        %v5794 = vpack.c.bf16 %v5248, %v5245
        %v5795 = vpack.c.bf16 %v5249, %v5246
        %v5796 = vpack.c.bf16 %v5250, %v5247
        %v5797 = vpack.c.bf16 %v5254, %v5251
        %v5798 = vpack.c.bf16 %v5255, %v5252
        %v5799 = vpack.c.bf16 %v5256, %v5253
        %v5800 = vpack.c.bf16 %v5260, %v5257
        %v5801 = vpack.c.bf16 %v5261, %v5258
        %v5802 = vpack.c.bf16 %v5262, %v5259
        %v5803 = vpack.c.bf16 %v5266, %v5263
        %v5804 = vpack.c.bf16 %v5267, %v5264
        %v5805 = vpack.c.bf16 %v5268, %v5265
        %v5806 = vpack.c.bf16 %v5272, %v5269
        %v5807 = vpack.c.bf16 %v5273, %v5270
        %v5808 = vpack.c.bf16 %v5274, %v5271
        %v5809 = vpack.c.bf16 %v5278, %v5275
        %v5810 = vpack.c.bf16 %v5279, %v5276
        %v5811 = vpack.c.bf16 %v5280, %v5277
        %v5812 = vpack.c.bf16 %v5284, %v5281
        %v5813 = vpack.c.bf16 %v5285, %v5282
        %v5814 = vpack.c.bf16 %v5286, %v5283
        %v5815 = vpack.c.bf16 %v5290, %v5287
        %v5816 = vpack.c.bf16 %v5291, %v5288
        %v5817 = vpack.c.bf16 %v5292, %v5289
        %v5818 = vpack.c.bf16 %v5296, %v5293
        %v5819 = vpack.c.bf16 %v5297, %v5294
        %v5820 = vpack.c.bf16 %v5298, %v5295
        %v5821 = vpack.c.bf16 %v5302, %v5299
        %v5822 = vpack.c.bf16 %v5303, %v5300
        %v5823 = vpack.c.bf16 %v5304, %v5301
        %v5824 = vpack.c.bf16 %v5308, %v5305
        %v5825 = vpack.c.bf16 %v5309, %v5306
        %v5826 = vpack.c.bf16 %v5310, %v5307
        %v5827 = vpack.c.bf16 %v5314, %v5311
        %v5828 = vpack.c.bf16 %v5315, %v5312
        %v5829 = vpack.c.bf16 %v5316, %v5313
        %v5830 = vpack.c.bf16 %v5320, %v5317
        %v5831 = vpack.c.bf16 %v5321, %v5318
        %v5832 = vpack.c.bf16 %v5322, %v5319
        %v5833 = vpack.c.bf16 %v5326, %v5323
        %v5834 = vpack.c.bf16 %v5327, %v5324
        %v5835 = vpack.c.bf16 %v5328, %v5325
        %v5836 = vpack.c.bf16 %v5332, %v5329
        %v5837 = vpack.c.bf16 %v5333, %v5330
        %v5838 = vpack.c.bf16 %v5334, %v5331
        %v5839 = vpack.c.bf16 %v5338, %v5335
        %v5840 = vpack.c.bf16 %v5339, %v5336
        %v5841 = vpack.c.bf16 %v5340, %v5337
        %v5842 = vpack.c.bf16 %v5344, %v5341
        %v5843 = vpack.c.bf16 %v5345, %v5342
        %v5844 = vpack.c.bf16 %v5346, %v5343
        %v5845 = vpack.c.bf16 %v5350, %v5347
        %v5846 = vpack.c.bf16 %v5351, %v5348
        %v5847 = vpack.c.bf16 %v5352, %v5349
        %v5848 = vpack.c.bf16 %v5356, %v5353
        %v5849 = vpack.c.bf16 %v5357, %v5354
        %v5850 = vpack.c.bf16 %v5358, %v5355
        %v5851 = vpack.c.bf16 %v5362, %v5359
        %v5852 = vpack.c.bf16 %v5363, %v5360
        %v5853 = vpack.c.bf16 %v5364, %v5361
        %v5854 = vpack.c.bf16 %v5368, %v5365
        %v5855 = vpack.c.bf16 %v5369, %v5366
        %v5856 = vpack.c.bf16 %v5370, %v5367
        %v5857 = vpack.c.bf16 %v5374, %v5371
        %v5858 = vpack.c.bf16 %v5375, %v5372
        %v5859 = vpack.c.bf16 %v5376, %v5373
        %v5860 = vpack.c.bf16 %v5380, %v5377
        %v5861 = vpack.c.bf16 %v5381, %v5378
        %v5862 = vpack.c.bf16 %v5382, %v5379
        %v5863 = vpack.c.bf16 %v5386, %v5383
        %v5864 = vpack.c.bf16 %v5387, %v5384
        %v5865 = vpack.c.bf16 %v5388, %v5385
        %v5866 = vpack.c.bf16 %v5392, %v5389
        %v5867 = vpack.c.bf16 %v5393, %v5390
        %v5868 = vpack.c.bf16 %v5394, %v5391
        %v5869 = vpack.c.bf16 %v5398, %v5395
        %v5870 = vpack.c.bf16 %v5399, %v5396
        %v5871 = vpack.c.bf16 %v5400, %v5397
        %v5872 = vpack.c.bf16 %v5404, %v5401
        %v5873 = vpack.c.bf16 %v5405, %v5402
        %v5874 = vpack.c.bf16 %v5406, %v5403
        %v5875 = vpack.c.bf16 %v5410, %v5407
        %v5876 = vpack.c.bf16 %v5411, %v5408
        %v5877 = vpack.c.bf16 %v5412, %v5409
        %v5878 = vpack.c.bf16 %v5416, %v5413
        %v5879 = vpack.c.bf16 %v5417, %v5414
        %v5880 = vpack.c.bf16 %v5418, %v5415
        %v5881 = vpack.c.bf16 %v5422, %v5419
        %v5882 = vpack.c.bf16 %v5423, %v5420
        %v5883 = vpack.c.bf16 %v5424, %v5421
        %v5884 = vpack.c.bf16 %v5428, %v5425
        %v5885 = vpack.c.bf16 %v5429, %v5426
        %v5886 = vpack.c.bf16 %v5430, %v5427
        %v5887 = vpack.c.bf16 %v5434, %v5431
        %v5888 = vpack.c.bf16 %v5435, %v5432
        %v5889 = vpack.c.bf16 %v5436, %v5433
        %v5890 = vpack.c.bf16 %v5440, %v5437
        %v5891 = vpack.c.bf16 %v5441, %v5438
        %v5892 = vpack.c.bf16 %v5442, %v5439
        %v5893 = vpack.c.bf16 %v5446, %v5443
        %v5894 = vpack.c.bf16 %v5447, %v5444
        %v5895 = vpack.c.bf16 %v5448, %v5445
        %v5896 = vpack.c.bf16 %v5452, %v5449
        %v5897 = vpack.c.bf16 %v5453, %v5450
        %v5898 = vpack.c.bf16 %v5454, %v5451
        %v5899 = vpack.c.bf16 %v5458, %v5455
        %v5900 = vpack.c.bf16 %v5459, %v5456
        %v5901 = vpack.c.bf16 %v5460, %v5457
        %v5902 = vpack.c.bf16 %v5464, %v5461
        %v5903 = vpack.c.bf16 %v5465, %v5462
        %v5904 = vpack.c.bf16 %v5466, %v5463
        %v5905 = vpack.c.bf16 %v5470, %v5467
        %v5906 = vpack.c.bf16 %v5471, %v5468
        %v5907 = vpack.c.bf16 %v5472, %v5469
        %v5908 = vpack.c.bf16 %v5476, %v5473
        %v5909 = vpack.c.bf16 %v5477, %v5474
        %v5910 = vpack.c.bf16 %v5478, %v5475
        %v5911 = vpack.c.bf16 %v5482, %v5479
        %v5912 = vpack.c.bf16 %v5483, %v5480
        %v5913 = vpack.c.bf16 %v5484, %v5481
        %v5914 = vpack.c.bf16 %v5488, %v5485
        %v5915 = vpack.c.bf16 %v5489, %v5486
        %v5916 = vpack.c.bf16 %v5490, %v5487
        %v5917 = vpack.c.bf16 %v5494, %v5491
        %v5918 = vpack.c.bf16 %v5495, %v5492
        %v5919 = vpack.c.bf16 %v5496, %v5493
        %v5920 = vpack.c.bf16 %v5500, %v5497
        %v5921 = vpack.c.bf16 %v5501, %v5498
        %v5922 = vpack.c.bf16 %v5502, %v5499
        %v5923 = vpack.c.bf16 %v5506, %v5503
        %v5924 = vpack.c.bf16 %v5507, %v5504
        %v5925 = vpack.c.bf16 %v5508, %v5505
        %v5926 = vpack.c.bf16 %v5512, %v5509
        %v5927 = vpack.c.bf16 %v5513, %v5510
        %v5928 = vpack.c.bf16 %v5514, %v5511
        %v5929 = vpack.c.bf16 %v5518, %v5515
        %v5930 = vpack.c.bf16 %v5519, %v5516
        %v5931 = vpack.c.bf16 %v5520, %v5517
        %v5932 = vpack.c.bf16 %v5524, %v5521
        %v5933 = vpack.c.bf16 %v5525, %v5522
        %v5934 = vpack.c.bf16 %v5526, %v5523
        %v5935 = vpack.c.bf16 %v5530, %v5527
        %v5936 = vpack.c.bf16 %v5531, %v5528
        %v5937 = vpack.c.bf16 %v5532, %v5529
        %v5938 = vpack.c.bf16 %v5536, %v5533
        %v5939 = vpack.c.bf16 %v5537, %v5534
        %v5940 = vpack.c.bf16 %v5538, %v5535
        %v5941 = vpack.c.bf16 %v5542, %v5539
        %v5942 = vpack.c.bf16 %v5543, %v5540
        %v5943 = vpack.c.bf16 %v5544, %v5541
        %v5944 = vpack.c.bf16 %v5548, %v5545
        %v5945 = vpack.c.bf16 %v5549, %v5546
        %v5946 = vpack.c.bf16 %v5550, %v5547
        %v5947 = vpack.c.bf16 %v5554, %v5551
        %v5948 = vpack.c.bf16 %v5555, %v5552
        %v5949 = vpack.c.bf16 %v5556, %v5553
        %v5950 = vpack.c.bf16 %v5560, %v5557
        %v5951 = vpack.c.bf16 %v5561, %v5558
        %v5952 = vpack.c.bf16 %v5562, %v5559
        %v5953 = vpack.c.bf16 %v5566, %v5563
        %v5954 = vpack.c.bf16 %v5567, %v5564
        %v5955 = vpack.c.bf16 %v5568, %v5565
        %v5956 = vpack.c.bf16 %v5572, %v5569
        %v5957 = vpack.c.bf16 %v5573, %v5570
        %v5958 = vpack.c.bf16 %v5574, %v5571
        %v5959 = vpack.c.bf16 %v5578, %v5575
        %v5960 = vpack.c.bf16 %v5579, %v5576
        %v5961 = vpack.c.bf16 %v5580, %v5577
        %v5962 = vpack.c.bf16 %v5584, %v5581
        %v5963 = vpack.c.bf16 %v5585, %v5582
        %v5964 = vpack.c.bf16 %v5586, %v5583
        %v5965 = vpack.c.bf16 %v5590, %v5587
        %v5966 = vpack.c.bf16 %v5591, %v5588
        %v5967 = vpack.c.bf16 %v5592, %v5589
        %v5968 = vpack.c.bf16 %v5596, %v5593
        %v5969 = vpack.c.bf16 %v5597, %v5594
        %v5970 = vpack.c.bf16 %v5598, %v5595
        %v5971 = vpack.c.bf16 %v5602, %v5599
        %v5972 = vpack.c.bf16 %v5603, %v5600
        %v5973 = vpack.c.bf16 %v5604, %v5601
        %v5974 = vpack.c.bf16 %v5608, %v5605
        %v5975 = vpack.c.bf16 %v5609, %v5606
        %v5976 = vpack.c.bf16 %v5610, %v5607
        %v5977 = vpack.c.bf16 %v5614, %v5611
        %v5978 = vpack.c.bf16 %v5615, %v5612
        %v5979 = vpack.c.bf16 %v5616, %v5613
        %v5980 = vpack.c.bf16 %v5620, %v5617
        %v5981 = vpack.c.bf16 %v5621, %v5618
        %v5982 = vpack.c.bf16 %v5622, %v5619
        %v5983 = vpack.c.bf16 %v5626, %v5623
        %v5984 = vpack.c.bf16 %v5627, %v5624
        %v5985 = vpack.c.bf16 %v5628, %v5625
        %v5986 = vpack.c.bf16 %v5632, %v5629
        %v5987 = vpack.c.bf16 %v5633, %v5630
        %v5988 = vpack.c.bf16 %v5634, %v5631
        %v5989 = vpack.c.bf16 %v5638, %v5635
        %v5990 = vpack.c.bf16 %v5639, %v5636
        %v5991 = vpack.c.bf16 %v5640, %v5637
        %v5992 = vpack.c.bf16 %v5644, %v5641
        %v5993 = vpack.c.bf16 %v5645, %v5642
        %v5994 = vpack.c.bf16 %v5646, %v5643
        %v5995 = vpack.c.bf16 %v5650, %v5647
        %v5996 = vpack.c.bf16 %v5651, %v5648
        %v5997 = vpack.c.bf16 %v5652, %v5649
        %v5998 = vpack.c.bf16 %v5656, %v5653
        %v5999 = vpack.c.bf16 %v5657, %v5654
        %v6000 = vpack.c.bf16 %v5658, %v5655
        %v6001 = vpack.c.bf16 %v5662, %v5659
        %v6002 = vpack.c.bf16 %v5663, %v5660
        %v6003 = vpack.c.bf16 %v5664, %v5661
        %v6004 = vpack.c.bf16 %v5668, %v5665
        %v6005 = vpack.c.bf16 %v5669, %v5666
        %v6006 = vpack.c.bf16 %v5670, %v5667
        %v6007 = vpack.c.bf16 %v5674, %v5671
        %v6008 = vpack.c.bf16 %v5675, %v5672
        %v6009 = vpack.c.bf16 %v5676, %v5673
        %v6010 = vpack.c.bf16 %v5680, %v5677
        %v6011 = vpack.c.bf16 %v5681, %v5678
        %v6012 = vpack.c.bf16 %v5682, %v5679
        %v6013 = vpack.c.bf16 %v5686, %v5683
        %v6014 = vpack.c.bf16 %v5687, %v5684
        %v6015 = vpack.c.bf16 %v5688, %v5685
        %v6016 = vpack.c.bf16 %v5692, %v5689
        %v6017 = vpack.c.bf16 %v5693, %v5690
        %v6018 = vpack.c.bf16 %v5694, %v5691
        %v6019 = vpack.c.bf16 %v5698, %v5695
        %v6020 = vpack.c.bf16 %v5699, %v5696
        %v6021 = vpack.c.bf16 %v5700, %v5697
        %v6022 = vpack.c.bf16 %v5704, %v5701
        %v6023 = vpack.c.bf16 %v5705, %v5702
        %v6024 = vpack.c.bf16 %v5706, %v5703
        %v6025 = vpack.c.bf16 %v5710, %v5707
        %v6026 = vpack.c.bf16 %v5711, %v5708
        %v6027 = vpack.c.bf16 %v5712, %v5709
        %v6028 = vpack.c.bf16 %v5716, %v5713
        %v6029 = vpack.c.bf16 %v5717, %v5714
        %v6030 = vpack.c.bf16 %v5718, %v5715
        %v6031 = vpack.c.bf16 %v5722, %v5719
        %v6032 = vpack.c.bf16 %v5723, %v5720
        %v6033 = vpack.c.bf16 %v5724, %v5721
        %v6034 = vpack.c.bf16 %v5728, %v5725
        %v6035 = vpack.c.bf16 %v5729, %v5726
        %v6036 = vpack.c.bf16 %v5730, %v5727
        %v6037 = vpack.c.bf16 %v5734, %v5731
        %v6038 = vpack.c.bf16 %v5735, %v5732
        %v6039 = vpack.c.bf16 %v5736, %v5733
        %v6040 = vpack.c.bf16 %v5740, %v5737
        %v6041 = vpack.c.bf16 %v5741, %v5738
        %v6042 = vpack.c.bf16 %v5742, %v5739
        %v6043 = vpack.c.bf16 %v5746, %v5743
        %v6044 = vpack.c.bf16 %v5747, %v5744
        %v6045 = vpack.c.bf16 %v5748, %v5745
        %v6046 = vpack.c.bf16 %v5752, %v5749
        %v6047 = vpack.c.bf16 %v5753, %v5750
        %v6048 = vpack.c.bf16 %v5754, %v5751
        %v6049 = vld [vmem:[%s3] sm:$0xf]
        %v6050 = vld [vmem:[%s3 + $0x4] sm:$0xf]
        %v6051 = vld [vmem:[%s3 + $0x8] sm:$0xf]
        %v6052 = vld [vmem:[%s3 + $0xc] sm:$0xf]
        %v6053 = vld [vmem:[%s3 + $0x10] sm:$0xf]
        %v6054 = vld [vmem:[%s3 + $0x14] sm:$0xf]
        %v6055 = vld [vmem:[%s3 + $0x18] sm:$0xf]
        %v6056 = vld [vmem:[%s3 + $0x1c] sm:$0xf]
        %v6057 = vld [vmem:[%s3 + $0x20] sm:$0xf]
        %v6058 = vld [vmem:[%s3 + $0x24] sm:$0xf]
        %v6059 = vld [vmem:[%s3 + $0x28] sm:$0xf]
        %v6060 = vld [vmem:[%s3 + $0x2c] sm:$0xf]
        %v6061 = vld [vmem:[%s3 + $0x30] sm:$0xf]
        %v6062 = vld [vmem:[%s3 + $0x34] sm:$0xf]
        %v6063 = vld [vmem:[%s3 + $0x38] sm:$0xf]
        %v6064 = vld [vmem:[%s3 + $0x3c] sm:$0xf]
        %v6065 = vld [vmem:[%s3 + $0x40] sm:$0xf]
        %v6066 = vld [vmem:[%s3 + $0x44] sm:$0xf]
        %v6067 = vld [vmem:[%s3 + $0x48] sm:$0xf]
        %v6068 = vld [vmem:[%s3 + $0x4c] sm:$0xf]
        %v6069 = vld [vmem:[%s3 + $0x50] sm:$0xf]
        %v6070 = vld [vmem:[%s3 + $0x54] sm:$0xf]
        %v6071 = vld [vmem:[%s3 + $0x58] sm:$0xf]
        %v6072 = vld [vmem:[%s3 + $0x5c] sm:$0xf]
        %v6073 = vld [vmem:[%s3 + $0x60] sm:$0xf]
        %v6074 = vld [vmem:[%s3 + $0x64] sm:$0xf]
        %v6075 = vld [vmem:[%s3 + $0x68] sm:$0xf]
        %v6076 = vld [vmem:[%s3 + $0x6c] sm:$0xf]
        %v6077 = vld [vmem:[%s3 + $0x70] sm:$0xf]
        %v6078 = vld [vmem:[%s3 + $0x74] sm:$0xf]
        %v6079 = vld [vmem:[%s3 + $0x78] sm:$0xf]
        %v6080 = vld [vmem:[%s3 + $0x7c] sm:$0xf]
        %v6081 = vld [vmem:[%s3 + $0x80] sm:$0xf]
        %v6082 = vld [vmem:[%s3 + $0x84] sm:$0xf]
        %v6083 = vld [vmem:[%s3 + $0x88] sm:$0xf]
        %v6084 = vld [vmem:[%s3 + $0x8c] sm:$0xf]
        %v6085 = vld [vmem:[%s3 + $0x90] sm:$0xf]
        %v6086 = vld [vmem:[%s3 + $0x94] sm:$0xf]
        %v6087 = vld [vmem:[%s3 + $0x98] sm:$0xf]
        %v6088 = vld [vmem:[%s3 + $0x9c] sm:$0xf]
        %v6089 = vld [vmem:[%s3 + $0xa0] sm:$0xf]
        %v6090 = vld [vmem:[%s3 + $0xa4] sm:$0xf]
        %v6091 = vld [vmem:[%s3 + $0xa8] sm:$0xf]
        %v6092 = vld [vmem:[%s3 + $0xac] sm:$0xf]
        %v6093 = vld [vmem:[%s3 + $0xb0] sm:$0xf]
        %v6094 = vld [vmem:[%s3 + $0xb4] sm:$0xf]
        %v6095 = vld [vmem:[%s3 + $0xb8] sm:$0xf]
        %v6096 = vld [vmem:[%s3 + $0xbc] sm:$0xf]
        %v6097 = vld [vmem:[#allocation5] sm:$0x1]
        %v6099 = vlaneseq
        %v6100 = vshrl.u32 %v6099, 7
        %v6101 = vsub.s32 0, %v6100
        %v6102 = vrot.slane %v6097, %v6101
        %v6152 = vunpack.c.l.b16 %v6049
        %v6153 = vunpack.c.l.b16 %v6050
        %v6154 = vunpack.c.l.b16 %v6051
        %v6155 = vunpack.c.l.b16 %v6052
        %v6156 = vunpack.c.l.b16 %v6053
        %v6157 = vunpack.c.l.b16 %v6054
        %v6158 = vunpack.c.l.b16 %v6055
        %v6159 = vunpack.c.l.b16 %v6056
        %v6160 = vunpack.c.l.b16 %v6057
        %v6161 = vunpack.c.l.b16 %v6058
        %v6162 = vunpack.c.l.b16 %v6059
        %v6163 = vunpack.c.l.b16 %v6060
        %v6164 = vunpack.c.l.b16 %v6061
        %v6165 = vunpack.c.l.b16 %v6062
        %v6166 = vunpack.c.l.b16 %v6063
        %v6167 = vunpack.c.l.b16 %v6064
        %v6168 = vunpack.c.l.b16 %v6065
        %v6169 = vunpack.c.l.b16 %v6066
        %v6170 = vunpack.c.l.b16 %v6067
        %v6171 = vunpack.c.l.b16 %v6068
        %v6172 = vunpack.c.l.b16 %v6069
        %v6173 = vunpack.c.l.b16 %v6070
        %v6174 = vunpack.c.l.b16 %v6071
        %v6175 = vunpack.c.l.b16 %v6072
        %v6176 = vunpack.c.l.b16 %v6073
        %v6177 = vunpack.c.l.b16 %v6074
        %v6178 = vunpack.c.l.b16 %v6075
        %v6179 = vunpack.c.l.b16 %v6076
        %v6180 = vunpack.c.l.b16 %v6077
        %v6181 = vunpack.c.l.b16 %v6078
        %v6182 = vunpack.c.l.b16 %v6079
        %v6183 = vunpack.c.l.b16 %v6080
        %v6184 = vunpack.c.l.b16 %v6081
        %v6185 = vunpack.c.l.b16 %v6082
        %v6186 = vunpack.c.l.b16 %v6083
        %v6187 = vunpack.c.l.b16 %v6084
        %v6188 = vunpack.c.l.b16 %v6085
        %v6189 = vunpack.c.l.b16 %v6086
        %v6190 = vunpack.c.l.b16 %v6087
        %v6191 = vunpack.c.l.b16 %v6088
        %v6192 = vunpack.c.l.b16 %v6089
        %v6193 = vunpack.c.l.b16 %v6090
        %v6194 = vunpack.c.l.b16 %v6091
        %v6195 = vunpack.c.l.b16 %v6092
        %v6196 = vunpack.c.l.b16 %v6093
        %v6197 = vunpack.c.l.b16 %v6094
        %v6198 = vunpack.c.l.b16 %v6095
        %v6199 = vunpack.c.l.b16 %v6096
        %v6200 = vpack.c.b16 %v6153, %v6152
        %v6201 = vpack.c.b16 %v6155, %v6154
        %v6202 = vpack.c.b16 %v6157, %v6156
        %v6203 = vpack.c.b16 %v6159, %v6158
        %v6204 = vpack.c.b16 %v6161, %v6160
        %v6205 = vpack.c.b16 %v6163, %v6162
        %v6206 = vpack.c.b16 %v6165, %v6164
        %v6207 = vpack.c.b16 %v6167, %v6166
        %v6208 = vpack.c.b16 %v6169, %v6168
        %v6209 = vpack.c.b16 %v6171, %v6170
        %v6210 = vpack.c.b16 %v6173, %v6172
        %v6211 = vpack.c.b16 %v6175, %v6174
        %v6212 = vpack.c.b16 %v6177, %v6176
        %v6213 = vpack.c.b16 %v6179, %v6178
        %v6214 = vpack.c.b16 %v6181, %v6180
        %v6215 = vpack.c.b16 %v6183, %v6182
        %v6216 = vpack.c.b16 %v6185, %v6184
        %v6217 = vpack.c.b16 %v6187, %v6186
        %v6218 = vpack.c.b16 %v6189, %v6188
        %v6219 = vpack.c.b16 %v6191, %v6190
        %v6220 = vpack.c.b16 %v6193, %v6192
        %v6221 = vpack.c.b16 %v6195, %v6194
        %v6222 = vpack.c.b16 %v6197, %v6196
        %v6223 = vpack.c.b16 %v6199, %v6198
        %6248 = vmatprep.subr.bf16.mxu0 0
        %6249 = vmatpush1.bf16.msra.mxu0 %v6200
        %6250 = vmatprep.subr.bf16.mxu0 0
        %6251 = vmatpush1.bf16.msra.mxu0 %v6201
        %6252 = vmatprep.subr.bf16.mxu0 0
        %6253 = vmatpush1.bf16.msra.mxu0 %v6202
        %6254 = vmatprep.subr.bf16.mxu0 0
        %6255 = vmatpush1.bf16.msra.mxu0 %v6203
        %6256 = vmatprep.subr.bf16.mxu0 0
        %6257 = vmatpush1.bf16.msra.mxu0 %v6204
        %6258 = vmatprep.subr.bf16.mxu0 0
        %6259 = vmatpush1.bf16.msra.mxu0 %v6205
        %6260 = vmatprep.subr.bf16.mxu0 0
        %6261 = vmatpush1.bf16.msra.mxu0 %v6206
        %6262 = vmatprep.subr.bf16.mxu0 0
        %6263 = vmatpush1.bf16.msra.mxu0 %v6207
        %6264 = vmatprep.subr.bf16.mxu0 0
        %6265 = vmatpush1.bf16.msra.mxu0 %v6208
        %6266 = vmatprep.subr.bf16.mxu0 0
        %6267 = vmatpush1.bf16.msra.mxu0 %v6209
        %6268 = vmatprep.subr.bf16.mxu0 0
        %6269 = vmatpush1.bf16.msra.mxu0 %v6210
        %6270 = vmatprep.subr.bf16.mxu0 0
        %6271 = vmatpush1.bf16.msra.mxu0 %v6211
        %6272 = vmatprep.subr.bf16.mxu0 0
        %6273 = vmatpush1.bf16.msra.mxu0 %v6212
        %6274 = vmatprep.subr.bf16.mxu0 0
        %6275 = vmatpush1.bf16.msra.mxu0 %v6213
        %6276 = vmatprep.subr.bf16.mxu0 0
        %6277 = vmatpush1.bf16.msra.mxu0 %v6214
        %6278 = vmatprep.subr.bf16.mxu0 0
        %6279 = vmatpush1.bf16.msra.mxu0 %v6215
        %6280 = vmatprep.mubr.bf16.mxu0 %v5756
        %6281 = vmatmul.mubr.bf16.gmra.mrb[0].mxu0 %v5755
        %v6282 = vpop.f32.mrb[0].mxu0
        %v6283 = vadd.f32 %v6102, %v6282
        %v6284 = vpop.f32.mrb[0].mxu0
        %v6285 = vpop.f32.mrb[0].mxu0
        %v6286 = vadd.f32 %v6102, %v6285
        %v6287 = vpop.f32.mrb[0].mxu0
        %6288 = vmatprep.mubr.bf16.mxu0 %v5759
        %6289 = vmatmul.mubr.bf16.gmra.mrb[0].mxu0 %v5758
        %v6290 = vpop.f32.mrb[0].mxu0
        %v6291 = vadd.f32 %v6102, %v6290
        %v6292 = vpop.f32.mrb[0].mxu0
        %v6293 = vpop.f32.mrb[0].mxu0
        %v6294 = vadd.f32 %v6102, %v6293
        %v6295 = vpop.f32.mrb[0].mxu0
        %6296 = vmatprep.mubr.bf16.mxu0 %v5762
        %6297 = vmatmul.mubr.bf16.gmra.mrb[0].mxu0 %v5761
        %v6298 = vpop.f32.mrb[0].mxu0
        %v6299 = vadd.f32 %v6102, %v6298
        %v6300 = vpop.f32.mrb[0].mxu0
        %v6301 = vpop.f32.mrb[0].mxu0
        %v6302 = vadd.f32 %v6102, %v6301
        %v6303 = vpop.f32.mrb[0].mxu0
        %6304 = vmatprep.mubr.bf16.mxu0 %v5765
        %6305 = vmatmul.mubr.bf16.gmra.mrb[0].mxu0 %v5764
        %v6306 = vpop.f32.mrb[0].mxu0
        %v6307 = vadd.f32 %v6102, %v6306
        %v6308 = vpop.f32.mrb[0].mxu0
        %v6309 = vpop.f32.mrb[0].mxu0
        %v6310 = vadd.f32 %v6102, %v6309
        %v6311 = vpop.f32.mrb[0].mxu0
        %6312 = vmatprep.mubr.bf16.mxu0 %v5768
        %6313 = vmatmul.mubr.bf16.gmra.mrb[0].mxu0 %v5767
        %v6314 = vpop.f32.mrb[0].mxu0
        %v6315 = vadd.f32 %v6102, %v6314
        %v6316 = vpop.f32.mrb[0].mxu0
        %v6317 = vpop.f32.mrb[0].mxu0
        %v6318 = vadd.f32 %v6102, %v6317
        %v6319 = vpop.f32.mrb[0].mxu0
        %6320 = vmatprep.mubr.bf16.mxu0 %v5771
        %6321 = vmatmul.mubr.bf16.gmra.mrb[0].mxu0 %v5770
        %v6322 = vpop.f32.mrb[0].mxu0
        %v6323 = vadd.f32 %v6102, %v6322
        %v6324 = vpop.f32.mrb[0].mxu0
        %v6325 = vpop.f32.mrb[0].mxu0
        %v6326 = vadd.f32 %v6102, %v6325
        %v6327 = vpop.f32.mrb[0].mxu0
        %6328 = vmatprep.mubr.bf16.mxu0 %v5774
        %6329 = vmatmul.mubr.bf16.gmra.mrb[0].mxu0 %v5773
        %v6330 = vpop.f32.mrb[0].mxu0
        %v6331 = vadd.f32 %v6102, %v6330
        %v6332 = vpop.f32.mrb[0].mxu0
        %v6333 = vpop.f32.mrb[0].mxu0
        %v6334 = vadd.f32 %v6102, %v6333
        %v6335 = vpop.f32.mrb[0].mxu0
        %6336 = vmatprep.mubr.bf16.mxu0 %v5777
        %6337 = vmatmul.mubr.bf16.gmra.mrb[0].mxu0 %v5776
        %v6338 = vpop.f32.mrb[0].mxu0
        %v6339 = vadd.f32 %v6102, %v6338
        %v6340 = vpop.f32.mrb[0].mxu0
        %v6341 = vpop.f32.mrb[0].mxu0
        %v6342 = vadd.f32 %v6102, %v6341
        %v6343 = vpop.f32.mrb[0].mxu0
        %6344 = vmatprep.mubr.bf16.mxu0 %v5780
        %6345 = vmatmul.mubr.bf16.gmra.mrb[0].mxu0 %v5779
        %v6346 = vpop.f32.mrb[0].mxu0
        %v6347 = vadd.f32 %v6102, %v6346
        %v6348 = vpop.f32.mrb[0].mxu0
        %v6349 = vpop.f32.mrb[0].mxu0
        %v6350 = vadd.f32 %v6102, %v6349
        %v6351 = vpop.f32.mrb[0].mxu0
        %6352 = vmatprep.mubr.bf16.mxu0 %v5783
        %6353 = vmatmul.mubr.bf16.gmra.mrb[0].mxu0 %v5782
        %v6354 = vpop.f32.mrb[0].mxu0
        %v6355 = vadd.f32 %v6102, %v6354
        %v6356 = vpop.f32.mrb[0].mxu0
        %v6357 = vpop.f32.mrb[0].mxu0
        %v6358 = vadd.f32 %v6102, %v6357
        %v6359 = vpop.f32.mrb[0].mxu0
        %6360 = vmatprep.mubr.bf16.mxu0 %v5786
        %6361 = vmatmul.mubr.bf16.gmra.mrb[0].mxu0 %v5785
        %v6362 = vpop.f32.mrb[0].mxu0
        %v6363 = vadd.f32 %v6102, %v6362
        %v6364 = vpop.f32.mrb[0].mxu0
        %v6365 = vpop.f32.mrb[0].mxu0
        %v6366 = vadd.f32 %v6102, %v6365
        %v6367 = vpop.f32.mrb[0].mxu0
        %6368 = vmatprep.mubr.bf16.mxu0 %v5789
        %6369 = vmatmul.mubr.bf16.gmra.mrb[0].mxu0 %v5788
        %v6370 = vpop.f32.mrb[0].mxu0
        %v6371 = vadd.f32 %v6102, %v6370
        %v6372 = vpop.f32.mrb[0].mxu0
        %v6373 = vpop.f32.mrb[0].mxu0
        %v6374 = vadd.f32 %v6102, %v6373
        %v6375 = vpop.f32.mrb[0].mxu0
        %6376 = vmatprep.mubr.bf16.mxu0 %v5792
        %6377 = vmatmul.mubr.bf16.gmra.mrb[0].mxu0 %v5791
        %v6378 = vpop.f32.mrb[0].mxu0
        %v6379 = vadd.f32 %v6102, %v6378
        %v6380 = vpop.f32.mrb[0].mxu0
        %v6381 = vpop.f32.mrb[0].mxu0
        %v6382 = vadd.f32 %v6102, %v6381
        %v6383 = vpop.f32.mrb[0].mxu0
        %6384 = vmatprep.mubr.bf16.mxu0 %v5795
        %6385 = vmatmul.mubr.bf16.gmra.mrb[0].mxu0 %v5794
        %v6386 = vpop.f32.mrb[0].mxu0
        %v6387 = vadd.f32 %v6102, %v6386
        %v6388 = vpop.f32.mrb[0].mxu0
        %v6389 = vpop.f32.mrb[0].mxu0
        %v6390 = vadd.f32 %v6102, %v6389
        %v6391 = vpop.f32.mrb[0].mxu0
        %6392 = vmatprep.mubr.bf16.mxu0 %v5798
        %6393 = vmatmul.mubr.bf16.gmra.mrb[0].mxu0 %v5797
        %v6394 = vpop.f32.mrb[0].mxu0
        %v6395 = vadd.f32 %v6102, %v6394
        %v6396 = vpop.f32.mrb[0].mxu0
        %v6397 = vpop.f32.mrb[0].mxu0
        %v6398 = vadd.f32 %v6102, %v6397
        %v6399 = vpop.f32.mrb[0].mxu0
        %6400 = vmatprep.mubr.bf16.mxu0 %v5801
        %6401 = vmatmul.mubr.bf16.gmra.mrb[0].mxu0 %v5800
        %v6402 = vpop.f32.mrb[0].mxu0
        %v6403 = vadd.f32 %v6102, %v6402
        %v6404 = vpop.f32.mrb[0].mxu0
        %v6405 = vpop.f32.mrb[0].mxu0
        %v6406 = vadd.f32 %v6102, %v6405
        %v6407 = vpop.f32.mrb[0].mxu0
        %6408 = vmatprep.mubr.bf16.mxu0 %v5804
        %6409 = vmatmul.mubr.bf16.gmra.mrb[0].mxu0 %v5803
        %v6410 = vpop.f32.mrb[0].mxu0
        %v6411 = vadd.f32 %v6102, %v6410
        %v6412 = vpop.f32.mrb[0].mxu0
        %v6413 = vpop.f32.mrb[0].mxu0
        %v6414 = vadd.f32 %v6102, %v6413
        %v6415 = vpop.f32.mrb[0].mxu0
        %6416 = vmatprep.mubr.bf16.mxu0 %v5807
        %6417 = vmatmul.mubr.bf16.gmra.mrb[0].mxu0 %v5806
        %v6418 = vpop.f32.mrb[0].mxu0
        %v6419 = vadd.f32 %v6102, %v6418
        %v6420 = vpop.f32.mrb[0].mxu0
        %v6421 = vpop.f32.mrb[0].mxu0
        %v6422 = vadd.f32 %v6102, %v6421
        %v6423 = vpop.f32.mrb[0].mxu0
        %6424 = vmatprep.mubr.bf16.mxu0 %v5810
        %6425 = vmatmul.mubr.bf16.gmra.mrb[0].mxu0 %v5809
        %v6426 = vpop.f32.mrb[0].mxu0
        %v6427 = vadd.f32 %v6102, %v6426
        %v6428 = vpop.f32.mrb[0].mxu0
        %v6429 = vpop.f32.mrb[0].mxu0
        %v6430 = vadd.f32 %v6102, %v6429
        %v6431 = vpop.f32.mrb[0].mxu0
        %6432 = vmatprep.mubr.bf16.mxu0 %v5813
        %6433 = vmatmul.mubr.bf16.gmra.mrb[0].mxu0 %v5812
        %v6434 = vpop.f32.mrb[0].mxu0
        %v6435 = vadd.f32 %v6102, %v6434
        %v6436 = vpop.f32.mrb[0].mxu0
        %v6437 = vpop.f32.mrb[0].mxu0
        %v6438 = vadd.f32 %v6102, %v6437
        %v6439 = vpop.f32.mrb[0].mxu0
        %6440 = vmatprep.mubr.bf16.mxu0 %v5816
        %6441 = vmatmul.mubr.bf16.gmra.mrb[0].mxu0 %v5815
        %v6442 = vpop.f32.mrb[0].mxu0
        %v6443 = vadd.f32 %v6102, %v6442
        %v6444 = vpop.f32.mrb[0].mxu0
        %v6445 = vpop.f32.mrb[0].mxu0
        %v6446 = vadd.f32 %v6102, %v6445
        %v6447 = vpop.f32.mrb[0].mxu0
        %6448 = vmatprep.mubr.bf16.mxu0 %v5819
        %6449 = vmatmul.mubr.bf16.gmra.mrb[0].mxu0 %v5818
        %v6450 = vpop.f32.mrb[0].mxu0
        %v6451 = vadd.f32 %v6102, %v6450
        %v6452 = vpop.f32.mrb[0].mxu0
        %v6453 = vpop.f32.mrb[0].mxu0
        %v6454 = vadd.f32 %v6102, %v6453
        %v6455 = vpop.f32.mrb[0].mxu0
        %6456 = vmatprep.mubr.bf16.mxu0 %v5822
        %6457 = vmatmul.mubr.bf16.gmra.mrb[0].mxu0 %v5821
        %v6458 = vpop.f32.mrb[0].mxu0
        %v6459 = vadd.f32 %v6102, %v6458
        %v6460 = vpop.f32.mrb[0].mxu0
        %v6461 = vpop.f32.mrb[0].mxu0
        %v6462 = vadd.f32 %v6102, %v6461
        %v6463 = vpop.f32.mrb[0].mxu0
        %6464 = vmatprep.mubr.bf16.mxu0 %v5825
        %6465 = vmatmul.mubr.bf16.gmra.mrb[0].mxu0 %v5824
        %v6466 = vpop.f32.mrb[0].mxu0
        %v6467 = vadd.f32 %v6102, %v6466
        %v6468 = vpop.f32.mrb[0].mxu0
        %v6469 = vpop.f32.mrb[0].mxu0
        %v6470 = vadd.f32 %v6102, %v6469
        %v6471 = vpop.f32.mrb[0].mxu0
        %6472 = vmatprep.mubr.bf16.mxu0 %v5828
        %6473 = vmatmul.mubr.bf16.gmra.mrb[0].mxu0 %v5827
        %v6474 = vpop.f32.mrb[0].mxu0
        %v6475 = vadd.f32 %v6102, %v6474
        %v6476 = vpop.f32.mrb[0].mxu0
        %v6477 = vpop.f32.mrb[0].mxu0
        %v6478 = vadd.f32 %v6102, %v6477
        %v6479 = vpop.f32.mrb[0].mxu0
        %6480 = vmatprep.mubr.bf16.mxu0 %v5831
        %6481 = vmatmul.mubr.bf16.gmra.mrb[0].mxu0 %v5830
        %v6482 = vpop.f32.mrb[0].mxu0
        %v6483 = vadd.f32 %v6102, %v6482
        %v6484 = vpop.f32.mrb[0].mxu0
        %v6485 = vpop.f32.mrb[0].mxu0
        %v6486 = vadd.f32 %v6102, %v6485
        %v6487 = vpop.f32.mrb[0].mxu0
        %6488 = vmatprep.mubr.bf16.mxu0 %v5834
        %6489 = vmatmul.mubr.bf16.gmra.mrb[0].mxu0 %v5833
        %v6490 = vpop.f32.mrb[0].mxu0
        %v6491 = vadd.f32 %v6102, %v6490
        %v6492 = vpop.f32.mrb[0].mxu0
        %v6493 = vpop.f32.mrb[0].mxu0
        %v6494 = vadd.f32 %v6102, %v6493
        %v6495 = vpop.f32.mrb[0].mxu0
        %6496 = vmatprep.mubr.bf16.mxu0 %v5837
        %6497 = vmatmul.mubr.bf16.gmra.mrb[0].mxu0 %v5836
        %v6498 = vpop.f32.mrb[0].mxu0
        %v6499 = vadd.f32 %v6102, %v6498
        %v6500 = vpop.f32.mrb[0].mxu0
        %v6501 = vpop.f32.mrb[0].mxu0
        %v6502 = vadd.f32 %v6102, %v6501
        %v6503 = vpop.f32.mrb[0].mxu0
        %6504 = vmatprep.mubr.bf16.mxu0 %v5840
        %6505 = vmatmul.mubr.bf16.gmra.mrb[0].mxu0 %v5839
        %v6506 = vpop.f32.mrb[0].mxu0
        %v6507 = vadd.f32 %v6102, %v6506
        %v6508 = vpop.f32.mrb[0].mxu0
        %v6509 = vpop.f32.mrb[0].mxu0
        %v6510 = vadd.f32 %v6102, %v6509
        %v6511 = vpop.f32.mrb[0].mxu0
        %6512 = vmatprep.mubr.bf16.mxu0 %v5843
        %6513 = vmatmul.mubr.bf16.gmra.mrb[0].mxu0 %v5842
        %v6514 = vpop.f32.mrb[0].mxu0
        %v6515 = vadd.f32 %v6102, %v6514
        %v6516 = vpop.f32.mrb[0].mxu0
        %v6517 = vpop.f32.mrb[0].mxu0
        %v6518 = vadd.f32 %v6102, %v6517
        %v6519 = vpop.f32.mrb[0].mxu0
        %6520 = vmatprep.mubr.bf16.mxu0 %v5846
        %6521 = vmatmul.mubr.bf16.gmra.mrb[0].mxu0 %v5845
        %v6522 = vpop.f32.mrb[0].mxu0
        %v6523 = vadd.f32 %v6102, %v6522
        %v6524 = vpop.f32.mrb[0].mxu0
        %v6525 = vpop.f32.mrb[0].mxu0
        %v6526 = vadd.f32 %v6102, %v6525
        %v6527 = vpop.f32.mrb[0].mxu0
        %6528 = vmatprep.mubr.bf16.mxu0 %v5849
        %6529 = vmatmul.mubr.bf16.gmra.mrb[0].mxu0 %v5848
        %v6530 = vpop.f32.mrb[0].mxu0
        %v6531 = vadd.f32 %v6102, %v6530
        %v6532 = vpop.f32.mrb[0].mxu0
        %v6533 = vpop.f32.mrb[0].mxu0
        %v6534 = vadd.f32 %v6102, %v6533
        %v6535 = vpop.f32.mrb[0].mxu0
        %6536 = vmatprep.mubr.bf16.mxu0 %v5852
        %6537 = vmatmul.mubr.bf16.gmra.mrb[0].mxu0 %v5851
        %v6538 = vpop.f32.mrb[0].mxu0
        %v6539 = vadd.f32 %v6102, %v6538
        %v6540 = vpop.f32.mrb[0].mxu0
        %v6541 = vpop.f32.mrb[0].mxu0
        %v6542 = vadd.f32 %v6102, %v6541
        %v6543 = vpop.f32.mrb[0].mxu0
        %6544 = vmatprep.mubr.bf16.mxu0 %v5855
        %6545 = vmatmul.mubr.bf16.gmra.mrb[0].mxu0 %v5854
        %v6546 = vpop.f32.mrb[0].mxu0
        %v6547 = vadd.f32 %v6102, %v6546
        %v6548 = vpop.f32.mrb[0].mxu0
        %v6549 = vpop.f32.mrb[0].mxu0
        %v6550 = vadd.f32 %v6102, %v6549
        %v6551 = vpop.f32.mrb[0].mxu0
        %6552 = vmatprep.mubr.bf16.mxu0 %v5858
        %6553 = vmatmul.mubr.bf16.gmra.mrb[0].mxu0 %v5857
        %v6554 = vpop.f32.mrb[0].mxu0
        %v6555 = vadd.f32 %v6102, %v6554
        %v6556 = vpop.f32.mrb[0].mxu0
        %v6557 = vpop.f32.mrb[0].mxu0
        %v6558 = vadd.f32 %v6102, %v6557
        %v6559 = vpop.f32.mrb[0].mxu0
        %6560 = vmatprep.mubr.bf16.mxu0 %v5861
        %6561 = vmatmul.mubr.bf16.gmra.mrb[0].mxu0 %v5860
        %v6562 = vpop.f32.mrb[0].mxu0
        %v6563 = vadd.f32 %v6102, %v6562
        %v6564 = vpop.f32.mrb[0].mxu0
        %v6565 = vpop.f32.mrb[0].mxu0
        %v6566 = vadd.f32 %v6102, %v6565
        %v6567 = vpop.f32.mrb[0].mxu0
        %6568 = vmatprep.mubr.bf16.mxu0 %v5864
        %6569 = vmatmul.mubr.bf16.gmra.mrb[0].mxu0 %v5863
        %v6570 = vpop.f32.mrb[0].mxu0
        %v6571 = vadd.f32 %v6102, %v6570
        %v6572 = vpop.f32.mrb[0].mxu0
        %v6573 = vpop.f32.mrb[0].mxu0
        %v6574 = vadd.f32 %v6102, %v6573
        %v6575 = vpop.f32.mrb[0].mxu0
        %6576 = vmatprep.mubr.bf16.mxu0 %v5867
        %6577 = vmatmul.mubr.bf16.gmra.mrb[0].mxu0 %v5866
        %v6578 = vpop.f32.mrb[0].mxu0
        %v6579 = vadd.f32 %v6102, %v6578
        %v6580 = vpop.f32.mrb[0].mxu0
        %v6581 = vpop.f32.mrb[0].mxu0
        %v6582 = vadd.f32 %v6102, %v6581
        %v6583 = vpop.f32.mrb[0].mxu0
        %6584 = vmatprep.mubr.bf16.mxu0 %v5870
        %6585 = vmatmul.mubr.bf16.gmra.mrb[0].mxu0 %v5869
        %v6586 = vpop.f32.mrb[0].mxu0
        %v6587 = vadd.f32 %v6102, %v6586
        %v6588 = vpop.f32.mrb[0].mxu0
        %v6589 = vpop.f32.mrb[0].mxu0
        %v6590 = vadd.f32 %v6102, %v6589
        %v6591 = vpop.f32.mrb[0].mxu0
        %6592 = vmatprep.mubr.bf16.mxu0 %v5873
        %6593 = vmatmul.mubr.bf16.gmra.mrb[0].mxu0 %v5872
        %v6594 = vpop.f32.mrb[0].mxu0
        %v6595 = vadd.f32 %v6102, %v6594
        %v6596 = vpop.f32.mrb[0].mxu0
        %v6597 = vpop.f32.mrb[0].mxu0
        %v6598 = vadd.f32 %v6102, %v6597
        %v6599 = vpop.f32.mrb[0].mxu0
        %6600 = vmatprep.mubr.bf16.mxu0 %v5876
        %6601 = vmatmul.mubr.bf16.gmra.mrb[0].mxu0 %v5875
        %v6602 = vpop.f32.mrb[0].mxu0
        %v6603 = vadd.f32 %v6102, %v6602
        %v6604 = vpop.f32.mrb[0].mxu0
        %v6605 = vpop.f32.mrb[0].mxu0
        %v6606 = vadd.f32 %v6102, %v6605
        %v6607 = vpop.f32.mrb[0].mxu0
        %6608 = vmatprep.mubr.bf16.mxu0 %v5879
        %6609 = vmatmul.mubr.bf16.gmra.mrb[0].mxu0 %v5878
        %v6610 = vpop.f32.mrb[0].mxu0
        %v6611 = vadd.f32 %v6102, %v6610
        %v6612 = vpop.f32.mrb[0].mxu0
        %v6613 = vpop.f32.mrb[0].mxu0
        %v6614 = vadd.f32 %v6102, %v6613
        %v6615 = vpop.f32.mrb[0].mxu0
        %6616 = vmatprep.mubr.bf16.mxu0 %v5882
        %6617 = vmatmul.mubr.bf16.gmra.mrb[0].mxu0 %v5881
        %v6618 = vpop.f32.mrb[0].mxu0
        %v6619 = vadd.f32 %v6102, %v6618
        %v6620 = vpop.f32.mrb[0].mxu0
        %v6621 = vpop.f32.mrb[0].mxu0
        %v6622 = vadd.f32 %v6102, %v6621
        %v6623 = vpop.f32.mrb[0].mxu0
        %6624 = vmatprep.mubr.bf16.mxu0 %v5885
        %6625 = vmatmul.mubr.bf16.gmra.mrb[0].mxu0 %v5884
        %v6626 = vpop.f32.mrb[0].mxu0
        %v6627 = vadd.f32 %v6102, %v6626
        %v6628 = vpop.f32.mrb[0].mxu0
        %v6629 = vpop.f32.mrb[0].mxu0
        %v6630 = vadd.f32 %v6102, %v6629
        %v6631 = vpop.f32.mrb[0].mxu0
        %6632 = vmatprep.mubr.bf16.mxu0 %v5888
        %6633 = vmatmul.mubr.bf16.gmra.mrb[0].mxu0 %v5887
        %v6634 = vpop.f32.mrb[0].mxu0
        %v6635 = vadd.f32 %v6102, %v6634
        %v6636 = vpop.f32.mrb[0].mxu0
        %v6637 = vpop.f32.mrb[0].mxu0
        %v6638 = vadd.f32 %v6102, %v6637
        %v6639 = vpop.f32.mrb[0].mxu0
        %6640 = vmatprep.mubr.bf16.mxu0 %v5891
        %6641 = vmatmul.mubr.bf16.gmra.mrb[0].mxu0 %v5890
        %v6642 = vpop.f32.mrb[0].mxu0
        %v6643 = vadd.f32 %v6102, %v6642
        %v6644 = vpop.f32.mrb[0].mxu0
        %v6645 = vpop.f32.mrb[0].mxu0
        %v6646 = vadd.f32 %v6102, %v6645
        %v6647 = vpop.f32.mrb[0].mxu0
        %6648 = vmatprep.mubr.bf16.mxu0 %v5894
        %6649 = vmatmul.mubr.bf16.gmra.mrb[0].mxu0 %v5893
        %v6650 = vpop.f32.mrb[0].mxu0
        %v6651 = vadd.f32 %v6102, %v6650
        %v6652 = vpop.f32.mrb[0].mxu0
        %v6653 = vpop.f32.mrb[0].mxu0
        %v6654 = vadd.f32 %v6102, %v6653
        %v6655 = vpop.f32.mrb[0].mxu0
        %6656 = vmatprep.mubr.bf16.mxu0 %v5897
        %6657 = vmatmul.mubr.bf16.gmra.mrb[0].mxu0 %v5896
        %v6658 = vpop.f32.mrb[0].mxu0
        %v6659 = vadd.f32 %v6102, %v6658
        %v6660 = vpop.f32.mrb[0].mxu0
        %v6661 = vpop.f32.mrb[0].mxu0
        %v6662 = vadd.f32 %v6102, %v6661
        %v6663 = vpop.f32.mrb[0].mxu0
        %6664 = vmatprep.mubr.bf16.mxu0 %v5900
        %6665 = vmatmul.mubr.bf16.gmra.mrb[0].mxu0 %v5899
        %v6666 = vpop.f32.mrb[0].mxu0
        %v6667 = vadd.f32 %v6102, %v6666
        %v6668 = vpop.f32.mrb[0].mxu0
        %v6669 = vpop.f32.mrb[0].mxu0
        %v6670 = vadd.f32 %v6102, %v6669
        %v6671 = vpop.f32.mrb[0].mxu0
        %6672 = vmatprep.mubr.bf16.mxu0 %v5903
        %6673 = vmatmul.mubr.bf16.gmra.mrb[0].mxu0 %v5902
        %v6674 = vpop.f32.mrb[0].mxu0
        %v6675 = vadd.f32 %v6102, %v6674
        %v6676 = vpop.f32.mrb[0].mxu0
        %v6677 = vpop.f32.mrb[0].mxu0
        %v6678 = vadd.f32 %v6102, %v6677
        %v6679 = vpop.f32.mrb[0].mxu0
        %6680 = vmatprep.mubr.bf16.mxu0 %v5906
        %6681 = vmatmul.mubr.bf16.gmra.mrb[0].mxu0 %v5905
        %v6682 = vpop.f32.mrb[0].mxu0
        %v6683 = vadd.f32 %v6102, %v6682
        %v6684 = vpop.f32.mrb[0].mxu0
        %v6685 = vpop.f32.mrb[0].mxu0
        %v6686 = vadd.f32 %v6102, %v6685
        %v6687 = vpop.f32.mrb[0].mxu0
        %6688 = vmatprep.mubr.bf16.mxu0 %v5909
        %6689 = vmatmul.mubr.bf16.gmra.mrb[0].mxu0 %v5908
        %v6690 = vpop.f32.mrb[0].mxu0
        %v6691 = vadd.f32 %v6102, %v6690
        %v6692 = vpop.f32.mrb[0].mxu0
        %v6693 = vpop.f32.mrb[0].mxu0
        %v6694 = vadd.f32 %v6102, %v6693
        %v6695 = vpop.f32.mrb[0].mxu0
        %6696 = vmatprep.mubr.bf16.mxu0 %v5912
        %6697 = vmatmul.mubr.bf16.gmra.mrb[0].mxu0 %v5911
        %v6698 = vpop.f32.mrb[0].mxu0
        %v6699 = vadd.f32 %v6102, %v6698
        %v6700 = vpop.f32.mrb[0].mxu0
        %v6701 = vpop.f32.mrb[0].mxu0
        %v6702 = vadd.f32 %v6102, %v6701
        %v6703 = vpop.f32.mrb[0].mxu0
        %6704 = vmatprep.mubr.bf16.mxu0 %v5915
        %6705 = vmatmul.mubr.bf16.gmra.mrb[0].mxu0 %v5914
        %v6706 = vpop.f32.mrb[0].mxu0
        %v6707 = vadd.f32 %v6102, %v6706
        %v6708 = vpop.f32.mrb[0].mxu0
        %v6709 = vpop.f32.mrb[0].mxu0
        %v6710 = vadd.f32 %v6102, %v6709
        %v6711 = vpop.f32.mrb[0].mxu0
        %6712 = vmatprep.mubr.bf16.mxu0 %v5918
        %6713 = vmatmul.mubr.bf16.gmra.mrb[0].mxu0 %v5917
        %v6714 = vpop.f32.mrb[0].mxu0
        %v6715 = vadd.f32 %v6102, %v6714
        %v6716 = vpop.f32.mrb[0].mxu0
        %v6717 = vpop.f32.mrb[0].mxu0
        %v6718 = vadd.f32 %v6102, %v6717
        %v6719 = vpop.f32.mrb[0].mxu0
        %6720 = vmatprep.mubr.bf16.mxu0 %v5921
        %6721 = vmatmul.mubr.bf16.gmra.mrb[0].mxu0 %v5920
        %v6722 = vpop.f32.mrb[0].mxu0
        %v6723 = vadd.f32 %v6102, %v6722
        %v6724 = vpop.f32.mrb[0].mxu0
        %v6725 = vpop.f32.mrb[0].mxu0
        %v6726 = vadd.f32 %v6102, %v6725
        %v6727 = vpop.f32.mrb[0].mxu0
        %6728 = vmatprep.mubr.bf16.mxu0 %v5924
        %6729 = vmatmul.mubr.bf16.gmra.mrb[0].mxu0 %v5923
        %v6730 = vpop.f32.mrb[0].mxu0
        %v6731 = vadd.f32 %v6102, %v6730
        %v6732 = vpop.f32.mrb[0].mxu0
        %v6733 = vpop.f32.mrb[0].mxu0
        %v6734 = vadd.f32 %v6102, %v6733
        %v6735 = vpop.f32.mrb[0].mxu0
        %6736 = vmatprep.mubr.bf16.mxu0 %v5927
        %6737 = vmatmul.mubr.bf16.gmra.mrb[0].mxu0 %v5926
        %v6738 = vpop.f32.mrb[0].mxu0
        %v6739 = vadd.f32 %v6102, %v6738
        %v6740 = vpop.f32.mrb[0].mxu0
        %v6741 = vpop.f32.mrb[0].mxu0
        %v6742 = vadd.f32 %v6102, %v6741
        %v6743 = vpop.f32.mrb[0].mxu0
        %6744 = vmatprep.mubr.bf16.mxu0 %v5930
        %6745 = vmatmul.mubr.bf16.gmra.mrb[0].mxu0 %v5929
        %v6746 = vpop.f32.mrb[0].mxu0
        %v6747 = vadd.f32 %v6102, %v6746
        %v6748 = vpop.f32.mrb[0].mxu0
        %v6749 = vpop.f32.mrb[0].mxu0
        %v6750 = vadd.f32 %v6102, %v6749
        %v6751 = vpop.f32.mrb[0].mxu0
        %6752 = vmatprep.mubr.bf16.mxu0 %v5933
        %6753 = vmatmul.mubr.bf16.gmra.mrb[0].mxu0 %v5932
        %v6754 = vpop.f32.mrb[0].mxu0
        %v6755 = vadd.f32 %v6102, %v6754
        %v6756 = vpop.f32.mrb[0].mxu0
        %v6757 = vpop.f32.mrb[0].mxu0
        %v6758 = vadd.f32 %v6102, %v6757
        %v6759 = vpop.f32.mrb[0].mxu0
        %6760 = vmatprep.mubr.bf16.mxu0 %v5936
        %6761 = vmatmul.mubr.bf16.gmra.mrb[0].mxu0 %v5935
        %v6762 = vpop.f32.mrb[0].mxu0
        %v6763 = vadd.f32 %v6102, %v6762
        %v6764 = vpop.f32.mrb[0].mxu0
        %v6765 = vpop.f32.mrb[0].mxu0
        %v6766 = vadd.f32 %v6102, %v6765
        %v6767 = vpop.f32.mrb[0].mxu0
        %6768 = vmatprep.mubr.bf16.mxu0 %v5939
        %6769 = vmatmul.mubr.bf16.gmra.mrb[0].mxu0 %v5938
        %v6770 = vpop.f32.mrb[0].mxu0
        %v6771 = vadd.f32 %v6102, %v6770
        %v6772 = vpop.f32.mrb[0].mxu0
        %v6773 = vpop.f32.mrb[0].mxu0
        %v6774 = vadd.f32 %v6102, %v6773
        %v6775 = vpop.f32.mrb[0].mxu0
        %6776 = vmatprep.mubr.bf16.mxu0 %v5942
        %6777 = vmatmul.mubr.bf16.gmra.mrb[0].mxu0 %v5941
        %v6778 = vpop.f32.mrb[0].mxu0
        %v6779 = vadd.f32 %v6102, %v6778
        %v6780 = vpop.f32.mrb[0].mxu0
        %v6781 = vpop.f32.mrb[0].mxu0
        %v6782 = vadd.f32 %v6102, %v6781
        %v6783 = vpop.f32.mrb[0].mxu0
        %6784 = vmatprep.mubr.bf16.mxu0 %v5945
        %6785 = vmatmul.mubr.bf16.gmra.mrb[0].mxu0 %v5944
        %v6786 = vpop.f32.mrb[0].mxu0
        %v6787 = vadd.f32 %v6102, %v6786
        %v6788 = vpop.f32.mrb[0].mxu0
        %v6789 = vpop.f32.mrb[0].mxu0
        %v6790 = vadd.f32 %v6102, %v6789
        %v6791 = vpop.f32.mrb[0].mxu0
        %6792 = vmatprep.mubr.bf16.mxu0 %v5948
        %6793 = vmatmul.mubr.bf16.gmra.mrb[0].mxu0 %v5947
        %v6794 = vpop.f32.mrb[0].mxu0
        %v6795 = vadd.f32 %v6102, %v6794
        %v6796 = vpop.f32.mrb[0].mxu0
        %v6797 = vpop.f32.mrb[0].mxu0
        %v6798 = vadd.f32 %v6102, %v6797
        %v6799 = vpop.f32.mrb[0].mxu0
        %6800 = vmatprep.mubr.bf16.mxu0 %v5951
        %6801 = vmatmul.mubr.bf16.gmra.mrb[0].mxu0 %v5950
        %v6802 = vpop.f32.mrb[0].mxu0
        %v6803 = vadd.f32 %v6102, %v6802
        %v6804 = vpop.f32.mrb[0].mxu0
        %v6805 = vpop.f32.mrb[0].mxu0
        %v6806 = vadd.f32 %v6102, %v6805
        %v6807 = vpop.f32.mrb[0].mxu0
        %6808 = vmatprep.mubr.bf16.mxu0 %v5954
        %6809 = vmatmul.mubr.bf16.gmra.mrb[0].mxu0 %v5953
        %v6810 = vpop.f32.mrb[0].mxu0
        %v6811 = vadd.f32 %v6102, %v6810
        %v6812 = vpop.f32.mrb[0].mxu0
        %v6813 = vpop.f32.mrb[0].mxu0
        %v6814 = vadd.f32 %v6102, %v6813
        %v6815 = vpop.f32.mrb[0].mxu0
        %6816 = vmatprep.mubr.bf16.mxu0 %v5957
        %6817 = vmatmul.mubr.bf16.gmra.mrb[0].mxu0 %v5956
        %v6818 = vpop.f32.mrb[0].mxu0
        %v6819 = vadd.f32 %v6102, %v6818
        %v6820 = vpop.f32.mrb[0].mxu0
        %v6821 = vpop.f32.mrb[0].mxu0
        %v6822 = vadd.f32 %v6102, %v6821
        %v6823 = vpop.f32.mrb[0].mxu0
        %6824 = vmatprep.mubr.bf16.mxu0 %v5960
        %6825 = vmatmul.mubr.bf16.gmra.mrb[0].mxu0 %v5959
        %v6826 = vpop.f32.mrb[0].mxu0
        %v6827 = vadd.f32 %v6102, %v6826
        %v6828 = vpop.f32.mrb[0].mxu0
        %v6829 = vpop.f32.mrb[0].mxu0
        %v6830 = vadd.f32 %v6102, %v6829
        %v6831 = vpop.f32.mrb[0].mxu0
        %6832 = vmatprep.mubr.bf16.mxu0 %v5963
        %6833 = vmatmul.mubr.bf16.gmra.mrb[0].mxu0 %v5962
        %v6834 = vpop.f32.mrb[0].mxu0
        %v6835 = vadd.f32 %v6102, %v6834
        %v6836 = vpop.f32.mrb[0].mxu0
        %v6837 = vpop.f32.mrb[0].mxu0
        %v6838 = vadd.f32 %v6102, %v6837
        %v6839 = vpop.f32.mrb[0].mxu0
        %6840 = vmatprep.mubr.bf16.mxu0 %v5966
        %6841 = vmatmul.mubr.bf16.gmra.mrb[0].mxu0 %v5965
        %v6842 = vpop.f32.mrb[0].mxu0
        %v6843 = vadd.f32 %v6102, %v6842
        %v6844 = vpop.f32.mrb[0].mxu0
        %v6845 = vpop.f32.mrb[0].mxu0
        %v6846 = vadd.f32 %v6102, %v6845
        %v6847 = vpop.f32.mrb[0].mxu0
        %6848 = vmatprep.mubr.bf16.mxu0 %v5969
        %6849 = vmatmul.mubr.bf16.gmra.mrb[0].mxu0 %v5968
        %v6850 = vpop.f32.mrb[0].mxu0
        %v6851 = vadd.f32 %v6102, %v6850
        %v6852 = vpop.f32.mrb[0].mxu0
        %v6853 = vpop.f32.mrb[0].mxu0
        %v6854 = vadd.f32 %v6102, %v6853
        %v6855 = vpop.f32.mrb[0].mxu0
        %6856 = vmatprep.mubr.bf16.mxu0 %v5972
        %6857 = vmatmul.mubr.bf16.gmra.mrb[0].mxu0 %v5971
        %v6858 = vpop.f32.mrb[0].mxu0
        %v6859 = vadd.f32 %v6102, %v6858
        %v6860 = vpop.f32.mrb[0].mxu0
        %v6861 = vpop.f32.mrb[0].mxu0
        %v6862 = vadd.f32 %v6102, %v6861
        %v6863 = vpop.f32.mrb[0].mxu0
        %6864 = vmatprep.mubr.bf16.mxu0 %v5975
        %6865 = vmatmul.mubr.bf16.gmra.mrb[0].mxu0 %v5974
        %v6866 = vpop.f32.mrb[0].mxu0
        %v6867 = vadd.f32 %v6102, %v6866
        %v6868 = vpop.f32.mrb[0].mxu0
        %v6869 = vpop.f32.mrb[0].mxu0
        %v6870 = vadd.f32 %v6102, %v6869
        %v6871 = vpop.f32.mrb[0].mxu0
        %6872 = vmatprep.mubr.bf16.mxu0 %v5978
        %6873 = vmatmul.mubr.bf16.gmra.mrb[0].mxu0 %v5977
        %v6874 = vpop.f32.mrb[0].mxu0
        %v6875 = vadd.f32 %v6102, %v6874
        %v6876 = vpop.f32.mrb[0].mxu0
        %v6877 = vpop.f32.mrb[0].mxu0
        %v6878 = vadd.f32 %v6102, %v6877
        %v6879 = vpop.f32.mrb[0].mxu0
        %6880 = vmatprep.mubr.bf16.mxu0 %v5981
        %6881 = vmatmul.mubr.bf16.gmra.mrb[0].mxu0 %v5980
        %v6882 = vpop.f32.mrb[0].mxu0
        %v6883 = vadd.f32 %v6102, %v6882
        %v6884 = vpop.f32.mrb[0].mxu0
        %v6885 = vpop.f32.mrb[0].mxu0
        %v6886 = vadd.f32 %v6102, %v6885
        %v6887 = vpop.f32.mrb[0].mxu0
        %6888 = vmatprep.mubr.bf16.mxu0 %v5984
        %6889 = vmatmul.mubr.bf16.gmra.mrb[0].mxu0 %v5983
        %v6890 = vpop.f32.mrb[0].mxu0
        %v6891 = vadd.f32 %v6102, %v6890
        %v6892 = vpop.f32.mrb[0].mxu0
        %v6893 = vpop.f32.mrb[0].mxu0
        %v6894 = vadd.f32 %v6102, %v6893
        %v6895 = vpop.f32.mrb[0].mxu0
        %6896 = vmatprep.mubr.bf16.mxu0 %v5987
        %6897 = vmatmul.mubr.bf16.gmra.mrb[0].mxu0 %v5986
        %v6898 = vpop.f32.mrb[0].mxu0
        %v6899 = vadd.f32 %v6102, %v6898
        %v6900 = vpop.f32.mrb[0].mxu0
        %v6901 = vpop.f32.mrb[0].mxu0
        %v6902 = vadd.f32 %v6102, %v6901
        %v6903 = vpop.f32.mrb[0].mxu0
        %6904 = vmatprep.mubr.bf16.mxu0 %v5990
        %6905 = vmatmul.mubr.bf16.gmra.mrb[0].mxu0 %v5989
        %v6906 = vpop.f32.mrb[0].mxu0
        %v6907 = vadd.f32 %v6102, %v6906
        %v6908 = vpop.f32.mrb[0].mxu0
        %v6909 = vpop.f32.mrb[0].mxu0
        %v6910 = vadd.f32 %v6102, %v6909
        %v6911 = vpop.f32.mrb[0].mxu0
        %6912 = vmatprep.mubr.bf16.mxu0 %v5993
        %6913 = vmatmul.mubr.bf16.gmra.mrb[0].mxu0 %v5992
        %v6914 = vpop.f32.mrb[0].mxu0
        %v6915 = vadd.f32 %v6102, %v6914
        %v6916 = vpop.f32.mrb[0].mxu0
        %v6917 = vpop.f32.mrb[0].mxu0
        %v6918 = vadd.f32 %v6102, %v6917
        %v6919 = vpop.f32.mrb[0].mxu0
        %6920 = vmatprep.mubr.bf16.mxu0 %v5996
        %6921 = vmatmul.mubr.bf16.gmra.mrb[0].mxu0 %v5995
        %v6922 = vpop.f32.mrb[0].mxu0
        %v6923 = vadd.f32 %v6102, %v6922
        %v6924 = vpop.f32.mrb[0].mxu0
        %v6925 = vpop.f32.mrb[0].mxu0
        %v6926 = vadd.f32 %v6102, %v6925
        %v6927 = vpop.f32.mrb[0].mxu0
        %6928 = vmatprep.mubr.bf16.mxu0 %v5999
        %6929 = vmatmul.mubr.bf16.gmra.mrb[0].mxu0 %v5998
        %v6930 = vpop.f32.mrb[0].mxu0
        %v6931 = vadd.f32 %v6102, %v6930
        %v6932 = vpop.f32.mrb[0].mxu0
        %v6933 = vpop.f32.mrb[0].mxu0
        %v6934 = vadd.f32 %v6102, %v6933
        %v6935 = vpop.f32.mrb[0].mxu0
        %6936 = vmatprep.mubr.bf16.mxu0 %v6002
        %6937 = vmatmul.mubr.bf16.gmra.mrb[0].mxu0 %v6001
        %v6938 = vpop.f32.mrb[0].mxu0
        %v6939 = vadd.f32 %v6102, %v6938
        %v6940 = vpop.f32.mrb[0].mxu0
        %v6941 = vpop.f32.mrb[0].mxu0
        %v6942 = vadd.f32 %v6102, %v6941
        %v6943 = vpop.f32.mrb[0].mxu0
        %6944 = vmatprep.mubr.bf16.mxu0 %v6005
        %6945 = vmatmul.mubr.bf16.gmra.mrb[0].mxu0 %v6004
        %v6946 = vpop.f32.mrb[0].mxu0
        %v6947 = vadd.f32 %v6102, %v6946
        %v6948 = vpop.f32.mrb[0].mxu0
        %v6949 = vpop.f32.mrb[0].mxu0
        %v6950 = vadd.f32 %v6102, %v6949
        %v6951 = vpop.f32.mrb[0].mxu0
        %6952 = vmatprep.mubr.bf16.mxu0 %v6008
        %6953 = vmatmul.mubr.bf16.gmra.mrb[0].mxu0 %v6007
        %v6954 = vpop.f32.mrb[0].mxu0
        %v6955 = vadd.f32 %v6102, %v6954
        %v6956 = vpop.f32.mrb[0].mxu0
        %v6957 = vpop.f32.mrb[0].mxu0
        %v6958 = vadd.f32 %v6102, %v6957
        %v6959 = vpop.f32.mrb[0].mxu0
        %6960 = vmatprep.mubr.bf16.mxu0 %v6011
        %6961 = vmatmul.mubr.bf16.gmra.mrb[0].mxu0 %v6010
        %v6962 = vpop.f32.mrb[0].mxu0
        %v6963 = vadd.f32 %v6102, %v6962
        %v6964 = vpop.f32.mrb[0].mxu0
        %v6965 = vpop.f32.mrb[0].mxu0
        %v6966 = vadd.f32 %v6102, %v6965
        %v6967 = vpop.f32.mrb[0].mxu0
        %6968 = vmatprep.mubr.bf16.mxu0 %v6014
        %6969 = vmatmul.mubr.bf16.gmra.mrb[0].mxu0 %v6013
        %v6970 = vpop.f32.mrb[0].mxu0
        %v6971 = vadd.f32 %v6102, %v6970
        %v6972 = vpop.f32.mrb[0].mxu0
        %v6973 = vpop.f32.mrb[0].mxu0
        %v6974 = vadd.f32 %v6102, %v6973
        %v6975 = vpop.f32.mrb[0].mxu0
        %6976 = vmatprep.mubr.bf16.mxu0 %v6017
        %6977 = vmatmul.mubr.bf16.gmra.mrb[0].mxu0 %v6016
        %v6978 = vpop.f32.mrb[0].mxu0
        %v6979 = vadd.f32 %v6102, %v6978
        %v6980 = vpop.f32.mrb[0].mxu0
        %v6981 = vpop.f32.mrb[0].mxu0
        %v6982 = vadd.f32 %v6102, %v6981
        %v6983 = vpop.f32.mrb[0].mxu0
        %6984 = vmatprep.mubr.bf16.mxu0 %v6020
        %6985 = vmatmul.mubr.bf16.gmra.mrb[0].mxu0 %v6019
        %v6986 = vpop.f32.mrb[0].mxu0
        %v6987 = vadd.f32 %v6102, %v6986
        %v6988 = vpop.f32.mrb[0].mxu0
        %v6989 = vpop.f32.mrb[0].mxu0
        %v6990 = vadd.f32 %v6102, %v6989
        %v6991 = vpop.f32.mrb[0].mxu0
        %6992 = vmatprep.mubr.bf16.mxu0 %v6023
        %6993 = vmatmul.mubr.bf16.gmra.mrb[0].mxu0 %v6022
        %v6994 = vpop.f32.mrb[0].mxu0
        %v6995 = vadd.f32 %v6102, %v6994
        %v6996 = vpop.f32.mrb[0].mxu0
        %v6997 = vpop.f32.mrb[0].mxu0
        %v6998 = vadd.f32 %v6102, %v6997
        %v6999 = vpop.f32.mrb[0].mxu0
        %7000 = vmatprep.mubr.bf16.mxu0 %v6026
        %7001 = vmatmul.mubr.bf16.gmra.mrb[0].mxu0 %v6025
        %v7002 = vpop.f32.mrb[0].mxu0
        %v7003 = vadd.f32 %v6102, %v7002
        %v7004 = vpop.f32.mrb[0].mxu0
        %v7005 = vpop.f32.mrb[0].mxu0
        %v7006 = vadd.f32 %v6102, %v7005
        %v7007 = vpop.f32.mrb[0].mxu0
        %7008 = vmatprep.mubr.bf16.mxu0 %v6029
        %7009 = vmatmul.mubr.bf16.gmra.mrb[0].mxu0 %v6028
        %v7010 = vpop.f32.mrb[0].mxu0
        %v7011 = vadd.f32 %v6102, %v7010
        %v7012 = vpop.f32.mrb[0].mxu0
        %v7013 = vpop.f32.mrb[0].mxu0
        %v7014 = vadd.f32 %v6102, %v7013
        %v7015 = vpop.f32.mrb[0].mxu0
        %7016 = vmatprep.mubr.bf16.mxu0 %v6032
        %7017 = vmatmul.mubr.bf16.gmra.mrb[0].mxu0 %v6031
        %v7018 = vpop.f32.mrb[0].mxu0
        %v7019 = vadd.f32 %v6102, %v7018
        %v7020 = vpop.f32.mrb[0].mxu0
        %v7021 = vpop.f32.mrb[0].mxu0
        %v7022 = vadd.f32 %v6102, %v7021
        %v7023 = vpop.f32.mrb[0].mxu0
        %7024 = vmatprep.mubr.bf16.mxu0 %v6035
        %7025 = vmatmul.mubr.bf16.gmra.mrb[0].mxu0 %v6034
        %v7026 = vpop.f32.mrb[0].mxu0
        %v7027 = vadd.f32 %v6102, %v7026
        %v7028 = vpop.f32.mrb[0].mxu0
        %v7029 = vpop.f32.mrb[0].mxu0
        %v7030 = vadd.f32 %v6102, %v7029
        %v7031 = vpop.f32.mrb[0].mxu0
        %7032 = vmatprep.mubr.bf16.mxu0 %v6038
        %7033 = vmatmul.mubr.bf16.gmra.mrb[0].mxu0 %v6037
        %v7034 = vpop.f32.mrb[0].mxu0
        %v7035 = vadd.f32 %v6102, %v7034
        %v7036 = vpop.f32.mrb[0].mxu0
        %v7037 = vpop.f32.mrb[0].mxu0
        %v7038 = vadd.f32 %v6102, %v7037
        %v7039 = vpop.f32.mrb[0].mxu0
        %7040 = vmatprep.mubr.bf16.mxu0 %v6041
        %7041 = vmatmul.mubr.bf16.gmra.mrb[0].mxu0 %v6040
        %v7042 = vpop.f32.mrb[0].mxu0
        %v7043 = vadd.f32 %v6102, %v7042
        %v7044 = vpop.f32.mrb[0].mxu0
        %v7045 = vpop.f32.mrb[0].mxu0
        %v7046 = vadd.f32 %v6102, %v7045
        %v7047 = vpop.f32.mrb[0].mxu0
        %7048 = vmatprep.mubr.bf16.mxu0 %v6044
        %7049 = vmatmul.mubr.bf16.gmra.mrb[0].mxu0 %v6043
        %v7050 = vpop.f32.mrb[0].mxu0
        %v7051 = vadd.f32 %v6102, %v7050
        %v7052 = vpop.f32.mrb[0].mxu0
        %v7053 = vpop.f32.mrb[0].mxu0
        %v7054 = vadd.f32 %v6102, %v7053
        %v7055 = vpop.f32.mrb[0].mxu0
        %7056 = vmatprep.mubr.bf16.mxu0 %v6047
        %7057 = vmatmul.mubr.bf16.gmra.mrb[0].mxu0 %v6046
        %v7058 = vpop.f32.mrb[0].mxu0
        %v7059 = vadd.f32 %v6102, %v7058
        %v7060 = vpop.f32.mrb[0].mxu0
        %v7061 = vpop.f32.mrb[0].mxu0
        %v7062 = vadd.f32 %v6102, %v7061
        %v7063 = vpop.f32.mrb[0].mxu0
        %7064 = vdwg.mxu0
        %7065 = vmatprep.subr.bf16.mxu0 0
        %7066 = vmatpush1.bf16.msra.mxu0 %v6216
        %7067 = vmatprep.subr.bf16.mxu0 0
        %7068 = vmatpush1.bf16.msra.mxu0 %v6217
        %7069 = vmatprep.subr.bf16.mxu0 0
        %7070 = vmatpush1.bf16.msra.mxu0 %v6218
        %7071 = vmatprep.subr.bf16.mxu0 0
        %7072 = vmatpush1.bf16.msra.mxu0 %v6219
        %7073 = vmatprep.subr.bf16.mxu0 0
        %7074 = vmatpush1.bf16.msra.mxu0 %v6220
        %7075 = vmatprep.subr.bf16.mxu0 0
        %7076 = vmatpush1.bf16.msra.mxu0 %v6221
        %7077 = vmatprep.subr.bf16.mxu0 0
        %7078 = vmatpush1.bf16.msra.mxu0 %v6222
        %7079 = vmatprep.subr.bf16.mxu0 0
        %7080 = vmatpush1.bf16.msra.mxu0 %v6223
        %7081 = vmatprep.subr.bf16.mxu0 0
        %7082 = vmatpush1.bf16.msra.mxu0 0
        %7083 = vmatprep.subr.bf16.mxu0 0
        %7084 = vmatpush1.bf16.msra.mxu0 0
        %7085 = vmatprep.subr.bf16.mxu0 0
        %7086 = vmatpush1.bf16.msra.mxu0 0
        %7087 = vmatprep.subr.bf16.mxu0 0
        %7088 = vmatpush1.bf16.msra.mxu0 0
        %7089 = vmatprep.subr.bf16.mxu0 0
        %7090 = vmatpush1.bf16.msra.mxu0 0
        %7091 = vmatprep.subr.bf16.mxu0 0
        %7092 = vmatpush1.bf16.msra.mxu0 0
        %7093 = vmatprep.subr.bf16.mxu0 0
        %7094 = vmatpush1.bf16.msra.mxu0 0
        %7095 = vmatprep.subr.bf16.mxu0 0
        %7096 = vmatpush1.bf16.msra.mxu0 0
        %7097 = vmatprep.mubr.bf16.mxu0 0
        %7098 = vmatmul.mubr.bf16.gmra.mrb[0].mxu0 %v5757
        %v7099 = vpop.f32.mrb[0].mxu0
        %v7100 = vadd.f32 %v6283, %v7099
        %v7101 = vpop.f32.mrb[0].mxu0
        %v7102 = vpop.f32.mrb[0].mxu0
        %v7103 = vadd.f32 %v6286, %v7102
        %v7104 = vpop.f32.mrb[0].mxu0
        %7105 = vmatprep.mubr.bf16.mxu0 0
        %7106 = vmatmul.mubr.bf16.gmra.mrb[0].mxu0 %v5760
        %v7107 = vpop.f32.mrb[0].mxu0
        %v7108 = vadd.f32 %v6291, %v7107
        %v7109 = vpop.f32.mrb[0].mxu0
        %v7110 = vpop.f32.mrb[0].mxu0
        %v7111 = vadd.f32 %v6294, %v7110
        %v7112 = vpop.f32.mrb[0].mxu0
        %7113 = vmatprep.mubr.bf16.mxu0 0
        %7114 = vmatmul.mubr.bf16.gmra.mrb[0].mxu0 %v5763
        %v7115 = vpop.f32.mrb[0].mxu0
        %v7116 = vadd.f32 %v6299, %v7115
        %v7117 = vpop.f32.mrb[0].mxu0
        %v7118 = vpop.f32.mrb[0].mxu0
        %v7119 = vadd.f32 %v6302, %v7118
        %v7120 = vpop.f32.mrb[0].mxu0
        %7121 = vmatprep.mubr.bf16.mxu0 0
        %7122 = vmatmul.mubr.bf16.gmra.mrb[0].mxu0 %v5766
        %v7123 = vpop.f32.mrb[0].mxu0
        %v7124 = vadd.f32 %v6307, %v7123
        %v7125 = vpop.f32.mrb[0].mxu0
        %v7126 = vpop.f32.mrb[0].mxu0
        %v7127 = vadd.f32 %v6310, %v7126
        %v7128 = vpop.f32.mrb[0].mxu0
        %7129 = vmatprep.mubr.bf16.mxu0 0
        %7130 = vmatmul.mubr.bf16.gmra.mrb[0].mxu0 %v5769
        %v7131 = vpop.f32.mrb[0].mxu0
        %v7132 = vadd.f32 %v6315, %v7131
        %v7133 = vpop.f32.mrb[0].mxu0
        %v7134 = vpop.f32.mrb[0].mxu0
        %v7135 = vadd.f32 %v6318, %v7134
        %v7136 = vpop.f32.mrb[0].mxu0
        %7137 = vmatprep.mubr.bf16.mxu0 0
        %7138 = vmatmul.mubr.bf16.gmra.mrb[0].mxu0 %v5772
        %v7139 = vpop.f32.mrb[0].mxu0
        %v7140 = vadd.f32 %v6323, %v7139
        %v7141 = vpop.f32.mrb[0].mxu0
        %v7142 = vpop.f32.mrb[0].mxu0
        %v7143 = vadd.f32 %v6326, %v7142
        %v7144 = vpop.f32.mrb[0].mxu0
        %7145 = vmatprep.mubr.bf16.mxu0 0
        %7146 = vmatmul.mubr.bf16.gmra.mrb[0].mxu0 %v5775
        %v7147 = vpop.f32.mrb[0].mxu0
        %v7148 = vadd.f32 %v6331, %v7147
        %v7149 = vpop.f32.mrb[0].mxu0
        %v7150 = vpop.f32.mrb[0].mxu0
        %v7151 = vadd.f32 %v6334, %v7150
        %v7152 = vpop.f32.mrb[0].mxu0
        %7153 = vmatprep.mubr.bf16.mxu0 0
        %7154 = vmatmul.mubr.bf16.gmra.mrb[0].mxu0 %v5778
        %v7155 = vpop.f32.mrb[0].mxu0
        %v7156 = vadd.f32 %v6339, %v7155
        %v7157 = vpop.f32.mrb[0].mxu0
        %v7158 = vpop.f32.mrb[0].mxu0
        %v7159 = vadd.f32 %v6342, %v7158
        %v7160 = vpop.f32.mrb[0].mxu0
        %7161 = vmatprep.mubr.bf16.mxu0 0
        %7162 = vmatmul.mubr.bf16.gmra.mrb[0].mxu0 %v5781
        %v7163 = vpop.f32.mrb[0].mxu0
        %v7164 = vadd.f32 %v6347, %v7163
        %v7165 = vpop.f32.mrb[0].mxu0
        %v7166 = vpop.f32.mrb[0].mxu0
        %v7167 = vadd.f32 %v6350, %v7166
        %v7168 = vpop.f32.mrb[0].mxu0
        %7169 = vmatprep.mubr.bf16.mxu0 0
        %7170 = vmatmul.mubr.bf16.gmra.mrb[0].mxu0 %v5784
        %v7171 = vpop.f32.mrb[0].mxu0
        %v7172 = vadd.f32 %v6355, %v7171
        %v7173 = vpop.f32.mrb[0].mxu0
        %v7174 = vpop.f32.mrb[0].mxu0
        %v7175 = vadd.f32 %v6358, %v7174
        %v7176 = vpop.f32.mrb[0].mxu0
        %7177 = vmatprep.mubr.bf16.mxu0 0
        %7178 = vmatmul.mubr.bf16.gmra.mrb[0].mxu0 %v5787
        %v7179 = vpop.f32.mrb[0].mxu0
        %v7180 = vadd.f32 %v6363, %v7179
        %v7181 = vpop.f32.mrb[0].mxu0
        %v7182 = vpop.f32.mrb[0].mxu0
        %v7183 = vadd.f32 %v6366, %v7182
        %v7184 = vpop.f32.mrb[0].mxu0
        %7185 = vmatprep.mubr.bf16.mxu0 0
        %7186 = vmatmul.mubr.bf16.gmra.mrb[0].mxu0 %v5790
        %v7187 = vpop.f32.mrb[0].mxu0
        %v7188 = vadd.f32 %v6371, %v7187
        %v7189 = vpop.f32.mrb[0].mxu0
        %v7190 = vpop.f32.mrb[0].mxu0
        %v7191 = vadd.f32 %v6374, %v7190
        %v7192 = vpop.f32.mrb[0].mxu0
        %7193 = vmatprep.mubr.bf16.mxu0 0
        %7194 = vmatmul.mubr.bf16.gmra.mrb[0].mxu0 %v5793
        %v7195 = vpop.f32.mrb[0].mxu0
        %v7196 = vadd.f32 %v6379, %v7195
        %v7197 = vpop.f32.mrb[0].mxu0
        %v7198 = vpop.f32.mrb[0].mxu0
        %v7199 = vadd.f32 %v6382, %v7198
        %v7200 = vpop.f32.mrb[0].mxu0
        %7201 = vmatprep.mubr.bf16.mxu0 0
        %7202 = vmatmul.mubr.bf16.gmra.mrb[0].mxu0 %v5796
        %v7203 = vpop.f32.mrb[0].mxu0
        %v7204 = vadd.f32 %v6387, %v7203
        %v7205 = vpop.f32.mrb[0].mxu0
        %v7206 = vpop.f32.mrb[0].mxu0
        %v7207 = vadd.f32 %v6390, %v7206
        %v7208 = vpop.f32.mrb[0].mxu0
        %7209 = vmatprep.mubr.bf16.mxu0 0
        %7210 = vmatmul.mubr.bf16.gmra.mrb[0].mxu0 %v5799
        %v7211 = vpop.f32.mrb[0].mxu0
        %v7212 = vadd.f32 %v6395, %v7211
        %v7213 = vpop.f32.mrb[0].mxu0
        %v7214 = vpop.f32.mrb[0].mxu0
        %v7215 = vadd.f32 %v6398, %v7214
        %v7216 = vpop.f32.mrb[0].mxu0
        %7217 = vmatprep.mubr.bf16.mxu0 0
        %7218 = vmatmul.mubr.bf16.gmra.mrb[0].mxu0 %v5802
        %v7219 = vpop.f32.mrb[0].mxu0
        %v7220 = vadd.f32 %v6403, %v7219
        %v7221 = vpop.f32.mrb[0].mxu0
        %v7222 = vpop.f32.mrb[0].mxu0
        %v7223 = vadd.f32 %v6406, %v7222
        %v7224 = vpop.f32.mrb[0].mxu0
        %7225 = vmatprep.mubr.bf16.mxu0 0
        %7226 = vmatmul.mubr.bf16.gmra.mrb[0].mxu0 %v5805
        %v7227 = vpop.f32.mrb[0].mxu0
        %v7228 = vadd.f32 %v6411, %v7227
        %v7229 = vpop.f32.mrb[0].mxu0
        %v7230 = vpop.f32.mrb[0].mxu0
        %v7231 = vadd.f32 %v6414, %v7230
        %v7232 = vpop.f32.mrb[0].mxu0
        %7233 = vmatprep.mubr.bf16.mxu0 0
        %7234 = vmatmul.mubr.bf16.gmra.mrb[0].mxu0 %v5808
        %v7235 = vpop.f32.mrb[0].mxu0
        %v7236 = vadd.f32 %v6419, %v7235
        %v7237 = vpop.f32.mrb[0].mxu0
        %v7238 = vpop.f32.mrb[0].mxu0
        %v7239 = vadd.f32 %v6422, %v7238
        %v7240 = vpop.f32.mrb[0].mxu0
        %7241 = vmatprep.mubr.bf16.mxu0 0
        %7242 = vmatmul.mubr.bf16.gmra.mrb[0].mxu0 %v5811
        %v7243 = vpop.f32.mrb[0].mxu0
        %v7244 = vadd.f32 %v6427, %v7243
        %v7245 = vpop.f32.mrb[0].mxu0
        %v7246 = vpop.f32.mrb[0].mxu0
        %v7247 = vadd.f32 %v6430, %v7246
        %v7248 = vpop.f32.mrb[0].mxu0
        %7249 = vmatprep.mubr.bf16.mxu0 0
        %7250 = vmatmul.mubr.bf16.gmra.mrb[0].mxu0 %v5814
        %v7251 = vpop.f32.mrb[0].mxu0
        %v7252 = vadd.f32 %v6435, %v7251
        %v7253 = vpop.f32.mrb[0].mxu0
        %v7254 = vpop.f32.mrb[0].mxu0
        %v7255 = vadd.f32 %v6438, %v7254
        %v7256 = vpop.f32.mrb[0].mxu0
        %7257 = vmatprep.mubr.bf16.mxu0 0
        %7258 = vmatmul.mubr.bf16.gmra.mrb[0].mxu0 %v5817
        %v7259 = vpop.f32.mrb[0].mxu0
        %v7260 = vadd.f32 %v6443, %v7259
        %v7261 = vpop.f32.mrb[0].mxu0
        %v7262 = vpop.f32.mrb[0].mxu0
        %v7263 = vadd.f32 %v6446, %v7262
        %v7264 = vpop.f32.mrb[0].mxu0
        %7265 = vmatprep.mubr.bf16.mxu0 0
        %7266 = vmatmul.mubr.bf16.gmra.mrb[0].mxu0 %v5820
        %v7267 = vpop.f32.mrb[0].mxu0
        %v7268 = vadd.f32 %v6451, %v7267
        %v7269 = vpop.f32.mrb[0].mxu0
        %v7270 = vpop.f32.mrb[0].mxu0
        %v7271 = vadd.f32 %v6454, %v7270
        %v7272 = vpop.f32.mrb[0].mxu0
        %7273 = vmatprep.mubr.bf16.mxu0 0
        %7274 = vmatmul.mubr.bf16.gmra.mrb[0].mxu0 %v5823
        %v7275 = vpop.f32.mrb[0].mxu0
        %v7276 = vadd.f32 %v6459, %v7275
        %v7277 = vpop.f32.mrb[0].mxu0
        %v7278 = vpop.f32.mrb[0].mxu0
        %v7279 = vadd.f32 %v6462, %v7278
        %v7280 = vpop.f32.mrb[0].mxu0
        %7281 = vmatprep.mubr.bf16.mxu0 0
        %7282 = vmatmul.mubr.bf16.gmra.mrb[0].mxu0 %v5826
        %v7283 = vpop.f32.mrb[0].mxu0
        %v7284 = vadd.f32 %v6467, %v7283
        %v7285 = vpop.f32.mrb[0].mxu0
        %v7286 = vpop.f32.mrb[0].mxu0
        %v7287 = vadd.f32 %v6470, %v7286
        %v7288 = vpop.f32.mrb[0].mxu0
        %7289 = vmatprep.mubr.bf16.mxu0 0
        %7290 = vmatmul.mubr.bf16.gmra.mrb[0].mxu0 %v5829
        %v7291 = vpop.f32.mrb[0].mxu0
        %v7292 = vadd.f32 %v6475, %v7291
        %v7293 = vpop.f32.mrb[0].mxu0
        %v7294 = vpop.f32.mrb[0].mxu0
        %v7295 = vadd.f32 %v6478, %v7294
        %v7296 = vpop.f32.mrb[0].mxu0
        %7297 = vmatprep.mubr.bf16.mxu0 0
        %7298 = vmatmul.mubr.bf16.gmra.mrb[0].mxu0 %v5832
        %v7299 = vpop.f32.mrb[0].mxu0
        %v7300 = vadd.f32 %v6483, %v7299
        %v7301 = vpop.f32.mrb[0].mxu0
        %v7302 = vpop.f32.mrb[0].mxu0
        %v7303 = vadd.f32 %v6486, %v7302
        %v7304 = vpop.f32.mrb[0].mxu0
        %7305 = vmatprep.mubr.bf16.mxu0 0
        %7306 = vmatmul.mubr.bf16.gmra.mrb[0].mxu0 %v5835
        %v7307 = vpop.f32.mrb[0].mxu0
        %v7308 = vadd.f32 %v6491, %v7307
        %v7309 = vpop.f32.mrb[0].mxu0
        %v7310 = vpop.f32.mrb[0].mxu0
        %v7311 = vadd.f32 %v6494, %v7310
        %v7312 = vpop.f32.mrb[0].mxu0
        %7313 = vmatprep.mubr.bf16.mxu0 0
        %7314 = vmatmul.mubr.bf16.gmra.mrb[0].mxu0 %v5838
        %v7315 = vpop.f32.mrb[0].mxu0
        %v7316 = vadd.f32 %v6499, %v7315
        %v7317 = vpop.f32.mrb[0].mxu0
        %v7318 = vpop.f32.mrb[0].mxu0
        %v7319 = vadd.f32 %v6502, %v7318
        %v7320 = vpop.f32.mrb[0].mxu0
        %7321 = vmatprep.mubr.bf16.mxu0 0
        %7322 = vmatmul.mubr.bf16.gmra.mrb[0].mxu0 %v5841
        %v7323 = vpop.f32.mrb[0].mxu0
        %v7324 = vadd.f32 %v6507, %v7323
        %v7325 = vpop.f32.mrb[0].mxu0
        %v7326 = vpop.f32.mrb[0].mxu0
        %v7327 = vadd.f32 %v6510, %v7326
        %v7328 = vpop.f32.mrb[0].mxu0
        %7329 = vmatprep.mubr.bf16.mxu0 0
        %7330 = vmatmul.mubr.bf16.gmra.mrb[0].mxu0 %v5844
        %v7331 = vpop.f32.mrb[0].mxu0
        %v7332 = vadd.f32 %v6515, %v7331
        %v7333 = vpop.f32.mrb[0].mxu0
        %v7334 = vpop.f32.mrb[0].mxu0
        %v7335 = vadd.f32 %v6518, %v7334
        %v7336 = vpop.f32.mrb[0].mxu0
        %7337 = vmatprep.mubr.bf16.mxu0 0
        %7338 = vmatmul.mubr.bf16.gmra.mrb[0].mxu0 %v5847
        %v7339 = vpop.f32.mrb[0].mxu0
        %v7340 = vadd.f32 %v6523, %v7339
        %v7341 = vpop.f32.mrb[0].mxu0
        %v7342 = vpop.f32.mrb[0].mxu0
        %v7343 = vadd.f32 %v6526, %v7342
        %v7344 = vpop.f32.mrb[0].mxu0
        %7345 = vmatprep.mubr.bf16.mxu0 0
        %7346 = vmatmul.mubr.bf16.gmra.mrb[0].mxu0 %v5850
        %v7347 = vpop.f32.mrb[0].mxu0
        %v7348 = vadd.f32 %v6531, %v7347
        %v7349 = vpop.f32.mrb[0].mxu0
        %v7350 = vpop.f32.mrb[0].mxu0
        %v7351 = vadd.f32 %v6534, %v7350
        %v7352 = vpop.f32.mrb[0].mxu0
        %7353 = vmatprep.mubr.bf16.mxu0 0
        %7354 = vmatmul.mubr.bf16.gmra.mrb[0].mxu0 %v5853
        %v7355 = vpop.f32.mrb[0].mxu0
        %v7356 = vadd.f32 %v6539, %v7355
        %v7357 = vpop.f32.mrb[0].mxu0
        %v7358 = vpop.f32.mrb[0].mxu0
        %v7359 = vadd.f32 %v6542, %v7358
        %v7360 = vpop.f32.mrb[0].mxu0
        %7361 = vmatprep.mubr.bf16.mxu0 0
        %7362 = vmatmul.mubr.bf16.gmra.mrb[0].mxu0 %v5856
        %v7363 = vpop.f32.mrb[0].mxu0
        %v7364 = vadd.f32 %v6547, %v7363
        %v7365 = vpop.f32.mrb[0].mxu0
        %v7366 = vpop.f32.mrb[0].mxu0
        %v7367 = vadd.f32 %v6550, %v7366
        %v7368 = vpop.f32.mrb[0].mxu0
        %7369 = vmatprep.mubr.bf16.mxu0 0
        %7370 = vmatmul.mubr.bf16.gmra.mrb[0].mxu0 %v5859
        %v7371 = vpop.f32.mrb[0].mxu0
        %v7372 = vadd.f32 %v6555, %v7371
        %v7373 = vpop.f32.mrb[0].mxu0
        %v7374 = vpop.f32.mrb[0].mxu0
        %v7375 = vadd.f32 %v6558, %v7374
        %v7376 = vpop.f32.mrb[0].mxu0
        %7377 = vmatprep.mubr.bf16.mxu0 0
        %7378 = vmatmul.mubr.bf16.gmra.mrb[0].mxu0 %v5862
        %v7379 = vpop.f32.mrb[0].mxu0
        %v7380 = vadd.f32 %v6563, %v7379
        %v7381 = vpop.f32.mrb[0].mxu0
        %v7382 = vpop.f32.mrb[0].mxu0
        %v7383 = vadd.f32 %v6566, %v7382
        %v7384 = vpop.f32.mrb[0].mxu0
        %7385 = vmatprep.mubr.bf16.mxu0 0
        %7386 = vmatmul.mubr.bf16.gmra.mrb[0].mxu0 %v5865
        %v7387 = vpop.f32.mrb[0].mxu0
        %v7388 = vadd.f32 %v6571, %v7387
        %v7389 = vpop.f32.mrb[0].mxu0
        %v7390 = vpop.f32.mrb[0].mxu0
        %v7391 = vadd.f32 %v6574, %v7390
        %v7392 = vpop.f32.mrb[0].mxu0
        %7393 = vmatprep.mubr.bf16.mxu0 0
        %7394 = vmatmul.mubr.bf16.gmra.mrb[0].mxu0 %v5868
        %v7395 = vpop.f32.mrb[0].mxu0
        %v7396 = vadd.f32 %v6579, %v7395
        %v7397 = vpop.f32.mrb[0].mxu0
        %v7398 = vpop.f32.mrb[0].mxu0
        %v7399 = vadd.f32 %v6582, %v7398
        %v7400 = vpop.f32.mrb[0].mxu0
        %7401 = vmatprep.mubr.bf16.mxu0 0
        %7402 = vmatmul.mubr.bf16.gmra.mrb[0].mxu0 %v5871
        %v7403 = vpop.f32.mrb[0].mxu0
        %v7404 = vadd.f32 %v6587, %v7403
        %v7405 = vpop.f32.mrb[0].mxu0
        %v7406 = vpop.f32.mrb[0].mxu0
        %v7407 = vadd.f32 %v6590, %v7406
        %v7408 = vpop.f32.mrb[0].mxu0
        %7409 = vmatprep.mubr.bf16.mxu0 0
        %7410 = vmatmul.mubr.bf16.gmra.mrb[0].mxu0 %v5874
        %v7411 = vpop.f32.mrb[0].mxu0
        %v7412 = vadd.f32 %v6595, %v7411
        %v7413 = vpop.f32.mrb[0].mxu0
        %v7414 = vpop.f32.mrb[0].mxu0
        %v7415 = vadd.f32 %v6598, %v7414
        %v7416 = vpop.f32.mrb[0].mxu0
        %7417 = vmatprep.mubr.bf16.mxu0 0
        %7418 = vmatmul.mubr.bf16.gmra.mrb[0].mxu0 %v5877
        %v7419 = vpop.f32.mrb[0].mxu0
        %v7420 = vadd.f32 %v6603, %v7419
        %v7421 = vpop.f32.mrb[0].mxu0
        %v7422 = vpop.f32.mrb[0].mxu0
        %v7423 = vadd.f32 %v6606, %v7422
        %v7424 = vpop.f32.mrb[0].mxu0
        %7425 = vmatprep.mubr.bf16.mxu0 0
        %7426 = vmatmul.mubr.bf16.gmra.mrb[0].mxu0 %v5880
        %v7427 = vpop.f32.mrb[0].mxu0
        %v7428 = vadd.f32 %v6611, %v7427
        %v7429 = vpop.f32.mrb[0].mxu0
        %v7430 = vpop.f32.mrb[0].mxu0
        %v7431 = vadd.f32 %v6614, %v7430
        %v7432 = vpop.f32.mrb[0].mxu0
        %7433 = vmatprep.mubr.bf16.mxu0 0
        %7434 = vmatmul.mubr.bf16.gmra.mrb[0].mxu0 %v5883
        %v7435 = vpop.f32.mrb[0].mxu0
        %v7436 = vadd.f32 %v6619, %v7435
        %v7437 = vpop.f32.mrb[0].mxu0
        %v7438 = vpop.f32.mrb[0].mxu0
        %v7439 = vadd.f32 %v6622, %v7438
        %v7440 = vpop.f32.mrb[0].mxu0
        %7441 = vmatprep.mubr.bf16.mxu0 0
        %7442 = vmatmul.mubr.bf16.gmra.mrb[0].mxu0 %v5886
        %v7443 = vpop.f32.mrb[0].mxu0
        %v7444 = vadd.f32 %v6627, %v7443
        %v7445 = vpop.f32.mrb[0].mxu0
        %v7446 = vpop.f32.mrb[0].mxu0
        %v7447 = vadd.f32 %v6630, %v7446
        %v7448 = vpop.f32.mrb[0].mxu0
        %7449 = vmatprep.mubr.bf16.mxu0 0
        %7450 = vmatmul.mubr.bf16.gmra.mrb[0].mxu0 %v5889
        %v7451 = vpop.f32.mrb[0].mxu0
        %v7452 = vadd.f32 %v6635, %v7451
        %v7453 = vpop.f32.mrb[0].mxu0
        %v7454 = vpop.f32.mrb[0].mxu0
        %v7455 = vadd.f32 %v6638, %v7454
        %v7456 = vpop.f32.mrb[0].mxu0
        %7457 = vmatprep.mubr.bf16.mxu0 0
        %7458 = vmatmul.mubr.bf16.gmra.mrb[0].mxu0 %v5892
        %v7459 = vpop.f32.mrb[0].mxu0
        %v7460 = vadd.f32 %v6643, %v7459
        %v7461 = vpop.f32.mrb[0].mxu0
        %v7462 = vpop.f32.mrb[0].mxu0
        %v7463 = vadd.f32 %v6646, %v7462
        %v7464 = vpop.f32.mrb[0].mxu0
        %7465 = vmatprep.mubr.bf16.mxu0 0
        %7466 = vmatmul.mubr.bf16.gmra.mrb[0].mxu0 %v5895
        %v7467 = vpop.f32.mrb[0].mxu0
        %v7468 = vadd.f32 %v6651, %v7467
        %v7469 = vpop.f32.mrb[0].mxu0
        %v7470 = vpop.f32.mrb[0].mxu0
        %v7471 = vadd.f32 %v6654, %v7470
        %v7472 = vpop.f32.mrb[0].mxu0
        %7473 = vmatprep.mubr.bf16.mxu0 0
        %7474 = vmatmul.mubr.bf16.gmra.mrb[0].mxu0 %v5898
        %v7475 = vpop.f32.mrb[0].mxu0
        %v7476 = vadd.f32 %v6659, %v7475
        %v7477 = vpop.f32.mrb[0].mxu0
        %v7478 = vpop.f32.mrb[0].mxu0
        %v7479 = vadd.f32 %v6662, %v7478
        %v7480 = vpop.f32.mrb[0].mxu0
        %7481 = vmatprep.mubr.bf16.mxu0 0
        %7482 = vmatmul.mubr.bf16.gmra.mrb[0].mxu0 %v5901
        %v7483 = vpop.f32.mrb[0].mxu0
        %v7484 = vadd.f32 %v6667, %v7483
        %v7485 = vpop.f32.mrb[0].mxu0
        %v7486 = vpop.f32.mrb[0].mxu0
        %v7487 = vadd.f32 %v6670, %v7486
        %v7488 = vpop.f32.mrb[0].mxu0
        %7489 = vmatprep.mubr.bf16.mxu0 0
        %7490 = vmatmul.mubr.bf16.gmra.mrb[0].mxu0 %v5904
        %v7491 = vpop.f32.mrb[0].mxu0
        %v7492 = vadd.f32 %v6675, %v7491
        %v7493 = vpop.f32.mrb[0].mxu0
        %v7494 = vpop.f32.mrb[0].mxu0
        %v7495 = vadd.f32 %v6678, %v7494
        %v7496 = vpop.f32.mrb[0].mxu0
        %7497 = vmatprep.mubr.bf16.mxu0 0
        %7498 = vmatmul.mubr.bf16.gmra.mrb[0].mxu0 %v5907
        %v7499 = vpop.f32.mrb[0].mxu0
        %v7500 = vadd.f32 %v6683, %v7499
        %v7501 = vpop.f32.mrb[0].mxu0
        %v7502 = vpop.f32.mrb[0].mxu0
        %v7503 = vadd.f32 %v6686, %v7502
        %v7504 = vpop.f32.mrb[0].mxu0
        %7505 = vmatprep.mubr.bf16.mxu0 0
        %7506 = vmatmul.mubr.bf16.gmra.mrb[0].mxu0 %v5910
        %v7507 = vpop.f32.mrb[0].mxu0
        %v7508 = vadd.f32 %v6691, %v7507
        %v7509 = vpop.f32.mrb[0].mxu0
        %v7510 = vpop.f32.mrb[0].mxu0
        %v7511 = vadd.f32 %v6694, %v7510
        %v7512 = vpop.f32.mrb[0].mxu0
        %7513 = vmatprep.mubr.bf16.mxu0 0
        %7514 = vmatmul.mubr.bf16.gmra.mrb[0].mxu0 %v5913
        %v7515 = vpop.f32.mrb[0].mxu0
        %v7516 = vadd.f32 %v6699, %v7515
        %v7517 = vpop.f32.mrb[0].mxu0
        %v7518 = vpop.f32.mrb[0].mxu0
        %v7519 = vadd.f32 %v6702, %v7518
        %v7520 = vpop.f32.mrb[0].mxu0
        %7521 = vmatprep.mubr.bf16.mxu0 0
        %7522 = vmatmul.mubr.bf16.gmra.mrb[0].mxu0 %v5916
        %v7523 = vpop.f32.mrb[0].mxu0
        %v7524 = vadd.f32 %v6707, %v7523
        %v7525 = vpop.f32.mrb[0].mxu0
        %v7526 = vpop.f32.mrb[0].mxu0
        %v7527 = vadd.f32 %v6710, %v7526
        %v7528 = vpop.f32.mrb[0].mxu0
        %7529 = vmatprep.mubr.bf16.mxu0 0
        %7530 = vmatmul.mubr.bf16.gmra.mrb[0].mxu0 %v5919
        %v7531 = vpop.f32.mrb[0].mxu0
        %v7532 = vadd.f32 %v6715, %v7531
        %v7533 = vpop.f32.mrb[0].mxu0
        %v7534 = vpop.f32.mrb[0].mxu0
        %v7535 = vadd.f32 %v6718, %v7534
        %v7536 = vpop.f32.mrb[0].mxu0
        %7537 = vmatprep.mubr.bf16.mxu0 0
        %7538 = vmatmul.mubr.bf16.gmra.mrb[0].mxu0 %v5922
        %v7539 = vpop.f32.mrb[0].mxu0
        %v7540 = vadd.f32 %v6723, %v7539
        %v7541 = vpop.f32.mrb[0].mxu0
        %v7542 = vpop.f32.mrb[0].mxu0
        %v7543 = vadd.f32 %v6726, %v7542
        %v7544 = vpop.f32.mrb[0].mxu0
        %7545 = vmatprep.mubr.bf16.mxu0 0
        %7546 = vmatmul.mubr.bf16.gmra.mrb[0].mxu0 %v5925
        %v7547 = vpop.f32.mrb[0].mxu0
        %v7548 = vadd.f32 %v6731, %v7547
        %v7549 = vpop.f32.mrb[0].mxu0
        %v7550 = vpop.f32.mrb[0].mxu0
        %v7551 = vadd.f32 %v6734, %v7550
        %v7552 = vpop.f32.mrb[0].mxu0
        %7553 = vmatprep.mubr.bf16.mxu0 0
        %7554 = vmatmul.mubr.bf16.gmra.mrb[0].mxu0 %v5928
        %v7555 = vpop.f32.mrb[0].mxu0
        %v7556 = vadd.f32 %v6739, %v7555
        %v7557 = vpop.f32.mrb[0].mxu0
        %v7558 = vpop.f32.mrb[0].mxu0
        %v7559 = vadd.f32 %v6742, %v7558
        %v7560 = vpop.f32.mrb[0].mxu0
        %7561 = vmatprep.mubr.bf16.mxu0 0
        %7562 = vmatmul.mubr.bf16.gmra.mrb[0].mxu0 %v5931
        %v7563 = vpop.f32.mrb[0].mxu0
        %v7564 = vadd.f32 %v6747, %v7563
        %v7565 = vpop.f32.mrb[0].mxu0
        %v7566 = vpop.f32.mrb[0].mxu0
        %v7567 = vadd.f32 %v6750, %v7566
        %v7568 = vpop.f32.mrb[0].mxu0
        %7569 = vmatprep.mubr.bf16.mxu0 0
        %7570 = vmatmul.mubr.bf16.gmra.mrb[0].mxu0 %v5934
        %v7571 = vpop.f32.mrb[0].mxu0
        %v7572 = vadd.f32 %v6755, %v7571
        %v7573 = vpop.f32.mrb[0].mxu0
        %v7574 = vpop.f32.mrb[0].mxu0
        %v7575 = vadd.f32 %v6758, %v7574
        %v7576 = vpop.f32.mrb[0].mxu0
        %7577 = vmatprep.mubr.bf16.mxu0 0
        %7578 = vmatmul.mubr.bf16.gmra.mrb[0].mxu0 %v5937
        %v7579 = vpop.f32.mrb[0].mxu0
        %v7580 = vadd.f32 %v6763, %v7579
        %v7581 = vpop.f32.mrb[0].mxu0
        %v7582 = vpop.f32.mrb[0].mxu0
        %v7583 = vadd.f32 %v6766, %v7582
        %v7584 = vpop.f32.mrb[0].mxu0
        %7585 = vmatprep.mubr.bf16.mxu0 0
        %7586 = vmatmul.mubr.bf16.gmra.mrb[0].mxu0 %v5940
        %v7587 = vpop.f32.mrb[0].mxu0
        %v7588 = vadd.f32 %v6771, %v7587
        %v7589 = vpop.f32.mrb[0].mxu0
        %v7590 = vpop.f32.mrb[0].mxu0
        %v7591 = vadd.f32 %v6774, %v7590
        %v7592 = vpop.f32.mrb[0].mxu0
        %7593 = vmatprep.mubr.bf16.mxu0 0
        %7594 = vmatmul.mubr.bf16.gmra.mrb[0].mxu0 %v5943
        %v7595 = vpop.f32.mrb[0].mxu0
        %v7596 = vadd.f32 %v6779, %v7595
        %v7597 = vpop.f32.mrb[0].mxu0
        %v7598 = vpop.f32.mrb[0].mxu0
        %v7599 = vadd.f32 %v6782, %v7598
        %v7600 = vpop.f32.mrb[0].mxu0
        %7601 = vmatprep.mubr.bf16.mxu0 0
        %7602 = vmatmul.mubr.bf16.gmra.mrb[0].mxu0 %v5946
        %v7603 = vpop.f32.mrb[0].mxu0
        %v7604 = vadd.f32 %v6787, %v7603
        %v7605 = vpop.f32.mrb[0].mxu0
        %v7606 = vpop.f32.mrb[0].mxu0
        %v7607 = vadd.f32 %v6790, %v7606
        %v7608 = vpop.f32.mrb[0].mxu0
        %7609 = vmatprep.mubr.bf16.mxu0 0
        %7610 = vmatmul.mubr.bf16.gmra.mrb[0].mxu0 %v5949
        %v7611 = vpop.f32.mrb[0].mxu0
        %v7612 = vadd.f32 %v6795, %v7611
        %v7613 = vpop.f32.mrb[0].mxu0
        %v7614 = vpop.f32.mrb[0].mxu0
        %v7615 = vadd.f32 %v6798, %v7614
        %v7616 = vpop.f32.mrb[0].mxu0
        %7617 = vmatprep.mubr.bf16.mxu0 0
        %7618 = vmatmul.mubr.bf16.gmra.mrb[0].mxu0 %v5952
        %v7619 = vpop.f32.mrb[0].mxu0
        %v7620 = vadd.f32 %v6803, %v7619
        %v7621 = vpop.f32.mrb[0].mxu0
        %v7622 = vpop.f32.mrb[0].mxu0
        %v7623 = vadd.f32 %v6806, %v7622
        %v7624 = vpop.f32.mrb[0].mxu0
        %7625 = vmatprep.mubr.bf16.mxu0 0
        %7626 = vmatmul.mubr.bf16.gmra.mrb[0].mxu0 %v5955
        %v7627 = vpop.f32.mrb[0].mxu0
        %v7628 = vadd.f32 %v6811, %v7627
        %v7629 = vpop.f32.mrb[0].mxu0
        %v7630 = vpop.f32.mrb[0].mxu0
        %v7631 = vadd.f32 %v6814, %v7630
        %v7632 = vpop.f32.mrb[0].mxu0
        %7633 = vmatprep.mubr.bf16.mxu0 0
        %7634 = vmatmul.mubr.bf16.gmra.mrb[0].mxu0 %v5958
        %v7635 = vpop.f32.mrb[0].mxu0
        %v7636 = vadd.f32 %v6819, %v7635
        %v7637 = vpop.f32.mrb[0].mxu0
        %v7638 = vpop.f32.mrb[0].mxu0
        %v7639 = vadd.f32 %v6822, %v7638
        %v7640 = vpop.f32.mrb[0].mxu0
        %7641 = vmatprep.mubr.bf16.mxu0 0
        %7642 = vmatmul.mubr.bf16.gmra.mrb[0].mxu0 %v5961
        %v7643 = vpop.f32.mrb[0].mxu0
        %v7644 = vadd.f32 %v6827, %v7643
        %v7645 = vpop.f32.mrb[0].mxu0
        %v7646 = vpop.f32.mrb[0].mxu0
        %v7647 = vadd.f32 %v6830, %v7646
        %v7648 = vpop.f32.mrb[0].mxu0
        %7649 = vmatprep.mubr.bf16.mxu0 0
        %7650 = vmatmul.mubr.bf16.gmra.mrb[0].mxu0 %v5964
        %v7651 = vpop.f32.mrb[0].mxu0
        %v7652 = vadd.f32 %v6835, %v7651
        %v7653 = vpop.f32.mrb[0].mxu0
        %v7654 = vpop.f32.mrb[0].mxu0
        %v7655 = vadd.f32 %v6838, %v7654
        %v7656 = vpop.f32.mrb[0].mxu0
        %7657 = vmatprep.mubr.bf16.mxu0 0
        %7658 = vmatmul.mubr.bf16.gmra.mrb[0].mxu0 %v5967
        %v7659 = vpop.f32.mrb[0].mxu0
        %v7660 = vadd.f32 %v6843, %v7659
        %v7661 = vpop.f32.mrb[0].mxu0
        %v7662 = vpop.f32.mrb[0].mxu0
        %v7663 = vadd.f32 %v6846, %v7662
        %v7664 = vpop.f32.mrb[0].mxu0
        %7665 = vmatprep.mubr.bf16.mxu0 0
        %7666 = vmatmul.mubr.bf16.gmra.mrb[0].mxu0 %v5970
        %v7667 = vpop.f32.mrb[0].mxu0
        %v7668 = vadd.f32 %v6851, %v7667
        %v7669 = vpop.f32.mrb[0].mxu0
        %v7670 = vpop.f32.mrb[0].mxu0
        %v7671 = vadd.f32 %v6854, %v7670
        %v7672 = vpop.f32.mrb[0].mxu0
        %7673 = vmatprep.mubr.bf16.mxu0 0
        %7674 = vmatmul.mubr.bf16.gmra.mrb[0].mxu0 %v5973
        %v7675 = vpop.f32.mrb[0].mxu0
        %v7676 = vadd.f32 %v6859, %v7675
        %v7677 = vpop.f32.mrb[0].mxu0
        %v7678 = vpop.f32.mrb[0].mxu0
        %v7679 = vadd.f32 %v6862, %v7678
        %v7680 = vpop.f32.mrb[0].mxu0
        %7681 = vmatprep.mubr.bf16.mxu0 0
        %7682 = vmatmul.mubr.bf16.gmra.mrb[0].mxu0 %v5976
        %v7683 = vpop.f32.mrb[0].mxu0
        %v7684 = vadd.f32 %v6867, %v7683
        %v7685 = vpop.f32.mrb[0].mxu0
        %v7686 = vpop.f32.mrb[0].mxu0
        %v7687 = vadd.f32 %v6870, %v7686
        %v7688 = vpop.f32.mrb[0].mxu0
        %7689 = vmatprep.mubr.bf16.mxu0 0
        %7690 = vmatmul.mubr.bf16.gmra.mrb[0].mxu0 %v5979
        %v7691 = vpop.f32.mrb[0].mxu0
        %v7692 = vadd.f32 %v6875, %v7691
        %v7693 = vpop.f32.mrb[0].mxu0
        %v7694 = vpop.f32.mrb[0].mxu0
        %v7695 = vadd.f32 %v6878, %v7694
        %v7696 = vpop.f32.mrb[0].mxu0
        %7697 = vmatprep.mubr.bf16.mxu0 0
        %7698 = vmatmul.mubr.bf16.gmra.mrb[0].mxu0 %v5982
        %v7699 = vpop.f32.mrb[0].mxu0
        %v7700 = vadd.f32 %v6883, %v7699
        %v7701 = vpop.f32.mrb[0].mxu0
        %v7702 = vpop.f32.mrb[0].mxu0
        %v7703 = vadd.f32 %v6886, %v7702
        %v7704 = vpop.f32.mrb[0].mxu0
        %7705 = vmatprep.mubr.bf16.mxu0 0
        %7706 = vmatmul.mubr.bf16.gmra.mrb[0].mxu0 %v5985
        %v7707 = vpop.f32.mrb[0].mxu0
        %v7708 = vadd.f32 %v6891, %v7707
        %v7709 = vpop.f32.mrb[0].mxu0
        %v7710 = vpop.f32.mrb[0].mxu0
        %v7711 = vadd.f32 %v6894, %v7710
        %v7712 = vpop.f32.mrb[0].mxu0
        %7713 = vmatprep.mubr.bf16.mxu0 0
        %7714 = vmatmul.mubr.bf16.gmra.mrb[0].mxu0 %v5988
        %v7715 = vpop.f32.mrb[0].mxu0
        %v7716 = vadd.f32 %v6899, %v7715
        %v7717 = vpop.f32.mrb[0].mxu0
        %v7718 = vpop.f32.mrb[0].mxu0
        %v7719 = vadd.f32 %v6902, %v7718
        %v7720 = vpop.f32.mrb[0].mxu0
        %7721 = vmatprep.mubr.bf16.mxu0 0
        %7722 = vmatmul.mubr.bf16.gmra.mrb[0].mxu0 %v5991
        %v7723 = vpop.f32.mrb[0].mxu0
        %v7724 = vadd.f32 %v6907, %v7723
        %v7725 = vpop.f32.mrb[0].mxu0
        %v7726 = vpop.f32.mrb[0].mxu0
        %v7727 = vadd.f32 %v6910, %v7726
        %v7728 = vpop.f32.mrb[0].mxu0
        %7729 = vmatprep.mubr.bf16.mxu0 0
        %7730 = vmatmul.mubr.bf16.gmra.mrb[0].mxu0 %v5994
        %v7731 = vpop.f32.mrb[0].mxu0
        %v7732 = vadd.f32 %v6915, %v7731
        %v7733 = vpop.f32.mrb[0].mxu0
        %v7734 = vpop.f32.mrb[0].mxu0
        %v7735 = vadd.f32 %v6918, %v7734
        %v7736 = vpop.f32.mrb[0].mxu0
        %7737 = vmatprep.mubr.bf16.mxu0 0
        %7738 = vmatmul.mubr.bf16.gmra.mrb[0].mxu0 %v5997
        %v7739 = vpop.f32.mrb[0].mxu0
        %v7740 = vadd.f32 %v6923, %v7739
        %v7741 = vpop.f32.mrb[0].mxu0
        %v7742 = vpop.f32.mrb[0].mxu0
        %v7743 = vadd.f32 %v6926, %v7742
        %v7744 = vpop.f32.mrb[0].mxu0
        %7745 = vmatprep.mubr.bf16.mxu0 0
        %7746 = vmatmul.mubr.bf16.gmra.mrb[0].mxu0 %v6000
        %v7747 = vpop.f32.mrb[0].mxu0
        %v7748 = vadd.f32 %v6931, %v7747
        %v7749 = vpop.f32.mrb[0].mxu0
        %v7750 = vpop.f32.mrb[0].mxu0
        %v7751 = vadd.f32 %v6934, %v7750
        %v7752 = vpop.f32.mrb[0].mxu0
        %7753 = vmatprep.mubr.bf16.mxu0 0
        %7754 = vmatmul.mubr.bf16.gmra.mrb[0].mxu0 %v6003
        %v7755 = vpop.f32.mrb[0].mxu0
        %v7756 = vadd.f32 %v6939, %v7755
        %v7757 = vpop.f32.mrb[0].mxu0
        %v7758 = vpop.f32.mrb[0].mxu0
        %v7759 = vadd.f32 %v6942, %v7758
        %v7760 = vpop.f32.mrb[0].mxu0
        %7761 = vmatprep.mubr.bf16.mxu0 0
        %7762 = vmatmul.mubr.bf16.gmra.mrb[0].mxu0 %v6006
        %v7763 = vpop.f32.mrb[0].mxu0
        %v7764 = vadd.f32 %v6947, %v7763
        %v7765 = vpop.f32.mrb[0].mxu0
        %v7766 = vpop.f32.mrb[0].mxu0
        %v7767 = vadd.f32 %v6950, %v7766
        %v7768 = vpop.f32.mrb[0].mxu0
        %7769 = vmatprep.mubr.bf16.mxu0 0
        %7770 = vmatmul.mubr.bf16.gmra.mrb[0].mxu0 %v6009
        %v7771 = vpop.f32.mrb[0].mxu0
        %v7772 = vadd.f32 %v6955, %v7771
        %v7773 = vpop.f32.mrb[0].mxu0
        %v7774 = vpop.f32.mrb[0].mxu0
        %v7775 = vadd.f32 %v6958, %v7774
        %v7776 = vpop.f32.mrb[0].mxu0
        %7777 = vmatprep.mubr.bf16.mxu0 0
        %7778 = vmatmul.mubr.bf16.gmra.mrb[0].mxu0 %v6012
        %v7779 = vpop.f32.mrb[0].mxu0
        %v7780 = vadd.f32 %v6963, %v7779
        %v7781 = vpop.f32.mrb[0].mxu0
        %v7782 = vpop.f32.mrb[0].mxu0
        %v7783 = vadd.f32 %v6966, %v7782
        %v7784 = vpop.f32.mrb[0].mxu0
        %7785 = vmatprep.mubr.bf16.mxu0 0
        %7786 = vmatmul.mubr.bf16.gmra.mrb[0].mxu0 %v6015
        %v7787 = vpop.f32.mrb[0].mxu0
        %v7788 = vadd.f32 %v6971, %v7787
        %v7789 = vpop.f32.mrb[0].mxu0
        %v7790 = vpop.f32.mrb[0].mxu0
        %v7791 = vadd.f32 %v6974, %v7790
        %v7792 = vpop.f32.mrb[0].mxu0
        %7793 = vmatprep.mubr.bf16.mxu0 0
        %7794 = vmatmul.mubr.bf16.gmra.mrb[0].mxu0 %v6018
        %v7795 = vpop.f32.mrb[0].mxu0
        %v7796 = vadd.f32 %v6979, %v7795
        %v7797 = vpop.f32.mrb[0].mxu0
        %v7798 = vpop.f32.mrb[0].mxu0
        %v7799 = vadd.f32 %v6982, %v7798
        %v7800 = vpop.f32.mrb[0].mxu0
        %7801 = vmatprep.mubr.bf16.mxu0 0
        %7802 = vmatmul.mubr.bf16.gmra.mrb[0].mxu0 %v6021
        %v7803 = vpop.f32.mrb[0].mxu0
        %v7804 = vadd.f32 %v6987, %v7803
        %v7805 = vpop.f32.mrb[0].mxu0
        %v7806 = vpop.f32.mrb[0].mxu0
        %v7807 = vadd.f32 %v6990, %v7806
        %v7808 = vpop.f32.mrb[0].mxu0
        %7809 = vmatprep.mubr.bf16.mxu0 0
        %7810 = vmatmul.mubr.bf16.gmra.mrb[0].mxu0 %v6024
        %v7811 = vpop.f32.mrb[0].mxu0
        %v7812 = vadd.f32 %v6995, %v7811
        %v7813 = vpop.f32.mrb[0].mxu0
        %v7814 = vpop.f32.mrb[0].mxu0
        %v7815 = vadd.f32 %v6998, %v7814
        %v7816 = vpop.f32.mrb[0].mxu0
        %7817 = vmatprep.mubr.bf16.mxu0 0
        %7818 = vmatmul.mubr.bf16.gmra.mrb[0].mxu0 %v6027
        %v7819 = vpop.f32.mrb[0].mxu0
        %v7820 = vadd.f32 %v7003, %v7819
        %v7821 = vpop.f32.mrb[0].mxu0
        %v7822 = vpop.f32.mrb[0].mxu0
        %v7823 = vadd.f32 %v7006, %v7822
        %v7824 = vpop.f32.mrb[0].mxu0
        %7825 = vmatprep.mubr.bf16.mxu0 0
        %7826 = vmatmul.mubr.bf16.gmra.mrb[0].mxu0 %v6030
        %v7827 = vpop.f32.mrb[0].mxu0
        %v7828 = vadd.f32 %v7011, %v7827
        %v7829 = vpop.f32.mrb[0].mxu0
        %v7830 = vpop.f32.mrb[0].mxu0
        %v7831 = vadd.f32 %v7014, %v7830
        %v7832 = vpop.f32.mrb[0].mxu0
        %7833 = vmatprep.mubr.bf16.mxu0 0
        %7834 = vmatmul.mubr.bf16.gmra.mrb[0].mxu0 %v6033
        %v7835 = vpop.f32.mrb[0].mxu0
        %v7836 = vadd.f32 %v7019, %v7835
        %v7837 = vpop.f32.mrb[0].mxu0
        %v7838 = vpop.f32.mrb[0].mxu0
        %v7839 = vadd.f32 %v7022, %v7838
        %v7840 = vpop.f32.mrb[0].mxu0
        %7841 = vmatprep.mubr.bf16.mxu0 0
        %7842 = vmatmul.mubr.bf16.gmra.mrb[0].mxu0 %v6036
        %v7843 = vpop.f32.mrb[0].mxu0
        %v7844 = vadd.f32 %v7027, %v7843
        %v7845 = vpop.f32.mrb[0].mxu0
        %v7846 = vpop.f32.mrb[0].mxu0
        %v7847 = vadd.f32 %v7030, %v7846
        %v7848 = vpop.f32.mrb[0].mxu0
        %7849 = vmatprep.mubr.bf16.mxu0 0
        %7850 = vmatmul.mubr.bf16.gmra.mrb[0].mxu0 %v6039
        %v7851 = vpop.f32.mrb[0].mxu0
        %v7852 = vadd.f32 %v7035, %v7851
        %v7853 = vpop.f32.mrb[0].mxu0
        %v7854 = vpop.f32.mrb[0].mxu0
        %v7855 = vadd.f32 %v7038, %v7854
        %v7856 = vpop.f32.mrb[0].mxu0
        %7857 = vmatprep.mubr.bf16.mxu0 0
        %7858 = vmatmul.mubr.bf16.gmra.mrb[0].mxu0 %v6042
        %v7859 = vpop.f32.mrb[0].mxu0
        %v7860 = vadd.f32 %v7043, %v7859
        %v7861 = vpop.f32.mrb[0].mxu0
        %v7862 = vpop.f32.mrb[0].mxu0
        %v7863 = vadd.f32 %v7046, %v7862
        %v7864 = vpop.f32.mrb[0].mxu0
        %7865 = vmatprep.mubr.bf16.mxu0 0
        %7866 = vmatmul.mubr.bf16.gmra.mrb[0].mxu0 %v6045
        %v7867 = vpop.f32.mrb[0].mxu0
        %v7868 = vadd.f32 %v7051, %v7867
        %v7869 = vpop.f32.mrb[0].mxu0
        %v7870 = vpop.f32.mrb[0].mxu0
        %v7871 = vadd.f32 %v7054, %v7870
        %v7872 = vpop.f32.mrb[0].mxu0
        %7873 = vmatprep.mubr.bf16.mxu0 0
        %7874 = vmatmul.mubr.bf16.gmra.mrb[0].mxu0 %v6048
        %v7875 = vpop.f32.mrb[0].mxu0
        %v7876 = vadd.f32 %v7059, %v7875
        %v7877 = vpop.f32.mrb[0].mxu0
        %v7878 = vpop.f32.mrb[0].mxu0
        %v7879 = vadd.f32 %v7062, %v7878
        %v7880 = vpop.f32.mrb[0].mxu0
        %7881 = vdwg.mxu0
        %7882 = vst.msk [vmem:[%s255] sm:$0xff] %vm690, %v7100
        %7883 = vst.msk [vmem:[%s255 + $0x8] sm:$0xff] %vm690, %v7103
        %7884 = vst.msk [vmem:[%s255 + $0x10] sm:$0xff] %vm690, %v7108
        %7885 = vst.msk [vmem:[%s255 + $0x18] sm:$0xff] %vm690, %v7111
        %7886 = vst.msk [vmem:[%s255 + $0x20] sm:$0xff] %vm690, %v7116
        %7887 = vst.msk [vmem:[%s255 + $0x28] sm:$0xff] %vm690, %v7119
        %7888 = vst.msk [vmem:[%s255 + $0x30] sm:$0xff] %vm690, %v7124
        %7889 = vst.msk [vmem:[%s255 + $0x38] sm:$0xff] %vm690, %v7127
        %7890 = vst.msk [vmem:[%s255 + $0x40] sm:$0xff] %vm690, %v7132
        %7891 = vst.msk [vmem:[%s255 + $0x48] sm:$0xff] %vm690, %v7135
        %7892 = vst.msk [vmem:[%s255 + $0x50] sm:$0xff] %vm690, %v7140
        %7893 = vst.msk [vmem:[%s255 + $0x58] sm:$0xff] %vm690, %v7143
        %7894 = vst.msk [vmem:[%s255 + $0x60] sm:$0xff] %vm690, %v7148
        %7895 = vst.msk [vmem:[%s255 + $0x68] sm:$0xff] %vm690, %v7151
        %7896 = vst.msk [vmem:[%s255 + $0x70] sm:$0xff] %vm690, %v7156
        %7897 = vst.msk [vmem:[%s255 + $0x78] sm:$0xff] %vm690, %v7159
        %7898 = vst.msk [vmem:[%s255 + $0x80] sm:$0xff] %vm690, %v7164
        %7899 = vst.msk [vmem:[%s255 + $0x88] sm:$0xff] %vm690, %v7167
        %7900 = vst.msk [vmem:[%s255 + $0x90] sm:$0xff] %vm690, %v7172
        %7901 = vst.msk [vmem:[%s255 + $0x98] sm:$0xff] %vm690, %v7175
        %7902 = vst.msk [vmem:[%s255 + $0xa0] sm:$0xff] %vm690, %v7180
        %7903 = vst.msk [vmem:[%s255 + $0xa8] sm:$0xff] %vm690, %v7183
        %7904 = vst.msk [vmem:[%s255 + $0xb0] sm:$0xff] %vm690, %v7188
        %7905 = vst.msk [vmem:[%s255 + $0xb8] sm:$0xff] %vm690, %v7191
        %7906 = vst.msk [vmem:[%s255 + $0xc0] sm:$0xff] %vm690, %v7196
        %7907 = vst.msk [vmem:[%s255 + $0xc8] sm:$0xff] %vm690, %v7199
        %7908 = vst.msk [vmem:[%s255 + $0xd0] sm:$0xff] %vm690, %v7204
        %7909 = vst.msk [vmem:[%s255 + $0xd8] sm:$0xff] %vm690, %v7207
        %7910 = vst.msk [vmem:[%s255 + $0xe0] sm:$0xff] %vm690, %v7212
        %7911 = vst.msk [vmem:[%s255 + $0xe8] sm:$0xff] %vm690, %v7215
        %7912 = vst.msk [vmem:[%s255 + $0xf0] sm:$0xff] %vm690, %v7220
        %7913 = vst.msk [vmem:[%s255 + $0xf8] sm:$0xff] %vm690, %v7223
        %7914 = vst.msk [vmem:[%s255 + $0x100] sm:$0xff] %vm690, %v7228
        %7915 = vst.msk [vmem:[%s255 + $0x108] sm:$0xff] %vm690, %v7231
        %7916 = vst.msk [vmem:[%s255 + $0x110] sm:$0xff] %vm690, %v7236
        %7917 = vst.msk [vmem:[%s255 + $0x118] sm:$0xff] %vm690, %v7239
        %7918 = vst.msk [vmem:[%s255 + $0x120] sm:$0xff] %vm690, %v7244
        %7919 = vst.msk [vmem:[%s255 + $0x128] sm:$0xff] %vm690, %v7247
        %7920 = vst.msk [vmem:[%s255 + $0x130] sm:$0xff] %vm690, %v7252
        %7921 = vst.msk [vmem:[%s255 + $0x138] sm:$0xff] %vm690, %v7255
        %7922 = vst.msk [vmem:[%s255 + $0x140] sm:$0xff] %vm690, %v7260
        %7923 = vst.msk [vmem:[%s255 + $0x148] sm:$0xff] %vm690, %v7263
        %7924 = vst.msk [vmem:[%s255 + $0x150] sm:$0xff] %vm690, %v7268
        %7925 = vst.msk [vmem:[%s255 + $0x158] sm:$0xff] %vm690, %v7271
        %7926 = vst.msk [vmem:[%s255 + $0x160] sm:$0xff] %vm690, %v7276
        %7927 = vst.msk [vmem:[%s255 + $0x168] sm:$0xff] %vm690, %v7279
        %7928 = vst.msk [vmem:[%s255 + $0x170] sm:$0xff] %vm690, %v7284
        %7929 = vst.msk [vmem:[%s255 + $0x178] sm:$0xff] %vm690, %v7287
        %7930 = vst.msk [vmem:[%s255 + $0x180] sm:$0xff] %vm690, %v7292
        %7931 = vst.msk [vmem:[%s255 + $0x188] sm:$0xff] %vm690, %v7295
        %7932 = vst.msk [vmem:[%s255 + $0x190] sm:$0xff] %vm690, %v7300
        %7933 = vst.msk [vmem:[%s255 + $0x198] sm:$0xff] %vm690, %v7303
        %7934 = vst.msk [vmem:[%s255 + $0x1a0] sm:$0xff] %vm690, %v7308
        %7935 = vst.msk [vmem:[%s255 + $0x1a8] sm:$0xff] %vm690, %v7311
        %7936 = vst.msk [vmem:[%s255 + $0x1b0] sm:$0xff] %vm690, %v7316
        %7937 = vst.msk [vmem:[%s255 + $0x1b8] sm:$0xff] %vm690, %v7319
        %7938 = vst.msk [vmem:[%s255 + $0x1c0] sm:$0xff] %vm690, %v7324
        %7939 = vst.msk [vmem:[%s255 + $0x1c8] sm:$0xff] %vm690, %v7327
        %7940 = vst.msk [vmem:[%s255 + $0x1d0] sm:$0xff] %vm690, %v7332
        %7941 = vst.msk [vmem:[%s255 + $0x1d8] sm:$0xff] %vm690, %v7335
        %7942 = vst.msk [vmem:[%s255 + $0x1e0] sm:$0xff] %vm690, %v7340
        %7943 = vst.msk [vmem:[%s255 + $0x1e8] sm:$0xff] %vm690, %v7343
        %7944 = vst.msk [vmem:[%s255 + $0x1f0] sm:$0xff] %vm690, %v7348
        %7945 = vst.msk [vmem:[%s255 + $0x1f8] sm:$0xff] %vm690, %v7351
        %7946 = vst.msk [vmem:[%s255 + $0x200] sm:$0xff] %vm690, %v7356
        %7947 = vst.msk [vmem:[%s255 + $0x208] sm:$0xff] %vm690, %v7359
        %7948 = vst.msk [vmem:[%s255 + $0x210] sm:$0xff] %vm690, %v7364
        %7949 = vst.msk [vmem:[%s255 + $0x218] sm:$0xff] %vm690, %v7367
        %7950 = vst.msk [vmem:[%s255 + $0x220] sm:$0xff] %vm690, %v7372
        %7951 = vst.msk [vmem:[%s255 + $0x228] sm:$0xff] %vm690, %v7375
        %7952 = vst.msk [vmem:[%s255 + $0x230] sm:$0xff] %vm690, %v7380
        %7953 = vst.msk [vmem:[%s255 + $0x238] sm:$0xff] %vm690, %v7383
        %7954 = vst.msk [vmem:[%s255 + $0x240] sm:$0xff] %vm690, %v7388
        %7955 = vst.msk [vmem:[%s255 + $0x248] sm:$0xff] %vm690, %v7391
        %7956 = vst.msk [vmem:[%s255 + $0x250] sm:$0xff] %vm690, %v7396
        %7957 = vst.msk [vmem:[%s255 + $0x258] sm:$0xff] %vm690, %v7399
        %7958 = vst.msk [vmem:[%s255 + $0x260] sm:$0xff] %vm690, %v7404
        %7959 = vst.msk [vmem:[%s255 + $0x268] sm:$0xff] %vm690, %v7407
        %7960 = vst.msk [vmem:[%s255 + $0x270] sm:$0xff] %vm690, %v7412
        %7961 = vst.msk [vmem:[%s255 + $0x278] sm:$0xff] %vm690, %v7415
        %7962 = vst.msk [vmem:[%s255 + $0x280] sm:$0xff] %vm690, %v7420
        %7963 = vst.msk [vmem:[%s255 + $0x288] sm:$0xff] %vm690, %v7423
        %7964 = vst.msk [vmem:[%s255 + $0x290] sm:$0xff] %vm690, %v7428
        %7965 = vst.msk [vmem:[%s255 + $0x298] sm:$0xff] %vm690, %v7431
        %7966 = vst.msk [vmem:[%s255 + $0x2a0] sm:$0xff] %vm690, %v7436
        %7967 = vst.msk [vmem:[%s255 + $0x2a8] sm:$0xff] %vm690, %v7439
        %7968 = vst.msk [vmem:[%s255 + $0x2b0] sm:$0xff] %vm690, %v7444
        %7969 = vst.msk [vmem:[%s255 + $0x2b8] sm:$0xff] %vm690, %v7447
        %7970 = vst.msk [vmem:[%s255 + $0x2c0] sm:$0xff] %vm690, %v7452
        %7971 = vst.msk [vmem:[%s255 + $0x2c8] sm:$0xff] %vm690, %v7455
        %7972 = vst.msk [vmem:[%s255 + $0x2d0] sm:$0xff] %vm690, %v7460
        %7973 = vst.msk [vmem:[%s255 + $0x2d8] sm:$0xff] %vm690, %v7463
        %7974 = vst.msk [vmem:[%s255 + $0x2e0] sm:$0xff] %vm690, %v7468
        %7975 = vst.msk [vmem:[%s255 + $0x2e8] sm:$0xff] %vm690, %v7471
        %7976 = vst.msk [vmem:[%s255 + $0x2f0] sm:$0xff] %vm690, %v7476
        %7977 = vst.msk [vmem:[%s255 + $0x2f8] sm:$0xff] %vm690, %v7479
        %7978 = vst.msk [vmem:[%s255 + $0x300] sm:$0xff] %vm690, %v7484
        %7979 = vst.msk [vmem:[%s255 + $0x308] sm:$0xff] %vm690, %v7487
        %7980 = vst.msk [vmem:[%s255 + $0x310] sm:$0xff] %vm690, %v7492
        %7981 = vst.msk [vmem:[%s255 + $0x318] sm:$0xff] %vm690, %v7495
        %7982 = vst.msk [vmem:[%s255 + $0x320] sm:$0xff] %vm690, %v7500
        %7983 = vst.msk [vmem:[%s255 + $0x328] sm:$0xff] %vm690, %v7503
        %7984 = vst.msk [vmem:[%s255 + $0x330] sm:$0xff] %vm690, %v7508
        %7985 = vst.msk [vmem:[%s255 + $0x338] sm:$0xff] %vm690, %v7511
        %7986 = vst.msk [vmem:[%s255 + $0x340] sm:$0xff] %vm690, %v7516
        %7987 = vst.msk [vmem:[%s255 + $0x348] sm:$0xff] %vm690, %v7519
        %7988 = vst.msk [vmem:[%s255 + $0x350] sm:$0xff] %vm690, %v7524
        %7989 = vst.msk [vmem:[%s255 + $0x358] sm:$0xff] %vm690, %v7527
        %7990 = vst.msk [vmem:[%s255 + $0x360] sm:$0xff] %vm690, %v7532
        %7991 = vst.msk [vmem:[%s255 + $0x368] sm:$0xff] %vm690, %v7535
        %7992 = vst.msk [vmem:[%s255 + $0x370] sm:$0xff] %vm690, %v7540
        %7993 = vst.msk [vmem:[%s255 + $0x378] sm:$0xff] %vm690, %v7543
        %7994 = vst.msk [vmem:[%s255 + $0x380] sm:$0xff] %vm690, %v7548
        %7995 = vst.msk [vmem:[%s255 + $0x388] sm:$0xff] %vm690, %v7551
        %7996 = vst.msk [vmem:[%s255 + $0x390] sm:$0xff] %vm690, %v7556
        %7997 = vst.msk [vmem:[%s255 + $0x398] sm:$0xff] %vm690, %v7559
        %7998 = vst.msk [vmem:[%s255 + $0x3a0] sm:$0xff] %vm690, %v7564
        %7999 = vst.msk [vmem:[%s255 + $0x3a8] sm:$0xff] %vm690, %v7567
        %8000 = vst.msk [vmem:[%s255 + $0x3b0] sm:$0xff] %vm690, %v7572
        %8001 = vst.msk [vmem:[%s255 + $0x3b8] sm:$0xff] %vm690, %v7575
        %8002 = vst.msk [vmem:[%s255 + $0x3c0] sm:$0xff] %vm690, %v7580
        %8003 = vst.msk [vmem:[%s255 + $0x3c8] sm:$0xff] %vm690, %v7583
        %8004 = vst.msk [vmem:[%s255 + $0x3d0] sm:$0xff] %vm690, %v7588
        %8005 = vst.msk [vmem:[%s255 + $0x3d8] sm:$0xff] %vm690, %v7591
        %8006 = vst.msk [vmem:[%s255 + $0x3e0] sm:$0xff] %vm690, %v7596
        %8007 = vst.msk [vmem:[%s255 + $0x3e8] sm:$0xff] %vm690, %v7599
        %8008 = vst.msk [vmem:[%s255 + $0x3f0] sm:$0xff] %vm690, %v7604
        %8009 = vst.msk [vmem:[%s255 + $0x3f8] sm:$0xff] %vm690, %v7607
        %8010 = vst.msk [vmem:[%s255 + $0x400] sm:$0xff] %vm690, %v7612
        %8011 = vst.msk [vmem:[%s255 + $0x408] sm:$0xff] %vm690, %v7615
        %8012 = vst.msk [vmem:[%s255 + $0x410] sm:$0xff] %vm690, %v7620
        %8013 = vst.msk [vmem:[%s255 + $0x418] sm:$0xff] %vm690, %v7623
        %8014 = vst.msk [vmem:[%s255 + $0x420] sm:$0xff] %vm690, %v7628
        %8015 = vst.msk [vmem:[%s255 + $0x428] sm:$0xff] %vm690, %v7631
        %8016 = vst.msk [vmem:[%s255 + $0x430] sm:$0xff] %vm690, %v7636
        %8017 = vst.msk [vmem:[%s255 + $0x438] sm:$0xff] %vm690, %v7639
        %8018 = vst.msk [vmem:[%s255 + $0x440] sm:$0xff] %vm690, %v7644
        %8019 = vst.msk [vmem:[%s255 + $0x448] sm:$0xff] %vm690, %v7647
        %8020 = vst.msk [vmem:[%s255 + $0x450] sm:$0xff] %vm690, %v7652
        %8021 = vst.msk [vmem:[%s255 + $0x458] sm:$0xff] %vm690, %v7655
        %8022 = vst.msk [vmem:[%s255 + $0x460] sm:$0xff] %vm690, %v7660
        %8023 = vst.msk [vmem:[%s255 + $0x468] sm:$0xff] %vm690, %v7663
        %8024 = vst.msk [vmem:[%s255 + $0x470] sm:$0xff] %vm690, %v7668
        %8025 = vst.msk [vmem:[%s255 + $0x478] sm:$0xff] %vm690, %v7671
        %8026 = vst.msk [vmem:[%s255 + $0x480] sm:$0xff] %vm690, %v7676
        %8027 = vst.msk [vmem:[%s255 + $0x488] sm:$0xff] %vm690, %v7679
        %8028 = vst.msk [vmem:[%s255 + $0x490] sm:$0xff] %vm690, %v7684
        %8029 = vst.msk [vmem:[%s255 + $0x498] sm:$0xff] %vm690, %v7687
        %8030 = vst.msk [vmem:[%s255 + $0x4a0] sm:$0xff] %vm690, %v7692
        %8031 = vst.msk [vmem:[%s255 + $0x4a8] sm:$0xff] %vm690, %v7695
        %8032 = vst.msk [vmem:[%s255 + $0x4b0] sm:$0xff] %vm690, %v7700
        %8033 = vst.msk [vmem:[%s255 + $0x4b8] sm:$0xff] %vm690, %v7703
        %8034 = vst.msk [vmem:[%s255 + $0x4c0] sm:$0xff] %vm690, %v7708
        %8035 = vst.msk [vmem:[%s255 + $0x4c8] sm:$0xff] %vm690, %v7711
        %8036 = vst.msk [vmem:[%s255 + $0x4d0] sm:$0xff] %vm690, %v7716
        %8037 = vst.msk [vmem:[%s255 + $0x4d8] sm:$0xff] %vm690, %v7719
        %8038 = vst.msk [vmem:[%s255 + $0x4e0] sm:$0xff] %vm690, %v7724
        %8039 = vst.msk [vmem:[%s255 + $0x4e8] sm:$0xff] %vm690, %v7727
        %8040 = vst.msk [vmem:[%s255 + $0x4f0] sm:$0xff] %vm690, %v7732
        %8041 = vst.msk [vmem:[%s255 + $0x4f8] sm:$0xff] %vm690, %v7735
        %8042 = vst.msk [vmem:[%s255 + $0x500] sm:$0xff] %vm690, %v7740
        %8043 = vst.msk [vmem:[%s255 + $0x508] sm:$0xff] %vm690, %v7743
        %8044 = vst.msk [vmem:[%s255 + $0x510] sm:$0xff] %vm690, %v7748
        %8045 = vst.msk [vmem:[%s255 + $0x518] sm:$0xff] %vm690, %v7751
        %8046 = vst.msk [vmem:[%s255 + $0x520] sm:$0xff] %vm690, %v7756
        %8047 = vst.msk [vmem:[%s255 + $0x528] sm:$0xff] %vm690, %v7759
        %8048 = vst.msk [vmem:[%s255 + $0x530] sm:$0xff] %vm690, %v7764
        %8049 = vst.msk [vmem:[%s255 + $0x538] sm:$0xff] %vm690, %v7767
        %8050 = vst.msk [vmem:[%s255 + $0x540] sm:$0xff] %vm690, %v7772
        %8051 = vst.msk [vmem:[%s255 + $0x548] sm:$0xff] %vm690, %v7775
        %8052 = vst.msk [vmem:[%s255 + $0x550] sm:$0xff] %vm690, %v7780
        %8053 = vst.msk [vmem:[%s255 + $0x558] sm:$0xff] %vm690, %v7783
        %8054 = vst.msk [vmem:[%s255 + $0x560] sm:$0xff] %vm690, %v7788
        %8055 = vst.msk [vmem:[%s255 + $0x568] sm:$0xff] %vm690, %v7791
        %8056 = vst.msk [vmem:[%s255 + $0x570] sm:$0xff] %vm690, %v7796
        %8057 = vst.msk [vmem:[%s255 + $0x578] sm:$0xff] %vm690, %v7799
        %8058 = vst.msk [vmem:[%s255 + $0x580] sm:$0xff] %vm690, %v7804
        %8059 = vst.msk [vmem:[%s255 + $0x588] sm:$0xff] %vm690, %v7807
        %8060 = vst.msk [vmem:[%s255 + $0x590] sm:$0xff] %vm690, %v7812
        %8061 = vst.msk [vmem:[%s255 + $0x598] sm:$0xff] %vm690, %v7815
        %8062 = vst.msk [vmem:[%s255 + $0x5a0] sm:$0xff] %vm690, %v7820
        %8063 = vst.msk [vmem:[%s255 + $0x5a8] sm:$0xff] %vm690, %v7823
        %8064 = vst.msk [vmem:[%s255 + $0x5b0] sm:$0xff] %vm690, %v7828
        %8065 = vst.msk [vmem:[%s255 + $0x5b8] sm:$0xff] %vm690, %v7831
        %8066 = vst.msk [vmem:[%s255 + $0x5c0] sm:$0xff] %vm690, %v7836
        %8067 = vst.msk [vmem:[%s255 + $0x5c8] sm:$0xff] %vm690, %v7839
        %8068 = vst.msk [vmem:[%s255 + $0x5d0] sm:$0xff] %vm690, %v7844
        %8069 = vst.msk [vmem:[%s255 + $0x5d8] sm:$0xff] %vm690, %v7847
        %8070 = vst.msk [vmem:[%s255 + $0x5e0] sm:$0xff] %vm690, %v7852
        %8071 = vst.msk [vmem:[%s255 + $0x5e8] sm:$0xff] %vm690, %v7855
        %8072 = vst.msk [vmem:[%s255 + $0x5f0] sm:$0xff] %vm690, %v7860
        %8073 = vst.msk [vmem:[%s255 + $0x5f8] sm:$0xff] %vm690, %v7863
        %8074 = vst.msk [vmem:[%s255 + $0x600] sm:$0xff] %vm690, %v7868
        %8075 = vst.msk [vmem:[%s255 + $0x608] sm:$0xff] %vm690, %v7871
        %8076 = vst.msk [vmem:[%s255 + $0x610] sm:$0xff] %vm690, %v7876
        %8077 = vst.msk [vmem:[%s255 + $0x618] sm:$0xff] %vm690, %v7879
        %s8078 = sand.u32 %s141, 1
        %s8079 = scalar_lea.sflag [#allocation4], %s8078
        %s8080 = sand.u32 %s141, 1
        %s8081 = smul.addr %s8080, 1568
        %s8082 = scalar_lea.vmem [#allocation7], %s8081
        // Predicated region
        $region49: #{convnext_mlp.1} parent=39 // pred_check
          %p8083 = pneg %p151
        $region50: #{convnext_mlp.1} parent=39 // pred_check_branch
          %8085 = sbr.rel (%p8083) target = $region52
        $region51: #{convnext_mlp.1} parent=39 // pred_region
          %s8086 = smul.u32 196, %s23
          %s8088 = ssub.s32 25088, 25088
          %8089 = vsyncadd %s8079, %s8088
          %s8090 = smul.addr %s8086, 128
          %s8091 = scalar_lea.hbm %s5, %s8090
          %s8092 = sshll.u32 %s8082, 4
          %s8093 = int_to_ptr.vmem [resolvable:$true] %s8092
          %8098 = dma.vmem_to_hbm [thread:$0]  %s8093, 25088, %s8091, %s8079, 128, 128, 8
        $region52: #{convnext_mlp.1} parent=39 // pred_fallthru
          _
      $region40: #{convnext_mlp.1} parent=5 // pred_fallthru
        _
      %p8099 = scmp.le.s32.totalorder 2, %s18
      // Predicated region
      $region53: #{convnext_mlp.1} parent=5 // pred_check
        %p8100 = pneg %p8099
      $region54: #{convnext_mlp.1} parent=5 // pred_check_branch
        %8102 = sbr.rel (%p8100) target = $region56
      $region55: #{convnext_mlp.1} parent=5 // pred_region
        %s8103 = ssub.s32 %s18, 2
        // Predicated region
        $region57: #{convnext_mlp.1} parent=55 // pred_check
          %p8104 = pneg %p157
        $region58: #{convnext_mlp.1} parent=55 // pred_check_branch
          %8106 = sbr.rel (%p8104) target = $region60
        $region59: #{convnext_mlp.1} parent=55 // pred_region
          %s8107 = sand.u32 %s142, 1
          %s8108 = scalar_lea.sflag [#allocation4], %s8107
          %s8109 = sand.u32 %s142, 1
          %s8110 = smul.addr %s8109, 1568
          %s8111 = scalar_lea.vmem [#allocation7], %s8110
          %8112 = dma.done %s8108, 25088
        $region60: #{convnext_mlp.1} parent=55 // pred_fallthru
          _
      $region56: #{convnext_mlp.1} parent=5 // pred_fallthru
        _
    $region6: #{convnext_mlp.1} parent=1 // loop_footer
      %s22 = sadd.s32 1, %s18
    $region7: #{convnext_mlp.1} parent=1 // loop_footer_branch
      %17 = sbr.rel target = $region3
    $region8: #{convnext_mlp.1} parent=1 // loop_exit
      _
    %8113 = vsyncpa [#allocation3], 1
    %s8114 = scalar_lea.sflag [#allocation3], 1
    %8115 = vsyncpa %s8114, 1
    %8116 = vsyncpa [#allocation6], 1
    %8117 = vsyncpa [#allocation4], 1
    %s8118 = scalar_lea.sflag [#allocation4], 1
    %8119 = vsyncpa %s8118, 1

</llo_original>
